<compile_context>
chip_gen: v7x
topology: tpu7x:2x2x1
jax: 0.10.0
libtpu: 0.0.40
codegen_flags: <defaults>
</compile_context>

<pallas_src>
import numpy as np
import jax
import jax.numpy as jnp
from jax import lax
from jax.experimental import pallas as pl
from jax.experimental.pallas import tpu as pltpu

# ---- problem sizes (small, consistent with the module's forward) ----------
B, L, C, H, W = 2, 8, 4, 16, 16     # batch, seq len, in-channels, spatial
CC = 8                              # conv_module output channels
HH, WW = H, W                       # 3x3 / pad=1 / stride=1 keeps spatial dims
D = CC * HH * WW                    # LSTM input dim (= 2048)
HID = 32                            # lstm_hidden_size
NCLS = 10                           # num_classes
KH = KW = 3                         # conv kernel
HP, WP = H + 2, W + 2               # padded spatial (18, 18)
LB = L * B                          # frames, ordered (l, b) -> time-major
G4 = 4 * HID                        # 128  (gate width)
WCC = W * CC                        # 128  (lane-dense conv row width)
CWP = C * WP                        # 72   (conv matmul K per tap)
NPAD = 128                          # lane-padded FC output width


# ---------------------------------------------------------------------------
# Fused kernel: conv(+ReLU) -> input projection -> LSTM -> FC
# ---------------------------------------------------------------------------
def fused_lrcn_kernel(x_ref, wb_ref, bb_ref, wih_ref, bg_ref,
                      whh_ref, wfc_ref, bfc_ref, o_ref):
    # x_ref  : (HP, LB, CWP)   padded input rows, frame order (l, b)
    # wb_ref : (KH, CWP, WCC)  banded conv weights (one band per kh tap)
    # bb_ref : (1, WCC)        conv bias tiled over w
    # wih_ref: (H, WCC, G4)    W_ih^T with rows permuted to (h, w, cc) order
    # bg_ref : (1, G4)         b_ih + b_hh
    # whh_ref: (HID, G4)       W_hh^T
    # wfc_ref: (HID, NPAD), bfc_ref: (1, NPAD)   zero-padded past NCLS
    # o_ref  : (L, B, NPAD)    lane-padded logits, time-major
    bb = bb_ref[...]
    gx = jnp.broadcast_to(bg_ref[...], (LB, G4))        # gate bias, hoisted

    # Conv + ReLU + input projection, accumulated over output rows h.
    for h in range(H):                                  # static, fully unrolled
        yh = bb
        for kh in range(KH):
            yh = yh + jnp.dot(x_ref[h + kh], wb_ref[kh],
                              preferred_element_type=jnp.float32)
        yh = jnp.maximum(yh, 0.0)                       # (LB, WCC): conv row h
        gx = gx + jnp.dot(yh, wih_ref[h],
                          preferred_element_type=jnp.float32)

    # LSTM recurrence (zero init state) + fused FC.
    whh = whh_ref[...]
    wfc = wfc_ref[...]
    bfc = bfc_ref[...]
    h_t = jnp.zeros((B, HID), jnp.float32)
    c_t = jnp.zeros((B, HID), jnp.float32)
    for t in range(L):                                  # static, fully unrolled
        g = gx[t * B:(t + 1) * B, :] + jnp.dot(
            h_t, whh, preferred_element_type=jnp.float32)
        # PyTorch gate order: i, f, g, o
        i_g = jax.nn.sigmoid(g[:, 0 * HID:1 * HID])
        f_g = jax.nn.sigmoid(g[:, 1 * HID:2 * HID])
        g_g = jnp.tanh(g[:, 2 * HID:3 * HID])
        o_g = jax.nn.sigmoid(g[:, 3 * HID:4 * HID])
        c_t = f_g * c_t + i_g * g_g
        h_t = o_g * jnp.tanh(c_t)
        # Dropout is identity at inference (eval mode); FC applies directly.
        o_ref[t] = (jnp.dot(h_t, wfc, preferred_element_type=jnp.float32)
                    + bfc)


def _fused_call(x_rows, wb, bb, wih_p, bg, whh, wfc, bfc):
    return pl.pallas_call(
        fused_lrcn_kernel,
        out_shape=jax.ShapeDtypeStruct((L, B, NPAD), jnp.float32),
        grid_spec=pltpu.PrefetchScalarGridSpec(
            num_scalar_prefetch=0,
            grid=(1,),
            in_specs=[
                pl.BlockSpec((HP, LB, CWP), lambda i: (0, 0, 0)),
                pl.BlockSpec((KH, CWP, WCC), lambda i: (0, 0, 0)),
                pl.BlockSpec((1, WCC), lambda i: (0, 0)),
                pl.BlockSpec((H, WCC, G4), lambda i: (0, 0, 0)),
                pl.BlockSpec((1, G4), lambda i: (0, 0)),
                pl.BlockSpec((HID, G4), lambda i: (0, 0)),
                pl.BlockSpec((HID, NPAD), lambda i: (0, 0)),
                pl.BlockSpec((1, NPAD), lambda i: (0, 0)),
            ],
            out_specs=pl.BlockSpec((L, B, NPAD), lambda i: (0, 0, 0)),
        ),
        compiler_params=pltpu.CompilerParams(
            dimension_semantics=("arbitrary",)),
    )(x_rows, wb, bb, wih_p, bg, whh, wfc, bfc)


# ---------------------------------------------------------------------------
# Trace-time weight repackaging (constant-folded / trivial XLA ops)
# ---------------------------------------------------------------------------
def _banded_conv_weight(w_conv):
    """(CC, C, KH, KW) -> (KH, C*WP, W*CC).

    band[kh][c*WP + p, w*CC + cc] = w_conv[cc, c, kh, p - w] if 0 <= p-w < KW.
    Turns the 3x3 'same' conv into 3 accumulated matmuls per output row, with
    a lane-dense (w*CC = 128) output layout.
    """
    sel = np.zeros((KW, WP, W), np.float32)
    for kw in range(KW):
        for w in range(W):
            sel[kw, w + kw, w] = 1.0
    sel = jnp.asarray(sel)
    bands = []
    for kh in range(KH):
        band = jnp.einsum("kpw,oik->ipwo", sel, w_conv[:, :, kh, :])
        bands.append(band.reshape(CWP, WCC))           # (C*WP, W*CC)
    return jnp.stack(bands, axis=0)


# ---------------------------------------------------------------------------
# Full forward
# ---------------------------------------------------------------------------
def lrcn3d_forward(x, params):
    # Frame order (l, b) so the recurrence reads contiguous gate rows per step.
    xt = jnp.transpose(x, (1, 0, 2, 3, 4)).reshape(LB, C, H, W)
    xp = jnp.pad(xt, ((0, 0), (0, 0), (1, 1), (1, 1)))        # (LB, C, HP, WP)
    x_rows = jnp.transpose(xp, (2, 0, 1, 3)).reshape(HP, LB, CWP)

    wb = _banded_conv_weight(params["w_conv"])                # (KH, 72, 128)
    bb = jnp.tile(params["b_conv"], W).reshape(1, WCC)        # (1, 128)
    # W_ih rows permuted from PyTorch (cc, h, w) flatten order to (h, w, cc).
    wih_p = (params["w_ih"].reshape(G4, CC, H, W)
             .transpose(2, 3, 1, 0).reshape(H, WCC, G4))      # (16, 128, 128)
    bg = (params["b_ih"] + params["b_hh"]).reshape(1, G4)     # (1, 128)
    whh = params["w_hh"].T                                    # (HID, 128)
    wfc = jnp.pad(params["w_fc"].T, ((0, 0), (0, NPAD - NCLS)))   # (HID, 128)
    bfc = jnp.pad(params["b_fc"], (0, NPAD - NCLS)).reshape(1, NPAD)

    out = _fused_call(x_rows, wb, bb, wih_p, bg, whh, wfc, bfc)   # (L, B, 128)
    # slice away lane padding; tiny (B*L*NCLS) transpose back to batch-major
    return jnp.transpose(out[:, :, :NCLS], (1, 0, 2))             # (B, L, NCLS)


# ---------------------------------------------------------------------------
# Pure-JAX reference (for correctness check)
# ---------------------------------------------------------------------------
def reference_forward(x, params):
    Bx, Lx = x.shape[0], x.shape[1]
    xf = x.reshape(Bx * Lx, C, H, W)
    y = lax.conv_general_dilated(
        xf, params["w_conv"], (1, 1), "SAME",
        dimension_numbers=("NCHW", "OIHW", "NCHW"),
        precision=lax.Precision.HIGHEST)
    y = jnp.maximum(y + params["b_conv"][None, :, None, None], 0.0)
    feat = y.reshape(Bx, Lx, D)

    w_ih_t, w_hh_t = params["w_ih"].T, params["w_hh"].T
    b_g = params["b_ih"] + params["b_hh"]

    def step(carry, x_t):
        h, c = carry
        gates = (jnp.dot(x_t, w_ih_t, precision=lax.Precision.HIGHEST)
                 + jnp.dot(h, w_hh_t, precision=lax.Precision.HIGHEST) + b_g)
        i_g = jax.nn.sigmoid(gates[:, :HID])
        f_g = jax.nn.sigmoid(gates[:, HID:2 * HID])
        g_g = jnp.tanh(gates[:, 2 * HID:3 * HID])
        o_g = jax.nn.sigmoid(gates[:, 3 * HID:])
        c = f_g * c + i_g * g_g
        h = o_g * jnp.tanh(c)
        return (h, c), h

    h0 = jnp.zeros((Bx, HID), jnp.float32)
    _, hs = lax.scan(step, (h0, h0), feat.transpose(1, 0, 2))
    logits = (jnp.dot(hs, params["w_fc"].T, precision=lax.Precision.HIGHEST)
              + params["b_fc"])
    return logits.transpose(1, 0, 2)


if __name__ == "__main__":
    ks = jax.random.split(jax.random.PRNGKey(0), 9)
    params = {
        "w_conv": 0.10 * jax.random.normal(ks[0], (CC, C, KH, KW), jnp.float32),
        "b_conv": 0.10 * jax.random.normal(ks[1], (CC,), jnp.float32),
        "w_ih":   0.05 * jax.random.normal(ks[2], (4 * HID, D), jnp.float32),
        "w_hh":   0.05 * jax.random.normal(ks[3], (4 * HID, HID), jnp.float32),
        "b_ih":   0.05 * jax.random.normal(ks[4], (4 * HID,), jnp.float32),
        "b_hh":   0.05 * jax.random.normal(ks[5], (4 * HID,), jnp.float32),
        "w_fc":   0.10 * jax.random.normal(ks[6], (NCLS, HID), jnp.float32),
        "b_fc":   0.10 * jax.random.normal(ks[7], (NCLS,), jnp.float32),
    }
    x = jax.random.normal(ks[8], (B, L, C, H, W), jnp.float32)

    out = jax.block_until_ready(jax.jit(lrcn3d_forward)(x, params))
    assert out.shape == (B, L, NCLS), out.shape

    ref = reference_forward(x, params)
    max_err = float(jnp.max(jnp.abs(out - ref)))
    assert jnp.allclose(out, ref, atol=2e-2, rtol=2e-2), max_err

    print("KERNEL_OK")
</pallas_src>

<mosaic_0001>
module attributes {stable_mosaic.version = 11 : i64} {
  func.func @fused_lrcn_kernel(%arg0: i32, %arg1: memref<18x16x72xf32, #tpu.memory_space<vmem>>, %arg2: memref<3x72x128xf32, #tpu.memory_space<vmem>>, %arg3: memref<1x128xf32, #tpu.memory_space<vmem>>, %arg4: memref<16x128x128xf32, #tpu.memory_space<vmem>>, %arg5: memref<1x128xf32, #tpu.memory_space<vmem>>, %arg6: memref<32x128xf32, #tpu.memory_space<vmem>>, %arg7: memref<32x128xf32, #tpu.memory_space<vmem>>, %arg8: memref<1x128xf32, #tpu.memory_space<vmem>>, %arg9: memref<8x2x128xf32, #tpu.memory_space<vmem>>) attributes {dimension_semantics = [#tpu.dimension_semantics<arbitrary>], iteration_bounds = array<i64: 1>, scalar_prefetch = 0 : i64, scratch_operands = 0 : i64, tpu.core_type = #tpu.core_type<tc>, window_params = [{pipeline_mode = #tpu.pipeline_mode<synchronous>, transform_indices = @transform_0, window_bounds = array<i64: 18, 16, 72>}, {pipeline_mode = #tpu.pipeline_mode<synchronous>, transform_indices = @transform_1, window_bounds = array<i64: 3, 72, 128>}, {pipeline_mode = #tpu.pipeline_mode<synchronous>, transform_indices = @transform_2, window_bounds = array<i64: 1, 128>}, {pipeline_mode = #tpu.pipeline_mode<synchronous>, transform_indices = @transform_3, window_bounds = array<i64: 16, 128, 128>}, {pipeline_mode = #tpu.pipeline_mode<synchronous>, transform_indices = @transform_4, window_bounds = array<i64: 1, 128>}, {pipeline_mode = #tpu.pipeline_mode<synchronous>, transform_indices = @transform_5, window_bounds = array<i64: 32, 128>}, {pipeline_mode = #tpu.pipeline_mode<synchronous>, transform_indices = @transform_6, window_bounds = array<i64: 32, 128>}, {pipeline_mode = #tpu.pipeline_mode<synchronous>, transform_indices = @transform_7, window_bounds = array<i64: 1, 128>}, {pipeline_mode = #tpu.pipeline_mode<synchronous>, transform_indices = @transform_8, window_bounds = array<i64: 8, 2, 128>}]} {
    %c0 = arith.constant 0 : index
    %c0_0 = arith.constant 0 : index
    %0 = vector.load %arg3[%c0, %c0_0] : memref<1x128xf32, #tpu.memory_space<vmem>>, vector<1x128xf32>
    %c0_1 = arith.constant 0 : index
    %c0_2 = arith.constant 0 : index
    %1 = vector.load %arg5[%c0_1, %c0_2] : memref<1x128xf32, #tpu.memory_space<vmem>>, vector<1x128xf32>
    %2 = vector.shape_cast %1 : vector<1x128xf32> to vector<1x128xf32>
    %3 = vector.broadcast %2 : vector<1x128xf32> to vector<16x128xf32>
    %c0_3 = arith.constant 0 : index
    %c0_4 = arith.constant 0 : index
    %c0_5 = arith.constant 0 : index
    %4 = vector.load %arg1[%c0_3, %c0_4, %c0_5] : memref<18x16x72xf32, #tpu.memory_space<vmem>>, vector<1x16x72xf32>
    %5 = vector.shape_cast %4 : vector<1x16x72xf32> to vector<16x72xf32>
    %c0_6 = arith.constant 0 : index
    %c0_7 = arith.constant 0 : index
    %c0_8 = arith.constant 0 : index
    %6 = vector.load %arg2[%c0_6, %c0_7, %c0_8] : memref<3x72x128xf32, #tpu.memory_space<vmem>>, vector<1x72x128xf32>
    %7 = vector.shape_cast %6 : vector<1x72x128xf32> to vector<72x128xf32>
    %cst = arith.constant dense<0.000000e+00> : vector<16x128xf32>
    %8 = tpu.matmul %5, %7, %cst {dimension_numbers = #tpu.dot_dimension_numbers<[1], [0], [0], [1], [0, 0, 1, 1], [], []>} : vector<16x72xf32>, vector<72x128xf32>, vector<16x128xf32> -> vector<16x128xf32>
    %9 = vector.broadcast %0 : vector<1x128xf32> to vector<16x128xf32>
    %10 = arith.addf %9, %8 : vector<16x128xf32>
    %c1 = arith.constant 1 : index
    %c0_9 = arith.constant 0 : index
    %c0_10 = arith.constant 0 : index
    %11 = vector.load %arg1[%c1, %c0_9, %c0_10] : memref<18x16x72xf32, #tpu.memory_space<vmem>>, vector<1x16x72xf32>
    %12 = vector.shape_cast %11 : vector<1x16x72xf32> to vector<16x72xf32>
    %c1_11 = arith.constant 1 : index
    %c0_12 = arith.constant 0 : index
    %c0_13 = arith.constant 0 : index
    %13 = vector.load %arg2[%c1_11, %c0_12, %c0_13] : memref<3x72x128xf32, #tpu.memory_space<vmem>>, vector<1x72x128xf32>
    %14 = vector.shape_cast %13 : vector<1x72x128xf32> to vector<72x128xf32>
    %cst_14 = arith.constant dense<0.000000e+00> : vector<16x128xf32>
    %15 = tpu.matmul %12, %14, %cst_14 {dimension_numbers = #tpu.dot_dimension_numbers<[1], [0], [0], [1], [0, 0, 1, 1], [], []>} : vector<16x72xf32>, vector<72x128xf32>, vector<16x128xf32> -> vector<16x128xf32>
    %16 = arith.addf %10, %15 : vector<16x128xf32>
    %c2 = arith.constant 2 : index
    %c0_15 = arith.constant 0 : index
    %c0_16 = arith.constant 0 : index
    %17 = vector.load %arg1[%c2, %c0_15, %c0_16] : memref<18x16x72xf32, #tpu.memory_space<vmem>>, vector<1x16x72xf32>
    %18 = vector.shape_cast %17 : vector<1x16x72xf32> to vector<16x72xf32>
    %c2_17 = arith.constant 2 : index
    %c0_18 = arith.constant 0 : index
    %c0_19 = arith.constant 0 : index
    %19 = vector.load %arg2[%c2_17, %c0_18, %c0_19] : memref<3x72x128xf32, #tpu.memory_space<vmem>>, vector<1x72x128xf32>
    %20 = vector.shape_cast %19 : vector<1x72x128xf32> to vector<72x128xf32>
    %cst_20 = arith.constant dense<0.000000e+00> : vector<16x128xf32>
    %21 = tpu.matmul %18, %20, %cst_20 {dimension_numbers = #tpu.dot_dimension_numbers<[1], [0], [0], [1], [0, 0, 1, 1], [], []>} : vector<16x72xf32>, vector<72x128xf32>, vector<16x128xf32> -> vector<16x128xf32>
    %22 = arith.addf %16, %21 : vector<16x128xf32>
    %cst_21 = arith.constant 0.000000e+00 : f32
    %23 = vector.broadcast %cst_21 : f32 to vector<16x128xf32>
    %24 = arith.maximumf %22, %23 : vector<16x128xf32>
    %c0_22 = arith.constant 0 : index
    %c0_23 = arith.constant 0 : index
    %c0_24 = arith.constant 0 : index
    %25 = vector.load %arg4[%c0_22, %c0_23, %c0_24] : memref<16x128x128xf32, #tpu.memory_space<vmem>>, vector<1x128x128xf32>
    %26 = vector.shape_cast %25 : vector<1x128x128xf32> to vector<128x128xf32>
    %cst_25 = arith.constant dense<0.000000e+00> : vector<16x128xf32>
    %27 = tpu.matmul %24, %26, %cst_25 {dimension_numbers = #tpu.dot_dimension_numbers<[1], [0], [0], [1], [0, 0, 1, 1], [], []>} : vector<16x128xf32>, vector<128x128xf32>, vector<16x128xf32> -> vector<16x128xf32>
    %28 = arith.addf %3, %27 : vector<16x128xf32>
    %c1_26 = arith.constant 1 : index
    %c0_27 = arith.constant 0 : index
    %c0_28 = arith.constant 0 : index
    %29 = vector.load %arg1[%c1_26, %c0_27, %c0_28] : memref<18x16x72xf32, #tpu.memory_space<vmem>>, vector<1x16x72xf32>
    %30 = vector.shape_cast %29 : vector<1x16x72xf32> to vector<16x72xf32>
    %c0_29 = arith.constant 0 : index
    %c0_30 = arith.constant 0 : index
    %c0_31 = arith.constant 0 : index
    %31 = vector.load %arg2[%c0_29, %c0_30, %c0_31] : memref<3x72x128xf32, #tpu.memory_space<vmem>>, vector<1x72x128xf32>
    %32 = vector.shape_cast %31 : vector<1x72x128xf32> to vector<72x128xf32>
    %cst_32 = arith.constant dense<0.000000e+00> : vector<16x128xf32>
    %33 = tpu.matmul %30, %32, %cst_32 {dimension_numbers = #tpu.dot_dimension_numbers<[1], [0], [0], [1], [0, 0, 1, 1], [], []>} : vector<16x72xf32>, vector<72x128xf32>, vector<16x128xf32> -> vector<16x128xf32>
    %34 = vector.broadcast %0 : vector<1x128xf32> to vector<16x128xf32>
    %35 = arith.addf %34, %33 : vector<16x128xf32>
    %c2_33 = arith.constant 2 : index
    %c0_34 = arith.constant 0 : index
    %c0_35 = arith.constant 0 : index
    %36 = vector.load %arg1[%c2_33, %c0_34, %c0_35] : memref<18x16x72xf32, #tpu.memory_space<vmem>>, vector<1x16x72xf32>
    %37 = vector.shape_cast %36 : vector<1x16x72xf32> to vector<16x72xf32>
    %c1_36 = arith.constant 1 : index
    %c0_37 = arith.constant 0 : index
    %c0_38 = arith.constant 0 : index
    %38 = vector.load %arg2[%c1_36, %c0_37, %c0_38] : memref<3x72x128xf32, #tpu.memory_space<vmem>>, vector<1x72x128xf32>
    %39 = vector.shape_cast %38 : vector<1x72x128xf32> to vector<72x128xf32>
    %cst_39 = arith.constant dense<0.000000e+00> : vector<16x128xf32>
    %40 = tpu.matmul %37, %39, %cst_39 {dimension_numbers = #tpu.dot_dimension_numbers<[1], [0], [0], [1], [0, 0, 1, 1], [], []>} : vector<16x72xf32>, vector<72x128xf32>, vector<16x128xf32> -> vector<16x128xf32>
    %41 = arith.addf %35, %40 : vector<16x128xf32>
    %c3 = arith.constant 3 : index
    %c0_40 = arith.constant 0 : index
    %c0_41 = arith.constant 0 : index
    %42 = vector.load %arg1[%c3, %c0_40, %c0_41] : memref<18x16x72xf32, #tpu.memory_space<vmem>>, vector<1x16x72xf32>
    %43 = vector.shape_cast %42 : vector<1x16x72xf32> to vector<16x72xf32>
    %c2_42 = arith.constant 2 : index
    %c0_43 = arith.constant 0 : index
    %c0_44 = arith.constant 0 : index
    %44 = vector.load %arg2[%c2_42, %c0_43, %c0_44] : memref<3x72x128xf32, #tpu.memory_space<vmem>>, vector<1x72x128xf32>
    %45 = vector.shape_cast %44 : vector<1x72x128xf32> to vector<72x128xf32>
    %cst_45 = arith.constant dense<0.000000e+00> : vector<16x128xf32>
    %46 = tpu.matmul %43, %45, %cst_45 {dimension_numbers = #tpu.dot_dimension_numbers<[1], [0], [0], [1], [0, 0, 1, 1], [], []>} : vector<16x72xf32>, vector<72x128xf32>, vector<16x128xf32> -> vector<16x128xf32>
    %47 = arith.addf %41, %46 : vector<16x128xf32>
    %cst_46 = arith.constant 0.000000e+00 : f32
    %48 = vector.broadcast %cst_46 : f32 to vector<16x128xf32>
    %49 = arith.maximumf %47, %48 : vector<16x128xf32>
    %c1_47 = arith.constant 1 : index
    %c0_48 = arith.constant 0 : index
    %c0_49 = arith.constant 0 : index
    %50 = vector.load %arg4[%c1_47, %c0_48, %c0_49] : memref<16x128x128xf32, #tpu.memory_space<vmem>>, vector<1x128x128xf32>
    %51 = vector.shape_cast %50 : vector<1x128x128xf32> to vector<128x128xf32>
    %cst_50 = arith.constant dense<0.000000e+00> : vector<16x128xf32>
    %52 = tpu.matmul %49, %51, %cst_50 {dimension_numbers = #tpu.dot_dimension_numbers<[1], [0], [0], [1], [0, 0, 1, 1], [], []>} : vector<16x128xf32>, vector<128x128xf32>, vector<16x128xf32> -> vector<16x128xf32>
    %53 = arith.addf %28, %52 : vector<16x128xf32>
    %c2_51 = arith.constant 2 : index
    %c0_52 = arith.constant 0 : index
    %c0_53 = arith.constant 0 : index
    %54 = vector.load %arg1[%c2_51, %c0_52, %c0_53] : memref<18x16x72xf32, #tpu.memory_space<vmem>>, vector<1x16x72xf32>
    %55 = vector.shape_cast %54 : vector<1x16x72xf32> to vector<16x72xf32>
    %c0_54 = arith.constant 0 : index
    %c0_55 = arith.constant 0 : index
    %c0_56 = arith.constant 0 : index
    %56 = vector.load %arg2[%c0_54, %c0_55, %c0_56] : memref<3x72x128xf32, #tpu.memory_space<vmem>>, vector<1x72x128xf32>
    %57 = vector.shape_cast %56 : vector<1x72x128xf32> to vector<72x128xf32>
    %cst_57 = arith.constant dense<0.000000e+00> : vector<16x128xf32>
    %58 = tpu.matmul %55, %57, %cst_57 {dimension_numbers = #tpu.dot_dimension_numbers<[1], [0], [0], [1], [0, 0, 1, 1], [], []>} : vector<16x72xf32>, vector<72x128xf32>, vector<16x128xf32> -> vector<16x128xf32>
    %59 = vector.broadcast %0 : vector<1x128xf32> to vector<16x128xf32>
    %60 = arith.addf %59, %58 : vector<16x128xf32>
    %c3_58 = arith.constant 3 : index
    %c0_59 = arith.constant 0 : index
    %c0_60 = arith.constant 0 : index
    %61 = vector.load %arg1[%c3_58, %c0_59, %c0_60] : memref<18x16x72xf32, #tpu.memory_space<vmem>>, vector<1x16x72xf32>
    %62 = vector.shape_cast %61 : vector<1x16x72xf32> to vector<16x72xf32>
    %c1_61 = arith.constant 1 : index
    %c0_62 = arith.constant 0 : index
    %c0_63 = arith.constant 0 : index
    %63 = vector.load %arg2[%c1_61, %c0_62, %c0_63] : memref<3x72x128xf32, #tpu.memory_space<vmem>>, vector<1x72x128xf32>
    %64 = vector.shape_cast %63 : vector<1x72x128xf32> to vector<72x128xf32>
    %cst_64 = arith.constant dense<0.000000e+00> : vector<16x128xf32>
    %65 = tpu.matmul %62, %64, %cst_64 {dimension_numbers = #tpu.dot_dimension_numbers<[1], [0], [0], [1], [0, 0, 1, 1], [], []>} : vector<16x72xf32>, vector<72x128xf32>, vector<16x128xf32> -> vector<16x128xf32>
    %66 = arith.addf %60, %65 : vector<16x128xf32>
    %c4 = arith.constant 4 : index
    %c0_65 = arith.constant 0 : index
    %c0_66 = arith.constant 0 : index
    %67 = vector.load %arg1[%c4, %c0_65, %c0_66] : memref<18x16x72xf32, #tpu.memory_space<vmem>>, vector<1x16x72xf32>
    %68 = vector.shape_cast %67 : vector<1x16x72xf32> to vector<16x72xf32>
    %c2_67 = arith.constant 2 : index
    %c0_68 = arith.constant 0 : index
    %c0_69 = arith.constant 0 : index
    %69 = vector.load %arg2[%c2_67, %c0_68, %c0_69] : memref<3x72x128xf32, #tpu.memory_space<vmem>>, vector<1x72x128xf32>
    %70 = vector.shape_cast %69 : vector<1x72x128xf32> to vector<72x128xf32>
    %cst_70 = arith.constant dense<0.000000e+00> : vector<16x128xf32>
    %71 = tpu.matmul %68, %70, %cst_70 {dimension_numbers = #tpu.dot_dimension_numbers<[1], [0], [0], [1], [0, 0, 1, 1], [], []>} : vector<16x72xf32>, vector<72x128xf32>, vector<16x128xf32> -> vector<16x128xf32>
    %72 = arith.addf %66, %71 : vector<16x128xf32>
    %cst_71 = arith.constant 0.000000e+00 : f32
    %73 = vector.broadcast %cst_71 : f32 to vector<16x128xf32>
    %74 = arith.maximumf %72, %73 : vector<16x128xf32>
    %c2_72 = arith.constant 2 : index
    %c0_73 = arith.constant 0 : index
    %c0_74 = arith.constant 0 : index
    %75 = vector.load %arg4[%c2_72, %c0_73, %c0_74] : memref<16x128x128xf32, #tpu.memory_space<vmem>>, vector<1x128x128xf32>
    %76 = vector.shape_cast %75 : vector<1x128x128xf32> to vector<128x128xf32>
    %cst_75 = arith.constant dense<0.000000e+00> : vector<16x128xf32>
    %77 = tpu.matmul %74, %76, %cst_75 {dimension_numbers = #tpu.dot_dimension_numbers<[1], [0], [0], [1], [0, 0, 1, 1], [], []>} : vector<16x128xf32>, vector<128x128xf32>, vector<16x128xf32> -> vector<16x128xf32>
    %78 = arith.addf %53, %77 : vector<16x128xf32>
    %c3_76 = arith.constant 3 : index
    %c0_77 = arith.constant 0 : index
    %c0_78 = arith.constant 0 : index
    %79 = vector.load %arg1[%c3_76, %c0_77, %c0_78] : memref<18x16x72xf32, #tpu.memory_space<vmem>>, vector<1x16x72xf32>
    %80 = vector.shape_cast %79 : vector<1x16x72xf32> to vector<16x72xf32>
    %c0_79 = arith.constant 0 : index
    %c0_80 = arith.constant 0 : index
    %c0_81 = arith.constant 0 : index
    %81 = vector.load %arg2[%c0_79, %c0_80, %c0_81] : memref<3x72x128xf32, #tpu.memory_space<vmem>>, vector<1x72x128xf32>
    %82 = vector.shape_cast %81 : vector<1x72x128xf32> to vector<72x128xf32>
    %cst_82 = arith.constant dense<0.000000e+00> : vector<16x128xf32>
    %83 = tpu.matmul %80, %82, %cst_82 {dimension_numbers = #tpu.dot_dimension_numbers<[1], [0], [0], [1], [0, 0, 1, 1], [], []>} : vector<16x72xf32>, vector<72x128xf32>, vector<16x128xf32> -> vector<16x128xf32>
    %84 = vector.broadcast %0 : vector<1x128xf32> to vector<16x128xf32>
    %85 = arith.addf %84, %83 : vector<16x128xf32>
    %c4_83 = arith.constant 4 : index
    %c0_84 = arith.constant 0 : index
    %c0_85 = arith.constant 0 : index
    %86 = vector.load %arg1[%c4_83, %c0_84, %c0_85] : memref<18x16x72xf32, #tpu.memory_space<vmem>>, vector<1x16x72xf32>
    %87 = vector.shape_cast %86 : vector<1x16x72xf32> to vector<16x72xf32>
    %c1_86 = arith.constant 1 : index
    %c0_87 = arith.constant 0 : index
    %c0_88 = arith.constant 0 : index
    %88 = vector.load %arg2[%c1_86, %c0_87, %c0_88] : memref<3x72x128xf32, #tpu.memory_space<vmem>>, vector<1x72x128xf32>
    %89 = vector.shape_cast %88 : vector<1x72x128xf32> to vector<72x128xf32>
    %cst_89 = arith.constant dense<0.000000e+00> : vector<16x128xf32>
    %90 = tpu.matmul %87, %89, %cst_89 {dimension_numbers = #tpu.dot_dimension_numbers<[1], [0], [0], [1], [0, 0, 1, 1], [], []>} : vector<16x72xf32>, vector<72x128xf32>, vector<16x128xf32> -> vector<16x128xf32>
    %91 = arith.addf %85, %90 : vector<16x128xf32>
    %c5 = arith.constant 5 : index
    %c0_90 = arith.constant 0 : index
    %c0_91 = arith.constant 0 : index
    %92 = vector.load %arg1[%c5, %c0_90, %c0_91] : memref<18x16x72xf32, #tpu.memory_space<vmem>>, vector<1x16x72xf32>
    %93 = vector.shape_cast %92 : vector<1x16x72xf32> to vector<16x72xf32>
    %c2_92 = arith.constant 2 : index
    %c0_93 = arith.constant 0 : index
    %c0_94 = arith.constant 0 : index
    %94 = vector.load %arg2[%c2_92, %c0_93, %c0_94] : memref<3x72x128xf32, #tpu.memory_space<vmem>>, vector<1x72x128xf32>
    %95 = vector.shape_cast %94 : vector<1x72x128xf32> to vector<72x128xf32>
    %cst_95 = arith.constant dense<0.000000e+00> : vector<16x128xf32>
    %96 = tpu.matmul %93, %95, %cst_95 {dimension_numbers = #tpu.dot_dimension_numbers<[1], [0], [0], [1], [0, 0, 1, 1], [], []>} : vector<16x72xf32>, vector<72x128xf32>, vector<16x128xf32> -> vector<16x128xf32>
    %97 = arith.addf %91, %96 : vector<16x128xf32>
    %cst_96 = arith.constant 0.000000e+00 : f32
    %98 = vector.broadcast %cst_96 : f32 to vector<16x128xf32>
    %99 = arith.maximumf %97, %98 : vector<16x128xf32>
    %c3_97 = arith.constant 3 : index
    %c0_98 = arith.constant 0 : index
    %c0_99 = arith.constant 0 : index
    %100 = vector.load %arg4[%c3_97, %c0_98, %c0_99] : memref<16x128x128xf32, #tpu.memory_space<vmem>>, vector<1x128x128xf32>
    %101 = vector.shape_cast %100 : vector<1x128x128xf32> to vector<128x128xf32>
    %cst_100 = arith.constant dense<0.000000e+00> : vector<16x128xf32>
    %102 = tpu.matmul %99, %101, %cst_100 {dimension_numbers = #tpu.dot_dimension_numbers<[1], [0], [0], [1], [0, 0, 1, 1], [], []>} : vector<16x128xf32>, vector<128x128xf32>, vector<16x128xf32> -> vector<16x128xf32>
    %103 = arith.addf %78, %102 : vector<16x128xf32>
    %c4_101 = arith.constant 4 : index
    %c0_102 = arith.constant 0 : index
    %c0_103 = arith.constant 0 : index
    %104 = vector.load %arg1[%c4_101, %c0_102, %c0_103] : memref<18x16x72xf32, #tpu.memory_space<vmem>>, vector<1x16x72xf32>
    %105 = vector.shape_cast %104 : vector<1x16x72xf32> to vector<16x72xf32>
    %c0_104 = arith.constant 0 : index
    %c0_105 = arith.constant 0 : index
    %c0_106 = arith.constant 0 : index
    %106 = vector.load %arg2[%c0_104, %c0_105, %c0_106] : memref<3x72x128xf32, #tpu.memory_space<vmem>>, vector<1x72x128xf32>
    %107 = vector.shape_cast %106 : vector<1x72x128xf32> to vector<72x128xf32>
    %cst_107 = arith.constant dense<0.000000e+00> : vector<16x128xf32>
    %108 = tpu.matmul %105, %107, %cst_107 {dimension_numbers = #tpu.dot_dimension_numbers<[1], [0], [0], [1], [0, 0, 1, 1], [], []>} : vector<16x72xf32>, vector<72x128xf32>, vector<16x128xf32> -> vector<16x128xf32>
    %109 = vector.broadcast %0 : vector<1x128xf32> to vector<16x128xf32>
    %110 = arith.addf %109, %108 : vector<16x128xf32>
    %c5_108 = arith.constant 5 : index
    %c0_109 = arith.constant 0 : index
    %c0_110 = arith.constant 0 : index
    %111 = vector.load %arg1[%c5_108, %c0_109, %c0_110] : memref<18x16x72xf32, #tpu.memory_space<vmem>>, vector<1x16x72xf32>
    %112 = vector.shape_cast %111 : vector<1x16x72xf32> to vector<16x72xf32>
    %c1_111 = arith.constant 1 : index
    %c0_112 = arith.constant 0 : index
    %c0_113 = arith.constant 0 : index
    %113 = vector.load %arg2[%c1_111, %c0_112, %c0_113] : memref<3x72x128xf32, #tpu.memory_space<vmem>>, vector<1x72x128xf32>
    %114 = vector.shape_cast %113 : vector<1x72x128xf32> to vector<72x128xf32>
    %cst_114 = arith.constant dense<0.000000e+00> : vector<16x128xf32>
    %115 = tpu.matmul %112, %114, %cst_114 {dimension_numbers = #tpu.dot_dimension_numbers<[1], [0], [0], [1], [0, 0, 1, 1], [], []>} : vector<16x72xf32>, vector<72x128xf32>, vector<16x128xf32> -> vector<16x128xf32>
    %116 = arith.addf %110, %115 : vector<16x128xf32>
    %c6 = arith.constant 6 : index
    %c0_115 = arith.constant 0 : index
    %c0_116 = arith.constant 0 : index
    %117 = vector.load %arg1[%c6, %c0_115, %c0_116] : memref<18x16x72xf32, #tpu.memory_space<vmem>>, vector<1x16x72xf32>
    %118 = vector.shape_cast %117 : vector<1x16x72xf32> to vector<16x72xf32>
    %c2_117 = arith.constant 2 : index
    %c0_118 = arith.constant 0 : index
    %c0_119 = arith.constant 0 : index
    %119 = vector.load %arg2[%c2_117, %c0_118, %c0_119] : memref<3x72x128xf32, #tpu.memory_space<vmem>>, vector<1x72x128xf32>
    %120 = vector.shape_cast %119 : vector<1x72x128xf32> to vector<72x128xf32>
    %cst_120 = arith.constant dense<0.000000e+00> : vector<16x128xf32>
    %121 = tpu.matmul %118, %120, %cst_120 {dimension_numbers = #tpu.dot_dimension_numbers<[1], [0], [0], [1], [0, 0, 1, 1], [], []>} : vector<16x72xf32>, vector<72x128xf32>, vector<16x128xf32> -> vector<16x128xf32>
    %122 = arith.addf %116, %121 : vector<16x128xf32>
    %cst_121 = arith.constant 0.000000e+00 : f32
    %123 = vector.broadcast %cst_121 : f32 to vector<16x128xf32>
    %124 = arith.maximumf %122, %123 : vector<16x128xf32>
    %c4_122 = arith.constant 4 : index
    %c0_123 = arith.constant 0 : index
    %c0_124 = arith.constant 0 : index
    %125 = vector.load %arg4[%c4_122, %c0_123, %c0_124] : memref<16x128x128xf32, #tpu.memory_space<vmem>>, vector<1x128x128xf32>
    %126 = vector.shape_cast %125 : vector<1x128x128xf32> to vector<128x128xf32>
    %cst_125 = arith.constant dense<0.000000e+00> : vector<16x128xf32>
    %127 = tpu.matmul %124, %126, %cst_125 {dimension_numbers = #tpu.dot_dimension_numbers<[1], [0], [0], [1], [0, 0, 1, 1], [], []>} : vector<16x128xf32>, vector<128x128xf32>, vector<16x128xf32> -> vector<16x128xf32>
    %128 = arith.addf %103, %127 : vector<16x128xf32>
    %c5_126 = arith.constant 5 : index
    %c0_127 = arith.constant 0 : index
    %c0_128 = arith.constant 0 : index
    %129 = vector.load %arg1[%c5_126, %c0_127, %c0_128] : memref<18x16x72xf32, #tpu.memory_space<vmem>>, vector<1x16x72xf32>
    %130 = vector.shape_cast %129 : vector<1x16x72xf32> to vector<16x72xf32>
    %c0_129 = arith.constant 0 : index
    %c0_130 = arith.constant 0 : index
    %c0_131 = arith.constant 0 : index
    %131 = vector.load %arg2[%c0_129, %c0_130, %c0_131] : memref<3x72x128xf32, #tpu.memory_space<vmem>>, vector<1x72x128xf32>
    %132 = vector.shape_cast %131 : vector<1x72x128xf32> to vector<72x128xf32>
    %cst_132 = arith.constant dense<0.000000e+00> : vector<16x128xf32>
    %133 = tpu.matmul %130, %132, %cst_132 {dimension_numbers = #tpu.dot_dimension_numbers<[1], [0], [0], [1], [0, 0, 1, 1], [], []>} : vector<16x72xf32>, vector<72x128xf32>, vector<16x128xf32> -> vector<16x128xf32>
    %134 = vector.broadcast %0 : vector<1x128xf32> to vector<16x128xf32>
    %135 = arith.addf %134, %133 : vector<16x128xf32>
    %c6_133 = arith.constant 6 : index
    %c0_134 = arith.constant 0 : index
    %c0_135 = arith.constant 0 : index
    %136 = vector.load %arg1[%c6_133, %c0_134, %c0_135] : memref<18x16x72xf32, #tpu.memory_space<vmem>>, vector<1x16x72xf32>
    %137 = vector.shape_cast %136 : vector<1x16x72xf32> to vector<16x72xf32>
    %c1_136 = arith.constant 1 : index
    %c0_137 = arith.constant 0 : index
    %c0_138 = arith.constant 0 : index
    %138 = vector.load %arg2[%c1_136, %c0_137, %c0_138] : memref<3x72x128xf32, #tpu.memory_space<vmem>>, vector<1x72x128xf32>
    %139 = vector.shape_cast %138 : vector<1x72x128xf32> to vector<72x128xf32>
    %cst_139 = arith.constant dense<0.000000e+00> : vector<16x128xf32>
    %140 = tpu.matmul %137, %139, %cst_139 {dimension_numbers = #tpu.dot_dimension_numbers<[1], [0], [0], [1], [0, 0, 1, 1], [], []>} : vector<16x72xf32>, vector<72x128xf32>, vector<16x128xf32> -> vector<16x128xf32>
    %141 = arith.addf %135, %140 : vector<16x128xf32>
    %c7 = arith.constant 7 : index
    %c0_140 = arith.constant 0 : index
    %c0_141 = arith.constant 0 : index
    %142 = vector.load %arg1[%c7, %c0_140, %c0_141] : memref<18x16x72xf32, #tpu.memory_space<vmem>>, vector<1x16x72xf32>
    %143 = vector.shape_cast %142 : vector<1x16x72xf32> to vector<16x72xf32>
    %c2_142 = arith.constant 2 : index
    %c0_143 = arith.constant 0 : index
    %c0_144 = arith.constant 0 : index
    %144 = vector.load %arg2[%c2_142, %c0_143, %c0_144] : memref<3x72x128xf32, #tpu.memory_space<vmem>>, vector<1x72x128xf32>
    %145 = vector.shape_cast %144 : vector<1x72x128xf32> to vector<72x128xf32>
    %cst_145 = arith.constant dense<0.000000e+00> : vector<16x128xf32>
    %146 = tpu.matmul %143, %145, %cst_145 {dimension_numbers = #tpu.dot_dimension_numbers<[1], [0], [0], [1], [0, 0, 1, 1], [], []>} : vector<16x72xf32>, vector<72x128xf32>, vector<16x128xf32> -> vector<16x128xf32>
    %147 = arith.addf %141, %146 : vector<16x128xf32>
    %cst_146 = arith.constant 0.000000e+00 : f32
    %148 = vector.broadcast %cst_146 : f32 to vector<16x128xf32>
    %149 = arith.maximumf %147, %148 : vector<16x128xf32>
    %c5_147 = arith.constant 5 : index
    %c0_148 = arith.constant 0 : index
    %c0_149 = arith.constant 0 : index
    %150 = vector.load %arg4[%c5_147, %c0_148, %c0_149] : memref<16x128x128xf32, #tpu.memory_space<vmem>>, vector<1x128x128xf32>
    %151 = vector.shape_cast %150 : vector<1x128x128xf32> to vector<128x128xf32>
    %cst_150 = arith.constant dense<0.000000e+00> : vector<16x128xf32>
    %152 = tpu.matmul %149, %151, %cst_150 {dimension_numbers = #tpu.dot_dimension_numbers<[1], [0], [0], [1], [0, 0, 1, 1], [], []>} : vector<16x128xf32>, vector<128x128xf32>, vector<16x128xf32> -> vector<16x128xf32>
    %153 = arith.addf %128, %152 : vector<16x128xf32>
    %c6_151 = arith.constant 6 : index
    %c0_152 = arith.constant 0 : index
    %c0_153 = arith.constant 0 : index
    %154 = vector.load %arg1[%c6_151, %c0_152, %c0_153] : memref<18x16x72xf32, #tpu.memory_space<vmem>>, vector<1x16x72xf32>
    %155 = vector.shape_cast %154 : vector<1x16x72xf32> to vector<16x72xf32>
    %c0_154 = arith.constant 0 : index
    %c0_155 = arith.constant 0 : index
    %c0_156 = arith.constant 0 : index
    %156 = vector.load %arg2[%c0_154, %c0_155, %c0_156] : memref<3x72x128xf32, #tpu.memory_space<vmem>>, vector<1x72x128xf32>
    %157 = vector.shape_cast %156 : vector<1x72x128xf32> to vector<72x128xf32>
    %cst_157 = arith.constant dense<0.000000e+00> : vector<16x128xf32>
    %158 = tpu.matmul %155, %157, %cst_157 {dimension_numbers = #tpu.dot_dimension_numbers<[1], [0], [0], [1], [0, 0, 1, 1], [], []>} : vector<16x72xf32>, vector<72x128xf32>, vector<16x128xf32> -> vector<16x128xf32>
    %159 = vector.broadcast %0 : vector<1x128xf32> to vector<16x128xf32>
    %160 = arith.addf %159, %158 : vector<16x128xf32>
    %c7_158 = arith.constant 7 : index
    %c0_159 = arith.constant 0 : index
    %c0_160 = arith.constant 0 : index
    %161 = vector.load %arg1[%c7_158, %c0_159, %c0_160] : memref<18x16x72xf32, #tpu.memory_space<vmem>>, vector<1x16x72xf32>
    %162 = vector.shape_cast %161 : vector<1x16x72xf32> to vector<16x72xf32>
    %c1_161 = arith.constant 1 : index
    %c0_162 = arith.constant 0 : index
    %c0_163 = arith.constant 0 : index
    %163 = vector.load %arg2[%c1_161, %c0_162, %c0_163] : memref<3x72x128xf32, #tpu.memory_space<vmem>>, vector<1x72x128xf32>
    %164 = vector.shape_cast %163 : vector<1x72x128xf32> to vector<72x128xf32>
    %cst_164 = arith.constant dense<0.000000e+00> : vector<16x128xf32>
    %165 = tpu.matmul %162, %164, %cst_164 {dimension_numbers = #tpu.dot_dimension_numbers<[1], [0], [0], [1], [0, 0, 1, 1], [], []>} : vector<16x72xf32>, vector<72x128xf32>, vector<16x128xf32> -> vector<16x128xf32>
    %166 = arith.addf %160, %165 : vector<16x128xf32>
    %c8 = arith.constant 8 : index
    %c0_165 = arith.constant 0 : index
    %c0_166 = arith.constant 0 : index
    %167 = vector.load %arg1[%c8, %c0_165, %c0_166] : memref<18x16x72xf32, #tpu.memory_space<vmem>>, vector<1x16x72xf32>
    %168 = vector.shape_cast %167 : vector<1x16x72xf32> to vector<16x72xf32>
    %c2_167 = arith.constant 2 : index
    %c0_168 = arith.constant 0 : index
    %c0_169 = arith.constant 0 : index
    %169 = vector.load %arg2[%c2_167, %c0_168, %c0_169] : memref<3x72x128xf32, #tpu.memory_space<vmem>>, vector<1x72x128xf32>
    %170 = vector.shape_cast %169 : vector<1x72x128xf32> to vector<72x128xf32>
    %cst_170 = arith.constant dense<0.000000e+00> : vector<16x128xf32>
    %171 = tpu.matmul %168, %170, %cst_170 {dimension_numbers = #tpu.dot_dimension_numbers<[1], [0], [0], [1], [0, 0, 1, 1], [], []>} : vector<16x72xf32>, vector<72x128xf32>, vector<16x128xf32> -> vector<16x128xf32>
    %172 = arith.addf %166, %171 : vector<16x128xf32>
    %cst_171 = arith.constant 0.000000e+00 : f32
    %173 = vector.broadcast %cst_171 : f32 to vector<16x128xf32>
    %174 = arith.maximumf %172, %173 : vector<16x128xf32>
    %c6_172 = arith.constant 6 : index
    %c0_173 = arith.constant 0 : index
    %c0_174 = arith.constant 0 : index
    %175 = vector.load %arg4[%c6_172, %c0_173, %c0_174] : memref<16x128x128xf32, #tpu.memory_space<vmem>>, vector<1x128x128xf32>
    %176 = vector.shape_cast %175 : vector<1x128x128xf32> to vector<128x128xf32>
    %cst_175 = arith.constant dense<0.000000e+00> : vector<16x128xf32>
    %177 = tpu.matmul %174, %176, %cst_175 {dimension_numbers = #tpu.dot_dimension_numbers<[1], [0], [0], [1], [0, 0, 1, 1], [], []>} : vector<16x128xf32>, vector<128x128xf32>, vector<16x128xf32> -> vector<16x128xf32>
    %178 = arith.addf %153, %177 : vector<16x128xf32>
    %c7_176 = arith.constant 7 : index
    %c0_177 = arith.constant 0 : index
    %c0_178 = arith.constant 0 : index
    %179 = vector.load %arg1[%c7_176, %c0_177, %c0_178] : memref<18x16x72xf32, #tpu.memory_space<vmem>>, vector<1x16x72xf32>
    %180 = vector.shape_cast %179 : vector<1x16x72xf32> to vector<16x72xf32>
    %c0_179 = arith.constant 0 : index
    %c0_180 = arith.constant 0 : index
    %c0_181 = arith.constant 0 : index
    %181 = vector.load %arg2[%c0_179, %c0_180, %c0_181] : memref<3x72x128xf32, #tpu.memory_space<vmem>>, vector<1x72x128xf32>
    %182 = vector.shape_cast %181 : vector<1x72x128xf32> to vector<72x128xf32>
    %cst_182 = arith.constant dense<0.000000e+00> : vector<16x128xf32>
    %183 = tpu.matmul %180, %182, %cst_182 {dimension_numbers = #tpu.dot_dimension_numbers<[1], [0], [0], [1], [0, 0, 1, 1], [], []>} : vector<16x72xf32>, vector<72x128xf32>, vector<16x128xf32> -> vector<16x128xf32>
    %184 = vector.broadcast %0 : vector<1x128xf32> to vector<16x128xf32>
    %185 = arith.addf %184, %183 : vector<16x128xf32>
    %c8_183 = arith.constant 8 : index
    %c0_184 = arith.constant 0 : index
    %c0_185 = arith.constant 0 : index
    %186 = vector.load %arg1[%c8_183, %c0_184, %c0_185] : memref<18x16x72xf32, #tpu.memory_space<vmem>>, vector<1x16x72xf32>
    %187 = vector.shape_cast %186 : vector<1x16x72xf32> to vector<16x72xf32>
    %c1_186 = arith.constant 1 : index
    %c0_187 = arith.constant 0 : index
    %c0_188 = arith.constant 0 : index
    %188 = vector.load %arg2[%c1_186, %c0_187, %c0_188] : memref<3x72x128xf32, #tpu.memory_space<vmem>>, vector<1x72x128xf32>
    %189 = vector.shape_cast %188 : vector<1x72x128xf32> to vector<72x128xf32>
    %cst_189 = arith.constant dense<0.000000e+00> : vector<16x128xf32>
    %190 = tpu.matmul %187, %189, %cst_189 {dimension_numbers = #tpu.dot_dimension_numbers<[1], [0], [0], [1], [0, 0, 1, 1], [], []>} : vector<16x72xf32>, vector<72x128xf32>, vector<16x128xf32> -> vector<16x128xf32>
    %191 = arith.addf %185, %190 : vector<16x128xf32>
    %c9 = arith.constant 9 : index
    %c0_190 = arith.constant 0 : index
    %c0_191 = arith.constant 0 : index
    %192 = vector.load %arg1[%c9, %c0_190, %c0_191] : memref<18x16x72xf32, #tpu.memory_space<vmem>>, vector<1x16x72xf32>
    %193 = vector.shape_cast %192 : vector<1x16x72xf32> to vector<16x72xf32>
    %c2_192 = arith.constant 2 : index
    %c0_193 = arith.constant 0 : index
    %c0_194 = arith.constant 0 : index
    %194 = vector.load %arg2[%c2_192, %c0_193, %c0_194] : memref<3x72x128xf32, #tpu.memory_space<vmem>>, vector<1x72x128xf32>
    %195 = vector.shape_cast %194 : vector<1x72x128xf32> to vector<72x128xf32>
    %cst_195 = arith.constant dense<0.000000e+00> : vector<16x128xf32>
    %196 = tpu.matmul %193, %195, %cst_195 {dimension_numbers = #tpu.dot_dimension_numbers<[1], [0], [0], [1], [0, 0, 1, 1], [], []>} : vector<16x72xf32>, vector<72x128xf32>, vector<16x128xf32> -> vector<16x128xf32>
    %197 = arith.addf %191, %196 : vector<16x128xf32>
    %cst_196 = arith.constant 0.000000e+00 : f32
    %198 = vector.broadcast %cst_196 : f32 to vector<16x128xf32>
    %199 = arith.maximumf %197, %198 : vector<16x128xf32>
    %c7_197 = arith.constant 7 : index
    %c0_198 = arith.constant 0 : index
    %c0_199 = arith.constant 0 : index
    %200 = vector.load %arg4[%c7_197, %c0_198, %c0_199] : memref<16x128x128xf32, #tpu.memory_space<vmem>>, vector<1x128x128xf32>
    %201 = vector.shape_cast %200 : vector<1x128x128xf32> to vector<128x128xf32>
    %cst_200 = arith.constant dense<0.000000e+00> : vector<16x128xf32>
    %202 = tpu.matmul %199, %201, %cst_200 {dimension_numbers = #tpu.dot_dimension_numbers<[1], [0], [0], [1], [0, 0, 1, 1], [], []>} : vector<16x128xf32>, vector<128x128xf32>, vector<16x128xf32> -> vector<16x128xf32>
    %203 = arith.addf %178, %202 : vector<16x128xf32>
    %c8_201 = arith.constant 8 : index
    %c0_202 = arith.constant 0 : index
    %c0_203 = arith.constant 0 : index
    %204 = vector.load %arg1[%c8_201, %c0_202, %c0_203] : memref<18x16x72xf32, #tpu.memory_space<vmem>>, vector<1x16x72xf32>
    %205 = vector.shape_cast %204 : vector<1x16x72xf32> to vector<16x72xf32>
    %c0_204 = arith.constant 0 : index
    %c0_205 = arith.constant 0 : index
    %c0_206 = arith.constant 0 : index
    %206 = vector.load %arg2[%c0_204, %c0_205, %c0_206] : memref<3x72x128xf32, #tpu.memory_space<vmem>>, vector<1x72x128xf32>
    %207 = vector.shape_cast %206 : vector<1x72x128xf32> to vector<72x128xf32>
    %cst_207 = arith.constant dense<0.000000e+00> : vector<16x128xf32>
    %208 = tpu.matmul %205, %207, %cst_207 {dimension_numbers = #tpu.dot_dimension_numbers<[1], [0], [0], [1], [0, 0, 1, 1], [], []>} : vector<16x72xf32>, vector<72x128xf32>, vector<16x128xf32> -> vector<16x128xf32>
    %209 = vector.broadcast %0 : vector<1x128xf32> to vector<16x128xf32>
    %210 = arith.addf %209, %208 : vector<16x128xf32>
    %c9_208 = arith.constant 9 : index
    %c0_209 = arith.constant 0 : index
    %c0_210 = arith.constant 0 : index
    %211 = vector.load %arg1[%c9_208, %c0_209, %c0_210] : memref<18x16x72xf32, #tpu.memory_space<vmem>>, vector<1x16x72xf32>
    %212 = vector.shape_cast %211 : vector<1x16x72xf32> to vector<16x72xf32>
    %c1_211 = arith.constant 1 : index
    %c0_212 = arith.constant 0 : index
    %c0_213 = arith.constant 0 : index
    %213 = vector.load %arg2[%c1_211, %c0_212, %c0_213] : memref<3x72x128xf32, #tpu.memory_space<vmem>>, vector<1x72x128xf32>
    %214 = vector.shape_cast %213 : vector<1x72x128xf32> to vector<72x128xf32>
    %cst_214 = arith.constant dense<0.000000e+00> : vector<16x128xf32>
    %215 = tpu.matmul %212, %214, %cst_214 {dimension_numbers = #tpu.dot_dimension_numbers<[1], [0], [0], [1], [0, 0, 1, 1], [], []>} : vector<16x72xf32>, vector<72x128xf32>, vector<16x128xf32> -> vector<16x128xf32>
    %216 = arith.addf %210, %215 : vector<16x128xf32>
    %c10 = arith.constant 10 : index
    %c0_215 = arith.constant 0 : index
    %c0_216 = arith.constant 0 : index
    %217 = vector.load %arg1[%c10, %c0_215, %c0_216] : memref<18x16x72xf32, #tpu.memory_space<vmem>>, vector<1x16x72xf32>
    %218 = vector.shape_cast %217 : vector<1x16x72xf32> to vector<16x72xf32>
    %c2_217 = arith.constant 2 : index
    %c0_218 = arith.constant 0 : index
    %c0_219 = arith.constant 0 : index
    %219 = vector.load %arg2[%c2_217, %c0_218, %c0_219] : memref<3x72x128xf32, #tpu.memory_space<vmem>>, vector<1x72x128xf32>
    %220 = vector.shape_cast %219 : vector<1x72x128xf32> to vector<72x128xf32>
    %cst_220 = arith.constant dense<0.000000e+00> : vector<16x128xf32>
    %221 = tpu.matmul %218, %220, %cst_220 {dimension_numbers = #tpu.dot_dimension_numbers<[1], [0], [0], [1], [0, 0, 1, 1], [], []>} : vector<16x72xf32>, vector<72x128xf32>, vector<16x128xf32> -> vector<16x128xf32>
    %222 = arith.addf %216, %221 : vector<16x128xf32>
    %cst_221 = arith.constant 0.000000e+00 : f32
    %223 = vector.broadcast %cst_221 : f32 to vector<16x128xf32>
    %224 = arith.maximumf %222, %223 : vector<16x128xf32>
    %c8_222 = arith.constant 8 : index
    %c0_223 = arith.constant 0 : index
    %c0_224 = arith.constant 0 : index
    %225 = vector.load %arg4[%c8_222, %c0_223, %c0_224] : memref<16x128x128xf32, #tpu.memory_space<vmem>>, vector<1x128x128xf32>
    %226 = vector.shape_cast %225 : vector<1x128x128xf32> to vector<128x128xf32>
    %cst_225 = arith.constant dense<0.000000e+00> : vector<16x128xf32>
    %227 = tpu.matmul %224, %226, %cst_225 {dimension_numbers = #tpu.dot_dimension_numbers<[1], [0], [0], [1], [0, 0, 1, 1], [], []>} : vector<16x128xf32>, vector<128x128xf32>, vector<16x128xf32> -> vector<16x128xf32>
    %228 = arith.addf %203, %227 : vector<16x128xf32>
    %c9_226 = arith.constant 9 : index
    %c0_227 = arith.constant 0 : index
    %c0_228 = arith.constant 0 : index
    %229 = vector.load %arg1[%c9_226, %c0_227, %c0_228] : memref<18x16x72xf32, #tpu.memory_space<vmem>>, vector<1x16x72xf32>
    %230 = vector.shape_cast %229 : vector<1x16x72xf32> to vector<16x72xf32>
    %c0_229 = arith.constant 0 : index
    %c0_230 = arith.constant 0 : index
    %c0_231 = arith.constant 0 : index
    %231 = vector.load %arg2[%c0_229, %c0_230, %c0_231] : memref<3x72x128xf32, #tpu.memory_space<vmem>>, vector<1x72x128xf32>
    %232 = vector.shape_cast %231 : vector<1x72x128xf32> to vector<72x128xf32>
    %cst_232 = arith.constant dense<0.000000e+00> : vector<16x128xf32>
    %233 = tpu.matmul %230, %232, %cst_232 {dimension_numbers = #tpu.dot_dimension_numbers<[1], [0], [0], [1], [0, 0, 1, 1], [], []>} : vector<16x72xf32>, vector<72x128xf32>, vector<16x128xf32> -> vector<16x128xf32>
    %234 = vector.broadcast %0 : vector<1x128xf32> to vector<16x128xf32>
    %235 = arith.addf %234, %233 : vector<16x128xf32>
    %c10_233 = arith.constant 10 : index
    %c0_234 = arith.constant 0 : index
    %c0_235 = arith.constant 0 : index
    %236 = vector.load %arg1[%c10_233, %c0_234, %c0_235] : memref<18x16x72xf32, #tpu.memory_space<vmem>>, vector<1x16x72xf32>
    %237 = vector.shape_cast %236 : vector<1x16x72xf32> to vector<16x72xf32>
    %c1_236 = arith.constant 1 : index
    %c0_237 = arith.constant 0 : index
    %c0_238 = arith.constant 0 : index
    %238 = vector.load %arg2[%c1_236, %c0_237, %c0_238] : memref<3x72x128xf32, #tpu.memory_space<vmem>>, vector<1x72x128xf32>
    %239 = vector.shape_cast %238 : vector<1x72x128xf32> to vector<72x128xf32>
    %cst_239 = arith.constant dense<0.000000e+00> : vector<16x128xf32>
    %240 = tpu.matmul %237, %239, %cst_239 {dimension_numbers = #tpu.dot_dimension_numbers<[1], [0], [0], [1], [0, 0, 1, 1], [], []>} : vector<16x72xf32>, vector<72x128xf32>, vector<16x128xf32> -> vector<16x128xf32>
    %241 = arith.addf %235, %240 : vector<16x128xf32>
    %c11 = arith.constant 11 : index
    %c0_240 = arith.constant 0 : index
    %c0_241 = arith.constant 0 : index
    %242 = vector.load %arg1[%c11, %c0_240, %c0_241] : memref<18x16x72xf32, #tpu.memory_space<vmem>>, vector<1x16x72xf32>
    %243 = vector.shape_cast %242 : vector<1x16x72xf32> to vector<16x72xf32>
    %c2_242 = arith.constant 2 : index
    %c0_243 = arith.constant 0 : index
    %c0_244 = arith.constant 0 : index
    %244 = vector.load %arg2[%c2_242, %c0_243, %c0_244] : memref<3x72x128xf32, #tpu.memory_space<vmem>>, vector<1x72x128xf32>
    %245 = vector.shape_cast %244 : vector<1x72x128xf32> to vector<72x128xf32>
    %cst_245 = arith.constant dense<0.000000e+00> : vector<16x128xf32>
    %246 = tpu.matmul %243, %245, %cst_245 {dimension_numbers = #tpu.dot_dimension_numbers<[1], [0], [0], [1], [0, 0, 1, 1], [], []>} : vector<16x72xf32>, vector<72x128xf32>, vector<16x128xf32> -> vector<16x128xf32>
    %247 = arith.addf %241, %246 : vector<16x128xf32>
    %cst_246 = arith.constant 0.000000e+00 : f32
    %248 = vector.broadcast %cst_246 : f32 to vector<16x128xf32>
    %249 = arith.maximumf %247, %248 : vector<16x128xf32>
    %c9_247 = arith.constant 9 : index
    %c0_248 = arith.constant 0 : index
    %c0_249 = arith.constant 0 : index
    %250 = vector.load %arg4[%c9_247, %c0_248, %c0_249] : memref<16x128x128xf32, #tpu.memory_space<vmem>>, vector<1x128x128xf32>
    %251 = vector.shape_cast %250 : vector<1x128x128xf32> to vector<128x128xf32>
    %cst_250 = arith.constant dense<0.000000e+00> : vector<16x128xf32>
    %252 = tpu.matmul %249, %251, %cst_250 {dimension_numbers = #tpu.dot_dimension_numbers<[1], [0], [0], [1], [0, 0, 1, 1], [], []>} : vector<16x128xf32>, vector<128x128xf32>, vector<16x128xf32> -> vector<16x128xf32>
    %253 = arith.addf %228, %252 : vector<16x128xf32>
    %c10_251 = arith.constant 10 : index
    %c0_252 = arith.constant 0 : index
    %c0_253 = arith.constant 0 : index
    %254 = vector.load %arg1[%c10_251, %c0_252, %c0_253] : memref<18x16x72xf32, #tpu.memory_space<vmem>>, vector<1x16x72xf32>
    %255 = vector.shape_cast %254 : vector<1x16x72xf32> to vector<16x72xf32>
    %c0_254 = arith.constant 0 : index
    %c0_255 = arith.constant 0 : index
    %c0_256 = arith.constant 0 : index
    %256 = vector.load %arg2[%c0_254, %c0_255, %c0_256] : memref<3x72x128xf32, #tpu.memory_space<vmem>>, vector<1x72x128xf32>
    %257 = vector.shape_cast %256 : vector<1x72x128xf32> to vector<72x128xf32>
    %cst_257 = arith.constant dense<0.000000e+00> : vector<16x128xf32>
    %258 = tpu.matmul %255, %257, %cst_257 {dimension_numbers = #tpu.dot_dimension_numbers<[1], [0], [0], [1], [0, 0, 1, 1], [], []>} : vector<16x72xf32>, vector<72x128xf32>, vector<16x128xf32> -> vector<16x128xf32>
    %259 = vector.broadcast %0 : vector<1x128xf32> to vector<16x128xf32>
    %260 = arith.addf %259, %258 : vector<16x128xf32>
    %c11_258 = arith.constant 11 : index
    %c0_259 = arith.constant 0 : index
    %c0_260 = arith.constant 0 : index
    %261 = vector.load %arg1[%c11_258, %c0_259, %c0_260] : memref<18x16x72xf32, #tpu.memory_space<vmem>>, vector<1x16x72xf32>
    %262 = vector.shape_cast %261 : vector<1x16x72xf32> to vector<16x72xf32>
    %c1_261 = arith.constant 1 : index
    %c0_262 = arith.constant 0 : index
    %c0_263 = arith.constant 0 : index
    %263 = vector.load %arg2[%c1_261, %c0_262, %c0_263] : memref<3x72x128xf32, #tpu.memory_space<vmem>>, vector<1x72x128xf32>
    %264 = vector.shape_cast %263 : vector<1x72x128xf32> to vector<72x128xf32>
    %cst_264 = arith.constant dense<0.000000e+00> : vector<16x128xf32>
    %265 = tpu.matmul %262, %264, %cst_264 {dimension_numbers = #tpu.dot_dimension_numbers<[1], [0], [0], [1], [0, 0, 1, 1], [], []>} : vector<16x72xf32>, vector<72x128xf32>, vector<16x128xf32> -> vector<16x128xf32>
    %266 = arith.addf %260, %265 : vector<16x128xf32>
    %c12 = arith.constant 12 : index
    %c0_265 = arith.constant 0 : index
    %c0_266 = arith.constant 0 : index
    %267 = vector.load %arg1[%c12, %c0_265, %c0_266] : memref<18x16x72xf32, #tpu.memory_space<vmem>>, vector<1x16x72xf32>
    %268 = vector.shape_cast %267 : vector<1x16x72xf32> to vector<16x72xf32>
    %c2_267 = arith.constant 2 : index
    %c0_268 = arith.constant 0 : index
    %c0_269 = arith.constant 0 : index
    %269 = vector.load %arg2[%c2_267, %c0_268, %c0_269] : memref<3x72x128xf32, #tpu.memory_space<vmem>>, vector<1x72x128xf32>
    %270 = vector.shape_cast %269 : vector<1x72x128xf32> to vector<72x128xf32>
    %cst_270 = arith.constant dense<0.000000e+00> : vector<16x128xf32>
    %271 = tpu.matmul %268, %270, %cst_270 {dimension_numbers = #tpu.dot_dimension_numbers<[1], [0], [0], [1], [0, 0, 1, 1], [], []>} : vector<16x72xf32>, vector<72x128xf32>, vector<16x128xf32> -> vector<16x128xf32>
    %272 = arith.addf %266, %271 : vector<16x128xf32>
    %cst_271 = arith.constant 0.000000e+00 : f32
    %273 = vector.broadcast %cst_271 : f32 to vector<16x128xf32>
    %274 = arith.maximumf %272, %273 : vector<16x128xf32>
    %c10_272 = arith.constant 10 : index
    %c0_273 = arith.constant 0 : index
    %c0_274 = arith.constant 0 : index
    %275 = vector.load %arg4[%c10_272, %c0_273, %c0_274] : memref<16x128x128xf32, #tpu.memory_space<vmem>>, vector<1x128x128xf32>
    %276 = vector.shape_cast %275 : vector<1x128x128xf32> to vector<128x128xf32>
    %cst_275 = arith.constant dense<0.000000e+00> : vector<16x128xf32>
    %277 = tpu.matmul %274, %276, %cst_275 {dimension_numbers = #tpu.dot_dimension_numbers<[1], [0], [0], [1], [0, 0, 1, 1], [], []>} : vector<16x128xf32>, vector<128x128xf32>, vector<16x128xf32> -> vector<16x128xf32>
    %278 = arith.addf %253, %277 : vector<16x128xf32>
    %c11_276 = arith.constant 11 : index
    %c0_277 = arith.constant 0 : index
    %c0_278 = arith.constant 0 : index
    %279 = vector.load %arg1[%c11_276, %c0_277, %c0_278] : memref<18x16x72xf32, #tpu.memory_space<vmem>>, vector<1x16x72xf32>
    %280 = vector.shape_cast %279 : vector<1x16x72xf32> to vector<16x72xf32>
    %c0_279 = arith.constant 0 : index
    %c0_280 = arith.constant 0 : index
    %c0_281 = arith.constant 0 : index
    %281 = vector.load %arg2[%c0_279, %c0_280, %c0_281] : memref<3x72x128xf32, #tpu.memory_space<vmem>>, vector<1x72x128xf32>
    %282 = vector.shape_cast %281 : vector<1x72x128xf32> to vector<72x128xf32>
    %cst_282 = arith.constant dense<0.000000e+00> : vector<16x128xf32>
    %283 = tpu.matmul %280, %282, %cst_282 {dimension_numbers = #tpu.dot_dimension_numbers<[1], [0], [0], [1], [0, 0, 1, 1], [], []>} : vector<16x72xf32>, vector<72x128xf32>, vector<16x128xf32> -> vector<16x128xf32>
    %284 = vector.broadcast %0 : vector<1x128xf32> to vector<16x128xf32>
    %285 = arith.addf %284, %283 : vector<16x128xf32>
    %c12_283 = arith.constant 12 : index
    %c0_284 = arith.constant 0 : index
    %c0_285 = arith.constant 0 : index
    %286 = vector.load %arg1[%c12_283, %c0_284, %c0_285] : memref<18x16x72xf32, #tpu.memory_space<vmem>>, vector<1x16x72xf32>
    %287 = vector.shape_cast %286 : vector<1x16x72xf32> to vector<16x72xf32>
    %c1_286 = arith.constant 1 : index
    %c0_287 = arith.constant 0 : index
    %c0_288 = arith.constant 0 : index
    %288 = vector.load %arg2[%c1_286, %c0_287, %c0_288] : memref<3x72x128xf32, #tpu.memory_space<vmem>>, vector<1x72x128xf32>
    %289 = vector.shape_cast %288 : vector<1x72x128xf32> to vector<72x128xf32>
    %cst_289 = arith.constant dense<0.000000e+00> : vector<16x128xf32>
    %290 = tpu.matmul %287, %289, %cst_289 {dimension_numbers = #tpu.dot_dimension_numbers<[1], [0], [0], [1], [0, 0, 1, 1], [], []>} : vector<16x72xf32>, vector<72x128xf32>, vector<16x128xf32> -> vector<16x128xf32>
    %291 = arith.addf %285, %290 : vector<16x128xf32>
    %c13 = arith.constant 13 : index
    %c0_290 = arith.constant 0 : index
    %c0_291 = arith.constant 0 : index
    %292 = vector.load %arg1[%c13, %c0_290, %c0_291] : memref<18x16x72xf32, #tpu.memory_space<vmem>>, vector<1x16x72xf32>
    %293 = vector.shape_cast %292 : vector<1x16x72xf32> to vector<16x72xf32>
    %c2_292 = arith.constant 2 : index
    %c0_293 = arith.constant 0 : index
    %c0_294 = arith.constant 0 : index
    %294 = vector.load %arg2[%c2_292, %c0_293, %c0_294] : memref<3x72x128xf32, #tpu.memory_space<vmem>>, vector<1x72x128xf32>
    %295 = vector.shape_cast %294 : vector<1x72x128xf32> to vector<72x128xf32>
    %cst_295 = arith.constant dense<0.000000e+00> : vector<16x128xf32>
    %296 = tpu.matmul %293, %295, %cst_295 {dimension_numbers = #tpu.dot_dimension_numbers<[1], [0], [0], [1], [0, 0, 1, 1], [], []>} : vector<16x72xf32>, vector<72x128xf32>, vector<16x128xf32> -> vector<16x128xf32>
    %297 = arith.addf %291, %296 : vector<16x128xf32>
    %cst_296 = arith.constant 0.000000e+00 : f32
    %298 = vector.broadcast %cst_296 : f32 to vector<16x128xf32>
    %299 = arith.maximumf %297, %298 : vector<16x128xf32>
    %c11_297 = arith.constant 11 : index
    %c0_298 = arith.constant 0 : index
    %c0_299 = arith.constant 0 : index
    %300 = vector.load %arg4[%c11_297, %c0_298, %c0_299] : memref<16x128x128xf32, #tpu.memory_space<vmem>>, vector<1x128x128xf32>
    %301 = vector.shape_cast %300 : vector<1x128x128xf32> to vector<128x128xf32>
    %cst_300 = arith.constant dense<0.000000e+00> : vector<16x128xf32>
    %302 = tpu.matmul %299, %301, %cst_300 {dimension_numbers = #tpu.dot_dimension_numbers<[1], [0], [0], [1], [0, 0, 1, 1], [], []>} : vector<16x128xf32>, vector<128x128xf32>, vector<16x128xf32> -> vector<16x128xf32>
    %303 = arith.addf %278, %302 : vector<16x128xf32>
    %c12_301 = arith.constant 12 : index
    %c0_302 = arith.constant 0 : index
    %c0_303 = arith.constant 0 : index
    %304 = vector.load %arg1[%c12_301, %c0_302, %c0_303] : memref<18x16x72xf32, #tpu.memory_space<vmem>>, vector<1x16x72xf32>
    %305 = vector.shape_cast %304 : vector<1x16x72xf32> to vector<16x72xf32>
    %c0_304 = arith.constant 0 : index
    %c0_305 = arith.constant 0 : index
    %c0_306 = arith.constant 0 : index
    %306 = vector.load %arg2[%c0_304, %c0_305, %c0_306] : memref<3x72x128xf32, #tpu.memory_space<vmem>>, vector<1x72x128xf32>
    %307 = vector.shape_cast %306 : vector<1x72x128xf32> to vector<72x128xf32>
    %cst_307 = arith.constant dense<0.000000e+00> : vector<16x128xf32>
    %308 = tpu.matmul %305, %307, %cst_307 {dimension_numbers = #tpu.dot_dimension_numbers<[1], [0], [0], [1], [0, 0, 1, 1], [], []>} : vector<16x72xf32>, vector<72x128xf32>, vector<16x128xf32> -> vector<16x128xf32>
    %309 = vector.broadcast %0 : vector<1x128xf32> to vector<16x128xf32>
    %310 = arith.addf %309, %308 : vector<16x128xf32>
    %c13_308 = arith.constant 13 : index
    %c0_309 = arith.constant 0 : index
    %c0_310 = arith.constant 0 : index
    %311 = vector.load %arg1[%c13_308, %c0_309, %c0_310] : memref<18x16x72xf32, #tpu.memory_space<vmem>>, vector<1x16x72xf32>
    %312 = vector.shape_cast %311 : vector<1x16x72xf32> to vector<16x72xf32>
    %c1_311 = arith.constant 1 : index
    %c0_312 = arith.constant 0 : index
    %c0_313 = arith.constant 0 : index
    %313 = vector.load %arg2[%c1_311, %c0_312, %c0_313] : memref<3x72x128xf32, #tpu.memory_space<vmem>>, vector<1x72x128xf32>
    %314 = vector.shape_cast %313 : vector<1x72x128xf32> to vector<72x128xf32>
    %cst_314 = arith.constant dense<0.000000e+00> : vector<16x128xf32>
    %315 = tpu.matmul %312, %314, %cst_314 {dimension_numbers = #tpu.dot_dimension_numbers<[1], [0], [0], [1], [0, 0, 1, 1], [], []>} : vector<16x72xf32>, vector<72x128xf32>, vector<16x128xf32> -> vector<16x128xf32>
    %316 = arith.addf %310, %315 : vector<16x128xf32>
    %c14 = arith.constant 14 : index
    %c0_315 = arith.constant 0 : index
    %c0_316 = arith.constant 0 : index
    %317 = vector.load %arg1[%c14, %c0_315, %c0_316] : memref<18x16x72xf32, #tpu.memory_space<vmem>>, vector<1x16x72xf32>
    %318 = vector.shape_cast %317 : vector<1x16x72xf32> to vector<16x72xf32>
    %c2_317 = arith.constant 2 : index
    %c0_318 = arith.constant 0 : index
    %c0_319 = arith.constant 0 : index
    %319 = vector.load %arg2[%c2_317, %c0_318, %c0_319] : memref<3x72x128xf32, #tpu.memory_space<vmem>>, vector<1x72x128xf32>
    %320 = vector.shape_cast %319 : vector<1x72x128xf32> to vector<72x128xf32>
    %cst_320 = arith.constant dense<0.000000e+00> : vector<16x128xf32>
    %321 = tpu.matmul %318, %320, %cst_320 {dimension_numbers = #tpu.dot_dimension_numbers<[1], [0], [0], [1], [0, 0, 1, 1], [], []>} : vector<16x72xf32>, vector<72x128xf32>, vector<16x128xf32> -> vector<16x128xf32>
    %322 = arith.addf %316, %321 : vector<16x128xf32>
    %cst_321 = arith.constant 0.000000e+00 : f32
    %323 = vector.broadcast %cst_321 : f32 to vector<16x128xf32>
    %324 = arith.maximumf %322, %323 : vector<16x128xf32>
    %c12_322 = arith.constant 12 : index
    %c0_323 = arith.constant 0 : index
    %c0_324 = arith.constant 0 : index
    %325 = vector.load %arg4[%c12_322, %c0_323, %c0_324] : memref<16x128x128xf32, #tpu.memory_space<vmem>>, vector<1x128x128xf32>
    %326 = vector.shape_cast %325 : vector<1x128x128xf32> to vector<128x128xf32>
    %cst_325 = arith.constant dense<0.000000e+00> : vector<16x128xf32>
    %327 = tpu.matmul %324, %326, %cst_325 {dimension_numbers = #tpu.dot_dimension_numbers<[1], [0], [0], [1], [0, 0, 1, 1], [], []>} : vector<16x128xf32>, vector<128x128xf32>, vector<16x128xf32> -> vector<16x128xf32>
    %328 = arith.addf %303, %327 : vector<16x128xf32>
    %c13_326 = arith.constant 13 : index
    %c0_327 = arith.constant 0 : index
    %c0_328 = arith.constant 0 : index
    %329 = vector.load %arg1[%c13_326, %c0_327, %c0_328] : memref<18x16x72xf32, #tpu.memory_space<vmem>>, vector<1x16x72xf32>
    %330 = vector.shape_cast %329 : vector<1x16x72xf32> to vector<16x72xf32>
    %c0_329 = arith.constant 0 : index
    %c0_330 = arith.constant 0 : index
    %c0_331 = arith.constant 0 : index
    %331 = vector.load %arg2[%c0_329, %c0_330, %c0_331] : memref<3x72x128xf32, #tpu.memory_space<vmem>>, vector<1x72x128xf32>
    %332 = vector.shape_cast %331 : vector<1x72x128xf32> to vector<72x128xf32>
    %cst_332 = arith.constant dense<0.000000e+00> : vector<16x128xf32>
    %333 = tpu.matmul %330, %332, %cst_332 {dimension_numbers = #tpu.dot_dimension_numbers<[1], [0], [0], [1], [0, 0, 1, 1], [], []>} : vector<16x72xf32>, vector<72x128xf32>, vector<16x128xf32> -> vector<16x128xf32>
    %334 = vector.broadcast %0 : vector<1x128xf32> to vector<16x128xf32>
    %335 = arith.addf %334, %333 : vector<16x128xf32>
    %c14_333 = arith.constant 14 : index
    %c0_334 = arith.constant 0 : index
    %c0_335 = arith.constant 0 : index
    %336 = vector.load %arg1[%c14_333, %c0_334, %c0_335] : memref<18x16x72xf32, #tpu.memory_space<vmem>>, vector<1x16x72xf32>
    %337 = vector.shape_cast %336 : vector<1x16x72xf32> to vector<16x72xf32>
    %c1_336 = arith.constant 1 : index
    %c0_337 = arith.constant 0 : index
    %c0_338 = arith.constant 0 : index
    %338 = vector.load %arg2[%c1_336, %c0_337, %c0_338] : memref<3x72x128xf32, #tpu.memory_space<vmem>>, vector<1x72x128xf32>
    %339 = vector.shape_cast %338 : vector<1x72x128xf32> to vector<72x128xf32>
    %cst_339 = arith.constant dense<0.000000e+00> : vector<16x128xf32>
    %340 = tpu.matmul %337, %339, %cst_339 {dimension_numbers = #tpu.dot_dimension_numbers<[1], [0], [0], [1], [0, 0, 1, 1], [], []>} : vector<16x72xf32>, vector<72x128xf32>, vector<16x128xf32> -> vector<16x128xf32>
    %341 = arith.addf %335, %340 : vector<16x128xf32>
    %c15 = arith.constant 15 : index
    %c0_340 = arith.constant 0 : index
    %c0_341 = arith.constant 0 : index
    %342 = vector.load %arg1[%c15, %c0_340, %c0_341] : memref<18x16x72xf32, #tpu.memory_space<vmem>>, vector<1x16x72xf32>
    %343 = vector.shape_cast %342 : vector<1x16x72xf32> to vector<16x72xf32>
    %c2_342 = arith.constant 2 : index
    %c0_343 = arith.constant 0 : index
    %c0_344 = arith.constant 0 : index
    %344 = vector.load %arg2[%c2_342, %c0_343, %c0_344] : memref<3x72x128xf32, #tpu.memory_space<vmem>>, vector<1x72x128xf32>
    %345 = vector.shape_cast %344 : vector<1x72x128xf32> to vector<72x128xf32>
    %cst_345 = arith.constant dense<0.000000e+00> : vector<16x128xf32>
    %346 = tpu.matmul %343, %345, %cst_345 {dimension_numbers = #tpu.dot_dimension_numbers<[1], [0], [0], [1], [0, 0, 1, 1], [], []>} : vector<16x72xf32>, vector<72x128xf32>, vector<16x128xf32> -> vector<16x128xf32>
    %347 = arith.addf %341, %346 : vector<16x128xf32>
    %cst_346 = arith.constant 0.000000e+00 : f32
    %348 = vector.broadcast %cst_346 : f32 to vector<16x128xf32>
    %349 = arith.maximumf %347, %348 : vector<16x128xf32>
    %c13_347 = arith.constant 13 : index
    %c0_348 = arith.constant 0 : index
    %c0_349 = arith.constant 0 : index
    %350 = vector.load %arg4[%c13_347, %c0_348, %c0_349] : memref<16x128x128xf32, #tpu.memory_space<vmem>>, vector<1x128x128xf32>
    %351 = vector.shape_cast %350 : vector<1x128x128xf32> to vector<128x128xf32>
    %cst_350 = arith.constant dense<0.000000e+00> : vector<16x128xf32>
    %352 = tpu.matmul %349, %351, %cst_350 {dimension_numbers = #tpu.dot_dimension_numbers<[1], [0], [0], [1], [0, 0, 1, 1], [], []>} : vector<16x128xf32>, vector<128x128xf32>, vector<16x128xf32> -> vector<16x128xf32>
    %353 = arith.addf %328, %352 : vector<16x128xf32>
    %c14_351 = arith.constant 14 : index
    %c0_352 = arith.constant 0 : index
    %c0_353 = arith.constant 0 : index
    %354 = vector.load %arg1[%c14_351, %c0_352, %c0_353] : memref<18x16x72xf32, #tpu.memory_space<vmem>>, vector<1x16x72xf32>
    %355 = vector.shape_cast %354 : vector<1x16x72xf32> to vector<16x72xf32>
    %c0_354 = arith.constant 0 : index
    %c0_355 = arith.constant 0 : index
    %c0_356 = arith.constant 0 : index
    %356 = vector.load %arg2[%c0_354, %c0_355, %c0_356] : memref<3x72x128xf32, #tpu.memory_space<vmem>>, vector<1x72x128xf32>
    %357 = vector.shape_cast %356 : vector<1x72x128xf32> to vector<72x128xf32>
    %cst_357 = arith.constant dense<0.000000e+00> : vector<16x128xf32>
    %358 = tpu.matmul %355, %357, %cst_357 {dimension_numbers = #tpu.dot_dimension_numbers<[1], [0], [0], [1], [0, 0, 1, 1], [], []>} : vector<16x72xf32>, vector<72x128xf32>, vector<16x128xf32> -> vector<16x128xf32>
    %359 = vector.broadcast %0 : vector<1x128xf32> to vector<16x128xf32>
    %360 = arith.addf %359, %358 : vector<16x128xf32>
    %c15_358 = arith.constant 15 : index
    %c0_359 = arith.constant 0 : index
    %c0_360 = arith.constant 0 : index
    %361 = vector.load %arg1[%c15_358, %c0_359, %c0_360] : memref<18x16x72xf32, #tpu.memory_space<vmem>>, vector<1x16x72xf32>
    %362 = vector.shape_cast %361 : vector<1x16x72xf32> to vector<16x72xf32>
    %c1_361 = arith.constant 1 : index
    %c0_362 = arith.constant 0 : index
    %c0_363 = arith.constant 0 : index
    %363 = vector.load %arg2[%c1_361, %c0_362, %c0_363] : memref<3x72x128xf32, #tpu.memory_space<vmem>>, vector<1x72x128xf32>
    %364 = vector.shape_cast %363 : vector<1x72x128xf32> to vector<72x128xf32>
    %cst_364 = arith.constant dense<0.000000e+00> : vector<16x128xf32>
    %365 = tpu.matmul %362, %364, %cst_364 {dimension_numbers = #tpu.dot_dimension_numbers<[1], [0], [0], [1], [0, 0, 1, 1], [], []>} : vector<16x72xf32>, vector<72x128xf32>, vector<16x128xf32> -> vector<16x128xf32>
    %366 = arith.addf %360, %365 : vector<16x128xf32>
    %c16 = arith.constant 16 : index
    %c0_365 = arith.constant 0 : index
    %c0_366 = arith.constant 0 : index
    %367 = vector.load %arg1[%c16, %c0_365, %c0_366] : memref<18x16x72xf32, #tpu.memory_space<vmem>>, vector<1x16x72xf32>
    %368 = vector.shape_cast %367 : vector<1x16x72xf32> to vector<16x72xf32>
    %c2_367 = arith.constant 2 : index
    %c0_368 = arith.constant 0 : index
    %c0_369 = arith.constant 0 : index
    %369 = vector.load %arg2[%c2_367, %c0_368, %c0_369] : memref<3x72x128xf32, #tpu.memory_space<vmem>>, vector<1x72x128xf32>
    %370 = vector.shape_cast %369 : vector<1x72x128xf32> to vector<72x128xf32>
    %cst_370 = arith.constant dense<0.000000e+00> : vector<16x128xf32>
    %371 = tpu.matmul %368, %370, %cst_370 {dimension_numbers = #tpu.dot_dimension_numbers<[1], [0], [0], [1], [0, 0, 1, 1], [], []>} : vector<16x72xf32>, vector<72x128xf32>, vector<16x128xf32> -> vector<16x128xf32>
    %372 = arith.addf %366, %371 : vector<16x128xf32>
    %cst_371 = arith.constant 0.000000e+00 : f32
    %373 = vector.broadcast %cst_371 : f32 to vector<16x128xf32>
    %374 = arith.maximumf %372, %373 : vector<16x128xf32>
    %c14_372 = arith.constant 14 : index
    %c0_373 = arith.constant 0 : index
    %c0_374 = arith.constant 0 : index
    %375 = vector.load %arg4[%c14_372, %c0_373, %c0_374] : memref<16x128x128xf32, #tpu.memory_space<vmem>>, vector<1x128x128xf32>
    %376 = vector.shape_cast %375 : vector<1x128x128xf32> to vector<128x128xf32>
    %cst_375 = arith.constant dense<0.000000e+00> : vector<16x128xf32>
    %377 = tpu.matmul %374, %376, %cst_375 {dimension_numbers = #tpu.dot_dimension_numbers<[1], [0], [0], [1], [0, 0, 1, 1], [], []>} : vector<16x128xf32>, vector<128x128xf32>, vector<16x128xf32> -> vector<16x128xf32>
    %378 = arith.addf %353, %377 : vector<16x128xf32>
    %c15_376 = arith.constant 15 : index
    %c0_377 = arith.constant 0 : index
    %c0_378 = arith.constant 0 : index
    %379 = vector.load %arg1[%c15_376, %c0_377, %c0_378] : memref<18x16x72xf32, #tpu.memory_space<vmem>>, vector<1x16x72xf32>
    %380 = vector.shape_cast %379 : vector<1x16x72xf32> to vector<16x72xf32>
    %c0_379 = arith.constant 0 : index
    %c0_380 = arith.constant 0 : index
    %c0_381 = arith.constant 0 : index
    %381 = vector.load %arg2[%c0_379, %c0_380, %c0_381] : memref<3x72x128xf32, #tpu.memory_space<vmem>>, vector<1x72x128xf32>
    %382 = vector.shape_cast %381 : vector<1x72x128xf32> to vector<72x128xf32>
    %cst_382 = arith.constant dense<0.000000e+00> : vector<16x128xf32>
    %383 = tpu.matmul %380, %382, %cst_382 {dimension_numbers = #tpu.dot_dimension_numbers<[1], [0], [0], [1], [0, 0, 1, 1], [], []>} : vector<16x72xf32>, vector<72x128xf32>, vector<16x128xf32> -> vector<16x128xf32>
    %384 = vector.broadcast %0 : vector<1x128xf32> to vector<16x128xf32>
    %385 = arith.addf %384, %383 : vector<16x128xf32>
    %c16_383 = arith.constant 16 : index
    %c0_384 = arith.constant 0 : index
    %c0_385 = arith.constant 0 : index
    %386 = vector.load %arg1[%c16_383, %c0_384, %c0_385] : memref<18x16x72xf32, #tpu.memory_space<vmem>>, vector<1x16x72xf32>
    %387 = vector.shape_cast %386 : vector<1x16x72xf32> to vector<16x72xf32>
    %c1_386 = arith.constant 1 : index
    %c0_387 = arith.constant 0 : index
    %c0_388 = arith.constant 0 : index
    %388 = vector.load %arg2[%c1_386, %c0_387, %c0_388] : memref<3x72x128xf32, #tpu.memory_space<vmem>>, vector<1x72x128xf32>
    %389 = vector.shape_cast %388 : vector<1x72x128xf32> to vector<72x128xf32>
    %cst_389 = arith.constant dense<0.000000e+00> : vector<16x128xf32>
    %390 = tpu.matmul %387, %389, %cst_389 {dimension_numbers = #tpu.dot_dimension_numbers<[1], [0], [0], [1], [0, 0, 1, 1], [], []>} : vector<16x72xf32>, vector<72x128xf32>, vector<16x128xf32> -> vector<16x128xf32>
    %391 = arith.addf %385, %390 : vector<16x128xf32>
    %c17 = arith.constant 17 : index
    %c0_390 = arith.constant 0 : index
    %c0_391 = arith.constant 0 : index
    %392 = vector.load %arg1[%c17, %c0_390, %c0_391] : memref<18x16x72xf32, #tpu.memory_space<vmem>>, vector<1x16x72xf32>
    %393 = vector.shape_cast %392 : vector<1x16x72xf32> to vector<16x72xf32>
    %c2_392 = arith.constant 2 : index
    %c0_393 = arith.constant 0 : index
    %c0_394 = arith.constant 0 : index
    %394 = vector.load %arg2[%c2_392, %c0_393, %c0_394] : memref<3x72x128xf32, #tpu.memory_space<vmem>>, vector<1x72x128xf32>
    %395 = vector.shape_cast %394 : vector<1x72x128xf32> to vector<72x128xf32>
    %cst_395 = arith.constant dense<0.000000e+00> : vector<16x128xf32>
    %396 = tpu.matmul %393, %395, %cst_395 {dimension_numbers = #tpu.dot_dimension_numbers<[1], [0], [0], [1], [0, 0, 1, 1], [], []>} : vector<16x72xf32>, vector<72x128xf32>, vector<16x128xf32> -> vector<16x128xf32>
    %397 = arith.addf %391, %396 : vector<16x128xf32>
    %cst_396 = arith.constant 0.000000e+00 : f32
    %398 = vector.broadcast %cst_396 : f32 to vector<16x128xf32>
    %399 = arith.maximumf %397, %398 : vector<16x128xf32>
    %c15_397 = arith.constant 15 : index
    %c0_398 = arith.constant 0 : index
    %c0_399 = arith.constant 0 : index
    %400 = vector.load %arg4[%c15_397, %c0_398, %c0_399] : memref<16x128x128xf32, #tpu.memory_space<vmem>>, vector<1x128x128xf32>
    %401 = vector.shape_cast %400 : vector<1x128x128xf32> to vector<128x128xf32>
    %cst_400 = arith.constant dense<0.000000e+00> : vector<16x128xf32>
    %402 = tpu.matmul %399, %401, %cst_400 {dimension_numbers = #tpu.dot_dimension_numbers<[1], [0], [0], [1], [0, 0, 1, 1], [], []>} : vector<16x128xf32>, vector<128x128xf32>, vector<16x128xf32> -> vector<16x128xf32>
    %403 = arith.addf %378, %402 : vector<16x128xf32>
    %c0_401 = arith.constant 0 : index
    %c0_402 = arith.constant 0 : index
    %404 = vector.load %arg6[%c0_401, %c0_402] : memref<32x128xf32, #tpu.memory_space<vmem>>, vector<32x128xf32>
    %c0_403 = arith.constant 0 : index
    %c0_404 = arith.constant 0 : index
    %405 = vector.load %arg7[%c0_403, %c0_404] : memref<32x128xf32, #tpu.memory_space<vmem>>, vector<32x128xf32>
    %c0_405 = arith.constant 0 : index
    %c0_406 = arith.constant 0 : index
    %406 = vector.load %arg8[%c0_405, %c0_406] : memref<1x128xf32, #tpu.memory_space<vmem>>, vector<1x128xf32>
    %cst_407 = arith.constant 0.000000e+00 : f32
    %407 = vector.broadcast %cst_407 : f32 to vector<2x32xf32>
    %cst_408 = arith.constant 0.000000e+00 : f32
    %408 = vector.broadcast %cst_408 : f32 to vector<2x32xf32>
    %409 = vector.extract_strided_slice %403 {offsets = [0, 0], sizes = [2, 128], strides = [1, 1]} : vector<16x128xf32> to vector<2x128xf32>
    %cst_409 = arith.constant dense<0.000000e+00> : vector<2x128xf32>
    %410 = tpu.matmul %407, %404, %cst_409 {dimension_numbers = #tpu.dot_dimension_numbers<[1], [0], [0], [1], [0, 0, 1, 1], [], []>} : vector<2x32xf32>, vector<32x128xf32>, vector<2x128xf32> -> vector<2x128xf32>
    %411 = arith.addf %409, %410 : vector<2x128xf32>
    %412 = vector.extract_strided_slice %411 {offsets = [0, 0], sizes = [2, 32], strides = [1, 1]} : vector<2x128xf32> to vector<2x32xf32>
    %413 = arith.negf %412 : vector<2x32xf32>
    %414 = math.exp %413 : vector<2x32xf32>
    %cst_410 = arith.constant 1.000000e+00 : f32
    %415 = vector.broadcast %cst_410 : f32 to vector<2x32xf32>
    %416 = arith.addf %415, %414 : vector<2x32xf32>
    %417 = arith.divf %415, %416 : vector<2x32xf32>
    %418 = vector.extract_strided_slice %411 {offsets = [0, 32], sizes = [2, 32], strides = [1, 1]} : vector<2x128xf32> to vector<2x32xf32>
    %419 = arith.negf %418 : vector<2x32xf32>
    %420 = math.exp %419 : vector<2x32xf32>
    %cst_411 = arith.constant 1.000000e+00 : f32
    %421 = vector.broadcast %cst_411 : f32 to vector<2x32xf32>
    %422 = arith.addf %421, %420 : vector<2x32xf32>
    %423 = arith.divf %421, %422 : vector<2x32xf32>
    %424 = vector.extract_strided_slice %411 {offsets = [0, 64], sizes = [2, 32], strides = [1, 1]} : vector<2x128xf32> to vector<2x32xf32>
    %425 = math.tanh %424 : vector<2x32xf32>
    %426 = vector.extract_strided_slice %411 {offsets = [0, 96], sizes = [2, 32], strides = [1, 1]} : vector<2x128xf32> to vector<2x32xf32>
    %427 = arith.negf %426 : vector<2x32xf32>
    %428 = math.exp %427 : vector<2x32xf32>
    %cst_412 = arith.constant 1.000000e+00 : f32
    %429 = vector.broadcast %cst_412 : f32 to vector<2x32xf32>
    %430 = arith.addf %429, %428 : vector<2x32xf32>
    %431 = arith.divf %429, %430 : vector<2x32xf32>
    %432 = arith.mulf %423, %408 : vector<2x32xf32>
    %433 = arith.mulf %417, %425 : vector<2x32xf32>
    %434 = arith.addf %432, %433 : vector<2x32xf32>
    %435 = math.tanh %434 : vector<2x32xf32>
    %436 = arith.mulf %431, %435 : vector<2x32xf32>
    %cst_413 = arith.constant dense<0.000000e+00> : vector<2x128xf32>
    %437 = tpu.matmul %436, %405, %cst_413 {dimension_numbers = #tpu.dot_dimension_numbers<[1], [0], [0], [1], [0, 0, 1, 1], [], []>} : vector<2x32xf32>, vector<32x128xf32>, vector<2x128xf32> -> vector<2x128xf32>
    %438 = vector.broadcast %406 : vector<1x128xf32> to vector<2x128xf32>
    %439 = arith.addf %437, %438 : vector<2x128xf32>
    %c0_414 = arith.constant 0 : index
    %c0_415 = arith.constant 0 : index
    %c0_416 = arith.constant 0 : index
    %440 = vector.load %arg9[%c0_414, %c0_415, %c0_416] : memref<8x2x128xf32, #tpu.memory_space<vmem>>, vector<1x2x128xf32>
    %441 = vector.shape_cast %440 : vector<1x2x128xf32> to vector<2x128xf32>
    %442 = vector.shape_cast %439 : vector<2x128xf32> to vector<1x2x128xf32>
    tpu.vector_store %arg9[%c0_414, %c0_415, %c0_416], %442 {strides = array<i32>} : memref<8x2x128xf32, #tpu.memory_space<vmem>>, vector<1x2x128xf32>,
    %443 = vector.extract_strided_slice %403 {offsets = [2, 0], sizes = [2, 128], strides = [1, 1]} : vector<16x128xf32> to vector<2x128xf32>
    %cst_417 = arith.constant dense<0.000000e+00> : vector<2x128xf32>
    %444 = tpu.matmul %436, %404, %cst_417 {dimension_numbers = #tpu.dot_dimension_numbers<[1], [0], [0], [1], [0, 0, 1, 1], [], []>} : vector<2x32xf32>, vector<32x128xf32>, vector<2x128xf32> -> vector<2x128xf32>
    %445 = arith.addf %443, %444 : vector<2x128xf32>
    %446 = vector.extract_strided_slice %445 {offsets = [0, 0], sizes = [2, 32], strides = [1, 1]} : vector<2x128xf32> to vector<2x32xf32>
    %447 = arith.negf %446 : vector<2x32xf32>
    %448 = math.exp %447 : vector<2x32xf32>
    %cst_418 = arith.constant 1.000000e+00 : f32
    %449 = vector.broadcast %cst_418 : f32 to vector<2x32xf32>
    %450 = arith.addf %449, %448 : vector<2x32xf32>
    %451 = arith.divf %449, %450 : vector<2x32xf32>
    %452 = vector.extract_strided_slice %445 {offsets = [0, 32], sizes = [2, 32], strides = [1, 1]} : vector<2x128xf32> to vector<2x32xf32>
    %453 = arith.negf %452 : vector<2x32xf32>
    %454 = math.exp %453 : vector<2x32xf32>
    %cst_419 = arith.constant 1.000000e+00 : f32
    %455 = vector.broadcast %cst_419 : f32 to vector<2x32xf32>
    %456 = arith.addf %455, %454 : vector<2x32xf32>
    %457 = arith.divf %455, %456 : vector<2x32xf32>
    %458 = vector.extract_strided_slice %445 {offsets = [0, 64], sizes = [2, 32], strides = [1, 1]} : vector<2x128xf32> to vector<2x32xf32>
    %459 = math.tanh %458 : vector<2x32xf32>
    %460 = vector.extract_strided_slice %445 {offsets = [0, 96], sizes = [2, 32], strides = [1, 1]} : vector<2x128xf32> to vector<2x32xf32>
    %461 = arith.negf %460 : vector<2x32xf32>
    %462 = math.exp %461 : vector<2x32xf32>
    %cst_420 = arith.constant 1.000000e+00 : f32
    %463 = vector.broadcast %cst_420 : f32 to vector<2x32xf32>
    %464 = arith.addf %463, %462 : vector<2x32xf32>
    %465 = arith.divf %463, %464 : vector<2x32xf32>
    %466 = arith.mulf %457, %434 : vector<2x32xf32>
    %467 = arith.mulf %451, %459 : vector<2x32xf32>
    %468 = arith.addf %466, %467 : vector<2x32xf32>
    %469 = math.tanh %468 : vector<2x32xf32>
    %470 = arith.mulf %465, %469 : vector<2x32xf32>
    %cst_421 = arith.constant dense<0.000000e+00> : vector<2x128xf32>
    %471 = tpu.matmul %470, %405, %cst_421 {dimension_numbers = #tpu.dot_dimension_numbers<[1], [0], [0], [1], [0, 0, 1, 1], [], []>} : vector<2x32xf32>, vector<32x128xf32>, vector<2x128xf32> -> vector<2x128xf32>
    %472 = vector.broadcast %406 : vector<1x128xf32> to vector<2x128xf32>
    %473 = arith.addf %471, %472 : vector<2x128xf32>
    %c1_422 = arith.constant 1 : index
    %c0_423 = arith.constant 0 : index
    %c0_424 = arith.constant 0 : index
    %474 = vector.load %arg9[%c1_422, %c0_423, %c0_424] : memref<8x2x128xf32, #tpu.memory_space<vmem>>, vector<1x2x128xf32>
    %475 = vector.shape_cast %474 : vector<1x2x128xf32> to vector<2x128xf32>
    %476 = vector.shape_cast %473 : vector<2x128xf32> to vector<1x2x128xf32>
    tpu.vector_store %arg9[%c1_422, %c0_423, %c0_424], %476 {strides = array<i32>} : memref<8x2x128xf32, #tpu.memory_space<vmem>>, vector<1x2x128xf32>,
    %477 = vector.extract_strided_slice %403 {offsets = [4, 0], sizes = [2, 128], strides = [1, 1]} : vector<16x128xf32> to vector<2x128xf32>
    %cst_425 = arith.constant dense<0.000000e+00> : vector<2x128xf32>
    %478 = tpu.matmul %470, %404, %cst_425 {dimension_numbers = #tpu.dot_dimension_numbers<[1], [0], [0], [1], [0, 0, 1, 1], [], []>} : vector<2x32xf32>, vector<32x128xf32>, vector<2x128xf32> -> vector<2x128xf32>
    %479 = arith.addf %477, %478 : vector<2x128xf32>
    %480 = vector.extract_strided_slice %479 {offsets = [0, 0], sizes = [2, 32], strides = [1, 1]} : vector<2x128xf32> to vector<2x32xf32>
    %481 = arith.negf %480 : vector<2x32xf32>
    %482 = math.exp %481 : vector<2x32xf32>
    %cst_426 = arith.constant 1.000000e+00 : f32
    %483 = vector.broadcast %cst_426 : f32 to vector<2x32xf32>
    %484 = arith.addf %483, %482 : vector<2x32xf32>
    %485 = arith.divf %483, %484 : vector<2x32xf32>
    %486 = vector.extract_strided_slice %479 {offsets = [0, 32], sizes = [2, 32], strides = [1, 1]} : vector<2x128xf32> to vector<2x32xf32>
    %487 = arith.negf %486 : vector<2x32xf32>
    %488 = math.exp %487 : vector<2x32xf32>
    %cst_427 = arith.constant 1.000000e+00 : f32
    %489 = vector.broadcast %cst_427 : f32 to vector<2x32xf32>
    %490 = arith.addf %489, %488 : vector<2x32xf32>
    %491 = arith.divf %489, %490 : vector<2x32xf32>
    %492 = vector.extract_strided_slice %479 {offsets = [0, 64], sizes = [2, 32], strides = [1, 1]} : vector<2x128xf32> to vector<2x32xf32>
    %493 = math.tanh %492 : vector<2x32xf32>
    %494 = vector.extract_strided_slice %479 {offsets = [0, 96], sizes = [2, 32], strides = [1, 1]} : vector<2x128xf32> to vector<2x32xf32>
    %495 = arith.negf %494 : vector<2x32xf32>
    %496 = math.exp %495 : vector<2x32xf32>
    %cst_428 = arith.constant 1.000000e+00 : f32
    %497 = vector.broadcast %cst_428 : f32 to vector<2x32xf32>
    %498 = arith.addf %497, %496 : vector<2x32xf32>
    %499 = arith.divf %497, %498 : vector<2x32xf32>
    %500 = arith.mulf %491, %468 : vector<2x32xf32>
    %501 = arith.mulf %485, %493 : vector<2x32xf32>
    %502 = arith.addf %500, %501 : vector<2x32xf32>
    %503 = math.tanh %502 : vector<2x32xf32>
    %504 = arith.mulf %499, %503 : vector<2x32xf32>
    %cst_429 = arith.constant dense<0.000000e+00> : vector<2x128xf32>
    %505 = tpu.matmul %504, %405, %cst_429 {dimension_numbers = #tpu.dot_dimension_numbers<[1], [0], [0], [1], [0, 0, 1, 1], [], []>} : vector<2x32xf32>, vector<32x128xf32>, vector<2x128xf32> -> vector<2x128xf32>
    %506 = vector.broadcast %406 : vector<1x128xf32> to vector<2x128xf32>
    %507 = arith.addf %505, %506 : vector<2x128xf32>
    %c2_430 = arith.constant 2 : index
    %c0_431 = arith.constant 0 : index
    %c0_432 = arith.constant 0 : index
    %508 = vector.load %arg9[%c2_430, %c0_431, %c0_432] : memref<8x2x128xf32, #tpu.memory_space<vmem>>, vector<1x2x128xf32>
    %509 = vector.shape_cast %508 : vector<1x2x128xf32> to vector<2x128xf32>
    %510 = vector.shape_cast %507 : vector<2x128xf32> to vector<1x2x128xf32>
    tpu.vector_store %arg9[%c2_430, %c0_431, %c0_432], %510 {strides = array<i32>} : memref<8x2x128xf32, #tpu.memory_space<vmem>>, vector<1x2x128xf32>,
    %511 = vector.extract_strided_slice %403 {offsets = [6, 0], sizes = [2, 128], strides = [1, 1]} : vector<16x128xf32> to vector<2x128xf32>
    %cst_433 = arith.constant dense<0.000000e+00> : vector<2x128xf32>
    %512 = tpu.matmul %504, %404, %cst_433 {dimension_numbers = #tpu.dot_dimension_numbers<[1], [0], [0], [1], [0, 0, 1, 1], [], []>} : vector<2x32xf32>, vector<32x128xf32>, vector<2x128xf32> -> vector<2x128xf32>
    %513 = arith.addf %511, %512 : vector<2x128xf32>
    %514 = vector.extract_strided_slice %513 {offsets = [0, 0], sizes = [2, 32], strides = [1, 1]} : vector<2x128xf32> to vector<2x32xf32>
    %515 = arith.negf %514 : vector<2x32xf32>
    %516 = math.exp %515 : vector<2x32xf32>
    %cst_434 = arith.constant 1.000000e+00 : f32
    %517 = vector.broadcast %cst_434 : f32 to vector<2x32xf32>
    %518 = arith.addf %517, %516 : vector<2x32xf32>
    %519 = arith.divf %517, %518 : vector<2x32xf32>
    %520 = vector.extract_strided_slice %513 {offsets = [0, 32], sizes = [2, 32], strides = [1, 1]} : vector<2x128xf32> to vector<2x32xf32>
    %521 = arith.negf %520 : vector<2x32xf32>
    %522 = math.exp %521 : vector<2x32xf32>
    %cst_435 = arith.constant 1.000000e+00 : f32
    %523 = vector.broadcast %cst_435 : f32 to vector<2x32xf32>
    %524 = arith.addf %523, %522 : vector<2x32xf32>
    %525 = arith.divf %523, %524 : vector<2x32xf32>
    %526 = vector.extract_strided_slice %513 {offsets = [0, 64], sizes = [2, 32], strides = [1, 1]} : vector<2x128xf32> to vector<2x32xf32>
    %527 = math.tanh %526 : vector<2x32xf32>
    %528 = vector.extract_strided_slice %513 {offsets = [0, 96], sizes = [2, 32], strides = [1, 1]} : vector<2x128xf32> to vector<2x32xf32>
    %529 = arith.negf %528 : vector<2x32xf32>
    %530 = math.exp %529 : vector<2x32xf32>
    %cst_436 = arith.constant 1.000000e+00 : f32
    %531 = vector.broadcast %cst_436 : f32 to vector<2x32xf32>
    %532 = arith.addf %531, %530 : vector<2x32xf32>
    %533 = arith.divf %531, %532 : vector<2x32xf32>
    %534 = arith.mulf %525, %502 : vector<2x32xf32>
    %535 = arith.mulf %519, %527 : vector<2x32xf32>
    %536 = arith.addf %534, %535 : vector<2x32xf32>
    %537 = math.tanh %536 : vector<2x32xf32>
    %538 = arith.mulf %533, %537 : vector<2x32xf32>
    %cst_437 = arith.constant dense<0.000000e+00> : vector<2x128xf32>
    %539 = tpu.matmul %538, %405, %cst_437 {dimension_numbers = #tpu.dot_dimension_numbers<[1], [0], [0], [1], [0, 0, 1, 1], [], []>} : vector<2x32xf32>, vector<32x128xf32>, vector<2x128xf32> -> vector<2x128xf32>
    %540 = vector.broadcast %406 : vector<1x128xf32> to vector<2x128xf32>
    %541 = arith.addf %539, %540 : vector<2x128xf32>
    %c3_438 = arith.constant 3 : index
    %c0_439 = arith.constant 0 : index
    %c0_440 = arith.constant 0 : index
    %542 = vector.load %arg9[%c3_438, %c0_439, %c0_440] : memref<8x2x128xf32, #tpu.memory_space<vmem>>, vector<1x2x128xf32>
    %543 = vector.shape_cast %542 : vector<1x2x128xf32> to vector<2x128xf32>
    %544 = vector.shape_cast %541 : vector<2x128xf32> to vector<1x2x128xf32>
    tpu.vector_store %arg9[%c3_438, %c0_439, %c0_440], %544 {strides = array<i32>} : memref<8x2x128xf32, #tpu.memory_space<vmem>>, vector<1x2x128xf32>,
    %545 = vector.extract_strided_slice %403 {offsets = [8, 0], sizes = [2, 128], strides = [1, 1]} : vector<16x128xf32> to vector<2x128xf32>
    %cst_441 = arith.constant dense<0.000000e+00> : vector<2x128xf32>
    %546 = tpu.matmul %538, %404, %cst_441 {dimension_numbers = #tpu.dot_dimension_numbers<[1], [0], [0], [1], [0, 0, 1, 1], [], []>} : vector<2x32xf32>, vector<32x128xf32>, vector<2x128xf32> -> vector<2x128xf32>
    %547 = arith.addf %545, %546 : vector<2x128xf32>
    %548 = vector.extract_strided_slice %547 {offsets = [0, 0], sizes = [2, 32], strides = [1, 1]} : vector<2x128xf32> to vector<2x32xf32>
    %549 = arith.negf %548 : vector<2x32xf32>
    %550 = math.exp %549 : vector<2x32xf32>
    %cst_442 = arith.constant 1.000000e+00 : f32
    %551 = vector.broadcast %cst_442 : f32 to vector<2x32xf32>
    %552 = arith.addf %551, %550 : vector<2x32xf32>
    %553 = arith.divf %551, %552 : vector<2x32xf32>
    %554 = vector.extract_strided_slice %547 {offsets = [0, 32], sizes = [2, 32], strides = [1, 1]} : vector<2x128xf32> to vector<2x32xf32>
    %555 = arith.negf %554 : vector<2x32xf32>
    %556 = math.exp %555 : vector<2x32xf32>
    %cst_443 = arith.constant 1.000000e+00 : f32
    %557 = vector.broadcast %cst_443 : f32 to vector<2x32xf32>
    %558 = arith.addf %557, %556 : vector<2x32xf32>
    %559 = arith.divf %557, %558 : vector<2x32xf32>
    %560 = vector.extract_strided_slice %547 {offsets = [0, 64], sizes = [2, 32], strides = [1, 1]} : vector<2x128xf32> to vector<2x32xf32>
    %561 = math.tanh %560 : vector<2x32xf32>
    %562 = vector.extract_strided_slice %547 {offsets = [0, 96], sizes = [2, 32], strides = [1, 1]} : vector<2x128xf32> to vector<2x32xf32>
    %563 = arith.negf %562 : vector<2x32xf32>
    %564 = math.exp %563 : vector<2x32xf32>
    %cst_444 = arith.constant 1.000000e+00 : f32
    %565 = vector.broadcast %cst_444 : f32 to vector<2x32xf32>
    %566 = arith.addf %565, %564 : vector<2x32xf32>
    %567 = arith.divf %565, %566 : vector<2x32xf32>
    %568 = arith.mulf %559, %536 : vector<2x32xf32>
    %569 = arith.mulf %553, %561 : vector<2x32xf32>
    %570 = arith.addf %568, %569 : vector<2x32xf32>
    %571 = math.tanh %570 : vector<2x32xf32>
    %572 = arith.mulf %567, %571 : vector<2x32xf32>
    %cst_445 = arith.constant dense<0.000000e+00> : vector<2x128xf32>
    %573 = tpu.matmul %572, %405, %cst_445 {dimension_numbers = #tpu.dot_dimension_numbers<[1], [0], [0], [1], [0, 0, 1, 1], [], []>} : vector<2x32xf32>, vector<32x128xf32>, vector<2x128xf32> -> vector<2x128xf32>
    %574 = vector.broadcast %406 : vector<1x128xf32> to vector<2x128xf32>
    %575 = arith.addf %573, %574 : vector<2x128xf32>
    %c4_446 = arith.constant 4 : index
    %c0_447 = arith.constant 0 : index
    %c0_448 = arith.constant 0 : index
    %576 = vector.load %arg9[%c4_446, %c0_447, %c0_448] : memref<8x2x128xf32, #tpu.memory_space<vmem>>, vector<1x2x128xf32>
    %577 = vector.shape_cast %576 : vector<1x2x128xf32> to vector<2x128xf32>
    %578 = vector.shape_cast %575 : vector<2x128xf32> to vector<1x2x128xf32>
    tpu.vector_store %arg9[%c4_446, %c0_447, %c0_448], %578 {strides = array<i32>} : memref<8x2x128xf32, #tpu.memory_space<vmem>>, vector<1x2x128xf32>,
    %579 = vector.extract_strided_slice %403 {offsets = [10, 0], sizes = [2, 128], strides = [1, 1]} : vector<16x128xf32> to vector<2x128xf32>
    %cst_449 = arith.constant dense<0.000000e+00> : vector<2x128xf32>
    %580 = tpu.matmul %572, %404, %cst_449 {dimension_numbers = #tpu.dot_dimension_numbers<[1], [0], [0], [1], [0, 0, 1, 1], [], []>} : vector<2x32xf32>, vector<32x128xf32>, vector<2x128xf32> -> vector<2x128xf32>
    %581 = arith.addf %579, %580 : vector<2x128xf32>
    %582 = vector.extract_strided_slice %581 {offsets = [0, 0], sizes = [2, 32], strides = [1, 1]} : vector<2x128xf32> to vector<2x32xf32>
    %583 = arith.negf %582 : vector<2x32xf32>
    %584 = math.exp %583 : vector<2x32xf32>
    %cst_450 = arith.constant 1.000000e+00 : f32
    %585 = vector.broadcast %cst_450 : f32 to vector<2x32xf32>
    %586 = arith.addf %585, %584 : vector<2x32xf32>
    %587 = arith.divf %585, %586 : vector<2x32xf32>
    %588 = vector.extract_strided_slice %581 {offsets = [0, 32], sizes = [2, 32], strides = [1, 1]} : vector<2x128xf32> to vector<2x32xf32>
    %589 = arith.negf %588 : vector<2x32xf32>
    %590 = math.exp %589 : vector<2x32xf32>
    %cst_451 = arith.constant 1.000000e+00 : f32
    %591 = vector.broadcast %cst_451 : f32 to vector<2x32xf32>
    %592 = arith.addf %591, %590 : vector<2x32xf32>
    %593 = arith.divf %591, %592 : vector<2x32xf32>
    %594 = vector.extract_strided_slice %581 {offsets = [0, 64], sizes = [2, 32], strides = [1, 1]} : vector<2x128xf32> to vector<2x32xf32>
    %595 = math.tanh %594 : vector<2x32xf32>
    %596 = vector.extract_strided_slice %581 {offsets = [0, 96], sizes = [2, 32], strides = [1, 1]} : vector<2x128xf32> to vector<2x32xf32>
    %597 = arith.negf %596 : vector<2x32xf32>
    %598 = math.exp %597 : vector<2x32xf32>
    %cst_452 = arith.constant 1.000000e+00 : f32
    %599 = vector.broadcast %cst_452 : f32 to vector<2x32xf32>
    %600 = arith.addf %599, %598 : vector<2x32xf32>
    %601 = arith.divf %599, %600 : vector<2x32xf32>
    %602 = arith.mulf %593, %570 : vector<2x32xf32>
    %603 = arith.mulf %587, %595 : vector<2x32xf32>
    %604 = arith.addf %602, %603 : vector<2x32xf32>
    %605 = math.tanh %604 : vector<2x32xf32>
    %606 = arith.mulf %601, %605 : vector<2x32xf32>
    %cst_453 = arith.constant dense<0.000000e+00> : vector<2x128xf32>
    %607 = tpu.matmul %606, %405, %cst_453 {dimension_numbers = #tpu.dot_dimension_numbers<[1], [0], [0], [1], [0, 0, 1, 1], [], []>} : vector<2x32xf32>, vector<32x128xf32>, vector<2x128xf32> -> vector<2x128xf32>
    %608 = vector.broadcast %406 : vector<1x128xf32> to vector<2x128xf32>
    %609 = arith.addf %607, %608 : vector<2x128xf32>
    %c5_454 = arith.constant 5 : index
    %c0_455 = arith.constant 0 : index
    %c0_456 = arith.constant 0 : index
    %610 = vector.load %arg9[%c5_454, %c0_455, %c0_456] : memref<8x2x128xf32, #tpu.memory_space<vmem>>, vector<1x2x128xf32>
    %611 = vector.shape_cast %610 : vector<1x2x128xf32> to vector<2x128xf32>
    %612 = vector.shape_cast %609 : vector<2x128xf32> to vector<1x2x128xf32>
    tpu.vector_store %arg9[%c5_454, %c0_455, %c0_456], %612 {strides = array<i32>} : memref<8x2x128xf32, #tpu.memory_space<vmem>>, vector<1x2x128xf32>,
    %613 = vector.extract_strided_slice %403 {offsets = [12, 0], sizes = [2, 128], strides = [1, 1]} : vector<16x128xf32> to vector<2x128xf32>
    %cst_457 = arith.constant dense<0.000000e+00> : vector<2x128xf32>
    %614 = tpu.matmul %606, %404, %cst_457 {dimension_numbers = #tpu.dot_dimension_numbers<[1], [0], [0], [1], [0, 0, 1, 1], [], []>} : vector<2x32xf32>, vector<32x128xf32>, vector<2x128xf32> -> vector<2x128xf32>
    %615 = arith.addf %613, %614 : vector<2x128xf32>
    %616 = vector.extract_strided_slice %615 {offsets = [0, 0], sizes = [2, 32], strides = [1, 1]} : vector<2x128xf32> to vector<2x32xf32>
    %617 = arith.negf %616 : vector<2x32xf32>
    %618 = math.exp %617 : vector<2x32xf32>
    %cst_458 = arith.constant 1.000000e+00 : f32
    %619 = vector.broadcast %cst_458 : f32 to vector<2x32xf32>
    %620 = arith.addf %619, %618 : vector<2x32xf32>
    %621 = arith.divf %619, %620 : vector<2x32xf32>
    %622 = vector.extract_strided_slice %615 {offsets = [0, 32], sizes = [2, 32], strides = [1, 1]} : vector<2x128xf32> to vector<2x32xf32>
    %623 = arith.negf %622 : vector<2x32xf32>
    %624 = math.exp %623 : vector<2x32xf32>
    %cst_459 = arith.constant 1.000000e+00 : f32
    %625 = vector.broadcast %cst_459 : f32 to vector<2x32xf32>
    %626 = arith.addf %625, %624 : vector<2x32xf32>
    %627 = arith.divf %625, %626 : vector<2x32xf32>
    %628 = vector.extract_strided_slice %615 {offsets = [0, 64], sizes = [2, 32], strides = [1, 1]} : vector<2x128xf32> to vector<2x32xf32>
    %629 = math.tanh %628 : vector<2x32xf32>
    %630 = vector.extract_strided_slice %615 {offsets = [0, 96], sizes = [2, 32], strides = [1, 1]} : vector<2x128xf32> to vector<2x32xf32>
    %631 = arith.negf %630 : vector<2x32xf32>
    %632 = math.exp %631 : vector<2x32xf32>
    %cst_460 = arith.constant 1.000000e+00 : f32
    %633 = vector.broadcast %cst_460 : f32 to vector<2x32xf32>
    %634 = arith.addf %633, %632 : vector<2x32xf32>
    %635 = arith.divf %633, %634 : vector<2x32xf32>
    %636 = arith.mulf %627, %604 : vector<2x32xf32>
    %637 = arith.mulf %621, %629 : vector<2x32xf32>
    %638 = arith.addf %636, %637 : vector<2x32xf32>
    %639 = math.tanh %638 : vector<2x32xf32>
    %640 = arith.mulf %635, %639 : vector<2x32xf32>
    %cst_461 = arith.constant dense<0.000000e+00> : vector<2x128xf32>
    %641 = tpu.matmul %640, %405, %cst_461 {dimension_numbers = #tpu.dot_dimension_numbers<[1], [0], [0], [1], [0, 0, 1, 1], [], []>} : vector<2x32xf32>, vector<32x128xf32>, vector<2x128xf32> -> vector<2x128xf32>
    %642 = vector.broadcast %406 : vector<1x128xf32> to vector<2x128xf32>
    %643 = arith.addf %641, %642 : vector<2x128xf32>
    %c6_462 = arith.constant 6 : index
    %c0_463 = arith.constant 0 : index
    %c0_464 = arith.constant 0 : index
    %644 = vector.load %arg9[%c6_462, %c0_463, %c0_464] : memref<8x2x128xf32, #tpu.memory_space<vmem>>, vector<1x2x128xf32>
    %645 = vector.shape_cast %644 : vector<1x2x128xf32> to vector<2x128xf32>
    %646 = vector.shape_cast %643 : vector<2x128xf32> to vector<1x2x128xf32>
    tpu.vector_store %arg9[%c6_462, %c0_463, %c0_464], %646 {strides = array<i32>} : memref<8x2x128xf32, #tpu.memory_space<vmem>>, vector<1x2x128xf32>,
    %647 = vector.extract_strided_slice %403 {offsets = [14, 0], sizes = [2, 128], strides = [1, 1]} : vector<16x128xf32> to vector<2x128xf32>
    %cst_465 = arith.constant dense<0.000000e+00> : vector<2x128xf32>
    %648 = tpu.matmul %640, %404, %cst_465 {dimension_numbers = #tpu.dot_dimension_numbers<[1], [0], [0], [1], [0, 0, 1, 1], [], []>} : vector<2x32xf32>, vector<32x128xf32>, vector<2x128xf32> -> vector<2x128xf32>
    %649 = arith.addf %647, %648 : vector<2x128xf32>
    %650 = vector.extract_strided_slice %649 {offsets = [0, 0], sizes = [2, 32], strides = [1, 1]} : vector<2x128xf32> to vector<2x32xf32>
    %651 = arith.negf %650 : vector<2x32xf32>
    %652 = math.exp %651 : vector<2x32xf32>
    %cst_466 = arith.constant 1.000000e+00 : f32
    %653 = vector.broadcast %cst_466 : f32 to vector<2x32xf32>
    %654 = arith.addf %653, %652 : vector<2x32xf32>
    %655 = arith.divf %653, %654 : vector<2x32xf32>
    %656 = vector.extract_strided_slice %649 {offsets = [0, 32], sizes = [2, 32], strides = [1, 1]} : vector<2x128xf32> to vector<2x32xf32>
    %657 = arith.negf %656 : vector<2x32xf32>
    %658 = math.exp %657 : vector<2x32xf32>
    %cst_467 = arith.constant 1.000000e+00 : f32
    %659 = vector.broadcast %cst_467 : f32 to vector<2x32xf32>
    %660 = arith.addf %659, %658 : vector<2x32xf32>
    %661 = arith.divf %659, %660 : vector<2x32xf32>
    %662 = vector.extract_strided_slice %649 {offsets = [0, 64], sizes = [2, 32], strides = [1, 1]} : vector<2x128xf32> to vector<2x32xf32>
    %663 = math.tanh %662 : vector<2x32xf32>
    %664 = vector.extract_strided_slice %649 {offsets = [0, 96], sizes = [2, 32], strides = [1, 1]} : vector<2x128xf32> to vector<2x32xf32>
    %665 = arith.negf %664 : vector<2x32xf32>
    %666 = math.exp %665 : vector<2x32xf32>
    %cst_468 = arith.constant 1.000000e+00 : f32
    %667 = vector.broadcast %cst_468 : f32 to vector<2x32xf32>
    %668 = arith.addf %667, %666 : vector<2x32xf32>
    %669 = arith.divf %667, %668 : vector<2x32xf32>
    %670 = arith.mulf %661, %638 : vector<2x32xf32>
    %671 = arith.mulf %655, %663 : vector<2x32xf32>
    %672 = arith.addf %670, %671 : vector<2x32xf32>
    %673 = math.tanh %672 : vector<2x32xf32>
    %674 = arith.mulf %669, %673 : vector<2x32xf32>
    %cst_469 = arith.constant dense<0.000000e+00> : vector<2x128xf32>
    %675 = tpu.matmul %674, %405, %cst_469 {dimension_numbers = #tpu.dot_dimension_numbers<[1], [0], [0], [1], [0, 0, 1, 1], [], []>} : vector<2x32xf32>, vector<32x128xf32>, vector<2x128xf32> -> vector<2x128xf32>
    %676 = vector.broadcast %406 : vector<1x128xf32> to vector<2x128xf32>
    %677 = arith.addf %675, %676 : vector<2x128xf32>
    %c7_470 = arith.constant 7 : index
    %c0_471 = arith.constant 0 : index
    %c0_472 = arith.constant 0 : index
    %678 = vector.load %arg9[%c7_470, %c0_471, %c0_472] : memref<8x2x128xf32, #tpu.memory_space<vmem>>, vector<1x2x128xf32>
    %679 = vector.shape_cast %678 : vector<1x2x128xf32> to vector<2x128xf32>
    %680 = vector.shape_cast %677 : vector<2x128xf32> to vector<1x2x128xf32>
    tpu.vector_store %arg9[%c7_470, %c0_471, %c0_472], %680 {strides = array<i32>} : memref<8x2x128xf32, #tpu.memory_space<vmem>>, vector<1x2x128xf32>,
    return
  }
  func.func @transform_0(%arg0: i32) -> (i32, i32, i32) {
    %c0_i32 = arith.constant 0 : i32
    %c0_i32_0 = arith.constant 0 : i32
    %c0_i32_1 = arith.constant 0 : i32
    %c0_i32_2 = arith.constant 0 : i32
    return %c0_i32, %c0_i32_0, %c0_i32_1 : i32, i32, i32
  }
  func.func @transform_1(%arg0: i32) -> (i32, i32, i32) {
    %c0_i32 = arith.constant 0 : i32
    %c0_i32_0 = arith.constant 0 : i32
    %c0_i32_1 = arith.constant 0 : i32
    %c0_i32_2 = arith.constant 0 : i32
    return %c0_i32, %c0_i32_0, %c0_i32_1 : i32, i32, i32
  }
  func.func @transform_2(%arg0: i32) -> (i32, i32) {
    %c0_i32 = arith.constant 0 : i32
    %c0_i32_0 = arith.constant 0 : i32
    %c0_i32_1 = arith.constant 0 : i32
    return %c0_i32, %c0_i32_0 : i32, i32
  }
  func.func @transform_3(%arg0: i32) -> (i32, i32, i32) {
    %c0_i32 = arith.constant 0 : i32
    %c0_i32_0 = arith.constant 0 : i32
    %c0_i32_1 = arith.constant 0 : i32
    %c0_i32_2 = arith.constant 0 : i32
    return %c0_i32, %c0_i32_0, %c0_i32_1 : i32, i32, i32
  }
  func.func @transform_4(%arg0: i32) -> (i32, i32) {
    %c0_i32 = arith.constant 0 : i32
    %c0_i32_0 = arith.constant 0 : i32
    %c0_i32_1 = arith.constant 0 : i32
    return %c0_i32, %c0_i32_0 : i32, i32
  }
  func.func @transform_5(%arg0: i32) -> (i32, i32) {
    %c0_i32 = arith.constant 0 : i32
    %c0_i32_0 = arith.constant 0 : i32
    %c0_i32_1 = arith.constant 0 : i32
    return %c0_i32, %c0_i32_0 : i32, i32
  }
  func.func @transform_6(%arg0: i32) -> (i32, i32) {
    %c0_i32 = arith.constant 0 : i32
    %c0_i32_0 = arith.constant 0 : i32
    %c0_i32_1 = arith.constant 0 : i32
    return %c0_i32, %c0_i32_0 : i32, i32
  }
  func.func @transform_7(%arg0: i32) -> (i32, i32) {
    %c0_i32 = arith.constant 0 : i32
    %c0_i32_0 = arith.constant 0 : i32
    %c0_i32_1 = arith.constant 0 : i32
    return %c0_i32, %c0_i32_0 : i32, i32
  }
  func.func @transform_8(%arg0: i32) -> (i32, i32, i32) {
    %c0_i32 = arith.constant 0 : i32
    %c0_i32_0 = arith.constant 0 : i32
    %c0_i32_1 = arith.constant 0 : i32
    %c0_i32_2 = arith.constant 0 : i32
    return %c0_i32, %c0_i32_0, %c0_i32_1 : i32, i32, i32
  }
}

</mosaic_0001>

<llo_original>
// kernel: tile.8
$region0: #{tile.8}
  #allocation0 [shape = 's32[1]{0}', space=sflag, size = 0x4, scoped, tag = 'scoped memory for tile.8']
  %s0 = inlined_call_operand.vmem [shape: f32[8], index: 0, kind: input, shape index: {}]
  %s1 = inlined_call_operand.vmem [shape: f32[16,8], index: 1, kind: output, shape index: {}]
  // Predicated region
  $region2: #{tile.8} parent=0 // pred_check
    _
  $region3: #{tile.8} parent=0 // pred_check_branch
    %3 = sbr.rel (0) target = $region5
  $region4: #{tile.8} parent=0 // pred_region
    _
  $region5: #{tile.8} parent=0 // pred_fallthru
    _
  %v4 = vld [vmem:[%s0] ss:$0 sm:$0xff]
  %5 = vst [vmem:[%s1] sm:$0xff] %v4
  %s6 = scalar_lea.vmem %s1, 8
  %7 = vst [vmem:[%s6] sm:$0xff] %v4

// kernel: tile.9
$region0: #{tile.9}
  %s0 = inlined_call_operand.vmem [shape: f32[16,8], index: 0, kind: input, shape index: {}]
  %s1 = inlined_call_operand.vmem [shape: f32[1,128], index: 1, kind: output, shape index: {}]
  $region1: #{tile.9} parent=0
    #allocation0 [shape = 'u8[4096]{0}', space=vmem, size = 0x1000, scoped, tag = 'scoped mem for output reshape']
    %v2 = vld [vmem:[%s0] sm:$0x1]
    %vm3 = vcmask 64512
    %4 = vst.msk [vmem:[#allocation0] sm:$0x1] %vm3, %v2
    %s5 = scalar_lea.vmem %s0, 15
    %v6 = vld [vmem:[%s5] sm:$0x1]
    %7 = vrot.lane.b32.xlu0 %v6, 120
    %v8 = vpop.permute.xlu0 %7
    %vm9 = vcmask 1048512
    %10 = vst.msk [vmem:[#allocation0] sm:$0x1] %vm9, %v8
    %s11 = scalar_lea.vmem %s0, 14
    %v12 = vld [vmem:[%s11] sm:$0x1]
    %13 = vrot.lane.b32.xlu0 %v12, 112
    %v14 = vpop.permute.xlu0 %13
    %vm15 = vcmask 982912
    %16 = vst.msk [vmem:[#allocation0] sm:$0x1] %vm15, %v14
    %s17 = scalar_lea.vmem %s0, 13
    %v18 = vld [vmem:[%s17] sm:$0x1]
    %19 = vrot.lane.b32.xlu0 %v18, 104
    %v20 = vpop.permute.xlu0 %19
    %vm21 = vcmask 917312
    %22 = vst.msk [vmem:[#allocation0] sm:$0x1] %vm21, %v20
    %s23 = scalar_lea.vmem %s0, 12
    %v24 = vld [vmem:[%s23] sm:$0x1]
    %25 = vrot.lane.b32.xlu0 %v24, 96
    %v26 = vpop.permute.xlu0 %25
    %vm27 = vcmask 851712
    %28 = vst.msk [vmem:[#allocation0] sm:$0x1] %vm27, %v26
    %s29 = scalar_lea.vmem %s0, 11
    %v30 = vld [vmem:[%s29] sm:$0x1]
    %31 = vrot.lane.b32.xlu0 %v30, 88
    %v32 = vpop.permute.xlu0 %31
    %vm33 = vcmask 786112
    %34 = vst.msk [vmem:[#allocation0] sm:$0x1] %vm33, %v32
    %s35 = scalar_lea.vmem %s0, 10
    %v36 = vld [vmem:[%s35] sm:$0x1]
    %37 = vrot.lane.b32.xlu0 %v36, 80
    %v38 = vpop.permute.xlu0 %37
    %vm39 = vcmask 720512
    %40 = vst.msk [vmem:[#allocation0] sm:$0x1] %vm39, %v38
    %s41 = scalar_lea.vmem %s0, 9
    %v42 = vld [vmem:[%s41] sm:$0x1]
    %43 = vrot.lane.b32.xlu0 %v42, 72
    %v44 = vpop.permute.xlu0 %43
    %vm45 = vcmask 654912
    %46 = vst.msk [vmem:[#allocation0] sm:$0x1] %vm45, %v44
    %s47 = scalar_lea.vmem %s0, 8
    %v48 = vld [vmem:[%s47] sm:$0x1]
    %49 = vrot.lane.b32.xlu0 %v48, 64
    %v50 = vpop.permute.xlu0 %49
    %vm51 = vcmask 589312
    %52 = vst.msk [vmem:[#allocation0] sm:$0x1] %vm51, %v50
    %s53 = scalar_lea.vmem %s0, 7
    %v54 = vld [vmem:[%s53] sm:$0x1]
    %55 = vrot.lane.b32.xlu0 %v54, 56
    %v56 = vpop.permute.xlu0 %55
    %vm57 = vcmask 523712
    %58 = vst.msk [vmem:[#allocation0] sm:$0x1] %vm57, %v56
    %s59 = scalar_lea.vmem %s0, 6
    %v60 = vld [vmem:[%s59] sm:$0x1]
    %61 = vrot.lane.b32.xlu0 %v60, 48
    %v62 = vpop.permute.xlu0 %61
    %vm63 = vcmask 458112
    %64 = vst.msk [vmem:[#allocation0] sm:$0x1] %vm63, %v62
    %s65 = scalar_lea.vmem %s0, 5
    %v66 = vld [vmem:[%s65] sm:$0x1]
    %67 = vrot.lane.b32.xlu0 %v66, 40
    %v68 = vpop.permute.xlu0 %67
    %vm69 = vcmask 392512
    %70 = vst.msk [vmem:[#allocation0] sm:$0x1] %vm69, %v68
    %s71 = scalar_lea.vmem %s0, 4
    %v72 = vld [vmem:[%s71] sm:$0x1]
    %73 = vrot.lane.b32.xlu0 %v72, 32
    %v74 = vpop.permute.xlu0 %73
    %vm75 = vcmask 326912
    %76 = vst.msk [vmem:[#allocation0] sm:$0x1] %vm75, %v74
    %s77 = scalar_lea.vmem %s0, 3
    %v78 = vld [vmem:[%s77] sm:$0x1]
    %79 = vrot.lane.b32.xlu0 %v78, 24
    %v80 = vpop.permute.xlu0 %79
    %vm81 = vcmask 261312
    %82 = vst.msk [vmem:[#allocation0] sm:$0x1] %vm81, %v80
    %s83 = scalar_lea.vmem %s0, 2
    %v84 = vld [vmem:[%s83] sm:$0x1]
    %85 = vrot.lane.b32.xlu0 %v84, 16
    %v86 = vpop.permute.xlu0 %85
    %vm87 = vcmask 195712
    %88 = vst.msk [vmem:[#allocation0] sm:$0x1] %vm87, %v86
    %s89 = scalar_lea.vmem %s0, 1
    %v90 = vld [vmem:[%s89] sm:$0x1]
    %91 = vrot.lane.b32.xlu0 %v90, 8
    %v92 = vpop.permute.xlu0 %91
    %vm93 = vcmask 130112
    %94 = vst.msk [vmem:[#allocation0] sm:$0x1] %vm93, %v92
    %s96 = sshllo.u32 0, 1
    %v98 = vld [vmem:[#allocation0] sm:%s96]
    %s99 = sshllo.u32 0, 1
    %100 = vst [vmem:[%s1] sm:%s99] %v98

// kernel: lrcn3d_forward.1
$region0: #{lrcn3d_forward.1}
  #allocation0 [shape = 'u32[]', space=smem, size = 0x4, offset = 0x4, fixed_abs, tag = 'smem constant byte address 0x4 - core index']
  #allocation1 [shape = 'u32[144,128]{1,0:T(1,128)}', space=vmem, size = 0x12000, scoped, tag = 'internal scratch']
  %s0 = inlined_call_operand.vmem [shape: f32[18,16,72], index: 0, kind: input, shape index: {}]
  %s1 = inlined_call_operand.vmem [shape: f32[3,72,128], index: 1, kind: input, shape index: {}]
  %s2 = inlined_call_operand.vmem [shape: f32[1,128], index: 2, kind: input, shape index: {}]
  %s3 = inlined_call_operand.vmem [shape: f32[16,128,128], index: 3, kind: input, shape index: {}]
  %s4 = inlined_call_operand.vmem [shape: f32[1,128], index: 4, kind: input, shape index: {}]
  %s5 = inlined_call_operand.vmem [shape: f32[32,128], index: 5, kind: input, shape index: {}]
  %s6 = inlined_call_operand.vmem [shape: f32[32,128], index: 6, kind: input, shape index: {}]
  %s7 = inlined_call_operand.vmem [shape: f32[1,128], index: 7, kind: input, shape index: {}]
  %s8 = inlined_call_operand.vmem [shape: f32[8,2,128], index: 8, kind: output, shape index: {}]
  %s9 = sld [smem:[#allocation0]]
  $region42: #{lrcn3d_forward.1} parent=0
    _
  %s11 = ssub.s32 1, %s9
  %s12 = scalar_select 0, %s11, %s9
  // Predicated region
  $region2: #{lrcn3d_forward.1} parent=0 // pred_check
    _
  $region3: #{lrcn3d_forward.1} parent=0 // pred_check_branch
    %14 = sbr.rel (0) target = $region5
  $region4: #{lrcn3d_forward.1} parent=0 // pred_region
    _
  $region5: #{lrcn3d_forward.1} parent=0 // pred_fallthru
    _
  // Predicated region
  $region6: #{lrcn3d_forward.1} parent=0 // pred_check
    _
  $region7: #{lrcn3d_forward.1} parent=0 // pred_check_branch
    %16 = sbr.rel (0) target = $region9
  $region8: #{lrcn3d_forward.1} parent=0 // pred_region
    _
  $region9: #{lrcn3d_forward.1} parent=0 // pred_fallthru
    _
  // Predicated region
  $region10: #{lrcn3d_forward.1} parent=0 // pred_check
    _
  $region11: #{lrcn3d_forward.1} parent=0 // pred_check_branch
    %18 = sbr.rel (0) target = $region13
  $region12: #{lrcn3d_forward.1} parent=0 // pred_region
    _
  $region13: #{lrcn3d_forward.1} parent=0 // pred_fallthru
    _
  // Predicated region
  $region14: #{lrcn3d_forward.1} parent=0 // pred_check
    _
  $region15: #{lrcn3d_forward.1} parent=0 // pred_check_branch
    %20 = sbr.rel (0) target = $region17
  $region16: #{lrcn3d_forward.1} parent=0 // pred_region
    _
  $region17: #{lrcn3d_forward.1} parent=0 // pred_fallthru
    _
  // Predicated region
  $region18: #{lrcn3d_forward.1} parent=0 // pred_check
    _
  $region19: #{lrcn3d_forward.1} parent=0 // pred_check_branch
    %22 = sbr.rel (0) target = $region21
  $region20: #{lrcn3d_forward.1} parent=0 // pred_region
    _
  $region21: #{lrcn3d_forward.1} parent=0 // pred_fallthru
    _
  // Predicated region
  $region22: #{lrcn3d_forward.1} parent=0 // pred_check
    _
  $region23: #{lrcn3d_forward.1} parent=0 // pred_check_branch
    %24 = sbr.rel (0) target = $region25
  $region24: #{lrcn3d_forward.1} parent=0 // pred_region
    _
  $region25: #{lrcn3d_forward.1} parent=0 // pred_fallthru
    _
  // Predicated region
  $region26: #{lrcn3d_forward.1} parent=0 // pred_check
    _
  $region27: #{lrcn3d_forward.1} parent=0 // pred_check_branch
    %26 = sbr.rel (0) target = $region29
  $region28: #{lrcn3d_forward.1} parent=0 // pred_region
    _
  $region29: #{lrcn3d_forward.1} parent=0 // pred_fallthru
    _
  // Predicated region
  $region30: #{lrcn3d_forward.1} parent=0 // pred_check
    _
  $region31: #{lrcn3d_forward.1} parent=0 // pred_check_branch
    %28 = sbr.rel (0) target = $region33
  $region32: #{lrcn3d_forward.1} parent=0 // pred_region
    _
  $region33: #{lrcn3d_forward.1} parent=0 // pred_fallthru
    _
  %v29 = vld [vmem:[%s2] sm:$0x1]
  %v30 = vld [vmem:[%s4] sm:$0x1]
  %v32 = vlaneseq
  %v33 = vshrl.u32 %v32, 7
  %v34 = vsub.s32 0, %v33
  %v35 = vrot.slane %v30, %v34
  %v37 = vld [vmem:[%s0] sm:$0xff]
  %v38 = vld [vmem:[%s0 + $0x8] sm:$0xff]
  %v39 = vld [vmem:[%s1] sm:$0xff]
  %v40 = vld [vmem:[%s1 + $0x8] sm:$0xff]
  %v41 = vld [vmem:[%s1 + $0x10] sm:$0xff]
  %v42 = vld [vmem:[%s1 + $0x18] sm:$0xff]
  %v43 = vld [vmem:[%s1 + $0x20] sm:$0xff]
  %v44 = vld [vmem:[%s1 + $0x28] sm:$0xff]
  %v45 = vld [vmem:[%s1 + $0x30] sm:$0xff]
  %v46 = vld [vmem:[%s1 + $0x38] sm:$0xff]
  %v47 = vld [vmem:[%s1 + $0x40] sm:$0xff]
  %vm48 = vcmask 588800
  %v50 = vsel %vm48, %v37, 0
  %v53 = vsel %vm48, %v38, 0
  %55 = vmatprep.subr.mxu0 0.0
  %56 = vmatpush1.msra.mxu0 %v39
  %57 = vmatprep.subr.mxu0 0.0
  %58 = vmatpush1.msra.mxu0 %v40
  %59 = vmatprep.subr.mxu0 0.0
  %60 = vmatpush1.msra.mxu0 %v41
  %61 = vmatprep.subr.mxu0 0.0
  %62 = vmatpush1.msra.mxu0 %v42
  %63 = vmatprep.subr.mxu0 0.0
  %64 = vmatpush1.msra.mxu0 %v43
  %65 = vmatprep.subr.mxu0 0.0
  %66 = vmatpush1.msra.mxu0 %v44
  %67 = vmatprep.subr.mxu0 0.0
  %68 = vmatpush1.msra.mxu0 %v45
  %69 = vmatprep.subr.mxu0 0.0
  %70 = vmatpush1.msra.mxu0 %v46
  %71 = vmatprep.subr.mxu0 0.0
  %72 = vmatpush1.msra.mxu0 %v47
  %73 = vmatprep.subr.mxu0 0.0
  %74 = vmatpush1.msra.mxu0 0.0
  %75 = vmatprep.subr.mxu0 0.0
  %76 = vmatpush1.msra.mxu0 0.0
  %77 = vmatprep.subr.mxu0 0.0
  %78 = vmatpush1.msra.mxu0 0.0
  %79 = vmatprep.subr.mxu0 0.0
  %80 = vmatpush1.msra.mxu0 0.0
  %81 = vmatprep.subr.mxu0 0.0
  %82 = vmatpush1.msra.mxu0 0.0
  %83 = vmatprep.subr.mxu0 0.0
  %84 = vmatpush1.msra.mxu0 0.0
  %85 = vmatprep.subr.mxu0 0.0
  %86 = vmatpush1.msra.mxu0 0.0
  %87 = vmatprep.subr.mxu0 0.0
  %88 = vmatpush1.msra.mxu0 0.0
  %89 = vmatprep.subr.mxu0 0.0
  %90 = vmatpush1.msra.mxu0 0.0
  %91 = vmatprep.subr.mxu0 0.0
  %92 = vmatpush1.msra.mxu0 0.0
  %93 = vmatprep.subr.mxu0 0.0
  %94 = vmatpush1.msra.mxu0 0.0
  %95 = vmatprep.subr.mxu0 0.0
  %96 = vmatpush1.msra.mxu0 0.0
  %97 = vmatprep.subr.mxu0 0.0
  %98 = vmatpush1.msra.mxu0 0.0
  %99 = vmatprep.subr.mxu0 0.0
  %100 = vmatpush1.msra.mxu0 0.0
  %101 = vmatprep.subr.mxu0 0.0
  %102 = vmatpush1.msra.mxu0 0.0
  %103 = vmatprep.subr.mxu0 0.0
  %104 = vmatpush1.msra.mxu0 0.0
  %105 = vmatprep.subr.mxu0 0.0
  %106 = vmatpush1.msra.mxu0 0.0
  %107 = vmatprep.subr.mxu0 0.0
  %108 = vmatpush1.msra.mxu0 0.0
  %109 = vmatprep.subr.mxu0 0.0
  %110 = vmatpush1.msra.mxu0 0.0
  %111 = vmatprep.subr.mxu0 0.0
  %112 = vmatpush1.msra.mxu0 0.0
  %113 = vmatprep.subr.mxu0 0.0
  %114 = vmatpush1.msra.mxu0 0.0
  %115 = vmatprep.subr.mxu0 0.0
  %116 = vmatpush1.msra.mxu0 0.0
  %117 = vmatprep.subr.mxu0 0.0
  %118 = vmatpush1.msra.mxu0 0.0
  %119 = vmatprep.mubr.f32.mxu0 0.0
  %120 = vmatmul.mubr.f32.gmra.mrb[0].mxu0 %v50
  %v121 = vpop.f32.mrb[0].mxu0
  %v122 = vadd.f32 0.0, %v121
  %v123 = vpop.f32.mrb[0].mxu0
  %124 = vmatprep.mubr.f32.mxu0 0.0
  %125 = vmatmul.mubr.f32.gmra.mrb[0].mxu0 %v53
  %v126 = vpop.f32.mrb[0].mxu0
  %v127 = vadd.f32 0.0, %v126
  %v128 = vpop.f32.mrb[0].mxu0
  %129 = vdwg.mxu0
  %v131 = vlaneseq
  %v132 = vshrl.u32 %v131, 7
  %v133 = vsub.s32 0, %v132
  %v134 = vrot.slane %v29, %v133
  %v136 = vadd.f32 %v134, %v122
  %v137 = vadd.f32 %v134, %v127
  %s138 = scalar_lea.vmem %s0, 16
  %v139 = vld [vmem:[%s138] sm:$0xff]
  %v140 = vld [vmem:[%s138 + $0x8] sm:$0xff]
  %s141 = scalar_lea.vmem %s1, 72
  %v142 = vld [vmem:[%s141] sm:$0xff]
  %v143 = vld [vmem:[%s141 + $0x8] sm:$0xff]
  %v144 = vld [vmem:[%s141 + $0x10] sm:$0xff]
  %v145 = vld [vmem:[%s141 + $0x18] sm:$0xff]
  %v146 = vld [vmem:[%s141 + $0x20] sm:$0xff]
  %v147 = vld [vmem:[%s141 + $0x28] sm:$0xff]
  %v148 = vld [vmem:[%s141 + $0x30] sm:$0xff]
  %v149 = vld [vmem:[%s141 + $0x38] sm:$0xff]
  %v150 = vld [vmem:[%s141 + $0x40] sm:$0xff]
  %v152 = vsel %vm48, %v139, 0
  %v155 = vsel %vm48, %v140, 0
  %157 = vmatprep.subr.mxu0 0.0
  %158 = vmatpush1.msra.mxu0 %v142
  %159 = vmatprep.subr.mxu0 0.0
  %160 = vmatpush1.msra.mxu0 %v143
  %161 = vmatprep.subr.mxu0 0.0
  %162 = vmatpush1.msra.mxu0 %v144
  %163 = vmatprep.subr.mxu0 0.0
  %164 = vmatpush1.msra.mxu0 %v145
  %165 = vmatprep.subr.mxu0 0.0
  %166 = vmatpush1.msra.mxu0 %v146
  %167 = vmatprep.subr.mxu0 0.0
  %168 = vmatpush1.msra.mxu0 %v147
  %169 = vmatprep.subr.mxu0 0.0
  %170 = vmatpush1.msra.mxu0 %v148
  %171 = vmatprep.subr.mxu0 0.0
  %172 = vmatpush1.msra.mxu0 %v149
  %173 = vmatprep.subr.mxu0 0.0
  %174 = vmatpush1.msra.mxu0 %v150
  %175 = vmatprep.subr.mxu0 0.0
  %176 = vmatpush1.msra.mxu0 0.0
  %177 = vmatprep.subr.mxu0 0.0
  %178 = vmatpush1.msra.mxu0 0.0
  %179 = vmatprep.subr.mxu0 0.0
  %180 = vmatpush1.msra.mxu0 0.0
  %181 = vmatprep.subr.mxu0 0.0
  %182 = vmatpush1.msra.mxu0 0.0
  %183 = vmatprep.subr.mxu0 0.0
  %184 = vmatpush1.msra.mxu0 0.0
  %185 = vmatprep.subr.mxu0 0.0
  %186 = vmatpush1.msra.mxu0 0.0
  %187 = vmatprep.subr.mxu0 0.0
  %188 = vmatpush1.msra.mxu0 0.0
  %189 = vmatprep.subr.mxu0 0.0
  %190 = vmatpush1.msra.mxu0 0.0
  %191 = vmatprep.subr.mxu0 0.0
  %192 = vmatpush1.msra.mxu0 0.0
  %193 = vmatprep.subr.mxu0 0.0
  %194 = vmatpush1.msra.mxu0 0.0
  %195 = vmatprep.subr.mxu0 0.0
  %196 = vmatpush1.msra.mxu0 0.0
  %197 = vmatprep.subr.mxu0 0.0
  %198 = vmatpush1.msra.mxu0 0.0
  %199 = vmatprep.subr.mxu0 0.0
  %200 = vmatpush1.msra.mxu0 0.0
  %201 = vmatprep.subr.mxu0 0.0
  %202 = vmatpush1.msra.mxu0 0.0
  %203 = vmatprep.subr.mxu0 0.0
  %204 = vmatpush1.msra.mxu0 0.0
  %205 = vmatprep.subr.mxu0 0.0
  %206 = vmatpush1.msra.mxu0 0.0
  %207 = vmatprep.subr.mxu0 0.0
  %208 = vmatpush1.msra.mxu0 0.0
  %209 = vmatprep.subr.mxu0 0.0
  %210 = vmatpush1.msra.mxu0 0.0
  %211 = vmatprep.subr.mxu0 0.0
  %212 = vmatpush1.msra.mxu0 0.0
  %213 = vmatprep.subr.mxu0 0.0
  %214 = vmatpush1.msra.mxu0 0.0
  %215 = vmatprep.subr.mxu0 0.0
  %216 = vmatpush1.msra.mxu0 0.0
  %217 = vmatprep.subr.mxu0 0.0
  %218 = vmatpush1.msra.mxu0 0.0
  %219 = vmatprep.subr.mxu0 0.0
  %220 = vmatpush1.msra.mxu0 0.0
  %221 = vmatprep.mubr.f32.mxu0 0.0
  %222 = vmatmul.mubr.f32.gmra.mrb[0].mxu0 %v152
  %v223 = vpop.f32.mrb[0].mxu0
  %v224 = vadd.f32 0.0, %v223
  %v225 = vpop.f32.mrb[0].mxu0
  %226 = vmatprep.mubr.f32.mxu0 0.0
  %227 = vmatmul.mubr.f32.gmra.mrb[0].mxu0 %v155
  %v228 = vpop.f32.mrb[0].mxu0
  %v229 = vadd.f32 0.0, %v228
  %v230 = vpop.f32.mrb[0].mxu0
  %231 = vdwg.mxu0
  %v232 = vadd.f32 %v136, %v224
  %v233 = vadd.f32 %v137, %v229
  %s234 = scalar_lea.vmem %s0, 32
  %v235 = vld [vmem:[%s234] sm:$0xff]
  %v236 = vld [vmem:[%s234 + $0x8] sm:$0xff]
  %s237 = scalar_lea.vmem %s1, 144
  %v238 = vld [vmem:[%s237] sm:$0xff]
  %v239 = vld [vmem:[%s237 + $0x8] sm:$0xff]
  %v240 = vld [vmem:[%s237 + $0x10] sm:$0xff]
  %v241 = vld [vmem:[%s237 + $0x18] sm:$0xff]
  %v242 = vld [vmem:[%s237 + $0x20] sm:$0xff]
  %v243 = vld [vmem:[%s237 + $0x28] sm:$0xff]
  %v244 = vld [vmem:[%s237 + $0x30] sm:$0xff]
  %v245 = vld [vmem:[%s237 + $0x38] sm:$0xff]
  %v246 = vld [vmem:[%s237 + $0x40] sm:$0xff]
  %v248 = vsel %vm48, %v235, 0
  %v251 = vsel %vm48, %v236, 0
  %253 = vmatprep.subr.mxu0 0.0
  %254 = vmatpush1.msra.mxu0 %v238
  %255 = vmatprep.subr.mxu0 0.0
  %256 = vmatpush1.msra.mxu0 %v239
  %257 = vmatprep.subr.mxu0 0.0
  %258 = vmatpush1.msra.mxu0 %v240
  %259 = vmatprep.subr.mxu0 0.0
  %260 = vmatpush1.msra.mxu0 %v241
  %261 = vmatprep.subr.mxu0 0.0
  %262 = vmatpush1.msra.mxu0 %v242
  %263 = vmatprep.subr.mxu0 0.0
  %264 = vmatpush1.msra.mxu0 %v243
  %265 = vmatprep.subr.mxu0 0.0
  %266 = vmatpush1.msra.mxu0 %v244
  %267 = vmatprep.subr.mxu0 0.0
  %268 = vmatpush1.msra.mxu0 %v245
  %269 = vmatprep.subr.mxu0 0.0
  %270 = vmatpush1.msra.mxu0 %v246
  %271 = vmatprep.subr.mxu0 0.0
  %272 = vmatpush1.msra.mxu0 0.0
  %273 = vmatprep.subr.mxu0 0.0
  %274 = vmatpush1.msra.mxu0 0.0
  %275 = vmatprep.subr.mxu0 0.0
  %276 = vmatpush1.msra.mxu0 0.0
  %277 = vmatprep.subr.mxu0 0.0
  %278 = vmatpush1.msra.mxu0 0.0
  %279 = vmatprep.subr.mxu0 0.0
  %280 = vmatpush1.msra.mxu0 0.0
  %281 = vmatprep.subr.mxu0 0.0
  %282 = vmatpush1.msra.mxu0 0.0
  %283 = vmatprep.subr.mxu0 0.0
  %284 = vmatpush1.msra.mxu0 0.0
  %285 = vmatprep.subr.mxu0 0.0
  %286 = vmatpush1.msra.mxu0 0.0
  %287 = vmatprep.subr.mxu0 0.0
  %288 = vmatpush1.msra.mxu0 0.0
  %289 = vmatprep.subr.mxu0 0.0
  %290 = vmatpush1.msra.mxu0 0.0
  %291 = vmatprep.subr.mxu0 0.0
  %292 = vmatpush1.msra.mxu0 0.0
  %293 = vmatprep.subr.mxu0 0.0
  %294 = vmatpush1.msra.mxu0 0.0
  %295 = vmatprep.subr.mxu0 0.0
  %296 = vmatpush1.msra.mxu0 0.0
  %297 = vmatprep.subr.mxu0 0.0
  %298 = vmatpush1.msra.mxu0 0.0
  %299 = vmatprep.subr.mxu0 0.0
  %300 = vmatpush1.msra.mxu0 0.0
  %301 = vmatprep.subr.mxu0 0.0
  %302 = vmatpush1.msra.mxu0 0.0
  %303 = vmatprep.subr.mxu0 0.0
  %304 = vmatpush1.msra.mxu0 0.0
  %305 = vmatprep.subr.mxu0 0.0
  %306 = vmatpush1.msra.mxu0 0.0
  %307 = vmatprep.subr.mxu0 0.0
  %308 = vmatpush1.msra.mxu0 0.0
  %309 = vmatprep.subr.mxu0 0.0
  %310 = vmatpush1.msra.mxu0 0.0
  %311 = vmatprep.subr.mxu0 0.0
  %312 = vmatpush1.msra.mxu0 0.0
  %313 = vmatprep.subr.mxu0 0.0
  %314 = vmatpush1.msra.mxu0 0.0
  %315 = vmatprep.subr.mxu0 0.0
  %316 = vmatpush1.msra.mxu0 0.0
  %317 = vmatprep.mubr.f32.mxu0 0.0
  %318 = vmatmul.mubr.f32.gmra.mrb[0].mxu0 %v248
  %v319 = vpop.f32.mrb[0].mxu0
  %v320 = vadd.f32 0.0, %v319
  %v321 = vpop.f32.mrb[0].mxu0
  %322 = vmatprep.mubr.f32.mxu0 0.0
  %323 = vmatmul.mubr.f32.gmra.mrb[0].mxu0 %v251
  %v324 = vpop.f32.mrb[0].mxu0
  %v325 = vadd.f32 0.0, %v324
  %v326 = vpop.f32.mrb[0].mxu0
  %327 = vdwg.mxu0
  %v328 = vadd.f32 %v232, %v320
  %v329 = vadd.f32 %v233, %v325
  %v330 = vmax.f32 %v328, 0.0
  %v331 = vmax.f32 %v329, 0.0
  %v332 = vld [vmem:[%s3] sm:$0xff]
  %v333 = vld [vmem:[%s3 + $0x8] sm:$0xff]
  %v334 = vld [vmem:[%s3 + $0x10] sm:$0xff]
  %v335 = vld [vmem:[%s3 + $0x18] sm:$0xff]
  %v336 = vld [vmem:[%s3 + $0x20] sm:$0xff]
  %v337 = vld [vmem:[%s3 + $0x28] sm:$0xff]
  %v338 = vld [vmem:[%s3 + $0x30] sm:$0xff]
  %v339 = vld [vmem:[%s3 + $0x38] sm:$0xff]
  %v340 = vld [vmem:[%s3 + $0x40] sm:$0xff]
  %v341 = vld [vmem:[%s3 + $0x48] sm:$0xff]
  %v342 = vld [vmem:[%s3 + $0x50] sm:$0xff]
  %v343 = vld [vmem:[%s3 + $0x58] sm:$0xff]
  %v344 = vld [vmem:[%s3 + $0x60] sm:$0xff]
  %v345 = vld [vmem:[%s3 + $0x68] sm:$0xff]
  %v346 = vld [vmem:[%s3 + $0x70] sm:$0xff]
  %v347 = vld [vmem:[%s3 + $0x78] sm:$0xff]
  %348 = vmatprep.subr.mxu0 0.0
  %349 = vmatpush1.msra.mxu0 %v332
  %350 = vmatprep.subr.mxu0 0.0
  %351 = vmatpush1.msra.mxu0 %v333
  %352 = vmatprep.subr.mxu0 0.0
  %353 = vmatpush1.msra.mxu0 %v334
  %354 = vmatprep.subr.mxu0 0.0
  %355 = vmatpush1.msra.mxu0 %v335
  %356 = vmatprep.subr.mxu0 0.0
  %357 = vmatpush1.msra.mxu0 %v336
  %358 = vmatprep.subr.mxu0 0.0
  %359 = vmatpush1.msra.mxu0 %v337
  %360 = vmatprep.subr.mxu0 0.0
  %361 = vmatpush1.msra.mxu0 %v338
  %362 = vmatprep.subr.mxu0 0.0
  %363 = vmatpush1.msra.mxu0 %v339
  %364 = vmatprep.subr.mxu0 0.0
  %365 = vmatpush1.msra.mxu0 %v340
  %366 = vmatprep.subr.mxu0 0.0
  %367 = vmatpush1.msra.mxu0 %v341
  %368 = vmatprep.subr.mxu0 0.0
  %369 = vmatpush1.msra.mxu0 %v342
  %370 = vmatprep.subr.mxu0 0.0
  %371 = vmatpush1.msra.mxu0 %v343
  %372 = vmatprep.subr.mxu0 0.0
  %373 = vmatpush1.msra.mxu0 %v344
  %374 = vmatprep.subr.mxu0 0.0
  %375 = vmatpush1.msra.mxu0 %v345
  %376 = vmatprep.subr.mxu0 0.0
  %377 = vmatpush1.msra.mxu0 %v346
  %378 = vmatprep.subr.mxu0 0.0
  %379 = vmatpush1.msra.mxu0 %v347
  %380 = vmatprep.subr.mxu0 0.0
  %381 = vmatpush1.msra.mxu0 0.0
  %382 = vmatprep.subr.mxu0 0.0
  %383 = vmatpush1.msra.mxu0 0.0
  %384 = vmatprep.subr.mxu0 0.0
  %385 = vmatpush1.msra.mxu0 0.0
  %386 = vmatprep.subr.mxu0 0.0
  %387 = vmatpush1.msra.mxu0 0.0
  %388 = vmatprep.subr.mxu0 0.0
  %389 = vmatpush1.msra.mxu0 0.0
  %390 = vmatprep.subr.mxu0 0.0
  %391 = vmatpush1.msra.mxu0 0.0
  %392 = vmatprep.subr.mxu0 0.0
  %393 = vmatpush1.msra.mxu0 0.0
  %394 = vmatprep.subr.mxu0 0.0
  %395 = vmatpush1.msra.mxu0 0.0
  %396 = vmatprep.subr.mxu0 0.0
  %397 = vmatpush1.msra.mxu0 0.0
  %398 = vmatprep.subr.mxu0 0.0
  %399 = vmatpush1.msra.mxu0 0.0
  %400 = vmatprep.subr.mxu0 0.0
  %401 = vmatpush1.msra.mxu0 0.0
  %402 = vmatprep.subr.mxu0 0.0
  %403 = vmatpush1.msra.mxu0 0.0
  %404 = vmatprep.subr.mxu0 0.0
  %405 = vmatpush1.msra.mxu0 0.0
  %406 = vmatprep.subr.mxu0 0.0
  %407 = vmatpush1.msra.mxu0 0.0
  %408 = vmatprep.subr.mxu0 0.0
  %409 = vmatpush1.msra.mxu0 0.0
  %410 = vmatprep.subr.mxu0 0.0
  %411 = vmatpush1.msra.mxu0 0.0
  %412 = vmatprep.mubr.f32.mxu0 0.0
  %413 = vmatmul.mubr.f32.gmra.mrb[0].mxu0 %v330
  %v414 = vpop.f32.mrb[0].mxu0
  %v415 = vadd.f32 0.0, %v414
  %v416 = vpop.f32.mrb[0].mxu0
  %417 = vmatprep.mubr.f32.mxu0 0.0
  %418 = vmatmul.mubr.f32.gmra.mrb[0].mxu0 %v331
  %v419 = vpop.f32.mrb[0].mxu0
  %v420 = vadd.f32 0.0, %v419
  %v421 = vpop.f32.mrb[0].mxu0
  %422 = vdwg.mxu0
  %v423 = vadd.f32 %v35, %v415
  %v424 = vadd.f32 %v35, %v420
  %425 = vmatprep.subr.mxu0 0.0
  %426 = vmatpush1.msra.mxu0 %v39
  %427 = vmatprep.subr.mxu0 0.0
  %428 = vmatpush1.msra.mxu0 %v40
  %429 = vmatprep.subr.mxu0 0.0
  %430 = vmatpush1.msra.mxu0 %v41
  %431 = vmatprep.subr.mxu0 0.0
  %432 = vmatpush1.msra.mxu0 %v42
  %433 = vmatprep.subr.mxu0 0.0
  %434 = vmatpush1.msra.mxu0 %v43
  %435 = vmatprep.subr.mxu0 0.0
  %436 = vmatpush1.msra.mxu0 %v44
  %437 = vmatprep.subr.mxu0 0.0
  %438 = vmatpush1.msra.mxu0 %v45
  %439 = vmatprep.subr.mxu0 0.0
  %440 = vmatpush1.msra.mxu0 %v46
  %441 = vmatprep.subr.mxu0 0.0
  %442 = vmatpush1.msra.mxu0 %v47
  %443 = vmatprep.subr.mxu0 0.0
  %444 = vmatpush1.msra.mxu0 0.0
  %445 = vmatprep.subr.mxu0 0.0
  %446 = vmatpush1.msra.mxu0 0.0
  %447 = vmatprep.subr.mxu0 0.0
  %448 = vmatpush1.msra.mxu0 0.0
  %449 = vmatprep.subr.mxu0 0.0
  %450 = vmatpush1.msra.mxu0 0.0
  %451 = vmatprep.subr.mxu0 0.0
  %452 = vmatpush1.msra.mxu0 0.0
  %453 = vmatprep.subr.mxu0 0.0
  %454 = vmatpush1.msra.mxu0 0.0
  %455 = vmatprep.subr.mxu0 0.0
  %456 = vmatpush1.msra.mxu0 0.0
  %457 = vmatprep.subr.mxu0 0.0
  %458 = vmatpush1.msra.mxu0 0.0
  %459 = vmatprep.subr.mxu0 0.0
  %460 = vmatpush1.msra.mxu0 0.0
  %461 = vmatprep.subr.mxu0 0.0
  %462 = vmatpush1.msra.mxu0 0.0
  %463 = vmatprep.subr.mxu0 0.0
  %464 = vmatpush1.msra.mxu0 0.0
  %465 = vmatprep.subr.mxu0 0.0
  %466 = vmatpush1.msra.mxu0 0.0
  %467 = vmatprep.subr.mxu0 0.0
  %468 = vmatpush1.msra.mxu0 0.0
  %469 = vmatprep.subr.mxu0 0.0
  %470 = vmatpush1.msra.mxu0 0.0
  %471 = vmatprep.subr.mxu0 0.0
  %472 = vmatpush1.msra.mxu0 0.0
  %473 = vmatprep.subr.mxu0 0.0
  %474 = vmatpush1.msra.mxu0 0.0
  %475 = vmatprep.subr.mxu0 0.0
  %476 = vmatpush1.msra.mxu0 0.0
  %477 = vmatprep.subr.mxu0 0.0
  %478 = vmatpush1.msra.mxu0 0.0
  %479 = vmatprep.subr.mxu0 0.0
  %480 = vmatpush1.msra.mxu0 0.0
  %481 = vmatprep.subr.mxu0 0.0
  %482 = vmatpush1.msra.mxu0 0.0
  %483 = vmatprep.subr.mxu0 0.0
  %484 = vmatpush1.msra.mxu0 0.0
  %485 = vmatprep.subr.mxu0 0.0
  %486 = vmatpush1.msra.mxu0 0.0
  %487 = vmatprep.subr.mxu0 0.0
  %488 = vmatpush1.msra.mxu0 0.0
  %489 = vmatprep.mubr.f32.mxu0 0.0
  %490 = vmatmul.mubr.f32.gmra.mrb[0].mxu0 %v152
  %v491 = vpop.f32.mrb[0].mxu0
  %v492 = vadd.f32 0.0, %v491
  %v493 = vpop.f32.mrb[0].mxu0
  %494 = vmatprep.mubr.f32.mxu0 0.0
  %495 = vmatmul.mubr.f32.gmra.mrb[0].mxu0 %v155
  %v496 = vpop.f32.mrb[0].mxu0
  %v497 = vadd.f32 0.0, %v496
  %v498 = vpop.f32.mrb[0].mxu0
  %499 = vdwg.mxu0
  %v500 = vadd.f32 %v134, %v492
  %v501 = vadd.f32 %v134, %v497
  %502 = vmatprep.subr.mxu0 0.0
  %503 = vmatpush1.msra.mxu0 %v142
  %504 = vmatprep.subr.mxu0 0.0
  %505 = vmatpush1.msra.mxu0 %v143
  %506 = vmatprep.subr.mxu0 0.0
  %507 = vmatpush1.msra.mxu0 %v144
  %508 = vmatprep.subr.mxu0 0.0
  %509 = vmatpush1.msra.mxu0 %v145
  %510 = vmatprep.subr.mxu0 0.0
  %511 = vmatpush1.msra.mxu0 %v146
  %512 = vmatprep.subr.mxu0 0.0
  %513 = vmatpush1.msra.mxu0 %v147
  %514 = vmatprep.subr.mxu0 0.0
  %515 = vmatpush1.msra.mxu0 %v148
  %516 = vmatprep.subr.mxu0 0.0
  %517 = vmatpush1.msra.mxu0 %v149
  %518 = vmatprep.subr.mxu0 0.0
  %519 = vmatpush1.msra.mxu0 %v150
  %520 = vmatprep.subr.mxu0 0.0
  %521 = vmatpush1.msra.mxu0 0.0
  %522 = vmatprep.subr.mxu0 0.0
  %523 = vmatpush1.msra.mxu0 0.0
  %524 = vmatprep.subr.mxu0 0.0
  %525 = vmatpush1.msra.mxu0 0.0
  %526 = vmatprep.subr.mxu0 0.0
  %527 = vmatpush1.msra.mxu0 0.0
  %528 = vmatprep.subr.mxu0 0.0
  %529 = vmatpush1.msra.mxu0 0.0
  %530 = vmatprep.subr.mxu0 0.0
  %531 = vmatpush1.msra.mxu0 0.0
  %532 = vmatprep.subr.mxu0 0.0
  %533 = vmatpush1.msra.mxu0 0.0
  %534 = vmatprep.subr.mxu0 0.0
  %535 = vmatpush1.msra.mxu0 0.0
  %536 = vmatprep.subr.mxu0 0.0
  %537 = vmatpush1.msra.mxu0 0.0
  %538 = vmatprep.subr.mxu0 0.0
  %539 = vmatpush1.msra.mxu0 0.0
  %540 = vmatprep.subr.mxu0 0.0
  %541 = vmatpush1.msra.mxu0 0.0
  %542 = vmatprep.subr.mxu0 0.0
  %543 = vmatpush1.msra.mxu0 0.0
  %544 = vmatprep.subr.mxu0 0.0
  %545 = vmatpush1.msra.mxu0 0.0
  %546 = vmatprep.subr.mxu0 0.0
  %547 = vmatpush1.msra.mxu0 0.0
  %548 = vmatprep.subr.mxu0 0.0
  %549 = vmatpush1.msra.mxu0 0.0
  %550 = vmatprep.subr.mxu0 0.0
  %551 = vmatpush1.msra.mxu0 0.0
  %552 = vmatprep.subr.mxu0 0.0
  %553 = vmatpush1.msra.mxu0 0.0
  %554 = vmatprep.subr.mxu0 0.0
  %555 = vmatpush1.msra.mxu0 0.0
  %556 = vmatprep.subr.mxu0 0.0
  %557 = vmatpush1.msra.mxu0 0.0
  %558 = vmatprep.subr.mxu0 0.0
  %559 = vmatpush1.msra.mxu0 0.0
  %560 = vmatprep.subr.mxu0 0.0
  %561 = vmatpush1.msra.mxu0 0.0
  %562 = vmatprep.subr.mxu0 0.0
  %563 = vmatpush1.msra.mxu0 0.0
  %564 = vmatprep.subr.mxu0 0.0
  %565 = vmatpush1.msra.mxu0 0.0
  %566 = vmatprep.mubr.f32.mxu0 0.0
  %567 = vmatmul.mubr.f32.gmra.mrb[0].mxu0 %v248
  %v568 = vpop.f32.mrb[0].mxu0
  %v569 = vadd.f32 0.0, %v568
  %v570 = vpop.f32.mrb[0].mxu0
  %571 = vmatprep.mubr.f32.mxu0 0.0
  %572 = vmatmul.mubr.f32.gmra.mrb[0].mxu0 %v251
  %v573 = vpop.f32.mrb[0].mxu0
  %v574 = vadd.f32 0.0, %v573
  %v575 = vpop.f32.mrb[0].mxu0
  %576 = vdwg.mxu0
  %v577 = vadd.f32 %v500, %v569
  %v578 = vadd.f32 %v501, %v574
  %s579 = scalar_lea.vmem %s0, 48
  %v580 = vld [vmem:[%s579] sm:$0xff]
  %v581 = vld [vmem:[%s579 + $0x8] sm:$0xff]
  %v583 = vsel %vm48, %v580, 0
  %v586 = vsel %vm48, %v581, 0
  %588 = vmatprep.subr.mxu0 0.0
  %589 = vmatpush1.msra.mxu0 %v238
  %590 = vmatprep.subr.mxu0 0.0
  %591 = vmatpush1.msra.mxu0 %v239
  %592 = vmatprep.subr.mxu0 0.0
  %593 = vmatpush1.msra.mxu0 %v240
  %594 = vmatprep.subr.mxu0 0.0
  %595 = vmatpush1.msra.mxu0 %v241
  %596 = vmatprep.subr.mxu0 0.0
  %597 = vmatpush1.msra.mxu0 %v242
  %598 = vmatprep.subr.mxu0 0.0
  %599 = vmatpush1.msra.mxu0 %v243
  %600 = vmatprep.subr.mxu0 0.0
  %601 = vmatpush1.msra.mxu0 %v244
  %602 = vmatprep.subr.mxu0 0.0
  %603 = vmatpush1.msra.mxu0 %v245
  %604 = vmatprep.subr.mxu0 0.0
  %605 = vmatpush1.msra.mxu0 %v246
  %606 = vmatprep.subr.mxu0 0.0
  %607 = vmatpush1.msra.mxu0 0.0
  %608 = vmatprep.subr.mxu0 0.0
  %609 = vmatpush1.msra.mxu0 0.0
  %610 = vmatprep.subr.mxu0 0.0
  %611 = vmatpush1.msra.mxu0 0.0
  %612 = vmatprep.subr.mxu0 0.0
  %613 = vmatpush1.msra.mxu0 0.0
  %614 = vmatprep.subr.mxu0 0.0
  %615 = vmatpush1.msra.mxu0 0.0
  %616 = vmatprep.subr.mxu0 0.0
  %617 = vmatpush1.msra.mxu0 0.0
  %618 = vmatprep.subr.mxu0 0.0
  %619 = vmatpush1.msra.mxu0 0.0
  %620 = vmatprep.subr.mxu0 0.0
  %621 = vmatpush1.msra.mxu0 0.0
  %622 = vmatprep.subr.mxu0 0.0
  %623 = vmatpush1.msra.mxu0 0.0
  %624 = vmatprep.subr.mxu0 0.0
  %625 = vmatpush1.msra.mxu0 0.0
  %626 = vmatprep.subr.mxu0 0.0
  %627 = vmatpush1.msra.mxu0 0.0
  %628 = vmatprep.subr.mxu0 0.0
  %629 = vmatpush1.msra.mxu0 0.0
  %630 = vmatprep.subr.mxu0 0.0
  %631 = vmatpush1.msra.mxu0 0.0
  %632 = vmatprep.subr.mxu0 0.0
  %633 = vmatpush1.msra.mxu0 0.0
  %634 = vmatprep.subr.mxu0 0.0
  %635 = vmatpush1.msra.mxu0 0.0
  %636 = vmatprep.subr.mxu0 0.0
  %637 = vmatpush1.msra.mxu0 0.0
  %638 = vmatprep.subr.mxu0 0.0
  %639 = vmatpush1.msra.mxu0 0.0
  %640 = vmatprep.subr.mxu0 0.0
  %641 = vmatpush1.msra.mxu0 0.0
  %642 = vmatprep.subr.mxu0 0.0
  %643 = vmatpush1.msra.mxu0 0.0
  %644 = vmatprep.subr.mxu0 0.0
  %645 = vmatpush1.msra.mxu0 0.0
  %646 = vmatprep.subr.mxu0 0.0
  %647 = vmatpush1.msra.mxu0 0.0
  %648 = vmatprep.subr.mxu0 0.0
  %649 = vmatpush1.msra.mxu0 0.0
  %650 = vmatprep.subr.mxu0 0.0
  %651 = vmatpush1.msra.mxu0 0.0
  %652 = vmatprep.mubr.f32.mxu0 0.0
  %653 = vmatmul.mubr.f32.gmra.mrb[0].mxu0 %v583
  %v654 = vpop.f32.mrb[0].mxu0
  %v655 = vadd.f32 0.0, %v654
  %v656 = vpop.f32.mrb[0].mxu0
  %657 = vmatprep.mubr.f32.mxu0 0.0
  %658 = vmatmul.mubr.f32.gmra.mrb[0].mxu0 %v586
  %v659 = vpop.f32.mrb[0].mxu0
  %v660 = vadd.f32 0.0, %v659
  %v661 = vpop.f32.mrb[0].mxu0
  %662 = vdwg.mxu0
  %v663 = vadd.f32 %v577, %v655
  %v664 = vadd.f32 %v578, %v660
  %v665 = vmax.f32 %v663, 0.0
  %v666 = vmax.f32 %v664, 0.0
  %s667 = scalar_lea.vmem %s3, 128
  %v668 = vld [vmem:[%s667] sm:$0xff]
  %v669 = vld [vmem:[%s667 + $0x8] sm:$0xff]
  %v670 = vld [vmem:[%s667 + $0x10] sm:$0xff]
  %v671 = vld [vmem:[%s667 + $0x18] sm:$0xff]
  %v672 = vld [vmem:[%s667 + $0x20] sm:$0xff]
  %v673 = vld [vmem:[%s667 + $0x28] sm:$0xff]
  %v674 = vld [vmem:[%s667 + $0x30] sm:$0xff]
  %v675 = vld [vmem:[%s667 + $0x38] sm:$0xff]
  %v676 = vld [vmem:[%s667 + $0x40] sm:$0xff]
  %v677 = vld [vmem:[%s667 + $0x48] sm:$0xff]
  %v678 = vld [vmem:[%s667 + $0x50] sm:$0xff]
  %v679 = vld [vmem:[%s667 + $0x58] sm:$0xff]
  %v680 = vld [vmem:[%s667 + $0x60] sm:$0xff]
  %v681 = vld [vmem:[%s667 + $0x68] sm:$0xff]
  %v682 = vld [vmem:[%s667 + $0x70] sm:$0xff]
  %v683 = vld [vmem:[%s667 + $0x78] sm:$0xff]
  %684 = vmatprep.subr.mxu0 0.0
  %685 = vmatpush1.msra.mxu0 %v668
  %686 = vmatprep.subr.mxu0 0.0
  %687 = vmatpush1.msra.mxu0 %v669
  %688 = vmatprep.subr.mxu0 0.0
  %689 = vmatpush1.msra.mxu0 %v670
  %690 = vmatprep.subr.mxu0 0.0
  %691 = vmatpush1.msra.mxu0 %v671
  %692 = vmatprep.subr.mxu0 0.0
  %693 = vmatpush1.msra.mxu0 %v672
  %694 = vmatprep.subr.mxu0 0.0
  %695 = vmatpush1.msra.mxu0 %v673
  %696 = vmatprep.subr.mxu0 0.0
  %697 = vmatpush1.msra.mxu0 %v674
  %698 = vmatprep.subr.mxu0 0.0
  %699 = vmatpush1.msra.mxu0 %v675
  %700 = vmatprep.subr.mxu0 0.0
  %701 = vmatpush1.msra.mxu0 %v676
  %702 = vmatprep.subr.mxu0 0.0
  %703 = vmatpush1.msra.mxu0 %v677
  %704 = vmatprep.subr.mxu0 0.0
  %705 = vmatpush1.msra.mxu0 %v678
  %706 = vmatprep.subr.mxu0 0.0
  %707 = vmatpush1.msra.mxu0 %v679
  %708 = vmatprep.subr.mxu0 0.0
  %709 = vmatpush1.msra.mxu0 %v680
  %710 = vmatprep.subr.mxu0 0.0
  %711 = vmatpush1.msra.mxu0 %v681
  %712 = vmatprep.subr.mxu0 0.0
  %713 = vmatpush1.msra.mxu0 %v682
  %714 = vmatprep.subr.mxu0 0.0
  %715 = vmatpush1.msra.mxu0 %v683
  %716 = vmatprep.subr.mxu0 0.0
  %717 = vmatpush1.msra.mxu0 0.0
  %718 = vmatprep.subr.mxu0 0.0
  %719 = vmatpush1.msra.mxu0 0.0
  %720 = vmatprep.subr.mxu0 0.0
  %721 = vmatpush1.msra.mxu0 0.0
  %722 = vmatprep.subr.mxu0 0.0
  %723 = vmatpush1.msra.mxu0 0.0
  %724 = vmatprep.subr.mxu0 0.0
  %725 = vmatpush1.msra.mxu0 0.0
  %726 = vmatprep.subr.mxu0 0.0
  %727 = vmatpush1.msra.mxu0 0.0
  %728 = vmatprep.subr.mxu0 0.0
  %729 = vmatpush1.msra.mxu0 0.0
  %730 = vmatprep.subr.mxu0 0.0
  %731 = vmatpush1.msra.mxu0 0.0
  %732 = vmatprep.subr.mxu0 0.0
  %733 = vmatpush1.msra.mxu0 0.0
  %734 = vmatprep.subr.mxu0 0.0
  %735 = vmatpush1.msra.mxu0 0.0
  %736 = vmatprep.subr.mxu0 0.0
  %737 = vmatpush1.msra.mxu0 0.0
  %738 = vmatprep.subr.mxu0 0.0
  %739 = vmatpush1.msra.mxu0 0.0
  %740 = vmatprep.subr.mxu0 0.0
  %741 = vmatpush1.msra.mxu0 0.0
  %742 = vmatprep.subr.mxu0 0.0
  %743 = vmatpush1.msra.mxu0 0.0
  %744 = vmatprep.subr.mxu0 0.0
  %745 = vmatpush1.msra.mxu0 0.0
  %746 = vmatprep.subr.mxu0 0.0
  %747 = vmatpush1.msra.mxu0 0.0
  %748 = vmatprep.mubr.f32.mxu0 0.0
  %749 = vmatmul.mubr.f32.gmra.mrb[0].mxu0 %v665
  %v750 = vpop.f32.mrb[0].mxu0
  %v751 = vadd.f32 0.0, %v750
  %v752 = vpop.f32.mrb[0].mxu0
  %753 = vmatprep.mubr.f32.mxu0 0.0
  %754 = vmatmul.mubr.f32.gmra.mrb[0].mxu0 %v666
  %v755 = vpop.f32.mrb[0].mxu0
  %v756 = vadd.f32 0.0, %v755
  %v757 = vpop.f32.mrb[0].mxu0
  %758 = vdwg.mxu0
  %v759 = vadd.f32 %v423, %v751
  %v760 = vadd.f32 %v424, %v756
  %761 = vmatprep.subr.mxu0 0.0
  %762 = vmatpush1.msra.mxu0 %v39
  %763 = vmatprep.subr.mxu0 0.0
  %764 = vmatpush1.msra.mxu0 %v40
  %765 = vmatprep.subr.mxu0 0.0
  %766 = vmatpush1.msra.mxu0 %v41
  %767 = vmatprep.subr.mxu0 0.0
  %768 = vmatpush1.msra.mxu0 %v42
  %769 = vmatprep.subr.mxu0 0.0
  %770 = vmatpush1.msra.mxu0 %v43
  %771 = vmatprep.subr.mxu0 0.0
  %772 = vmatpush1.msra.mxu0 %v44
  %773 = vmatprep.subr.mxu0 0.0
  %774 = vmatpush1.msra.mxu0 %v45
  %775 = vmatprep.subr.mxu0 0.0
  %776 = vmatpush1.msra.mxu0 %v46
  %777 = vmatprep.subr.mxu0 0.0
  %778 = vmatpush1.msra.mxu0 %v47
  %779 = vmatprep.subr.mxu0 0.0
  %780 = vmatpush1.msra.mxu0 0.0
  %781 = vmatprep.subr.mxu0 0.0
  %782 = vmatpush1.msra.mxu0 0.0
  %783 = vmatprep.subr.mxu0 0.0
  %784 = vmatpush1.msra.mxu0 0.0
  %785 = vmatprep.subr.mxu0 0.0
  %786 = vmatpush1.msra.mxu0 0.0
  %787 = vmatprep.subr.mxu0 0.0
  %788 = vmatpush1.msra.mxu0 0.0
  %789 = vmatprep.subr.mxu0 0.0
  %790 = vmatpush1.msra.mxu0 0.0
  %791 = vmatprep.subr.mxu0 0.0
  %792 = vmatpush1.msra.mxu0 0.0
  %793 = vmatprep.subr.mxu0 0.0
  %794 = vmatpush1.msra.mxu0 0.0
  %795 = vmatprep.subr.mxu0 0.0
  %796 = vmatpush1.msra.mxu0 0.0
  %797 = vmatprep.subr.mxu0 0.0
  %798 = vmatpush1.msra.mxu0 0.0
  %799 = vmatprep.subr.mxu0 0.0
  %800 = vmatpush1.msra.mxu0 0.0
  %801 = vmatprep.subr.mxu0 0.0
  %802 = vmatpush1.msra.mxu0 0.0
  %803 = vmatprep.subr.mxu0 0.0
  %804 = vmatpush1.msra.mxu0 0.0
  %805 = vmatprep.subr.mxu0 0.0
  %806 = vmatpush1.msra.mxu0 0.0
  %807 = vmatprep.subr.mxu0 0.0
  %808 = vmatpush1.msra.mxu0 0.0
  %809 = vmatprep.subr.mxu0 0.0
  %810 = vmatpush1.msra.mxu0 0.0
  %811 = vmatprep.subr.mxu0 0.0
  %812 = vmatpush1.msra.mxu0 0.0
  %813 = vmatprep.subr.mxu0 0.0
  %814 = vmatpush1.msra.mxu0 0.0
  %815 = vmatprep.subr.mxu0 0.0
  %816 = vmatpush1.msra.mxu0 0.0
  %817 = vmatprep.subr.mxu0 0.0
  %818 = vmatpush1.msra.mxu0 0.0
  %819 = vmatprep.subr.mxu0 0.0
  %820 = vmatpush1.msra.mxu0 0.0
  %821 = vmatprep.subr.mxu0 0.0
  %822 = vmatpush1.msra.mxu0 0.0
  %823 = vmatprep.subr.mxu0 0.0
  %824 = vmatpush1.msra.mxu0 0.0
  %825 = vmatprep.mubr.f32.mxu0 0.0
  %826 = vmatmul.mubr.f32.gmra.mrb[0].mxu0 %v248
  %v827 = vpop.f32.mrb[0].mxu0
  %v828 = vadd.f32 0.0, %v827
  %v829 = vpop.f32.mrb[0].mxu0
  %830 = vmatprep.mubr.f32.mxu0 0.0
  %831 = vmatmul.mubr.f32.gmra.mrb[0].mxu0 %v251
  %v832 = vpop.f32.mrb[0].mxu0
  %v833 = vadd.f32 0.0, %v832
  %v834 = vpop.f32.mrb[0].mxu0
  %835 = vdwg.mxu0
  %v836 = vadd.f32 %v134, %v828
  %v837 = vadd.f32 %v134, %v833
  %838 = vmatprep.subr.mxu0 0.0
  %839 = vmatpush1.msra.mxu0 %v142
  %840 = vmatprep.subr.mxu0 0.0
  %841 = vmatpush1.msra.mxu0 %v143
  %842 = vmatprep.subr.mxu0 0.0
  %843 = vmatpush1.msra.mxu0 %v144
  %844 = vmatprep.subr.mxu0 0.0
  %845 = vmatpush1.msra.mxu0 %v145
  %846 = vmatprep.subr.mxu0 0.0
  %847 = vmatpush1.msra.mxu0 %v146
  %848 = vmatprep.subr.mxu0 0.0
  %849 = vmatpush1.msra.mxu0 %v147
  %850 = vmatprep.subr.mxu0 0.0
  %851 = vmatpush1.msra.mxu0 %v148
  %852 = vmatprep.subr.mxu0 0.0
  %853 = vmatpush1.msra.mxu0 %v149
  %854 = vmatprep.subr.mxu0 0.0
  %855 = vmatpush1.msra.mxu0 %v150
  %856 = vmatprep.subr.mxu0 0.0
  %857 = vmatpush1.msra.mxu0 0.0
  %858 = vmatprep.subr.mxu0 0.0
  %859 = vmatpush1.msra.mxu0 0.0
  %860 = vmatprep.subr.mxu0 0.0
  %861 = vmatpush1.msra.mxu0 0.0
  %862 = vmatprep.subr.mxu0 0.0
  %863 = vmatpush1.msra.mxu0 0.0
  %864 = vmatprep.subr.mxu0 0.0
  %865 = vmatpush1.msra.mxu0 0.0
  %866 = vmatprep.subr.mxu0 0.0
  %867 = vmatpush1.msra.mxu0 0.0
  %868 = vmatprep.subr.mxu0 0.0
  %869 = vmatpush1.msra.mxu0 0.0
  %870 = vmatprep.subr.mxu0 0.0
  %871 = vmatpush1.msra.mxu0 0.0
  %872 = vmatprep.subr.mxu0 0.0
  %873 = vmatpush1.msra.mxu0 0.0
  %874 = vmatprep.subr.mxu0 0.0
  %875 = vmatpush1.msra.mxu0 0.0
  %876 = vmatprep.subr.mxu0 0.0
  %877 = vmatpush1.msra.mxu0 0.0
  %878 = vmatprep.subr.mxu0 0.0
  %879 = vmatpush1.msra.mxu0 0.0
  %880 = vmatprep.subr.mxu0 0.0
  %881 = vmatpush1.msra.mxu0 0.0
  %882 = vmatprep.subr.mxu0 0.0
  %883 = vmatpush1.msra.mxu0 0.0
  %884 = vmatprep.subr.mxu0 0.0
  %885 = vmatpush1.msra.mxu0 0.0
  %886 = vmatprep.subr.mxu0 0.0
  %887 = vmatpush1.msra.mxu0 0.0
  %888 = vmatprep.subr.mxu0 0.0
  %889 = vmatpush1.msra.mxu0 0.0
  %890 = vmatprep.subr.mxu0 0.0
  %891 = vmatpush1.msra.mxu0 0.0
  %892 = vmatprep.subr.mxu0 0.0
  %893 = vmatpush1.msra.mxu0 0.0
  %894 = vmatprep.subr.mxu0 0.0
  %895 = vmatpush1.msra.mxu0 0.0
  %896 = vmatprep.subr.mxu0 0.0
  %897 = vmatpush1.msra.mxu0 0.0
  %898 = vmatprep.subr.mxu0 0.0
  %899 = vmatpush1.msra.mxu0 0.0
  %900 = vmatprep.subr.mxu0 0.0
  %901 = vmatpush1.msra.mxu0 0.0
  %902 = vmatprep.mubr.f32.mxu0 0.0
  %903 = vmatmul.mubr.f32.gmra.mrb[0].mxu0 %v583
  %v904 = vpop.f32.mrb[0].mxu0
  %v905 = vadd.f32 0.0, %v904
  %v906 = vpop.f32.mrb[0].mxu0
  %907 = vmatprep.mubr.f32.mxu0 0.0
  %908 = vmatmul.mubr.f32.gmra.mrb[0].mxu0 %v586
  %v909 = vpop.f32.mrb[0].mxu0
  %v910 = vadd.f32 0.0, %v909
  %v911 = vpop.f32.mrb[0].mxu0
  %912 = vdwg.mxu0
  %v913 = vadd.f32 %v836, %v905
  %v914 = vadd.f32 %v837, %v910
  %s915 = scalar_lea.vmem %s0, 64
  %v916 = vld [vmem:[%s915] sm:$0xff]
  %v917 = vld [vmem:[%s915 + $0x8] sm:$0xff]
  %v919 = vsel %vm48, %v916, 0
  %v922 = vsel %vm48, %v917, 0
  %924 = vmatprep.subr.mxu0 0.0
  %925 = vmatpush1.msra.mxu0 %v238
  %926 = vmatprep.subr.mxu0 0.0
  %927 = vmatpush1.msra.mxu0 %v239
  %928 = vmatprep.subr.mxu0 0.0
  %929 = vmatpush1.msra.mxu0 %v240
  %930 = vmatprep.subr.mxu0 0.0
  %931 = vmatpush1.msra.mxu0 %v241
  %932 = vmatprep.subr.mxu0 0.0
  %933 = vmatpush1.msra.mxu0 %v242
  %934 = vmatprep.subr.mxu0 0.0
  %935 = vmatpush1.msra.mxu0 %v243
  %936 = vmatprep.subr.mxu0 0.0
  %937 = vmatpush1.msra.mxu0 %v244
  %938 = vmatprep.subr.mxu0 0.0
  %939 = vmatpush1.msra.mxu0 %v245
  %940 = vmatprep.subr.mxu0 0.0
  %941 = vmatpush1.msra.mxu0 %v246
  %942 = vmatprep.subr.mxu0 0.0
  %943 = vmatpush1.msra.mxu0 0.0
  %944 = vmatprep.subr.mxu0 0.0
  %945 = vmatpush1.msra.mxu0 0.0
  %946 = vmatprep.subr.mxu0 0.0
  %947 = vmatpush1.msra.mxu0 0.0
  %948 = vmatprep.subr.mxu0 0.0
  %949 = vmatpush1.msra.mxu0 0.0
  %950 = vmatprep.subr.mxu0 0.0
  %951 = vmatpush1.msra.mxu0 0.0
  %952 = vmatprep.subr.mxu0 0.0
  %953 = vmatpush1.msra.mxu0 0.0
  %954 = vmatprep.subr.mxu0 0.0
  %955 = vmatpush1.msra.mxu0 0.0
  %956 = vmatprep.subr.mxu0 0.0
  %957 = vmatpush1.msra.mxu0 0.0
  %958 = vmatprep.subr.mxu0 0.0
  %959 = vmatpush1.msra.mxu0 0.0
  %960 = vmatprep.subr.mxu0 0.0
  %961 = vmatpush1.msra.mxu0 0.0
  %962 = vmatprep.subr.mxu0 0.0
  %963 = vmatpush1.msra.mxu0 0.0
  %964 = vmatprep.subr.mxu0 0.0
  %965 = vmatpush1.msra.mxu0 0.0
  %966 = vmatprep.subr.mxu0 0.0
  %967 = vmatpush1.msra.mxu0 0.0
  %968 = vmatprep.subr.mxu0 0.0
  %969 = vmatpush1.msra.mxu0 0.0
  %970 = vmatprep.subr.mxu0 0.0
  %971 = vmatpush1.msra.mxu0 0.0
  %972 = vmatprep.subr.mxu0 0.0
  %973 = vmatpush1.msra.mxu0 0.0
  %974 = vmatprep.subr.mxu0 0.0
  %975 = vmatpush1.msra.mxu0 0.0
  %976 = vmatprep.subr.mxu0 0.0
  %977 = vmatpush1.msra.mxu0 0.0
  %978 = vmatprep.subr.mxu0 0.0
  %979 = vmatpush1.msra.mxu0 0.0
  %980 = vmatprep.subr.mxu0 0.0
  %981 = vmatpush1.msra.mxu0 0.0
  %982 = vmatprep.subr.mxu0 0.0
  %983 = vmatpush1.msra.mxu0 0.0
  %984 = vmatprep.subr.mxu0 0.0
  %985 = vmatpush1.msra.mxu0 0.0
  %986 = vmatprep.subr.mxu0 0.0
  %987 = vmatpush1.msra.mxu0 0.0
  %988 = vmatprep.mubr.f32.mxu0 0.0
  %989 = vmatmul.mubr.f32.gmra.mrb[0].mxu0 %v919
  %v990 = vpop.f32.mrb[0].mxu0
  %v991 = vadd.f32 0.0, %v990
  %v992 = vpop.f32.mrb[0].mxu0
  %993 = vmatprep.mubr.f32.mxu0 0.0
  %994 = vmatmul.mubr.f32.gmra.mrb[0].mxu0 %v922
  %v995 = vpop.f32.mrb[0].mxu0
  %v996 = vadd.f32 0.0, %v995
  %v997 = vpop.f32.mrb[0].mxu0
  %998 = vdwg.mxu0
  %v999 = vadd.f32 %v913, %v991
  %v1000 = vadd.f32 %v914, %v996
  %v1001 = vmax.f32 %v999, 0.0
  %v1002 = vmax.f32 %v1000, 0.0
  %s1003 = scalar_lea.vmem %s3, 256
  %v1004 = vld [vmem:[%s1003] sm:$0xff]
  %v1005 = vld [vmem:[%s1003 + $0x8] sm:$0xff]
  %v1006 = vld [vmem:[%s1003 + $0x10] sm:$0xff]
  %v1007 = vld [vmem:[%s1003 + $0x18] sm:$0xff]
  %v1008 = vld [vmem:[%s1003 + $0x20] sm:$0xff]
  %v1009 = vld [vmem:[%s1003 + $0x28] sm:$0xff]
  %v1010 = vld [vmem:[%s1003 + $0x30] sm:$0xff]
  %v1011 = vld [vmem:[%s1003 + $0x38] sm:$0xff]
  %v1012 = vld [vmem:[%s1003 + $0x40] sm:$0xff]
  %v1013 = vld [vmem:[%s1003 + $0x48] sm:$0xff]
  %v1014 = vld [vmem:[%s1003 + $0x50] sm:$0xff]
  %v1015 = vld [vmem:[%s1003 + $0x58] sm:$0xff]
  %v1016 = vld [vmem:[%s1003 + $0x60] sm:$0xff]
  %v1017 = vld [vmem:[%s1003 + $0x68] sm:$0xff]
  %v1018 = vld [vmem:[%s1003 + $0x70] sm:$0xff]
  %v1019 = vld [vmem:[%s1003 + $0x78] sm:$0xff]
  %1020 = vmatprep.subr.mxu0 0.0
  %1021 = vmatpush1.msra.mxu0 %v1004
  %1022 = vmatprep.subr.mxu0 0.0
  %1023 = vmatpush1.msra.mxu0 %v1005
  %1024 = vmatprep.subr.mxu0 0.0
  %1025 = vmatpush1.msra.mxu0 %v1006
  %1026 = vmatprep.subr.mxu0 0.0
  %1027 = vmatpush1.msra.mxu0 %v1007
  %1028 = vmatprep.subr.mxu0 0.0
  %1029 = vmatpush1.msra.mxu0 %v1008
  %1030 = vmatprep.subr.mxu0 0.0
  %1031 = vmatpush1.msra.mxu0 %v1009
  %1032 = vmatprep.subr.mxu0 0.0
  %1033 = vmatpush1.msra.mxu0 %v1010
  %1034 = vmatprep.subr.mxu0 0.0
  %1035 = vmatpush1.msra.mxu0 %v1011
  %1036 = vmatprep.subr.mxu0 0.0
  %1037 = vmatpush1.msra.mxu0 %v1012
  %1038 = vmatprep.subr.mxu0 0.0
  %1039 = vmatpush1.msra.mxu0 %v1013
  %1040 = vmatprep.subr.mxu0 0.0
  %1041 = vmatpush1.msra.mxu0 %v1014
  %1042 = vmatprep.subr.mxu0 0.0
  %1043 = vmatpush1.msra.mxu0 %v1015
  %1044 = vmatprep.subr.mxu0 0.0
  %1045 = vmatpush1.msra.mxu0 %v1016
  %1046 = vmatprep.subr.mxu0 0.0
  %1047 = vmatpush1.msra.mxu0 %v1017
  %1048 = vmatprep.subr.mxu0 0.0
  %1049 = vmatpush1.msra.mxu0 %v1018
  %1050 = vmatprep.subr.mxu0 0.0
  %1051 = vmatpush1.msra.mxu0 %v1019
  %1052 = vmatprep.subr.mxu0 0.0
  %1053 = vmatpush1.msra.mxu0 0.0
  %1054 = vmatprep.subr.mxu0 0.0
  %1055 = vmatpush1.msra.mxu0 0.0
  %1056 = vmatprep.subr.mxu0 0.0
  %1057 = vmatpush1.msra.mxu0 0.0
  %1058 = vmatprep.subr.mxu0 0.0
  %1059 = vmatpush1.msra.mxu0 0.0
  %1060 = vmatprep.subr.mxu0 0.0
  %1061 = vmatpush1.msra.mxu0 0.0
  %1062 = vmatprep.subr.mxu0 0.0
  %1063 = vmatpush1.msra.mxu0 0.0
  %1064 = vmatprep.subr.mxu0 0.0
  %1065 = vmatpush1.msra.mxu0 0.0
  %1066 = vmatprep.subr.mxu0 0.0
  %1067 = vmatpush1.msra.mxu0 0.0
  %1068 = vmatprep.subr.mxu0 0.0
  %1069 = vmatpush1.msra.mxu0 0.0
  %1070 = vmatprep.subr.mxu0 0.0
  %1071 = vmatpush1.msra.mxu0 0.0
  %1072 = vmatprep.subr.mxu0 0.0
  %1073 = vmatpush1.msra.mxu0 0.0
  %1074 = vmatprep.subr.mxu0 0.0
  %1075 = vmatpush1.msra.mxu0 0.0
  %1076 = vmatprep.subr.mxu0 0.0
  %1077 = vmatpush1.msra.mxu0 0.0
  %1078 = vmatprep.subr.mxu0 0.0
  %1079 = vmatpush1.msra.mxu0 0.0
  %1080 = vmatprep.subr.mxu0 0.0
  %1081 = vmatpush1.msra.mxu0 0.0
  %1082 = vmatprep.subr.mxu0 0.0
  %1083 = vmatpush1.msra.mxu0 0.0
  %1084 = vmatprep.mubr.f32.mxu0 0.0
  %1085 = vmatmul.mubr.f32.gmra.mrb[0].mxu0 %v1001
  %v1086 = vpop.f32.mrb[0].mxu0
  %v1087 = vadd.f32 0.0, %v1086
  %v1088 = vpop.f32.mrb[0].mxu0
  %1089 = vmatprep.mubr.f32.mxu0 0.0
  %1090 = vmatmul.mubr.f32.gmra.mrb[0].mxu0 %v1002
  %v1091 = vpop.f32.mrb[0].mxu0
  %v1092 = vadd.f32 0.0, %v1091
  %v1093 = vpop.f32.mrb[0].mxu0
  %1094 = vdwg.mxu0
  %v1095 = vadd.f32 %v759, %v1087
  %v1096 = vadd.f32 %v760, %v1092
  %1097 = vmatprep.subr.mxu0 0.0
  %1098 = vmatpush1.msra.mxu0 %v39
  %1099 = vmatprep.subr.mxu0 0.0
  %1100 = vmatpush1.msra.mxu0 %v40
  %1101 = vmatprep.subr.mxu0 0.0
  %1102 = vmatpush1.msra.mxu0 %v41
  %1103 = vmatprep.subr.mxu0 0.0
  %1104 = vmatpush1.msra.mxu0 %v42
  %1105 = vmatprep.subr.mxu0 0.0
  %1106 = vmatpush1.msra.mxu0 %v43
  %1107 = vmatprep.subr.mxu0 0.0
  %1108 = vmatpush1.msra.mxu0 %v44
  %1109 = vmatprep.subr.mxu0 0.0
  %1110 = vmatpush1.msra.mxu0 %v45
  %1111 = vmatprep.subr.mxu0 0.0
  %1112 = vmatpush1.msra.mxu0 %v46
  %1113 = vmatprep.subr.mxu0 0.0
  %1114 = vmatpush1.msra.mxu0 %v47
  %1115 = vmatprep.subr.mxu0 0.0
  %1116 = vmatpush1.msra.mxu0 0.0
  %1117 = vmatprep.subr.mxu0 0.0
  %1118 = vmatpush1.msra.mxu0 0.0
  %1119 = vmatprep.subr.mxu0 0.0
  %1120 = vmatpush1.msra.mxu0 0.0
  %1121 = vmatprep.subr.mxu0 0.0
  %1122 = vmatpush1.msra.mxu0 0.0
  %1123 = vmatprep.subr.mxu0 0.0
  %1124 = vmatpush1.msra.mxu0 0.0
  %1125 = vmatprep.subr.mxu0 0.0
  %1126 = vmatpush1.msra.mxu0 0.0
  %1127 = vmatprep.subr.mxu0 0.0
  %1128 = vmatpush1.msra.mxu0 0.0
  %1129 = vmatprep.subr.mxu0 0.0
  %1130 = vmatpush1.msra.mxu0 0.0
  %1131 = vmatprep.subr.mxu0 0.0
  %1132 = vmatpush1.msra.mxu0 0.0
  %1133 = vmatprep.subr.mxu0 0.0
  %1134 = vmatpush1.msra.mxu0 0.0
  %1135 = vmatprep.subr.mxu0 0.0
  %1136 = vmatpush1.msra.mxu0 0.0
  %1137 = vmatprep.subr.mxu0 0.0
  %1138 = vmatpush1.msra.mxu0 0.0
  %1139 = vmatprep.subr.mxu0 0.0
  %1140 = vmatpush1.msra.mxu0 0.0
  %1141 = vmatprep.subr.mxu0 0.0
  %1142 = vmatpush1.msra.mxu0 0.0
  %1143 = vmatprep.subr.mxu0 0.0
  %1144 = vmatpush1.msra.mxu0 0.0
  %1145 = vmatprep.subr.mxu0 0.0
  %1146 = vmatpush1.msra.mxu0 0.0
  %1147 = vmatprep.subr.mxu0 0.0
  %1148 = vmatpush1.msra.mxu0 0.0
  %1149 = vmatprep.subr.mxu0 0.0
  %1150 = vmatpush1.msra.mxu0 0.0
  %1151 = vmatprep.subr.mxu0 0.0
  %1152 = vmatpush1.msra.mxu0 0.0
  %1153 = vmatprep.subr.mxu0 0.0
  %1154 = vmatpush1.msra.mxu0 0.0
  %1155 = vmatprep.subr.mxu0 0.0
  %1156 = vmatpush1.msra.mxu0 0.0
  %1157 = vmatprep.subr.mxu0 0.0
  %1158 = vmatpush1.msra.mxu0 0.0
  %1159 = vmatprep.subr.mxu0 0.0
  %1160 = vmatpush1.msra.mxu0 0.0
  %1161 = vmatprep.mubr.f32.mxu0 0.0
  %1162 = vmatmul.mubr.f32.gmra.mrb[0].mxu0 %v583
  %v1163 = vpop.f32.mrb[0].mxu0
  %v1164 = vadd.f32 0.0, %v1163
  %v1165 = vpop.f32.mrb[0].mxu0
  %1166 = vmatprep.mubr.f32.mxu0 0.0
  %1167 = vmatmul.mubr.f32.gmra.mrb[0].mxu0 %v586
  %v1168 = vpop.f32.mrb[0].mxu0
  %v1169 = vadd.f32 0.0, %v1168
  %v1170 = vpop.f32.mrb[0].mxu0
  %1171 = vdwg.mxu0
  %v1172 = vadd.f32 %v134, %v1164
  %v1173 = vadd.f32 %v134, %v1169
  %1174 = vmatprep.subr.mxu0 0.0
  %1175 = vmatpush1.msra.mxu0 %v142
  %1176 = vmatprep.subr.mxu0 0.0
  %1177 = vmatpush1.msra.mxu0 %v143
  %1178 = vmatprep.subr.mxu0 0.0
  %1179 = vmatpush1.msra.mxu0 %v144
  %1180 = vmatprep.subr.mxu0 0.0
  %1181 = vmatpush1.msra.mxu0 %v145
  %1182 = vmatprep.subr.mxu0 0.0
  %1183 = vmatpush1.msra.mxu0 %v146
  %1184 = vmatprep.subr.mxu0 0.0
  %1185 = vmatpush1.msra.mxu0 %v147
  %1186 = vmatprep.subr.mxu0 0.0
  %1187 = vmatpush1.msra.mxu0 %v148
  %1188 = vmatprep.subr.mxu0 0.0
  %1189 = vmatpush1.msra.mxu0 %v149
  %1190 = vmatprep.subr.mxu0 0.0
  %1191 = vmatpush1.msra.mxu0 %v150
  %1192 = vmatprep.subr.mxu0 0.0
  %1193 = vmatpush1.msra.mxu0 0.0
  %1194 = vmatprep.subr.mxu0 0.0
  %1195 = vmatpush1.msra.mxu0 0.0
  %1196 = vmatprep.subr.mxu0 0.0
  %1197 = vmatpush1.msra.mxu0 0.0
  %1198 = vmatprep.subr.mxu0 0.0
  %1199 = vmatpush1.msra.mxu0 0.0
  %1200 = vmatprep.subr.mxu0 0.0
  %1201 = vmatpush1.msra.mxu0 0.0
  %1202 = vmatprep.subr.mxu0 0.0
  %1203 = vmatpush1.msra.mxu0 0.0
  %1204 = vmatprep.subr.mxu0 0.0
  %1205 = vmatpush1.msra.mxu0 0.0
  %1206 = vmatprep.subr.mxu0 0.0
  %1207 = vmatpush1.msra.mxu0 0.0
  %1208 = vmatprep.subr.mxu0 0.0
  %1209 = vmatpush1.msra.mxu0 0.0
  %1210 = vmatprep.subr.mxu0 0.0
  %1211 = vmatpush1.msra.mxu0 0.0
  %1212 = vmatprep.subr.mxu0 0.0
  %1213 = vmatpush1.msra.mxu0 0.0
  %1214 = vmatprep.subr.mxu0 0.0
  %1215 = vmatpush1.msra.mxu0 0.0
  %1216 = vmatprep.subr.mxu0 0.0
  %1217 = vmatpush1.msra.mxu0 0.0
  %1218 = vmatprep.subr.mxu0 0.0
  %1219 = vmatpush1.msra.mxu0 0.0
  %1220 = vmatprep.subr.mxu0 0.0
  %1221 = vmatpush1.msra.mxu0 0.0
  %1222 = vmatprep.subr.mxu0 0.0
  %1223 = vmatpush1.msra.mxu0 0.0
  %1224 = vmatprep.subr.mxu0 0.0
  %1225 = vmatpush1.msra.mxu0 0.0
  %1226 = vmatprep.subr.mxu0 0.0
  %1227 = vmatpush1.msra.mxu0 0.0
  %1228 = vmatprep.subr.mxu0 0.0
  %1229 = vmatpush1.msra.mxu0 0.0
  %1230 = vmatprep.subr.mxu0 0.0
  %1231 = vmatpush1.msra.mxu0 0.0
  %1232 = vmatprep.subr.mxu0 0.0
  %1233 = vmatpush1.msra.mxu0 0.0
  %1234 = vmatprep.subr.mxu0 0.0
  %1235 = vmatpush1.msra.mxu0 0.0
  %1236 = vmatprep.subr.mxu0 0.0
  %1237 = vmatpush1.msra.mxu0 0.0
  %1238 = vmatprep.mubr.f32.mxu0 0.0
  %1239 = vmatmul.mubr.f32.gmra.mrb[0].mxu0 %v919
  %v1240 = vpop.f32.mrb[0].mxu0
  %v1241 = vadd.f32 0.0, %v1240
  %v1242 = vpop.f32.mrb[0].mxu0
  %1243 = vmatprep.mubr.f32.mxu0 0.0
  %1244 = vmatmul.mubr.f32.gmra.mrb[0].mxu0 %v922
  %v1245 = vpop.f32.mrb[0].mxu0
  %v1246 = vadd.f32 0.0, %v1245
  %v1247 = vpop.f32.mrb[0].mxu0
  %1248 = vdwg.mxu0
  %v1249 = vadd.f32 %v1172, %v1241
  %v1250 = vadd.f32 %v1173, %v1246
  %s1251 = scalar_lea.vmem %s0, 80
  %v1252 = vld [vmem:[%s1251] sm:$0xff]
  %v1253 = vld [vmem:[%s1251 + $0x8] sm:$0xff]
  %v1255 = vsel %vm48, %v1252, 0
  %v1258 = vsel %vm48, %v1253, 0
  %1260 = vmatprep.subr.mxu0 0.0
  %1261 = vmatpush1.msra.mxu0 %v238
  %1262 = vmatprep.subr.mxu0 0.0
  %1263 = vmatpush1.msra.mxu0 %v239
  %1264 = vmatprep.subr.mxu0 0.0
  %1265 = vmatpush1.msra.mxu0 %v240
  %1266 = vmatprep.subr.mxu0 0.0
  %1267 = vmatpush1.msra.mxu0 %v241
  %1268 = vmatprep.subr.mxu0 0.0
  %1269 = vmatpush1.msra.mxu0 %v242
  %1270 = vmatprep.subr.mxu0 0.0
  %1271 = vmatpush1.msra.mxu0 %v243
  %1272 = vmatprep.subr.mxu0 0.0
  %1273 = vmatpush1.msra.mxu0 %v244
  %1274 = vmatprep.subr.mxu0 0.0
  %1275 = vmatpush1.msra.mxu0 %v245
  %1276 = vmatprep.subr.mxu0 0.0
  %1277 = vmatpush1.msra.mxu0 %v246
  %1278 = vmatprep.subr.mxu0 0.0
  %1279 = vmatpush1.msra.mxu0 0.0
  %1280 = vmatprep.subr.mxu0 0.0
  %1281 = vmatpush1.msra.mxu0 0.0
  %1282 = vmatprep.subr.mxu0 0.0
  %1283 = vmatpush1.msra.mxu0 0.0
  %1284 = vmatprep.subr.mxu0 0.0
  %1285 = vmatpush1.msra.mxu0 0.0
  %1286 = vmatprep.subr.mxu0 0.0
  %1287 = vmatpush1.msra.mxu0 0.0
  %1288 = vmatprep.subr.mxu0 0.0
  %1289 = vmatpush1.msra.mxu0 0.0
  %1290 = vmatprep.subr.mxu0 0.0
  %1291 = vmatpush1.msra.mxu0 0.0
  %1292 = vmatprep.subr.mxu0 0.0
  %1293 = vmatpush1.msra.mxu0 0.0
  %1294 = vmatprep.subr.mxu0 0.0
  %1295 = vmatpush1.msra.mxu0 0.0
  %1296 = vmatprep.subr.mxu0 0.0
  %1297 = vmatpush1.msra.mxu0 0.0
  %1298 = vmatprep.subr.mxu0 0.0
  %1299 = vmatpush1.msra.mxu0 0.0
  %1300 = vmatprep.subr.mxu0 0.0
  %1301 = vmatpush1.msra.mxu0 0.0
  %1302 = vmatprep.subr.mxu0 0.0
  %1303 = vmatpush1.msra.mxu0 0.0
  %1304 = vmatprep.subr.mxu0 0.0
  %1305 = vmatpush1.msra.mxu0 0.0
  %1306 = vmatprep.subr.mxu0 0.0
  %1307 = vmatpush1.msra.mxu0 0.0
  %1308 = vmatprep.subr.mxu0 0.0
  %1309 = vmatpush1.msra.mxu0 0.0
  %1310 = vmatprep.subr.mxu0 0.0
  %1311 = vmatpush1.msra.mxu0 0.0
  %1312 = vmatprep.subr.mxu0 0.0
  %1313 = vmatpush1.msra.mxu0 0.0
  %1314 = vmatprep.subr.mxu0 0.0
  %1315 = vmatpush1.msra.mxu0 0.0
  %1316 = vmatprep.subr.mxu0 0.0
  %1317 = vmatpush1.msra.mxu0 0.0
  %1318 = vmatprep.subr.mxu0 0.0
  %1319 = vmatpush1.msra.mxu0 0.0
  %1320 = vmatprep.subr.mxu0 0.0
  %1321 = vmatpush1.msra.mxu0 0.0
  %1322 = vmatprep.subr.mxu0 0.0
  %1323 = vmatpush1.msra.mxu0 0.0
  %1324 = vmatprep.mubr.f32.mxu0 0.0
  %1325 = vmatmul.mubr.f32.gmra.mrb[0].mxu0 %v1255
  %v1326 = vpop.f32.mrb[0].mxu0
  %v1327 = vadd.f32 0.0, %v1326
  %v1328 = vpop.f32.mrb[0].mxu0
  %1329 = vmatprep.mubr.f32.mxu0 0.0
  %1330 = vmatmul.mubr.f32.gmra.mrb[0].mxu0 %v1258
  %v1331 = vpop.f32.mrb[0].mxu0
  %v1332 = vadd.f32 0.0, %v1331
  %v1333 = vpop.f32.mrb[0].mxu0
  %1334 = vdwg.mxu0
  %v1335 = vadd.f32 %v1249, %v1327
  %v1336 = vadd.f32 %v1250, %v1332
  %v1337 = vmax.f32 %v1335, 0.0
  %v1338 = vmax.f32 %v1336, 0.0
  %s1339 = scalar_lea.vmem %s3, 384
  %v1340 = vld [vmem:[%s1339] sm:$0xff]
  %v1341 = vld [vmem:[%s1339 + $0x8] sm:$0xff]
  %v1342 = vld [vmem:[%s1339 + $0x10] sm:$0xff]
  %v1343 = vld [vmem:[%s1339 + $0x18] sm:$0xff]
  %v1344 = vld [vmem:[%s1339 + $0x20] sm:$0xff]
  %v1345 = vld [vmem:[%s1339 + $0x28] sm:$0xff]
  %v1346 = vld [vmem:[%s1339 + $0x30] sm:$0xff]
  %v1347 = vld [vmem:[%s1339 + $0x38] sm:$0xff]
  %v1348 = vld [vmem:[%s1339 + $0x40] sm:$0xff]
  %v1349 = vld [vmem:[%s1339 + $0x48] sm:$0xff]
  %v1350 = vld [vmem:[%s1339 + $0x50] sm:$0xff]
  %v1351 = vld [vmem:[%s1339 + $0x58] sm:$0xff]
  %v1352 = vld [vmem:[%s1339 + $0x60] sm:$0xff]
  %v1353 = vld [vmem:[%s1339 + $0x68] sm:$0xff]
  %v1354 = vld [vmem:[%s1339 + $0x70] sm:$0xff]
  %v1355 = vld [vmem:[%s1339 + $0x78] sm:$0xff]
  %1356 = vmatprep.subr.mxu0 0.0
  %1357 = vmatpush1.msra.mxu0 %v1340
  %1358 = vmatprep.subr.mxu0 0.0
  %1359 = vmatpush1.msra.mxu0 %v1341
  %1360 = vmatprep.subr.mxu0 0.0
  %1361 = vmatpush1.msra.mxu0 %v1342
  %1362 = vmatprep.subr.mxu0 0.0
  %1363 = vmatpush1.msra.mxu0 %v1343
  %1364 = vmatprep.subr.mxu0 0.0
  %1365 = vmatpush1.msra.mxu0 %v1344
  %1366 = vmatprep.subr.mxu0 0.0
  %1367 = vmatpush1.msra.mxu0 %v1345
  %1368 = vmatprep.subr.mxu0 0.0
  %1369 = vmatpush1.msra.mxu0 %v1346
  %1370 = vmatprep.subr.mxu0 0.0
  %1371 = vmatpush1.msra.mxu0 %v1347
  %1372 = vmatprep.subr.mxu0 0.0
  %1373 = vmatpush1.msra.mxu0 %v1348
  %1374 = vmatprep.subr.mxu0 0.0
  %1375 = vmatpush1.msra.mxu0 %v1349
  %1376 = vmatprep.subr.mxu0 0.0
  %1377 = vmatpush1.msra.mxu0 %v1350
  %1378 = vmatprep.subr.mxu0 0.0
  %1379 = vmatpush1.msra.mxu0 %v1351
  %1380 = vmatprep.subr.mxu0 0.0
  %1381 = vmatpush1.msra.mxu0 %v1352
  %1382 = vmatprep.subr.mxu0 0.0
  %1383 = vmatpush1.msra.mxu0 %v1353
  %1384 = vmatprep.subr.mxu0 0.0
  %1385 = vmatpush1.msra.mxu0 %v1354
  %1386 = vmatprep.subr.mxu0 0.0
  %1387 = vmatpush1.msra.mxu0 %v1355
  %1388 = vmatprep.subr.mxu0 0.0
  %1389 = vmatpush1.msra.mxu0 0.0
  %1390 = vmatprep.subr.mxu0 0.0
  %1391 = vmatpush1.msra.mxu0 0.0
  %1392 = vmatprep.subr.mxu0 0.0
  %1393 = vmatpush1.msra.mxu0 0.0
  %1394 = vmatprep.subr.mxu0 0.0
  %1395 = vmatpush1.msra.mxu0 0.0
  %1396 = vmatprep.subr.mxu0 0.0
  %1397 = vmatpush1.msra.mxu0 0.0
  %1398 = vmatprep.subr.mxu0 0.0
  %1399 = vmatpush1.msra.mxu0 0.0
  %1400 = vmatprep.subr.mxu0 0.0
  %1401 = vmatpush1.msra.mxu0 0.0
  %1402 = vmatprep.subr.mxu0 0.0
  %1403 = vmatpush1.msra.mxu0 0.0
  %1404 = vmatprep.subr.mxu0 0.0
  %1405 = vmatpush1.msra.mxu0 0.0
  %1406 = vmatprep.subr.mxu0 0.0
  %1407 = vmatpush1.msra.mxu0 0.0
  %1408 = vmatprep.subr.mxu0 0.0
  %1409 = vmatpush1.msra.mxu0 0.0
  %1410 = vmatprep.subr.mxu0 0.0
  %1411 = vmatpush1.msra.mxu0 0.0
  %1412 = vmatprep.subr.mxu0 0.0
  %1413 = vmatpush1.msra.mxu0 0.0
  %1414 = vmatprep.subr.mxu0 0.0
  %1415 = vmatpush1.msra.mxu0 0.0
  %1416 = vmatprep.subr.mxu0 0.0
  %1417 = vmatpush1.msra.mxu0 0.0
  %1418 = vmatprep.subr.mxu0 0.0
  %1419 = vmatpush1.msra.mxu0 0.0
  %1420 = vmatprep.mubr.f32.mxu0 0.0
  %1421 = vmatmul.mubr.f32.gmra.mrb[0].mxu0 %v1337
  %v1422 = vpop.f32.mrb[0].mxu0
  %v1423 = vadd.f32 0.0, %v1422
  %v1424 = vpop.f32.mrb[0].mxu0
  %1425 = vmatprep.mubr.f32.mxu0 0.0
  %1426 = vmatmul.mubr.f32.gmra.mrb[0].mxu0 %v1338
  %v1427 = vpop.f32.mrb[0].mxu0
  %v1428 = vadd.f32 0.0, %v1427
  %v1429 = vpop.f32.mrb[0].mxu0
  %1430 = vdwg.mxu0
  %v1431 = vadd.f32 %v1095, %v1423
  %v1432 = vadd.f32 %v1096, %v1428
  %1433 = vmatprep.subr.mxu0 0.0
  %1434 = vmatpush1.msra.mxu0 %v39
  %1435 = vmatprep.subr.mxu0 0.0
  %1436 = vmatpush1.msra.mxu0 %v40
  %1437 = vmatprep.subr.mxu0 0.0
  %1438 = vmatpush1.msra.mxu0 %v41
  %1439 = vmatprep.subr.mxu0 0.0
  %1440 = vmatpush1.msra.mxu0 %v42
  %1441 = vmatprep.subr.mxu0 0.0
  %1442 = vmatpush1.msra.mxu0 %v43
  %1443 = vmatprep.subr.mxu0 0.0
  %1444 = vmatpush1.msra.mxu0 %v44
  %1445 = vmatprep.subr.mxu0 0.0
  %1446 = vmatpush1.msra.mxu0 %v45
  %1447 = vmatprep.subr.mxu0 0.0
  %1448 = vmatpush1.msra.mxu0 %v46
  %1449 = vmatprep.subr.mxu0 0.0
  %1450 = vmatpush1.msra.mxu0 %v47
  %1451 = vmatprep.subr.mxu0 0.0
  %1452 = vmatpush1.msra.mxu0 0.0
  %1453 = vmatprep.subr.mxu0 0.0
  %1454 = vmatpush1.msra.mxu0 0.0
  %1455 = vmatprep.subr.mxu0 0.0
  %1456 = vmatpush1.msra.mxu0 0.0
  %1457 = vmatprep.subr.mxu0 0.0
  %1458 = vmatpush1.msra.mxu0 0.0
  %1459 = vmatprep.subr.mxu0 0.0
  %1460 = vmatpush1.msra.mxu0 0.0
  %1461 = vmatprep.subr.mxu0 0.0
  %1462 = vmatpush1.msra.mxu0 0.0
  %1463 = vmatprep.subr.mxu0 0.0
  %1464 = vmatpush1.msra.mxu0 0.0
  %1465 = vmatprep.subr.mxu0 0.0
  %1466 = vmatpush1.msra.mxu0 0.0
  %1467 = vmatprep.subr.mxu0 0.0
  %1468 = vmatpush1.msra.mxu0 0.0
  %1469 = vmatprep.subr.mxu0 0.0
  %1470 = vmatpush1.msra.mxu0 0.0
  %1471 = vmatprep.subr.mxu0 0.0
  %1472 = vmatpush1.msra.mxu0 0.0
  %1473 = vmatprep.subr.mxu0 0.0
  %1474 = vmatpush1.msra.mxu0 0.0
  %1475 = vmatprep.subr.mxu0 0.0
  %1476 = vmatpush1.msra.mxu0 0.0
  %1477 = vmatprep.subr.mxu0 0.0
  %1478 = vmatpush1.msra.mxu0 0.0
  %1479 = vmatprep.subr.mxu0 0.0
  %1480 = vmatpush1.msra.mxu0 0.0
  %1481 = vmatprep.subr.mxu0 0.0
  %1482 = vmatpush1.msra.mxu0 0.0
  %1483 = vmatprep.subr.mxu0 0.0
  %1484 = vmatpush1.msra.mxu0 0.0
  %1485 = vmatprep.subr.mxu0 0.0
  %1486 = vmatpush1.msra.mxu0 0.0
  %1487 = vmatprep.subr.mxu0 0.0
  %1488 = vmatpush1.msra.mxu0 0.0
  %1489 = vmatprep.subr.mxu0 0.0
  %1490 = vmatpush1.msra.mxu0 0.0
  %1491 = vmatprep.subr.mxu0 0.0
  %1492 = vmatpush1.msra.mxu0 0.0
  %1493 = vmatprep.subr.mxu0 0.0
  %1494 = vmatpush1.msra.mxu0 0.0
  %1495 = vmatprep.subr.mxu0 0.0
  %1496 = vmatpush1.msra.mxu0 0.0
  %1497 = vmatprep.mubr.f32.mxu0 0.0
  %1498 = vmatmul.mubr.f32.gmra.mrb[0].mxu0 %v919
  %v1499 = vpop.f32.mrb[0].mxu0
  %v1500 = vadd.f32 0.0, %v1499
  %v1501 = vpop.f32.mrb[0].mxu0
  %1502 = vmatprep.mubr.f32.mxu0 0.0
  %1503 = vmatmul.mubr.f32.gmra.mrb[0].mxu0 %v922
  %v1504 = vpop.f32.mrb[0].mxu0
  %v1505 = vadd.f32 0.0, %v1504
  %v1506 = vpop.f32.mrb[0].mxu0
  %1507 = vdwg.mxu0
  %v1508 = vadd.f32 %v134, %v1500
  %v1509 = vadd.f32 %v134, %v1505
  %1510 = vmatprep.subr.mxu0 0.0
  %1511 = vmatpush1.msra.mxu0 %v142
  %1512 = vmatprep.subr.mxu0 0.0
  %1513 = vmatpush1.msra.mxu0 %v143
  %1514 = vmatprep.subr.mxu0 0.0
  %1515 = vmatpush1.msra.mxu0 %v144
  %1516 = vmatprep.subr.mxu0 0.0
  %1517 = vmatpush1.msra.mxu0 %v145
  %1518 = vmatprep.subr.mxu0 0.0
  %1519 = vmatpush1.msra.mxu0 %v146
  %1520 = vmatprep.subr.mxu0 0.0
  %1521 = vmatpush1.msra.mxu0 %v147
  %1522 = vmatprep.subr.mxu0 0.0
  %1523 = vmatpush1.msra.mxu0 %v148
  %1524 = vmatprep.subr.mxu0 0.0
  %1525 = vmatpush1.msra.mxu0 %v149
  %1526 = vmatprep.subr.mxu0 0.0
  %1527 = vmatpush1.msra.mxu0 %v150
  %1528 = vmatprep.subr.mxu0 0.0
  %1529 = vmatpush1.msra.mxu0 0.0
  %1530 = vmatprep.subr.mxu0 0.0
  %1531 = vmatpush1.msra.mxu0 0.0
  %1532 = vmatprep.subr.mxu0 0.0
  %1533 = vmatpush1.msra.mxu0 0.0
  %1534 = vmatprep.subr.mxu0 0.0
  %1535 = vmatpush1.msra.mxu0 0.0
  %1536 = vmatprep.subr.mxu0 0.0
  %1537 = vmatpush1.msra.mxu0 0.0
  %1538 = vmatprep.subr.mxu0 0.0
  %1539 = vmatpush1.msra.mxu0 0.0
  %1540 = vmatprep.subr.mxu0 0.0
  %1541 = vmatpush1.msra.mxu0 0.0
  %1542 = vmatprep.subr.mxu0 0.0
  %1543 = vmatpush1.msra.mxu0 0.0
  %1544 = vmatprep.subr.mxu0 0.0
  %1545 = vmatpush1.msra.mxu0 0.0
  %1546 = vmatprep.subr.mxu0 0.0
  %1547 = vmatpush1.msra.mxu0 0.0
  %1548 = vmatprep.subr.mxu0 0.0
  %1549 = vmatpush1.msra.mxu0 0.0
  %1550 = vmatprep.subr.mxu0 0.0
  %1551 = vmatpush1.msra.mxu0 0.0
  %1552 = vmatprep.subr.mxu0 0.0
  %1553 = vmatpush1.msra.mxu0 0.0
  %1554 = vmatprep.subr.mxu0 0.0
  %1555 = vmatpush1.msra.mxu0 0.0
  %1556 = vmatprep.subr.mxu0 0.0
  %1557 = vmatpush1.msra.mxu0 0.0
  %1558 = vmatprep.subr.mxu0 0.0
  %1559 = vmatpush1.msra.mxu0 0.0
  %1560 = vmatprep.subr.mxu0 0.0
  %1561 = vmatpush1.msra.mxu0 0.0
  %1562 = vmatprep.subr.mxu0 0.0
  %1563 = vmatpush1.msra.mxu0 0.0
  %1564 = vmatprep.subr.mxu0 0.0
  %1565 = vmatpush1.msra.mxu0 0.0
  %1566 = vmatprep.subr.mxu0 0.0
  %1567 = vmatpush1.msra.mxu0 0.0
  %1568 = vmatprep.subr.mxu0 0.0
  %1569 = vmatpush1.msra.mxu0 0.0
  %1570 = vmatprep.subr.mxu0 0.0
  %1571 = vmatpush1.msra.mxu0 0.0
  %1572 = vmatprep.subr.mxu0 0.0
  %1573 = vmatpush1.msra.mxu0 0.0
  %1574 = vmatprep.mubr.f32.mxu0 0.0
  %1575 = vmatmul.mubr.f32.gmra.mrb[0].mxu0 %v1255
  %v1576 = vpop.f32.mrb[0].mxu0
  %v1577 = vadd.f32 0.0, %v1576
  %v1578 = vpop.f32.mrb[0].mxu0
  %1579 = vmatprep.mubr.f32.mxu0 0.0
  %1580 = vmatmul.mubr.f32.gmra.mrb[0].mxu0 %v1258
  %v1581 = vpop.f32.mrb[0].mxu0
  %v1582 = vadd.f32 0.0, %v1581
  %v1583 = vpop.f32.mrb[0].mxu0
  %1584 = vdwg.mxu0
  %v1585 = vadd.f32 %v1508, %v1577
  %v1586 = vadd.f32 %v1509, %v1582
  %s1587 = scalar_lea.vmem %s0, 96
  %v1588 = vld [vmem:[%s1587] sm:$0xff]
  %v1589 = vld [vmem:[%s1587 + $0x8] sm:$0xff]
  %v1591 = vsel %vm48, %v1588, 0
  %v1594 = vsel %vm48, %v1589, 0
  %1596 = vmatprep.subr.mxu0 0.0
  %1597 = vmatpush1.msra.mxu0 %v238
  %1598 = vmatprep.subr.mxu0 0.0
  %1599 = vmatpush1.msra.mxu0 %v239
  %1600 = vmatprep.subr.mxu0 0.0
  %1601 = vmatpush1.msra.mxu0 %v240
  %1602 = vmatprep.subr.mxu0 0.0
  %1603 = vmatpush1.msra.mxu0 %v241
  %1604 = vmatprep.subr.mxu0 0.0
  %1605 = vmatpush1.msra.mxu0 %v242
  %1606 = vmatprep.subr.mxu0 0.0
  %1607 = vmatpush1.msra.mxu0 %v243
  %1608 = vmatprep.subr.mxu0 0.0
  %1609 = vmatpush1.msra.mxu0 %v244
  %1610 = vmatprep.subr.mxu0 0.0
  %1611 = vmatpush1.msra.mxu0 %v245
  %1612 = vmatprep.subr.mxu0 0.0
  %1613 = vmatpush1.msra.mxu0 %v246
  %1614 = vmatprep.subr.mxu0 0.0
  %1615 = vmatpush1.msra.mxu0 0.0
  %1616 = vmatprep.subr.mxu0 0.0
  %1617 = vmatpush1.msra.mxu0 0.0
  %1618 = vmatprep.subr.mxu0 0.0
  %1619 = vmatpush1.msra.mxu0 0.0
  %1620 = vmatprep.subr.mxu0 0.0
  %1621 = vmatpush1.msra.mxu0 0.0
  %1622 = vmatprep.subr.mxu0 0.0
  %1623 = vmatpush1.msra.mxu0 0.0
  %1624 = vmatprep.subr.mxu0 0.0
  %1625 = vmatpush1.msra.mxu0 0.0
  %1626 = vmatprep.subr.mxu0 0.0
  %1627 = vmatpush1.msra.mxu0 0.0
  %1628 = vmatprep.subr.mxu0 0.0
  %1629 = vmatpush1.msra.mxu0 0.0
  %1630 = vmatprep.subr.mxu0 0.0
  %1631 = vmatpush1.msra.mxu0 0.0
  %1632 = vmatprep.subr.mxu0 0.0
  %1633 = vmatpush1.msra.mxu0 0.0
  %1634 = vmatprep.subr.mxu0 0.0
  %1635 = vmatpush1.msra.mxu0 0.0
  %1636 = vmatprep.subr.mxu0 0.0
  %1637 = vmatpush1.msra.mxu0 0.0
  %1638 = vmatprep.subr.mxu0 0.0
  %1639 = vmatpush1.msra.mxu0 0.0
  %1640 = vmatprep.subr.mxu0 0.0
  %1641 = vmatpush1.msra.mxu0 0.0
  %1642 = vmatprep.subr.mxu0 0.0
  %1643 = vmatpush1.msra.mxu0 0.0
  %1644 = vmatprep.subr.mxu0 0.0
  %1645 = vmatpush1.msra.mxu0 0.0
  %1646 = vmatprep.subr.mxu0 0.0
  %1647 = vmatpush1.msra.mxu0 0.0
  %1648 = vmatprep.subr.mxu0 0.0
  %1649 = vmatpush1.msra.mxu0 0.0
  %1650 = vmatprep.subr.mxu0 0.0
  %1651 = vmatpush1.msra.mxu0 0.0
  %1652 = vmatprep.subr.mxu0 0.0
  %1653 = vmatpush1.msra.mxu0 0.0
  %1654 = vmatprep.subr.mxu0 0.0
  %1655 = vmatpush1.msra.mxu0 0.0
  %1656 = vmatprep.subr.mxu0 0.0
  %1657 = vmatpush1.msra.mxu0 0.0
  %1658 = vmatprep.subr.mxu0 0.0
  %1659 = vmatpush1.msra.mxu0 0.0
  %1660 = vmatprep.mubr.f32.mxu0 0.0
  %1661 = vmatmul.mubr.f32.gmra.mrb[0].mxu0 %v1591
  %v1662 = vpop.f32.mrb[0].mxu0
  %v1663 = vadd.f32 0.0, %v1662
  %v1664 = vpop.f32.mrb[0].mxu0
  %1665 = vmatprep.mubr.f32.mxu0 0.0
  %1666 = vmatmul.mubr.f32.gmra.mrb[0].mxu0 %v1594
  %v1667 = vpop.f32.mrb[0].mxu0
  %v1668 = vadd.f32 0.0, %v1667
  %v1669 = vpop.f32.mrb[0].mxu0
  %1670 = vdwg.mxu0
  %v1671 = vadd.f32 %v1585, %v1663
  %v1672 = vadd.f32 %v1586, %v1668
  %v1673 = vmax.f32 %v1671, 0.0
  %v1674 = vmax.f32 %v1672, 0.0
  %s1675 = scalar_lea.vmem %s3, 512
  %v1676 = vld [vmem:[%s1675] sm:$0xff]
  %v1677 = vld [vmem:[%s1675 + $0x8] sm:$0xff]
  %v1678 = vld [vmem:[%s1675 + $0x10] sm:$0xff]
  %v1679 = vld [vmem:[%s1675 + $0x18] sm:$0xff]
  %v1680 = vld [vmem:[%s1675 + $0x20] sm:$0xff]
  %v1681 = vld [vmem:[%s1675 + $0x28] sm:$0xff]
  %v1682 = vld [vmem:[%s1675 + $0x30] sm:$0xff]
  %v1683 = vld [vmem:[%s1675 + $0x38] sm:$0xff]
  %v1684 = vld [vmem:[%s1675 + $0x40] sm:$0xff]
  %v1685 = vld [vmem:[%s1675 + $0x48] sm:$0xff]
  %v1686 = vld [vmem:[%s1675 + $0x50] sm:$0xff]
  %v1687 = vld [vmem:[%s1675 + $0x58] sm:$0xff]
  %v1688 = vld [vmem:[%s1675 + $0x60] sm:$0xff]
  %v1689 = vld [vmem:[%s1675 + $0x68] sm:$0xff]
  %v1690 = vld [vmem:[%s1675 + $0x70] sm:$0xff]
  %v1691 = vld [vmem:[%s1675 + $0x78] sm:$0xff]
  %1692 = vmatprep.subr.mxu0 0.0
  %1693 = vmatpush1.msra.mxu0 %v1676
  %1694 = vmatprep.subr.mxu0 0.0
  %1695 = vmatpush1.msra.mxu0 %v1677
  %1696 = vmatprep.subr.mxu0 0.0
  %1697 = vmatpush1.msra.mxu0 %v1678
  %1698 = vmatprep.subr.mxu0 0.0
  %1699 = vmatpush1.msra.mxu0 %v1679
  %1700 = vmatprep.subr.mxu0 0.0
  %1701 = vmatpush1.msra.mxu0 %v1680
  %1702 = vmatprep.subr.mxu0 0.0
  %1703 = vmatpush1.msra.mxu0 %v1681
  %1704 = vmatprep.subr.mxu0 0.0
  %1705 = vmatpush1.msra.mxu0 %v1682
  %1706 = vmatprep.subr.mxu0 0.0
  %1707 = vmatpush1.msra.mxu0 %v1683
  %1708 = vmatprep.subr.mxu0 0.0
  %1709 = vmatpush1.msra.mxu0 %v1684
  %1710 = vmatprep.subr.mxu0 0.0
  %1711 = vmatpush1.msra.mxu0 %v1685
  %1712 = vmatprep.subr.mxu0 0.0
  %1713 = vmatpush1.msra.mxu0 %v1686
  %1714 = vmatprep.subr.mxu0 0.0
  %1715 = vmatpush1.msra.mxu0 %v1687
  %1716 = vmatprep.subr.mxu0 0.0
  %1717 = vmatpush1.msra.mxu0 %v1688
  %1718 = vmatprep.subr.mxu0 0.0
  %1719 = vmatpush1.msra.mxu0 %v1689
  %1720 = vmatprep.subr.mxu0 0.0
  %1721 = vmatpush1.msra.mxu0 %v1690
  %1722 = vmatprep.subr.mxu0 0.0
  %1723 = vmatpush1.msra.mxu0 %v1691
  %1724 = vmatprep.subr.mxu0 0.0
  %1725 = vmatpush1.msra.mxu0 0.0
  %1726 = vmatprep.subr.mxu0 0.0
  %1727 = vmatpush1.msra.mxu0 0.0
  %1728 = vmatprep.subr.mxu0 0.0
  %1729 = vmatpush1.msra.mxu0 0.0
  %1730 = vmatprep.subr.mxu0 0.0
  %1731 = vmatpush1.msra.mxu0 0.0
  %1732 = vmatprep.subr.mxu0 0.0
  %1733 = vmatpush1.msra.mxu0 0.0
  %1734 = vmatprep.subr.mxu0 0.0
  %1735 = vmatpush1.msra.mxu0 0.0
  %1736 = vmatprep.subr.mxu0 0.0
  %1737 = vmatpush1.msra.mxu0 0.0
  %1738 = vmatprep.subr.mxu0 0.0
  %1739 = vmatpush1.msra.mxu0 0.0
  %1740 = vmatprep.subr.mxu0 0.0
  %1741 = vmatpush1.msra.mxu0 0.0
  %1742 = vmatprep.subr.mxu0 0.0
  %1743 = vmatpush1.msra.mxu0 0.0
  %1744 = vmatprep.subr.mxu0 0.0
  %1745 = vmatpush1.msra.mxu0 0.0
  %1746 = vmatprep.subr.mxu0 0.0
  %1747 = vmatpush1.msra.mxu0 0.0
  %1748 = vmatprep.subr.mxu0 0.0
  %1749 = vmatpush1.msra.mxu0 0.0
  %1750 = vmatprep.subr.mxu0 0.0
  %1751 = vmatpush1.msra.mxu0 0.0
  %1752 = vmatprep.subr.mxu0 0.0
  %1753 = vmatpush1.msra.mxu0 0.0
  %1754 = vmatprep.subr.mxu0 0.0
  %1755 = vmatpush1.msra.mxu0 0.0
  %1756 = vmatprep.mubr.f32.mxu0 0.0
  %1757 = vmatmul.mubr.f32.gmra.mrb[0].mxu0 %v1673
  %v1758 = vpop.f32.mrb[0].mxu0
  %v1759 = vadd.f32 0.0, %v1758
  %v1760 = vpop.f32.mrb[0].mxu0
  %1761 = vmatprep.mubr.f32.mxu0 0.0
  %1762 = vmatmul.mubr.f32.gmra.mrb[0].mxu0 %v1674
  %v1763 = vpop.f32.mrb[0].mxu0
  %v1764 = vadd.f32 0.0, %v1763
  %v1765 = vpop.f32.mrb[0].mxu0
  %1766 = vdwg.mxu0
  %v1767 = vadd.f32 %v1431, %v1759
  %v1768 = vadd.f32 %v1432, %v1764
  %1769 = vmatprep.subr.mxu0 0.0
  %1770 = vmatpush1.msra.mxu0 %v39
  %1771 = vmatprep.subr.mxu0 0.0
  %1772 = vmatpush1.msra.mxu0 %v40
  %1773 = vmatprep.subr.mxu0 0.0
  %1774 = vmatpush1.msra.mxu0 %v41
  %1775 = vmatprep.subr.mxu0 0.0
  %1776 = vmatpush1.msra.mxu0 %v42
  %1777 = vmatprep.subr.mxu0 0.0
  %1778 = vmatpush1.msra.mxu0 %v43
  %1779 = vmatprep.subr.mxu0 0.0
  %1780 = vmatpush1.msra.mxu0 %v44
  %1781 = vmatprep.subr.mxu0 0.0
  %1782 = vmatpush1.msra.mxu0 %v45
  %1783 = vmatprep.subr.mxu0 0.0
  %1784 = vmatpush1.msra.mxu0 %v46
  %1785 = vmatprep.subr.mxu0 0.0
  %1786 = vmatpush1.msra.mxu0 %v47
  %1787 = vmatprep.subr.mxu0 0.0
  %1788 = vmatpush1.msra.mxu0 0.0
  %1789 = vmatprep.subr.mxu0 0.0
  %1790 = vmatpush1.msra.mxu0 0.0
  %1791 = vmatprep.subr.mxu0 0.0
  %1792 = vmatpush1.msra.mxu0 0.0
  %1793 = vmatprep.subr.mxu0 0.0
  %1794 = vmatpush1.msra.mxu0 0.0
  %1795 = vmatprep.subr.mxu0 0.0
  %1796 = vmatpush1.msra.mxu0 0.0
  %1797 = vmatprep.subr.mxu0 0.0
  %1798 = vmatpush1.msra.mxu0 0.0
  %1799 = vmatprep.subr.mxu0 0.0
  %1800 = vmatpush1.msra.mxu0 0.0
  %1801 = vmatprep.subr.mxu0 0.0
  %1802 = vmatpush1.msra.mxu0 0.0
  %1803 = vmatprep.subr.mxu0 0.0
  %1804 = vmatpush1.msra.mxu0 0.0
  %1805 = vmatprep.subr.mxu0 0.0
  %1806 = vmatpush1.msra.mxu0 0.0
  %1807 = vmatprep.subr.mxu0 0.0
  %1808 = vmatpush1.msra.mxu0 0.0
  %1809 = vmatprep.subr.mxu0 0.0
  %1810 = vmatpush1.msra.mxu0 0.0
  %1811 = vmatprep.subr.mxu0 0.0
  %1812 = vmatpush1.msra.mxu0 0.0
  %1813 = vmatprep.subr.mxu0 0.0
  %1814 = vmatpush1.msra.mxu0 0.0
  %1815 = vmatprep.subr.mxu0 0.0
  %1816 = vmatpush1.msra.mxu0 0.0
  %1817 = vmatprep.subr.mxu0 0.0
  %1818 = vmatpush1.msra.mxu0 0.0
  %1819 = vmatprep.subr.mxu0 0.0
  %1820 = vmatpush1.msra.mxu0 0.0
  %1821 = vmatprep.subr.mxu0 0.0
  %1822 = vmatpush1.msra.mxu0 0.0
  %1823 = vmatprep.subr.mxu0 0.0
  %1824 = vmatpush1.msra.mxu0 0.0
  %1825 = vmatprep.subr.mxu0 0.0
  %1826 = vmatpush1.msra.mxu0 0.0
  %1827 = vmatprep.subr.mxu0 0.0
  %1828 = vmatpush1.msra.mxu0 0.0
  %1829 = vmatprep.subr.mxu0 0.0
  %1830 = vmatpush1.msra.mxu0 0.0
  %1831 = vmatprep.subr.mxu0 0.0
  %1832 = vmatpush1.msra.mxu0 0.0
  %1833 = vmatprep.mubr.f32.mxu0 0.0
  %1834 = vmatmul.mubr.f32.gmra.mrb[0].mxu0 %v1255
  %v1835 = vpop.f32.mrb[0].mxu0
  %v1836 = vadd.f32 0.0, %v1835
  %v1837 = vpop.f32.mrb[0].mxu0
  %1838 = vmatprep.mubr.f32.mxu0 0.0
  %1839 = vmatmul.mubr.f32.gmra.mrb[0].mxu0 %v1258
  %v1840 = vpop.f32.mrb[0].mxu0
  %v1841 = vadd.f32 0.0, %v1840
  %v1842 = vpop.f32.mrb[0].mxu0
  %1843 = vdwg.mxu0
  %v1844 = vadd.f32 %v134, %v1836
  %v1845 = vadd.f32 %v134, %v1841
  %1846 = vmatprep.subr.mxu0 0.0
  %1847 = vmatpush1.msra.mxu0 %v142
  %1848 = vmatprep.subr.mxu0 0.0
  %1849 = vmatpush1.msra.mxu0 %v143
  %1850 = vmatprep.subr.mxu0 0.0
  %1851 = vmatpush1.msra.mxu0 %v144
  %1852 = vmatprep.subr.mxu0 0.0
  %1853 = vmatpush1.msra.mxu0 %v145
  %1854 = vmatprep.subr.mxu0 0.0
  %1855 = vmatpush1.msra.mxu0 %v146
  %1856 = vmatprep.subr.mxu0 0.0
  %1857 = vmatpush1.msra.mxu0 %v147
  %1858 = vmatprep.subr.mxu0 0.0
  %1859 = vmatpush1.msra.mxu0 %v148
  %1860 = vmatprep.subr.mxu0 0.0
  %1861 = vmatpush1.msra.mxu0 %v149
  %1862 = vmatprep.subr.mxu0 0.0
  %1863 = vmatpush1.msra.mxu0 %v150
  %1864 = vmatprep.subr.mxu0 0.0
  %1865 = vmatpush1.msra.mxu0 0.0
  %1866 = vmatprep.subr.mxu0 0.0
  %1867 = vmatpush1.msra.mxu0 0.0
  %1868 = vmatprep.subr.mxu0 0.0
  %1869 = vmatpush1.msra.mxu0 0.0
  %1870 = vmatprep.subr.mxu0 0.0
  %1871 = vmatpush1.msra.mxu0 0.0
  %1872 = vmatprep.subr.mxu0 0.0
  %1873 = vmatpush1.msra.mxu0 0.0
  %1874 = vmatprep.subr.mxu0 0.0
  %1875 = vmatpush1.msra.mxu0 0.0
  %1876 = vmatprep.subr.mxu0 0.0
  %1877 = vmatpush1.msra.mxu0 0.0
  %1878 = vmatprep.subr.mxu0 0.0
  %1879 = vmatpush1.msra.mxu0 0.0
  %1880 = vmatprep.subr.mxu0 0.0
  %1881 = vmatpush1.msra.mxu0 0.0
  %1882 = vmatprep.subr.mxu0 0.0
  %1883 = vmatpush1.msra.mxu0 0.0
  %1884 = vmatprep.subr.mxu0 0.0
  %1885 = vmatpush1.msra.mxu0 0.0
  %1886 = vmatprep.subr.mxu0 0.0
  %1887 = vmatpush1.msra.mxu0 0.0
  %1888 = vmatprep.subr.mxu0 0.0
  %1889 = vmatpush1.msra.mxu0 0.0
  %1890 = vmatprep.subr.mxu0 0.0
  %1891 = vmatpush1.msra.mxu0 0.0
  %1892 = vmatprep.subr.mxu0 0.0
  %1893 = vmatpush1.msra.mxu0 0.0
  %1894 = vmatprep.subr.mxu0 0.0
  %1895 = vmatpush1.msra.mxu0 0.0
  %1896 = vmatprep.subr.mxu0 0.0
  %1897 = vmatpush1.msra.mxu0 0.0
  %1898 = vmatprep.subr.mxu0 0.0
  %1899 = vmatpush1.msra.mxu0 0.0
  %1900 = vmatprep.subr.mxu0 0.0
  %1901 = vmatpush1.msra.mxu0 0.0
  %1902 = vmatprep.subr.mxu0 0.0
  %1903 = vmatpush1.msra.mxu0 0.0
  %1904 = vmatprep.subr.mxu0 0.0
  %1905 = vmatpush1.msra.mxu0 0.0
  %1906 = vmatprep.subr.mxu0 0.0
  %1907 = vmatpush1.msra.mxu0 0.0
  %1908 = vmatprep.subr.mxu0 0.0
  %1909 = vmatpush1.msra.mxu0 0.0
  %1910 = vmatprep.mubr.f32.mxu0 0.0
  %1911 = vmatmul.mubr.f32.gmra.mrb[0].mxu0 %v1591
  %v1912 = vpop.f32.mrb[0].mxu0
  %v1913 = vadd.f32 0.0, %v1912
  %v1914 = vpop.f32.mrb[0].mxu0
  %1915 = vmatprep.mubr.f32.mxu0 0.0
  %1916 = vmatmul.mubr.f32.gmra.mrb[0].mxu0 %v1594
  %v1917 = vpop.f32.mrb[0].mxu0
  %v1918 = vadd.f32 0.0, %v1917
  %v1919 = vpop.f32.mrb[0].mxu0
  %1920 = vdwg.mxu0
  %v1921 = vadd.f32 %v1844, %v1913
  %v1922 = vadd.f32 %v1845, %v1918
  %s1923 = scalar_lea.vmem %s0, 112
  %v1924 = vld [vmem:[%s1923] sm:$0xff]
  %v1925 = vld [vmem:[%s1923 + $0x8] sm:$0xff]
  %v1927 = vsel %vm48, %v1924, 0
  %v1930 = vsel %vm48, %v1925, 0
  %1932 = vmatprep.subr.mxu0 0.0
  %1933 = vmatpush1.msra.mxu0 %v238
  %1934 = vmatprep.subr.mxu0 0.0
  %1935 = vmatpush1.msra.mxu0 %v239
  %1936 = vmatprep.subr.mxu0 0.0
  %1937 = vmatpush1.msra.mxu0 %v240
  %1938 = vmatprep.subr.mxu0 0.0
  %1939 = vmatpush1.msra.mxu0 %v241
  %1940 = vmatprep.subr.mxu0 0.0
  %1941 = vmatpush1.msra.mxu0 %v242
  %1942 = vmatprep.subr.mxu0 0.0
  %1943 = vmatpush1.msra.mxu0 %v243
  %1944 = vmatprep.subr.mxu0 0.0
  %1945 = vmatpush1.msra.mxu0 %v244
  %1946 = vmatprep.subr.mxu0 0.0
  %1947 = vmatpush1.msra.mxu0 %v245
  %1948 = vmatprep.subr.mxu0 0.0
  %1949 = vmatpush1.msra.mxu0 %v246
  %1950 = vmatprep.subr.mxu0 0.0
  %1951 = vmatpush1.msra.mxu0 0.0
  %1952 = vmatprep.subr.mxu0 0.0
  %1953 = vmatpush1.msra.mxu0 0.0
  %1954 = vmatprep.subr.mxu0 0.0
  %1955 = vmatpush1.msra.mxu0 0.0
  %1956 = vmatprep.subr.mxu0 0.0
  %1957 = vmatpush1.msra.mxu0 0.0
  %1958 = vmatprep.subr.mxu0 0.0
  %1959 = vmatpush1.msra.mxu0 0.0
  %1960 = vmatprep.subr.mxu0 0.0
  %1961 = vmatpush1.msra.mxu0 0.0
  %1962 = vmatprep.subr.mxu0 0.0
  %1963 = vmatpush1.msra.mxu0 0.0
  %1964 = vmatprep.subr.mxu0 0.0
  %1965 = vmatpush1.msra.mxu0 0.0
  %1966 = vmatprep.subr.mxu0 0.0
  %1967 = vmatpush1.msra.mxu0 0.0
  %1968 = vmatprep.subr.mxu0 0.0
  %1969 = vmatpush1.msra.mxu0 0.0
  %1970 = vmatprep.subr.mxu0 0.0
  %1971 = vmatpush1.msra.mxu0 0.0
  %1972 = vmatprep.subr.mxu0 0.0
  %1973 = vmatpush1.msra.mxu0 0.0
  %1974 = vmatprep.subr.mxu0 0.0
  %1975 = vmatpush1.msra.mxu0 0.0
  %1976 = vmatprep.subr.mxu0 0.0
  %1977 = vmatpush1.msra.mxu0 0.0
  %1978 = vmatprep.subr.mxu0 0.0
  %1979 = vmatpush1.msra.mxu0 0.0
  %1980 = vmatprep.subr.mxu0 0.0
  %1981 = vmatpush1.msra.mxu0 0.0
  %1982 = vmatprep.subr.mxu0 0.0
  %1983 = vmatpush1.msra.mxu0 0.0
  %1984 = vmatprep.subr.mxu0 0.0
  %1985 = vmatpush1.msra.mxu0 0.0
  %1986 = vmatprep.subr.mxu0 0.0
  %1987 = vmatpush1.msra.mxu0 0.0
  %1988 = vmatprep.subr.mxu0 0.0
  %1989 = vmatpush1.msra.mxu0 0.0
  %1990 = vmatprep.subr.mxu0 0.0
  %1991 = vmatpush1.msra.mxu0 0.0
  %1992 = vmatprep.subr.mxu0 0.0
  %1993 = vmatpush1.msra.mxu0 0.0
  %1994 = vmatprep.subr.mxu0 0.0
  %1995 = vmatpush1.msra.mxu0 0.0
  %1996 = vmatprep.mubr.f32.mxu0 0.0
  %1997 = vmatmul.mubr.f32.gmra.mrb[0].mxu0 %v1927
  %v1998 = vpop.f32.mrb[0].mxu0
  %v1999 = vadd.f32 0.0, %v1998
  %v2000 = vpop.f32.mrb[0].mxu0
  %2001 = vmatprep.mubr.f32.mxu0 0.0
  %2002 = vmatmul.mubr.f32.gmra.mrb[0].mxu0 %v1930
  %v2003 = vpop.f32.mrb[0].mxu0
  %v2004 = vadd.f32 0.0, %v2003
  %v2005 = vpop.f32.mrb[0].mxu0
  %2006 = vdwg.mxu0
  %v2007 = vadd.f32 %v1921, %v1999
  %v2008 = vadd.f32 %v1922, %v2004
  %v2009 = vmax.f32 %v2007, 0.0
  %v2010 = vmax.f32 %v2008, 0.0
  %s2011 = scalar_lea.vmem %s3, 640
  %v2012 = vld [vmem:[%s2011] sm:$0xff]
  %v2013 = vld [vmem:[%s2011 + $0x8] sm:$0xff]
  %v2014 = vld [vmem:[%s2011 + $0x10] sm:$0xff]
  %v2015 = vld [vmem:[%s2011 + $0x18] sm:$0xff]
  %v2016 = vld [vmem:[%s2011 + $0x20] sm:$0xff]
  %v2017 = vld [vmem:[%s2011 + $0x28] sm:$0xff]
  %v2018 = vld [vmem:[%s2011 + $0x30] sm:$0xff]
  %v2019 = vld [vmem:[%s2011 + $0x38] sm:$0xff]
  %v2020 = vld [vmem:[%s2011 + $0x40] sm:$0xff]
  %v2021 = vld [vmem:[%s2011 + $0x48] sm:$0xff]
  %v2022 = vld [vmem:[%s2011 + $0x50] sm:$0xff]
  %v2023 = vld [vmem:[%s2011 + $0x58] sm:$0xff]
  %v2024 = vld [vmem:[%s2011 + $0x60] sm:$0xff]
  %v2025 = vld [vmem:[%s2011 + $0x68] sm:$0xff]
  %v2026 = vld [vmem:[%s2011 + $0x70] sm:$0xff]
  %v2027 = vld [vmem:[%s2011 + $0x78] sm:$0xff]
  %2028 = vmatprep.subr.mxu0 0.0
  %2029 = vmatpush1.msra.mxu0 %v2012
  %2030 = vmatprep.subr.mxu0 0.0
  %2031 = vmatpush1.msra.mxu0 %v2013
  %2032 = vmatprep.subr.mxu0 0.0
  %2033 = vmatpush1.msra.mxu0 %v2014
  %2034 = vmatprep.subr.mxu0 0.0
  %2035 = vmatpush1.msra.mxu0 %v2015
  %2036 = vmatprep.subr.mxu0 0.0
  %2037 = vmatpush1.msra.mxu0 %v2016
  %2038 = vmatprep.subr.mxu0 0.0
  %2039 = vmatpush1.msra.mxu0 %v2017
  %2040 = vmatprep.subr.mxu0 0.0
  %2041 = vmatpush1.msra.mxu0 %v2018
  %2042 = vmatprep.subr.mxu0 0.0
  %2043 = vmatpush1.msra.mxu0 %v2019
  %2044 = vmatprep.subr.mxu0 0.0
  %2045 = vmatpush1.msra.mxu0 %v2020
  %2046 = vmatprep.subr.mxu0 0.0
  %2047 = vmatpush1.msra.mxu0 %v2021
  %2048 = vmatprep.subr.mxu0 0.0
  %2049 = vmatpush1.msra.mxu0 %v2022
  %2050 = vmatprep.subr.mxu0 0.0
  %2051 = vmatpush1.msra.mxu0 %v2023
  %2052 = vmatprep.subr.mxu0 0.0
  %2053 = vmatpush1.msra.mxu0 %v2024
  %2054 = vmatprep.subr.mxu0 0.0
  %2055 = vmatpush1.msra.mxu0 %v2025
  %2056 = vmatprep.subr.mxu0 0.0
  %2057 = vmatpush1.msra.mxu0 %v2026
  %2058 = vmatprep.subr.mxu0 0.0
  %2059 = vmatpush1.msra.mxu0 %v2027
  %2060 = vmatprep.subr.mxu0 0.0
  %2061 = vmatpush1.msra.mxu0 0.0
  %2062 = vmatprep.subr.mxu0 0.0
  %2063 = vmatpush1.msra.mxu0 0.0
  %2064 = vmatprep.subr.mxu0 0.0
  %2065 = vmatpush1.msra.mxu0 0.0
  %2066 = vmatprep.subr.mxu0 0.0
  %2067 = vmatpush1.msra.mxu0 0.0
  %2068 = vmatprep.subr.mxu0 0.0
  %2069 = vmatpush1.msra.mxu0 0.0
  %2070 = vmatprep.subr.mxu0 0.0
  %2071 = vmatpush1.msra.mxu0 0.0
  %2072 = vmatprep.subr.mxu0 0.0
  %2073 = vmatpush1.msra.mxu0 0.0
  %2074 = vmatprep.subr.mxu0 0.0
  %2075 = vmatpush1.msra.mxu0 0.0
  %2076 = vmatprep.subr.mxu0 0.0
  %2077 = vmatpush1.msra.mxu0 0.0
  %2078 = vmatprep.subr.mxu0 0.0
  %2079 = vmatpush1.msra.mxu0 0.0
  %2080 = vmatprep.subr.mxu0 0.0
  %2081 = vmatpush1.msra.mxu0 0.0
  %2082 = vmatprep.subr.mxu0 0.0
  %2083 = vmatpush1.msra.mxu0 0.0
  %2084 = vmatprep.subr.mxu0 0.0
  %2085 = vmatpush1.msra.mxu0 0.0
  %2086 = vmatprep.subr.mxu0 0.0
  %2087 = vmatpush1.msra.mxu0 0.0
  %2088 = vmatprep.subr.mxu0 0.0
  %2089 = vmatpush1.msra.mxu0 0.0
  %2090 = vmatprep.subr.mxu0 0.0
  %2091 = vmatpush1.msra.mxu0 0.0
  %2092 = vmatprep.mubr.f32.mxu0 0.0
  %2093 = vmatmul.mubr.f32.gmra.mrb[0].mxu0 %v2009
  %v2094 = vpop.f32.mrb[0].mxu0
  %v2095 = vadd.f32 0.0, %v2094
  %v2096 = vpop.f32.mrb[0].mxu0
  %2097 = vmatprep.mubr.f32.mxu0 0.0
  %2098 = vmatmul.mubr.f32.gmra.mrb[0].mxu0 %v2010
  %v2099 = vpop.f32.mrb[0].mxu0
  %v2100 = vadd.f32 0.0, %v2099
  %v2101 = vpop.f32.mrb[0].mxu0
  %2102 = vdwg.mxu0
  %v2103 = vadd.f32 %v1767, %v2095
  %v2104 = vadd.f32 %v1768, %v2100
  %2105 = vmatprep.subr.mxu0 0.0
  %2106 = vmatpush1.msra.mxu0 %v39
  %2107 = vmatprep.subr.mxu0 0.0
  %2108 = vmatpush1.msra.mxu0 %v40
  %2109 = vmatprep.subr.mxu0 0.0
  %2110 = vmatpush1.msra.mxu0 %v41
  %2111 = vmatprep.subr.mxu0 0.0
  %2112 = vmatpush1.msra.mxu0 %v42
  %2113 = vmatprep.subr.mxu0 0.0
  %2114 = vmatpush1.msra.mxu0 %v43
  %2115 = vmatprep.subr.mxu0 0.0
  %2116 = vmatpush1.msra.mxu0 %v44
  %2117 = vmatprep.subr.mxu0 0.0
  %2118 = vmatpush1.msra.mxu0 %v45
  %2119 = vmatprep.subr.mxu0 0.0
  %2120 = vmatpush1.msra.mxu0 %v46
  %2121 = vmatprep.subr.mxu0 0.0
  %2122 = vmatpush1.msra.mxu0 %v47
  %2123 = vmatprep.subr.mxu0 0.0
  %2124 = vmatpush1.msra.mxu0 0.0
  %2125 = vmatprep.subr.mxu0 0.0
  %2126 = vmatpush1.msra.mxu0 0.0
  %2127 = vmatprep.subr.mxu0 0.0
  %2128 = vmatpush1.msra.mxu0 0.0
  %2129 = vmatprep.subr.mxu0 0.0
  %2130 = vmatpush1.msra.mxu0 0.0
  %2131 = vmatprep.subr.mxu0 0.0
  %2132 = vmatpush1.msra.mxu0 0.0
  %2133 = vmatprep.subr.mxu0 0.0
  %2134 = vmatpush1.msra.mxu0 0.0
  %2135 = vmatprep.subr.mxu0 0.0
  %2136 = vmatpush1.msra.mxu0 0.0
  %2137 = vmatprep.subr.mxu0 0.0
  %2138 = vmatpush1.msra.mxu0 0.0
  %2139 = vmatprep.subr.mxu0 0.0
  %2140 = vmatpush1.msra.mxu0 0.0
  %2141 = vmatprep.subr.mxu0 0.0
  %2142 = vmatpush1.msra.mxu0 0.0
  %2143 = vmatprep.subr.mxu0 0.0
  %2144 = vmatpush1.msra.mxu0 0.0
  %2145 = vmatprep.subr.mxu0 0.0
  %2146 = vmatpush1.msra.mxu0 0.0
  %2147 = vmatprep.subr.mxu0 0.0
  %2148 = vmatpush1.msra.mxu0 0.0
  %2149 = vmatprep.subr.mxu0 0.0
  %2150 = vmatpush1.msra.mxu0 0.0
  %2151 = vmatprep.subr.mxu0 0.0
  %2152 = vmatpush1.msra.mxu0 0.0
  %2153 = vmatprep.subr.mxu0 0.0
  %2154 = vmatpush1.msra.mxu0 0.0
  %2155 = vmatprep.subr.mxu0 0.0
  %2156 = vmatpush1.msra.mxu0 0.0
  %2157 = vmatprep.subr.mxu0 0.0
  %2158 = vmatpush1.msra.mxu0 0.0
  %2159 = vmatprep.subr.mxu0 0.0
  %2160 = vmatpush1.msra.mxu0 0.0
  %2161 = vmatprep.subr.mxu0 0.0
  %2162 = vmatpush1.msra.mxu0 0.0
  %2163 = vmatprep.subr.mxu0 0.0
  %2164 = vmatpush1.msra.mxu0 0.0
  %2165 = vmatprep.subr.mxu0 0.0
  %2166 = vmatpush1.msra.mxu0 0.0
  %2167 = vmatprep.subr.mxu0 0.0
  %2168 = vmatpush1.msra.mxu0 0.0
  %2169 = vmatprep.mubr.f32.mxu0 0.0
  %2170 = vmatmul.mubr.f32.gmra.mrb[0].mxu0 %v1591
  %v2171 = vpop.f32.mrb[0].mxu0
  %v2172 = vadd.f32 0.0, %v2171
  %v2173 = vpop.f32.mrb[0].mxu0
  %2174 = vmatprep.mubr.f32.mxu0 0.0
  %2175 = vmatmul.mubr.f32.gmra.mrb[0].mxu0 %v1594
  %v2176 = vpop.f32.mrb[0].mxu0
  %v2177 = vadd.f32 0.0, %v2176
  %v2178 = vpop.f32.mrb[0].mxu0
  %2179 = vdwg.mxu0
  %v2180 = vadd.f32 %v134, %v2172
  %v2181 = vadd.f32 %v134, %v2177
  %2182 = vmatprep.subr.mxu0 0.0
  %2183 = vmatpush1.msra.mxu0 %v142
  %2184 = vmatprep.subr.mxu0 0.0
  %2185 = vmatpush1.msra.mxu0 %v143
  %2186 = vmatprep.subr.mxu0 0.0
  %2187 = vmatpush1.msra.mxu0 %v144
  %2188 = vmatprep.subr.mxu0 0.0
  %2189 = vmatpush1.msra.mxu0 %v145
  %2190 = vmatprep.subr.mxu0 0.0
  %2191 = vmatpush1.msra.mxu0 %v146
  %2192 = vmatprep.subr.mxu0 0.0
  %2193 = vmatpush1.msra.mxu0 %v147
  %2194 = vmatprep.subr.mxu0 0.0
  %2195 = vmatpush1.msra.mxu0 %v148
  %2196 = vmatprep.subr.mxu0 0.0
  %2197 = vmatpush1.msra.mxu0 %v149
  %2198 = vmatprep.subr.mxu0 0.0
  %2199 = vmatpush1.msra.mxu0 %v150
  %2200 = vmatprep.subr.mxu0 0.0
  %2201 = vmatpush1.msra.mxu0 0.0
  %2202 = vmatprep.subr.mxu0 0.0
  %2203 = vmatpush1.msra.mxu0 0.0
  %2204 = vmatprep.subr.mxu0 0.0
  %2205 = vmatpush1.msra.mxu0 0.0
  %2206 = vmatprep.subr.mxu0 0.0
  %2207 = vmatpush1.msra.mxu0 0.0
  %2208 = vmatprep.subr.mxu0 0.0
  %2209 = vmatpush1.msra.mxu0 0.0
  %2210 = vmatprep.subr.mxu0 0.0
  %2211 = vmatpush1.msra.mxu0 0.0
  %2212 = vmatprep.subr.mxu0 0.0
  %2213 = vmatpush1.msra.mxu0 0.0
  %2214 = vmatprep.subr.mxu0 0.0
  %2215 = vmatpush1.msra.mxu0 0.0
  %2216 = vmatprep.subr.mxu0 0.0
  %2217 = vmatpush1.msra.mxu0 0.0
  %2218 = vmatprep.subr.mxu0 0.0
  %2219 = vmatpush1.msra.mxu0 0.0
  %2220 = vmatprep.subr.mxu0 0.0
  %2221 = vmatpush1.msra.mxu0 0.0
  %2222 = vmatprep.subr.mxu0 0.0
  %2223 = vmatpush1.msra.mxu0 0.0
  %2224 = vmatprep.subr.mxu0 0.0
  %2225 = vmatpush1.msra.mxu0 0.0
  %2226 = vmatprep.subr.mxu0 0.0
  %2227 = vmatpush1.msra.mxu0 0.0
  %2228 = vmatprep.subr.mxu0 0.0
  %2229 = vmatpush1.msra.mxu0 0.0
  %2230 = vmatprep.subr.mxu0 0.0
  %2231 = vmatpush1.msra.mxu0 0.0
  %2232 = vmatprep.subr.mxu0 0.0
  %2233 = vmatpush1.msra.mxu0 0.0
  %2234 = vmatprep.subr.mxu0 0.0
  %2235 = vmatpush1.msra.mxu0 0.0
  %2236 = vmatprep.subr.mxu0 0.0
  %2237 = vmatpush1.msra.mxu0 0.0
  %2238 = vmatprep.subr.mxu0 0.0
  %2239 = vmatpush1.msra.mxu0 0.0
  %2240 = vmatprep.subr.mxu0 0.0
  %2241 = vmatpush1.msra.mxu0 0.0
  %2242 = vmatprep.subr.mxu0 0.0
  %2243 = vmatpush1.msra.mxu0 0.0
  %2244 = vmatprep.subr.mxu0 0.0
  %2245 = vmatpush1.msra.mxu0 0.0
  %2246 = vmatprep.mubr.f32.mxu0 0.0
  %2247 = vmatmul.mubr.f32.gmra.mrb[0].mxu0 %v1927
  %v2248 = vpop.f32.mrb[0].mxu0
  %v2249 = vadd.f32 0.0, %v2248
  %v2250 = vpop.f32.mrb[0].mxu0
  %2251 = vmatprep.mubr.f32.mxu0 0.0
  %2252 = vmatmul.mubr.f32.gmra.mrb[0].mxu0 %v1930
  %v2253 = vpop.f32.mrb[0].mxu0
  %v2254 = vadd.f32 0.0, %v2253
  %v2255 = vpop.f32.mrb[0].mxu0
  %2256 = vdwg.mxu0
  %v2257 = vadd.f32 %v2180, %v2249
  %v2258 = vadd.f32 %v2181, %v2254
  %s2259 = scalar_lea.vmem %s0, 128
  %v2260 = vld [vmem:[%s2259] sm:$0xff]
  %v2261 = vld [vmem:[%s2259 + $0x8] sm:$0xff]
  %v2263 = vsel %vm48, %v2260, 0
  %v2266 = vsel %vm48, %v2261, 0
  %2268 = vmatprep.subr.mxu0 0.0
  %2269 = vmatpush1.msra.mxu0 %v238
  %2270 = vmatprep.subr.mxu0 0.0
  %2271 = vmatpush1.msra.mxu0 %v239
  %2272 = vmatprep.subr.mxu0 0.0
  %2273 = vmatpush1.msra.mxu0 %v240
  %2274 = vmatprep.subr.mxu0 0.0
  %2275 = vmatpush1.msra.mxu0 %v241
  %2276 = vmatprep.subr.mxu0 0.0
  %2277 = vmatpush1.msra.mxu0 %v242
  %2278 = vmatprep.subr.mxu0 0.0
  %2279 = vmatpush1.msra.mxu0 %v243
  %2280 = vmatprep.subr.mxu0 0.0
  %2281 = vmatpush1.msra.mxu0 %v244
  %2282 = vmatprep.subr.mxu0 0.0
  %2283 = vmatpush1.msra.mxu0 %v245
  %2284 = vmatprep.subr.mxu0 0.0
  %2285 = vmatpush1.msra.mxu0 %v246
  %2286 = vmatprep.subr.mxu0 0.0
  %2287 = vmatpush1.msra.mxu0 0.0
  %2288 = vmatprep.subr.mxu0 0.0
  %2289 = vmatpush1.msra.mxu0 0.0
  %2290 = vmatprep.subr.mxu0 0.0
  %2291 = vmatpush1.msra.mxu0 0.0
  %2292 = vmatprep.subr.mxu0 0.0
  %2293 = vmatpush1.msra.mxu0 0.0
  %2294 = vmatprep.subr.mxu0 0.0
  %2295 = vmatpush1.msra.mxu0 0.0
  %2296 = vmatprep.subr.mxu0 0.0
  %2297 = vmatpush1.msra.mxu0 0.0
  %2298 = vmatprep.subr.mxu0 0.0
  %2299 = vmatpush1.msra.mxu0 0.0
  %2300 = vmatprep.subr.mxu0 0.0
  %2301 = vmatpush1.msra.mxu0 0.0
  %2302 = vmatprep.subr.mxu0 0.0
  %2303 = vmatpush1.msra.mxu0 0.0
  %2304 = vmatprep.subr.mxu0 0.0
  %2305 = vmatpush1.msra.mxu0 0.0
  %2306 = vmatprep.subr.mxu0 0.0
  %2307 = vmatpush1.msra.mxu0 0.0
  %2308 = vmatprep.subr.mxu0 0.0
  %2309 = vmatpush1.msra.mxu0 0.0
  %2310 = vmatprep.subr.mxu0 0.0
  %2311 = vmatpush1.msra.mxu0 0.0
  %2312 = vmatprep.subr.mxu0 0.0
  %2313 = vmatpush1.msra.mxu0 0.0
  %2314 = vmatprep.subr.mxu0 0.0
  %2315 = vmatpush1.msra.mxu0 0.0
  %2316 = vmatprep.subr.mxu0 0.0
  %2317 = vmatpush1.msra.mxu0 0.0
  %2318 = vmatprep.subr.mxu0 0.0
  %2319 = vmatpush1.msra.mxu0 0.0
  %2320 = vmatprep.subr.mxu0 0.0
  %2321 = vmatpush1.msra.mxu0 0.0
  %2322 = vmatprep.subr.mxu0 0.0
  %2323 = vmatpush1.msra.mxu0 0.0
  %2324 = vmatprep.subr.mxu0 0.0
  %2325 = vmatpush1.msra.mxu0 0.0
  %2326 = vmatprep.subr.mxu0 0.0
  %2327 = vmatpush1.msra.mxu0 0.0
  %2328 = vmatprep.subr.mxu0 0.0
  %2329 = vmatpush1.msra.mxu0 0.0
  %2330 = vmatprep.subr.mxu0 0.0
  %2331 = vmatpush1.msra.mxu0 0.0
  %2332 = vmatprep.mubr.f32.mxu0 0.0
  %2333 = vmatmul.mubr.f32.gmra.mrb[0].mxu0 %v2263
  %v2334 = vpop.f32.mrb[0].mxu0
  %v2335 = vadd.f32 0.0, %v2334
  %v2336 = vpop.f32.mrb[0].mxu0
  %2337 = vmatprep.mubr.f32.mxu0 0.0
  %2338 = vmatmul.mubr.f32.gmra.mrb[0].mxu0 %v2266
  %v2339 = vpop.f32.mrb[0].mxu0
  %v2340 = vadd.f32 0.0, %v2339
  %v2341 = vpop.f32.mrb[0].mxu0
  %2342 = vdwg.mxu0
  %v2343 = vadd.f32 %v2257, %v2335
  %v2344 = vadd.f32 %v2258, %v2340
  %v2345 = vmax.f32 %v2343, 0.0
  %v2346 = vmax.f32 %v2344, 0.0
  %s2347 = scalar_lea.vmem %s3, 768
  %v2348 = vld [vmem:[%s2347] sm:$0xff]
  %v2349 = vld [vmem:[%s2347 + $0x8] sm:$0xff]
  %v2350 = vld [vmem:[%s2347 + $0x10] sm:$0xff]
  %v2351 = vld [vmem:[%s2347 + $0x18] sm:$0xff]
  %v2352 = vld [vmem:[%s2347 + $0x20] sm:$0xff]
  %v2353 = vld [vmem:[%s2347 + $0x28] sm:$0xff]
  %v2354 = vld [vmem:[%s2347 + $0x30] sm:$0xff]
  %v2355 = vld [vmem:[%s2347 + $0x38] sm:$0xff]
  %v2356 = vld [vmem:[%s2347 + $0x40] sm:$0xff]
  %v2357 = vld [vmem:[%s2347 + $0x48] sm:$0xff]
  %v2358 = vld [vmem:[%s2347 + $0x50] sm:$0xff]
  %v2359 = vld [vmem:[%s2347 + $0x58] sm:$0xff]
  %v2360 = vld [vmem:[%s2347 + $0x60] sm:$0xff]
  %v2361 = vld [vmem:[%s2347 + $0x68] sm:$0xff]
  %v2362 = vld [vmem:[%s2347 + $0x70] sm:$0xff]
  %v2363 = vld [vmem:[%s2347 + $0x78] sm:$0xff]
  %2364 = vmatprep.subr.mxu0 0.0
  %2365 = vmatpush1.msra.mxu0 %v2348
  %2366 = vmatprep.subr.mxu0 0.0
  %2367 = vmatpush1.msra.mxu0 %v2349
  %2368 = vmatprep.subr.mxu0 0.0
  %2369 = vmatpush1.msra.mxu0 %v2350
  %2370 = vmatprep.subr.mxu0 0.0
  %2371 = vmatpush1.msra.mxu0 %v2351
  %2372 = vmatprep.subr.mxu0 0.0
  %2373 = vmatpush1.msra.mxu0 %v2352
  %2374 = vmatprep.subr.mxu0 0.0
  %2375 = vmatpush1.msra.mxu0 %v2353
  %2376 = vmatprep.subr.mxu0 0.0
  %2377 = vmatpush1.msra.mxu0 %v2354
  %2378 = vmatprep.subr.mxu0 0.0
  %2379 = vmatpush1.msra.mxu0 %v2355
  %2380 = vmatprep.subr.mxu0 0.0
  %2381 = vmatpush1.msra.mxu0 %v2356
  %2382 = vmatprep.subr.mxu0 0.0
  %2383 = vmatpush1.msra.mxu0 %v2357
  %2384 = vmatprep.subr.mxu0 0.0
  %2385 = vmatpush1.msra.mxu0 %v2358
  %2386 = vmatprep.subr.mxu0 0.0
  %2387 = vmatpush1.msra.mxu0 %v2359
  %2388 = vmatprep.subr.mxu0 0.0
  %2389 = vmatpush1.msra.mxu0 %v2360
  %2390 = vmatprep.subr.mxu0 0.0
  %2391 = vmatpush1.msra.mxu0 %v2361
  %2392 = vmatprep.subr.mxu0 0.0
  %2393 = vmatpush1.msra.mxu0 %v2362
  %2394 = vmatprep.subr.mxu0 0.0
  %2395 = vmatpush1.msra.mxu0 %v2363
  %2396 = vmatprep.subr.mxu0 0.0
  %2397 = vmatpush1.msra.mxu0 0.0
  %2398 = vmatprep.subr.mxu0 0.0
  %2399 = vmatpush1.msra.mxu0 0.0
  %2400 = vmatprep.subr.mxu0 0.0
  %2401 = vmatpush1.msra.mxu0 0.0
  %2402 = vmatprep.subr.mxu0 0.0
  %2403 = vmatpush1.msra.mxu0 0.0
  %2404 = vmatprep.subr.mxu0 0.0
  %2405 = vmatpush1.msra.mxu0 0.0
  %2406 = vmatprep.subr.mxu0 0.0
  %2407 = vmatpush1.msra.mxu0 0.0
  %2408 = vmatprep.subr.mxu0 0.0
  %2409 = vmatpush1.msra.mxu0 0.0
  %2410 = vmatprep.subr.mxu0 0.0
  %2411 = vmatpush1.msra.mxu0 0.0
  %2412 = vmatprep.subr.mxu0 0.0
  %2413 = vmatpush1.msra.mxu0 0.0
  %2414 = vmatprep.subr.mxu0 0.0
  %2415 = vmatpush1.msra.mxu0 0.0
  %2416 = vmatprep.subr.mxu0 0.0
  %2417 = vmatpush1.msra.mxu0 0.0
  %2418 = vmatprep.subr.mxu0 0.0
  %2419 = vmatpush1.msra.mxu0 0.0
  %2420 = vmatprep.subr.mxu0 0.0
  %2421 = vmatpush1.msra.mxu0 0.0
  %2422 = vmatprep.subr.mxu0 0.0
  %2423 = vmatpush1.msra.mxu0 0.0
  %2424 = vmatprep.subr.mxu0 0.0
  %2425 = vmatpush1.msra.mxu0 0.0
  %2426 = vmatprep.subr.mxu0 0.0
  %2427 = vmatpush1.msra.mxu0 0.0
  %2428 = vmatprep.mubr.f32.mxu0 0.0
  %2429 = vmatmul.mubr.f32.gmra.mrb[0].mxu0 %v2345
  %v2430 = vpop.f32.mrb[0].mxu0
  %v2431 = vadd.f32 0.0, %v2430
  %v2432 = vpop.f32.mrb[0].mxu0
  %2433 = vmatprep.mubr.f32.mxu0 0.0
  %2434 = vmatmul.mubr.f32.gmra.mrb[0].mxu0 %v2346
  %v2435 = vpop.f32.mrb[0].mxu0
  %v2436 = vadd.f32 0.0, %v2435
  %v2437 = vpop.f32.mrb[0].mxu0
  %2438 = vdwg.mxu0
  %v2439 = vadd.f32 %v2103, %v2431
  %v2440 = vadd.f32 %v2104, %v2436
  %2441 = vmatprep.subr.mxu0 0.0
  %2442 = vmatpush1.msra.mxu0 %v39
  %2443 = vmatprep.subr.mxu0 0.0
  %2444 = vmatpush1.msra.mxu0 %v40
  %2445 = vmatprep.subr.mxu0 0.0
  %2446 = vmatpush1.msra.mxu0 %v41
  %2447 = vmatprep.subr.mxu0 0.0
  %2448 = vmatpush1.msra.mxu0 %v42
  %2449 = vmatprep.subr.mxu0 0.0
  %2450 = vmatpush1.msra.mxu0 %v43
  %2451 = vmatprep.subr.mxu0 0.0
  %2452 = vmatpush1.msra.mxu0 %v44
  %2453 = vmatprep.subr.mxu0 0.0
  %2454 = vmatpush1.msra.mxu0 %v45
  %2455 = vmatprep.subr.mxu0 0.0
  %2456 = vmatpush1.msra.mxu0 %v46
  %2457 = vmatprep.subr.mxu0 0.0
  %2458 = vmatpush1.msra.mxu0 %v47
  %2459 = vmatprep.subr.mxu0 0.0
  %2460 = vmatpush1.msra.mxu0 0.0
  %2461 = vmatprep.subr.mxu0 0.0
  %2462 = vmatpush1.msra.mxu0 0.0
  %2463 = vmatprep.subr.mxu0 0.0
  %2464 = vmatpush1.msra.mxu0 0.0
  %2465 = vmatprep.subr.mxu0 0.0
  %2466 = vmatpush1.msra.mxu0 0.0
  %2467 = vmatprep.subr.mxu0 0.0
  %2468 = vmatpush1.msra.mxu0 0.0
  %2469 = vmatprep.subr.mxu0 0.0
  %2470 = vmatpush1.msra.mxu0 0.0
  %2471 = vmatprep.subr.mxu0 0.0
  %2472 = vmatpush1.msra.mxu0 0.0
  %2473 = vmatprep.subr.mxu0 0.0
  %2474 = vmatpush1.msra.mxu0 0.0
  %2475 = vmatprep.subr.mxu0 0.0
  %2476 = vmatpush1.msra.mxu0 0.0
  %2477 = vmatprep.subr.mxu0 0.0
  %2478 = vmatpush1.msra.mxu0 0.0
  %2479 = vmatprep.subr.mxu0 0.0
  %2480 = vmatpush1.msra.mxu0 0.0
  %2481 = vmatprep.subr.mxu0 0.0
  %2482 = vmatpush1.msra.mxu0 0.0
  %2483 = vmatprep.subr.mxu0 0.0
  %2484 = vmatpush1.msra.mxu0 0.0
  %2485 = vmatprep.subr.mxu0 0.0
  %2486 = vmatpush1.msra.mxu0 0.0
  %2487 = vmatprep.subr.mxu0 0.0
  %2488 = vmatpush1.msra.mxu0 0.0
  %2489 = vmatprep.subr.mxu0 0.0
  %2490 = vmatpush1.msra.mxu0 0.0
  %2491 = vmatprep.subr.mxu0 0.0
  %2492 = vmatpush1.msra.mxu0 0.0
  %2493 = vmatprep.subr.mxu0 0.0
  %2494 = vmatpush1.msra.mxu0 0.0
  %2495 = vmatprep.subr.mxu0 0.0
  %2496 = vmatpush1.msra.mxu0 0.0
  %2497 = vmatprep.subr.mxu0 0.0
  %2498 = vmatpush1.msra.mxu0 0.0
  %2499 = vmatprep.subr.mxu0 0.0
  %2500 = vmatpush1.msra.mxu0 0.0
  %2501 = vmatprep.subr.mxu0 0.0
  %2502 = vmatpush1.msra.mxu0 0.0
  %2503 = vmatprep.subr.mxu0 0.0
  %2504 = vmatpush1.msra.mxu0 0.0
  %2505 = vmatprep.mubr.f32.mxu0 0.0
  %2506 = vmatmul.mubr.f32.gmra.mrb[0].mxu0 %v1927
  %v2507 = vpop.f32.mrb[0].mxu0
  %v2508 = vadd.f32 0.0, %v2507
  %v2509 = vpop.f32.mrb[0].mxu0
  %2510 = vmatprep.mubr.f32.mxu0 0.0
  %2511 = vmatmul.mubr.f32.gmra.mrb[0].mxu0 %v1930
  %v2512 = vpop.f32.mrb[0].mxu0
  %v2513 = vadd.f32 0.0, %v2512
  %v2514 = vpop.f32.mrb[0].mxu0
  %2515 = vdwg.mxu0
  %v2516 = vadd.f32 %v134, %v2508
  %v2517 = vadd.f32 %v134, %v2513
  %2518 = vmatprep.subr.mxu0 0.0
  %2519 = vmatpush1.msra.mxu0 %v142
  %2520 = vmatprep.subr.mxu0 0.0
  %2521 = vmatpush1.msra.mxu0 %v143
  %2522 = vmatprep.subr.mxu0 0.0
  %2523 = vmatpush1.msra.mxu0 %v144
  %2524 = vmatprep.subr.mxu0 0.0
  %2525 = vmatpush1.msra.mxu0 %v145
  %2526 = vmatprep.subr.mxu0 0.0
  %2527 = vmatpush1.msra.mxu0 %v146
  %2528 = vmatprep.subr.mxu0 0.0
  %2529 = vmatpush1.msra.mxu0 %v147
  %2530 = vmatprep.subr.mxu0 0.0
  %2531 = vmatpush1.msra.mxu0 %v148
  %2532 = vmatprep.subr.mxu0 0.0
  %2533 = vmatpush1.msra.mxu0 %v149
  %2534 = vmatprep.subr.mxu0 0.0
  %2535 = vmatpush1.msra.mxu0 %v150
  %2536 = vmatprep.subr.mxu0 0.0
  %2537 = vmatpush1.msra.mxu0 0.0
  %2538 = vmatprep.subr.mxu0 0.0
  %2539 = vmatpush1.msra.mxu0 0.0
  %2540 = vmatprep.subr.mxu0 0.0
  %2541 = vmatpush1.msra.mxu0 0.0
  %2542 = vmatprep.subr.mxu0 0.0
  %2543 = vmatpush1.msra.mxu0 0.0
  %2544 = vmatprep.subr.mxu0 0.0
  %2545 = vmatpush1.msra.mxu0 0.0
  %2546 = vmatprep.subr.mxu0 0.0
  %2547 = vmatpush1.msra.mxu0 0.0
  %2548 = vmatprep.subr.mxu0 0.0
  %2549 = vmatpush1.msra.mxu0 0.0
  %2550 = vmatprep.subr.mxu0 0.0
  %2551 = vmatpush1.msra.mxu0 0.0
  %2552 = vmatprep.subr.mxu0 0.0
  %2553 = vmatpush1.msra.mxu0 0.0
  %2554 = vmatprep.subr.mxu0 0.0
  %2555 = vmatpush1.msra.mxu0 0.0
  %2556 = vmatprep.subr.mxu0 0.0
  %2557 = vmatpush1.msra.mxu0 0.0
  %2558 = vmatprep.subr.mxu0 0.0
  %2559 = vmatpush1.msra.mxu0 0.0
  %2560 = vmatprep.subr.mxu0 0.0
  %2561 = vmatpush1.msra.mxu0 0.0
  %2562 = vmatprep.subr.mxu0 0.0
  %2563 = vmatpush1.msra.mxu0 0.0
  %2564 = vmatprep.subr.mxu0 0.0
  %2565 = vmatpush1.msra.mxu0 0.0
  %2566 = vmatprep.subr.mxu0 0.0
  %2567 = vmatpush1.msra.mxu0 0.0
  %2568 = vmatprep.subr.mxu0 0.0
  %2569 = vmatpush1.msra.mxu0 0.0
  %2570 = vmatprep.subr.mxu0 0.0
  %2571 = vmatpush1.msra.mxu0 0.0
  %2572 = vmatprep.subr.mxu0 0.0
  %2573 = vmatpush1.msra.mxu0 0.0
  %2574 = vmatprep.subr.mxu0 0.0
  %2575 = vmatpush1.msra.mxu0 0.0
  %2576 = vmatprep.subr.mxu0 0.0
  %2577 = vmatpush1.msra.mxu0 0.0
  %2578 = vmatprep.subr.mxu0 0.0
  %2579 = vmatpush1.msra.mxu0 0.0
  %2580 = vmatprep.subr.mxu0 0.0
  %2581 = vmatpush1.msra.mxu0 0.0
  %2582 = vmatprep.mubr.f32.mxu0 0.0
  %2583 = vmatmul.mubr.f32.gmra.mrb[0].mxu0 %v2263
  %v2584 = vpop.f32.mrb[0].mxu0
  %v2585 = vadd.f32 0.0, %v2584
  %v2586 = vpop.f32.mrb[0].mxu0
  %2587 = vmatprep.mubr.f32.mxu0 0.0
  %2588 = vmatmul.mubr.f32.gmra.mrb[0].mxu0 %v2266
  %v2589 = vpop.f32.mrb[0].mxu0
  %v2590 = vadd.f32 0.0, %v2589
  %v2591 = vpop.f32.mrb[0].mxu0
  %2592 = vdwg.mxu0
  %v2593 = vadd.f32 %v2516, %v2585
  %v2594 = vadd.f32 %v2517, %v2590
  %s2595 = scalar_lea.vmem %s0, 144
  %v2596 = vld [vmem:[%s2595] sm:$0xff]
  %v2597 = vld [vmem:[%s2595 + $0x8] sm:$0xff]
  %v2599 = vsel %vm48, %v2596, 0
  %v2602 = vsel %vm48, %v2597, 0
  %2604 = vmatprep.subr.mxu0 0.0
  %2605 = vmatpush1.msra.mxu0 %v238
  %2606 = vmatprep.subr.mxu0 0.0
  %2607 = vmatpush1.msra.mxu0 %v239
  %2608 = vmatprep.subr.mxu0 0.0
  %2609 = vmatpush1.msra.mxu0 %v240
  %2610 = vmatprep.subr.mxu0 0.0
  %2611 = vmatpush1.msra.mxu0 %v241
  %2612 = vmatprep.subr.mxu0 0.0
  %2613 = vmatpush1.msra.mxu0 %v242
  %2614 = vmatprep.subr.mxu0 0.0
  %2615 = vmatpush1.msra.mxu0 %v243
  %2616 = vmatprep.subr.mxu0 0.0
  %2617 = vmatpush1.msra.mxu0 %v244
  %2618 = vmatprep.subr.mxu0 0.0
  %2619 = vmatpush1.msra.mxu0 %v245
  %2620 = vmatprep.subr.mxu0 0.0
  %2621 = vmatpush1.msra.mxu0 %v246
  %2622 = vmatprep.subr.mxu0 0.0
  %2623 = vmatpush1.msra.mxu0 0.0
  %2624 = vmatprep.subr.mxu0 0.0
  %2625 = vmatpush1.msra.mxu0 0.0
  %2626 = vmatprep.subr.mxu0 0.0
  %2627 = vmatpush1.msra.mxu0 0.0
  %2628 = vmatprep.subr.mxu0 0.0
  %2629 = vmatpush1.msra.mxu0 0.0
  %2630 = vmatprep.subr.mxu0 0.0
  %2631 = vmatpush1.msra.mxu0 0.0
  %2632 = vmatprep.subr.mxu0 0.0
  %2633 = vmatpush1.msra.mxu0 0.0
  %2634 = vmatprep.subr.mxu0 0.0
  %2635 = vmatpush1.msra.mxu0 0.0
  %2636 = vmatprep.subr.mxu0 0.0
  %2637 = vmatpush1.msra.mxu0 0.0
  %2638 = vmatprep.subr.mxu0 0.0
  %2639 = vmatpush1.msra.mxu0 0.0
  %2640 = vmatprep.subr.mxu0 0.0
  %2641 = vmatpush1.msra.mxu0 0.0
  %2642 = vmatprep.subr.mxu0 0.0
  %2643 = vmatpush1.msra.mxu0 0.0
  %2644 = vmatprep.subr.mxu0 0.0
  %2645 = vmatpush1.msra.mxu0 0.0
  %2646 = vmatprep.subr.mxu0 0.0
  %2647 = vmatpush1.msra.mxu0 0.0
  %2648 = vmatprep.subr.mxu0 0.0
  %2649 = vmatpush1.msra.mxu0 0.0
  %2650 = vmatprep.subr.mxu0 0.0
  %2651 = vmatpush1.msra.mxu0 0.0
  %2652 = vmatprep.subr.mxu0 0.0
  %2653 = vmatpush1.msra.mxu0 0.0
  %2654 = vmatprep.subr.mxu0 0.0
  %2655 = vmatpush1.msra.mxu0 0.0
  %2656 = vmatprep.subr.mxu0 0.0
  %2657 = vmatpush1.msra.mxu0 0.0
  %2658 = vmatprep.subr.mxu0 0.0
  %2659 = vmatpush1.msra.mxu0 0.0
  %2660 = vmatprep.subr.mxu0 0.0
  %2661 = vmatpush1.msra.mxu0 0.0
  %2662 = vmatprep.subr.mxu0 0.0
  %2663 = vmatpush1.msra.mxu0 0.0
  %2664 = vmatprep.subr.mxu0 0.0
  %2665 = vmatpush1.msra.mxu0 0.0
  %2666 = vmatprep.subr.mxu0 0.0
  %2667 = vmatpush1.msra.mxu0 0.0
  %2668 = vmatprep.mubr.f32.mxu0 0.0
  %2669 = vmatmul.mubr.f32.gmra.mrb[0].mxu0 %v2599
  %v2670 = vpop.f32.mrb[0].mxu0
  %v2671 = vadd.f32 0.0, %v2670
  %v2672 = vpop.f32.mrb[0].mxu0
  %2673 = vmatprep.mubr.f32.mxu0 0.0
  %2674 = vmatmul.mubr.f32.gmra.mrb[0].mxu0 %v2602
  %v2675 = vpop.f32.mrb[0].mxu0
  %v2676 = vadd.f32 0.0, %v2675
  %v2677 = vpop.f32.mrb[0].mxu0
  %2678 = vdwg.mxu0
  %v2679 = vadd.f32 %v2593, %v2671
  %v2680 = vadd.f32 %v2594, %v2676
  %v2681 = vmax.f32 %v2679, 0.0
  %v2682 = vmax.f32 %v2680, 0.0
  %s2683 = scalar_lea.vmem %s3, 896
  %v2684 = vld [vmem:[%s2683] sm:$0xff]
  %v2685 = vld [vmem:[%s2683 + $0x8] sm:$0xff]
  %v2686 = vld [vmem:[%s2683 + $0x10] sm:$0xff]
  %v2687 = vld [vmem:[%s2683 + $0x18] sm:$0xff]
  %v2688 = vld [vmem:[%s2683 + $0x20] sm:$0xff]
  %v2689 = vld [vmem:[%s2683 + $0x28] sm:$0xff]
  %v2690 = vld [vmem:[%s2683 + $0x30] sm:$0xff]
  %v2691 = vld [vmem:[%s2683 + $0x38] sm:$0xff]
  %v2692 = vld [vmem:[%s2683 + $0x40] sm:$0xff]
  %v2693 = vld [vmem:[%s2683 + $0x48] sm:$0xff]
  %v2694 = vld [vmem:[%s2683 + $0x50] sm:$0xff]
  %v2695 = vld [vmem:[%s2683 + $0x58] sm:$0xff]
  %v2696 = vld [vmem:[%s2683 + $0x60] sm:$0xff]
  %v2697 = vld [vmem:[%s2683 + $0x68] sm:$0xff]
  %v2698 = vld [vmem:[%s2683 + $0x70] sm:$0xff]
  %v2699 = vld [vmem:[%s2683 + $0x78] sm:$0xff]
  %2700 = vmatprep.subr.mxu0 0.0
  %2701 = vmatpush1.msra.mxu0 %v2684
  %2702 = vmatprep.subr.mxu0 0.0
  %2703 = vmatpush1.msra.mxu0 %v2685
  %2704 = vmatprep.subr.mxu0 0.0
  %2705 = vmatpush1.msra.mxu0 %v2686
  %2706 = vmatprep.subr.mxu0 0.0
  %2707 = vmatpush1.msra.mxu0 %v2687
  %2708 = vmatprep.subr.mxu0 0.0
  %2709 = vmatpush1.msra.mxu0 %v2688
  %2710 = vmatprep.subr.mxu0 0.0
  %2711 = vmatpush1.msra.mxu0 %v2689
  %2712 = vmatprep.subr.mxu0 0.0
  %2713 = vmatpush1.msra.mxu0 %v2690
  %2714 = vmatprep.subr.mxu0 0.0
  %2715 = vmatpush1.msra.mxu0 %v2691
  %2716 = vmatprep.subr.mxu0 0.0
  %2717 = vmatpush1.msra.mxu0 %v2692
  %2718 = vmatprep.subr.mxu0 0.0
  %2719 = vmatpush1.msra.mxu0 %v2693
  %2720 = vmatprep.subr.mxu0 0.0
  %2721 = vmatpush1.msra.mxu0 %v2694
  %2722 = vmatprep.subr.mxu0 0.0
  %2723 = vmatpush1.msra.mxu0 %v2695
  %2724 = vmatprep.subr.mxu0 0.0
  %2725 = vmatpush1.msra.mxu0 %v2696
  %2726 = vmatprep.subr.mxu0 0.0
  %2727 = vmatpush1.msra.mxu0 %v2697
  %2728 = vmatprep.subr.mxu0 0.0
  %2729 = vmatpush1.msra.mxu0 %v2698
  %2730 = vmatprep.subr.mxu0 0.0
  %2731 = vmatpush1.msra.mxu0 %v2699
  %2732 = vmatprep.subr.mxu0 0.0
  %2733 = vmatpush1.msra.mxu0 0.0
  %2734 = vmatprep.subr.mxu0 0.0
  %2735 = vmatpush1.msra.mxu0 0.0
  %2736 = vmatprep.subr.mxu0 0.0
  %2737 = vmatpush1.msra.mxu0 0.0
  %2738 = vmatprep.subr.mxu0 0.0
  %2739 = vmatpush1.msra.mxu0 0.0
  %2740 = vmatprep.subr.mxu0 0.0
  %2741 = vmatpush1.msra.mxu0 0.0
  %2742 = vmatprep.subr.mxu0 0.0
  %2743 = vmatpush1.msra.mxu0 0.0
  %2744 = vmatprep.subr.mxu0 0.0
  %2745 = vmatpush1.msra.mxu0 0.0
  %2746 = vmatprep.subr.mxu0 0.0
  %2747 = vmatpush1.msra.mxu0 0.0
  %2748 = vmatprep.subr.mxu0 0.0
  %2749 = vmatpush1.msra.mxu0 0.0
  %2750 = vmatprep.subr.mxu0 0.0
  %2751 = vmatpush1.msra.mxu0 0.0
  %2752 = vmatprep.subr.mxu0 0.0
  %2753 = vmatpush1.msra.mxu0 0.0
  %2754 = vmatprep.subr.mxu0 0.0
  %2755 = vmatpush1.msra.mxu0 0.0
  %2756 = vmatprep.subr.mxu0 0.0
  %2757 = vmatpush1.msra.mxu0 0.0
  %2758 = vmatprep.subr.mxu0 0.0
  %2759 = vmatpush1.msra.mxu0 0.0
  %2760 = vmatprep.subr.mxu0 0.0
  %2761 = vmatpush1.msra.mxu0 0.0
  %2762 = vmatprep.subr.mxu0 0.0
  %2763 = vmatpush1.msra.mxu0 0.0
  %2764 = vmatprep.mubr.f32.mxu0 0.0
  %2765 = vmatmul.mubr.f32.gmra.mrb[0].mxu0 %v2681
  %v2766 = vpop.f32.mrb[0].mxu0
  %v2767 = vadd.f32 0.0, %v2766
  %v2768 = vpop.f32.mrb[0].mxu0
  %2769 = vmatprep.mubr.f32.mxu0 0.0
  %2770 = vmatmul.mubr.f32.gmra.mrb[0].mxu0 %v2682
  %v2771 = vpop.f32.mrb[0].mxu0
  %v2772 = vadd.f32 0.0, %v2771
  %v2773 = vpop.f32.mrb[0].mxu0
  %2774 = vdwg.mxu0
  %v2775 = vadd.f32 %v2439, %v2767
  %v2776 = vadd.f32 %v2440, %v2772
  %2777 = vmatprep.subr.mxu0 0.0
  %2778 = vmatpush1.msra.mxu0 %v39
  %2779 = vmatprep.subr.mxu0 0.0
  %2780 = vmatpush1.msra.mxu0 %v40
  %2781 = vmatprep.subr.mxu0 0.0
  %2782 = vmatpush1.msra.mxu0 %v41
  %2783 = vmatprep.subr.mxu0 0.0
  %2784 = vmatpush1.msra.mxu0 %v42
  %2785 = vmatprep.subr.mxu0 0.0
  %2786 = vmatpush1.msra.mxu0 %v43
  %2787 = vmatprep.subr.mxu0 0.0
  %2788 = vmatpush1.msra.mxu0 %v44
  %2789 = vmatprep.subr.mxu0 0.0
  %2790 = vmatpush1.msra.mxu0 %v45
  %2791 = vmatprep.subr.mxu0 0.0
  %2792 = vmatpush1.msra.mxu0 %v46
  %2793 = vmatprep.subr.mxu0 0.0
  %2794 = vmatpush1.msra.mxu0 %v47
  %2795 = vmatprep.subr.mxu0 0.0
  %2796 = vmatpush1.msra.mxu0 0.0
  %2797 = vmatprep.subr.mxu0 0.0
  %2798 = vmatpush1.msra.mxu0 0.0
  %2799 = vmatprep.subr.mxu0 0.0
  %2800 = vmatpush1.msra.mxu0 0.0
  %2801 = vmatprep.subr.mxu0 0.0
  %2802 = vmatpush1.msra.mxu0 0.0
  %2803 = vmatprep.subr.mxu0 0.0
  %2804 = vmatpush1.msra.mxu0 0.0
  %2805 = vmatprep.subr.mxu0 0.0
  %2806 = vmatpush1.msra.mxu0 0.0
  %2807 = vmatprep.subr.mxu0 0.0
  %2808 = vmatpush1.msra.mxu0 0.0
  %2809 = vmatprep.subr.mxu0 0.0
  %2810 = vmatpush1.msra.mxu0 0.0
  %2811 = vmatprep.subr.mxu0 0.0
  %2812 = vmatpush1.msra.mxu0 0.0
  %2813 = vmatprep.subr.mxu0 0.0
  %2814 = vmatpush1.msra.mxu0 0.0
  %2815 = vmatprep.subr.mxu0 0.0
  %2816 = vmatpush1.msra.mxu0 0.0
  %2817 = vmatprep.subr.mxu0 0.0
  %2818 = vmatpush1.msra.mxu0 0.0
  %2819 = vmatprep.subr.mxu0 0.0
  %2820 = vmatpush1.msra.mxu0 0.0
  %2821 = vmatprep.subr.mxu0 0.0
  %2822 = vmatpush1.msra.mxu0 0.0
  %2823 = vmatprep.subr.mxu0 0.0
  %2824 = vmatpush1.msra.mxu0 0.0
  %2825 = vmatprep.subr.mxu0 0.0
  %2826 = vmatpush1.msra.mxu0 0.0
  %2827 = vmatprep.subr.mxu0 0.0
  %2828 = vmatpush1.msra.mxu0 0.0
  %2829 = vmatprep.subr.mxu0 0.0
  %2830 = vmatpush1.msra.mxu0 0.0
  %2831 = vmatprep.subr.mxu0 0.0
  %2832 = vmatpush1.msra.mxu0 0.0
  %2833 = vmatprep.subr.mxu0 0.0
  %2834 = vmatpush1.msra.mxu0 0.0
  %2835 = vmatprep.subr.mxu0 0.0
  %2836 = vmatpush1.msra.mxu0 0.0
  %2837 = vmatprep.subr.mxu0 0.0
  %2838 = vmatpush1.msra.mxu0 0.0
  %2839 = vmatprep.subr.mxu0 0.0
  %2840 = vmatpush1.msra.mxu0 0.0
  %2841 = vmatprep.mubr.f32.mxu0 0.0
  %2842 = vmatmul.mubr.f32.gmra.mrb[0].mxu0 %v2263
  %v2843 = vpop.f32.mrb[0].mxu0
  %v2844 = vadd.f32 0.0, %v2843
  %v2845 = vpop.f32.mrb[0].mxu0
  %2846 = vmatprep.mubr.f32.mxu0 0.0
  %2847 = vmatmul.mubr.f32.gmra.mrb[0].mxu0 %v2266
  %v2848 = vpop.f32.mrb[0].mxu0
  %v2849 = vadd.f32 0.0, %v2848
  %v2850 = vpop.f32.mrb[0].mxu0
  %2851 = vdwg.mxu0
  %v2852 = vadd.f32 %v134, %v2844
  %v2853 = vadd.f32 %v134, %v2849
  %2854 = vmatprep.subr.mxu0 0.0
  %2855 = vmatpush1.msra.mxu0 %v142
  %2856 = vmatprep.subr.mxu0 0.0
  %2857 = vmatpush1.msra.mxu0 %v143
  %2858 = vmatprep.subr.mxu0 0.0
  %2859 = vmatpush1.msra.mxu0 %v144
  %2860 = vmatprep.subr.mxu0 0.0
  %2861 = vmatpush1.msra.mxu0 %v145
  %2862 = vmatprep.subr.mxu0 0.0
  %2863 = vmatpush1.msra.mxu0 %v146
  %2864 = vmatprep.subr.mxu0 0.0
  %2865 = vmatpush1.msra.mxu0 %v147
  %2866 = vmatprep.subr.mxu0 0.0
  %2867 = vmatpush1.msra.mxu0 %v148
  %2868 = vmatprep.subr.mxu0 0.0
  %2869 = vmatpush1.msra.mxu0 %v149
  %2870 = vmatprep.subr.mxu0 0.0
  %2871 = vmatpush1.msra.mxu0 %v150
  %2872 = vmatprep.subr.mxu0 0.0
  %2873 = vmatpush1.msra.mxu0 0.0
  %2874 = vmatprep.subr.mxu0 0.0
  %2875 = vmatpush1.msra.mxu0 0.0
  %2876 = vmatprep.subr.mxu0 0.0
  %2877 = vmatpush1.msra.mxu0 0.0
  %2878 = vmatprep.subr.mxu0 0.0
  %2879 = vmatpush1.msra.mxu0 0.0
  %2880 = vmatprep.subr.mxu0 0.0
  %2881 = vmatpush1.msra.mxu0 0.0
  %2882 = vmatprep.subr.mxu0 0.0
  %2883 = vmatpush1.msra.mxu0 0.0
  %2884 = vmatprep.subr.mxu0 0.0
  %2885 = vmatpush1.msra.mxu0 0.0
  %2886 = vmatprep.subr.mxu0 0.0
  %2887 = vmatpush1.msra.mxu0 0.0
  %2888 = vmatprep.subr.mxu0 0.0
  %2889 = vmatpush1.msra.mxu0 0.0
  %2890 = vmatprep.subr.mxu0 0.0
  %2891 = vmatpush1.msra.mxu0 0.0
  %2892 = vmatprep.subr.mxu0 0.0
  %2893 = vmatpush1.msra.mxu0 0.0
  %2894 = vmatprep.subr.mxu0 0.0
  %2895 = vmatpush1.msra.mxu0 0.0
  %2896 = vmatprep.subr.mxu0 0.0
  %2897 = vmatpush1.msra.mxu0 0.0
  %2898 = vmatprep.subr.mxu0 0.0
  %2899 = vmatpush1.msra.mxu0 0.0
  %2900 = vmatprep.subr.mxu0 0.0
  %2901 = vmatpush1.msra.mxu0 0.0
  %2902 = vmatprep.subr.mxu0 0.0
  %2903 = vmatpush1.msra.mxu0 0.0
  %2904 = vmatprep.subr.mxu0 0.0
  %2905 = vmatpush1.msra.mxu0 0.0
  %2906 = vmatprep.subr.mxu0 0.0
  %2907 = vmatpush1.msra.mxu0 0.0
  %2908 = vmatprep.subr.mxu0 0.0
  %2909 = vmatpush1.msra.mxu0 0.0
  %2910 = vmatprep.subr.mxu0 0.0
  %2911 = vmatpush1.msra.mxu0 0.0
  %2912 = vmatprep.subr.mxu0 0.0
  %2913 = vmatpush1.msra.mxu0 0.0
  %2914 = vmatprep.subr.mxu0 0.0
  %2915 = vmatpush1.msra.mxu0 0.0
  %2916 = vmatprep.subr.mxu0 0.0
  %2917 = vmatpush1.msra.mxu0 0.0
  %2918 = vmatprep.mubr.f32.mxu0 0.0
  %2919 = vmatmul.mubr.f32.gmra.mrb[0].mxu0 %v2599
  %v2920 = vpop.f32.mrb[0].mxu0
  %v2921 = vadd.f32 0.0, %v2920
  %v2922 = vpop.f32.mrb[0].mxu0
  %2923 = vmatprep.mubr.f32.mxu0 0.0
  %2924 = vmatmul.mubr.f32.gmra.mrb[0].mxu0 %v2602
  %v2925 = vpop.f32.mrb[0].mxu0
  %v2926 = vadd.f32 0.0, %v2925
  %v2927 = vpop.f32.mrb[0].mxu0
  %2928 = vdwg.mxu0
  %v2929 = vadd.f32 %v2852, %v2921
  %v2930 = vadd.f32 %v2853, %v2926
  %s2931 = scalar_lea.vmem %s0, 160
  %v2932 = vld [vmem:[%s2931] sm:$0xff]
  %v2933 = vld [vmem:[%s2931 + $0x8] sm:$0xff]
  %v2935 = vsel %vm48, %v2932, 0
  %v2938 = vsel %vm48, %v2933, 0
  %2940 = vmatprep.subr.mxu0 0.0
  %2941 = vmatpush1.msra.mxu0 %v238
  %2942 = vmatprep.subr.mxu0 0.0
  %2943 = vmatpush1.msra.mxu0 %v239
  %2944 = vmatprep.subr.mxu0 0.0
  %2945 = vmatpush1.msra.mxu0 %v240
  %2946 = vmatprep.subr.mxu0 0.0
  %2947 = vmatpush1.msra.mxu0 %v241
  %2948 = vmatprep.subr.mxu0 0.0
  %2949 = vmatpush1.msra.mxu0 %v242
  %2950 = vmatprep.subr.mxu0 0.0
  %2951 = vmatpush1.msra.mxu0 %v243
  %2952 = vmatprep.subr.mxu0 0.0
  %2953 = vmatpush1.msra.mxu0 %v244
  %2954 = vmatprep.subr.mxu0 0.0
  %2955 = vmatpush1.msra.mxu0 %v245
  %2956 = vmatprep.subr.mxu0 0.0
  %2957 = vmatpush1.msra.mxu0 %v246
  %2958 = vmatprep.subr.mxu0 0.0
  %2959 = vmatpush1.msra.mxu0 0.0
  %2960 = vmatprep.subr.mxu0 0.0
  %2961 = vmatpush1.msra.mxu0 0.0
  %2962 = vmatprep.subr.mxu0 0.0
  %2963 = vmatpush1.msra.mxu0 0.0
  %2964 = vmatprep.subr.mxu0 0.0
  %2965 = vmatpush1.msra.mxu0 0.0
  %2966 = vmatprep.subr.mxu0 0.0
  %2967 = vmatpush1.msra.mxu0 0.0
  %2968 = vmatprep.subr.mxu0 0.0
  %2969 = vmatpush1.msra.mxu0 0.0
  %2970 = vmatprep.subr.mxu0 0.0
  %2971 = vmatpush1.msra.mxu0 0.0
  %2972 = vmatprep.subr.mxu0 0.0
  %2973 = vmatpush1.msra.mxu0 0.0
  %2974 = vmatprep.subr.mxu0 0.0
  %2975 = vmatpush1.msra.mxu0 0.0
  %2976 = vmatprep.subr.mxu0 0.0
  %2977 = vmatpush1.msra.mxu0 0.0
  %2978 = vmatprep.subr.mxu0 0.0
  %2979 = vmatpush1.msra.mxu0 0.0
  %2980 = vmatprep.subr.mxu0 0.0
  %2981 = vmatpush1.msra.mxu0 0.0
  %2982 = vmatprep.subr.mxu0 0.0
  %2983 = vmatpush1.msra.mxu0 0.0
  %2984 = vmatprep.subr.mxu0 0.0
  %2985 = vmatpush1.msra.mxu0 0.0
  %2986 = vmatprep.subr.mxu0 0.0
  %2987 = vmatpush1.msra.mxu0 0.0
  %2988 = vmatprep.subr.mxu0 0.0
  %2989 = vmatpush1.msra.mxu0 0.0
  %2990 = vmatprep.subr.mxu0 0.0
  %2991 = vmatpush1.msra.mxu0 0.0
  %2992 = vmatprep.subr.mxu0 0.0
  %2993 = vmatpush1.msra.mxu0 0.0
  %2994 = vmatprep.subr.mxu0 0.0
  %2995 = vmatpush1.msra.mxu0 0.0
  %2996 = vmatprep.subr.mxu0 0.0
  %2997 = vmatpush1.msra.mxu0 0.0
  %2998 = vmatprep.subr.mxu0 0.0
  %2999 = vmatpush1.msra.mxu0 0.0
  %3000 = vmatprep.subr.mxu0 0.0
  %3001 = vmatpush1.msra.mxu0 0.0
  %3002 = vmatprep.subr.mxu0 0.0
  %3003 = vmatpush1.msra.mxu0 0.0
  %3004 = vmatprep.mubr.f32.mxu0 0.0
  %3005 = vmatmul.mubr.f32.gmra.mrb[0].mxu0 %v2935
  %v3006 = vpop.f32.mrb[0].mxu0
  %v3007 = vadd.f32 0.0, %v3006
  %v3008 = vpop.f32.mrb[0].mxu0
  %3009 = vmatprep.mubr.f32.mxu0 0.0
  %3010 = vmatmul.mubr.f32.gmra.mrb[0].mxu0 %v2938
  %v3011 = vpop.f32.mrb[0].mxu0
  %v3012 = vadd.f32 0.0, %v3011
  %v3013 = vpop.f32.mrb[0].mxu0
  %3014 = vdwg.mxu0
  %v3015 = vadd.f32 %v2929, %v3007
  %v3016 = vadd.f32 %v2930, %v3012
  %v3017 = vmax.f32 %v3015, 0.0
  %v3018 = vmax.f32 %v3016, 0.0
  %s3019 = scalar_lea.vmem %s3, 1024
  %v3020 = vld [vmem:[%s3019] sm:$0xff]
  %v3021 = vld [vmem:[%s3019 + $0x8] sm:$0xff]
  %v3022 = vld [vmem:[%s3019 + $0x10] sm:$0xff]
  %v3023 = vld [vmem:[%s3019 + $0x18] sm:$0xff]
  %v3024 = vld [vmem:[%s3019 + $0x20] sm:$0xff]
  %v3025 = vld [vmem:[%s3019 + $0x28] sm:$0xff]
  %v3026 = vld [vmem:[%s3019 + $0x30] sm:$0xff]
  %v3027 = vld [vmem:[%s3019 + $0x38] sm:$0xff]
  %v3028 = vld [vmem:[%s3019 + $0x40] sm:$0xff]
  %v3029 = vld [vmem:[%s3019 + $0x48] sm:$0xff]
  %v3030 = vld [vmem:[%s3019 + $0x50] sm:$0xff]
  %v3031 = vld [vmem:[%s3019 + $0x58] sm:$0xff]
  %v3032 = vld [vmem:[%s3019 + $0x60] sm:$0xff]
  %v3033 = vld [vmem:[%s3019 + $0x68] sm:$0xff]
  %v3034 = vld [vmem:[%s3019 + $0x70] sm:$0xff]
  %v3035 = vld [vmem:[%s3019 + $0x78] sm:$0xff]
  %3036 = vmatprep.subr.mxu0 0.0
  %3037 = vmatpush1.msra.mxu0 %v3020
  %3038 = vmatprep.subr.mxu0 0.0
  %3039 = vmatpush1.msra.mxu0 %v3021
  %3040 = vmatprep.subr.mxu0 0.0
  %3041 = vmatpush1.msra.mxu0 %v3022
  %3042 = vmatprep.subr.mxu0 0.0
  %3043 = vmatpush1.msra.mxu0 %v3023
  %3044 = vmatprep.subr.mxu0 0.0
  %3045 = vmatpush1.msra.mxu0 %v3024
  %3046 = vmatprep.subr.mxu0 0.0
  %3047 = vmatpush1.msra.mxu0 %v3025
  %3048 = vmatprep.subr.mxu0 0.0
  %3049 = vmatpush1.msra.mxu0 %v3026
  %3050 = vmatprep.subr.mxu0 0.0
  %3051 = vmatpush1.msra.mxu0 %v3027
  %3052 = vmatprep.subr.mxu0 0.0
  %3053 = vmatpush1.msra.mxu0 %v3028
  %3054 = vmatprep.subr.mxu0 0.0
  %3055 = vmatpush1.msra.mxu0 %v3029
  %3056 = vmatprep.subr.mxu0 0.0
  %3057 = vmatpush1.msra.mxu0 %v3030
  %3058 = vmatprep.subr.mxu0 0.0
  %3059 = vmatpush1.msra.mxu0 %v3031
  %3060 = vmatprep.subr.mxu0 0.0
  %3061 = vmatpush1.msra.mxu0 %v3032
  %3062 = vmatprep.subr.mxu0 0.0
  %3063 = vmatpush1.msra.mxu0 %v3033
  %3064 = vmatprep.subr.mxu0 0.0
  %3065 = vmatpush1.msra.mxu0 %v3034
  %3066 = vmatprep.subr.mxu0 0.0
  %3067 = vmatpush1.msra.mxu0 %v3035
  %3068 = vmatprep.subr.mxu0 0.0
  %3069 = vmatpush1.msra.mxu0 0.0
  %3070 = vmatprep.subr.mxu0 0.0
  %3071 = vmatpush1.msra.mxu0 0.0
  %3072 = vmatprep.subr.mxu0 0.0
  %3073 = vmatpush1.msra.mxu0 0.0
  %3074 = vmatprep.subr.mxu0 0.0
  %3075 = vmatpush1.msra.mxu0 0.0
  %3076 = vmatprep.subr.mxu0 0.0
  %3077 = vmatpush1.msra.mxu0 0.0
  %3078 = vmatprep.subr.mxu0 0.0
  %3079 = vmatpush1.msra.mxu0 0.0
  %3080 = vmatprep.subr.mxu0 0.0
  %3081 = vmatpush1.msra.mxu0 0.0
  %3082 = vmatprep.subr.mxu0 0.0
  %3083 = vmatpush1.msra.mxu0 0.0
  %3084 = vmatprep.subr.mxu0 0.0
  %3085 = vmatpush1.msra.mxu0 0.0
  %3086 = vmatprep.subr.mxu0 0.0
  %3087 = vmatpush1.msra.mxu0 0.0
  %3088 = vmatprep.subr.mxu0 0.0
  %3089 = vmatpush1.msra.mxu0 0.0
  %3090 = vmatprep.subr.mxu0 0.0
  %3091 = vmatpush1.msra.mxu0 0.0
  %3092 = vmatprep.subr.mxu0 0.0
  %3093 = vmatpush1.msra.mxu0 0.0
  %3094 = vmatprep.subr.mxu0 0.0
  %3095 = vmatpush1.msra.mxu0 0.0
  %3096 = vmatprep.subr.mxu0 0.0
  %3097 = vmatpush1.msra.mxu0 0.0
  %3098 = vmatprep.subr.mxu0 0.0
  %3099 = vmatpush1.msra.mxu0 0.0
  %3100 = vmatprep.mubr.f32.mxu0 0.0
  %3101 = vmatmul.mubr.f32.gmra.mrb[0].mxu0 %v3017
  %v3102 = vpop.f32.mrb[0].mxu0
  %v3103 = vadd.f32 0.0, %v3102
  %v3104 = vpop.f32.mrb[0].mxu0
  %3105 = vmatprep.mubr.f32.mxu0 0.0
  %3106 = vmatmul.mubr.f32.gmra.mrb[0].mxu0 %v3018
  %v3107 = vpop.f32.mrb[0].mxu0
  %v3108 = vadd.f32 0.0, %v3107
  %v3109 = vpop.f32.mrb[0].mxu0
  %3110 = vdwg.mxu0
  %v3111 = vadd.f32 %v2775, %v3103
  %v3112 = vadd.f32 %v2776, %v3108
  %3113 = vmatprep.subr.mxu0 0.0
  %3114 = vmatpush1.msra.mxu0 %v39
  %3115 = vmatprep.subr.mxu0 0.0
  %3116 = vmatpush1.msra.mxu0 %v40
  %3117 = vmatprep.subr.mxu0 0.0
  %3118 = vmatpush1.msra.mxu0 %v41
  %3119 = vmatprep.subr.mxu0 0.0
  %3120 = vmatpush1.msra.mxu0 %v42
  %3121 = vmatprep.subr.mxu0 0.0
  %3122 = vmatpush1.msra.mxu0 %v43
  %3123 = vmatprep.subr.mxu0 0.0
  %3124 = vmatpush1.msra.mxu0 %v44
  %3125 = vmatprep.subr.mxu0 0.0
  %3126 = vmatpush1.msra.mxu0 %v45
  %3127 = vmatprep.subr.mxu0 0.0
  %3128 = vmatpush1.msra.mxu0 %v46
  %3129 = vmatprep.subr.mxu0 0.0
  %3130 = vmatpush1.msra.mxu0 %v47
  %3131 = vmatprep.subr.mxu0 0.0
  %3132 = vmatpush1.msra.mxu0 0.0
  %3133 = vmatprep.subr.mxu0 0.0
  %3134 = vmatpush1.msra.mxu0 0.0
  %3135 = vmatprep.subr.mxu0 0.0
  %3136 = vmatpush1.msra.mxu0 0.0
  %3137 = vmatprep.subr.mxu0 0.0
  %3138 = vmatpush1.msra.mxu0 0.0
  %3139 = vmatprep.subr.mxu0 0.0
  %3140 = vmatpush1.msra.mxu0 0.0
  %3141 = vmatprep.subr.mxu0 0.0
  %3142 = vmatpush1.msra.mxu0 0.0
  %3143 = vmatprep.subr.mxu0 0.0
  %3144 = vmatpush1.msra.mxu0 0.0
  %3145 = vmatprep.subr.mxu0 0.0
  %3146 = vmatpush1.msra.mxu0 0.0
  %3147 = vmatprep.subr.mxu0 0.0
  %3148 = vmatpush1.msra.mxu0 0.0
  %3149 = vmatprep.subr.mxu0 0.0
  %3150 = vmatpush1.msra.mxu0 0.0
  %3151 = vmatprep.subr.mxu0 0.0
  %3152 = vmatpush1.msra.mxu0 0.0
  %3153 = vmatprep.subr.mxu0 0.0
  %3154 = vmatpush1.msra.mxu0 0.0
  %3155 = vmatprep.subr.mxu0 0.0
  %3156 = vmatpush1.msra.mxu0 0.0
  %3157 = vmatprep.subr.mxu0 0.0
  %3158 = vmatpush1.msra.mxu0 0.0
  %3159 = vmatprep.subr.mxu0 0.0
  %3160 = vmatpush1.msra.mxu0 0.0
  %3161 = vmatprep.subr.mxu0 0.0
  %3162 = vmatpush1.msra.mxu0 0.0
  %3163 = vmatprep.subr.mxu0 0.0
  %3164 = vmatpush1.msra.mxu0 0.0
  %3165 = vmatprep.subr.mxu0 0.0
  %3166 = vmatpush1.msra.mxu0 0.0
  %3167 = vmatprep.subr.mxu0 0.0
  %3168 = vmatpush1.msra.mxu0 0.0
  %3169 = vmatprep.subr.mxu0 0.0
  %3170 = vmatpush1.msra.mxu0 0.0
  %3171 = vmatprep.subr.mxu0 0.0
  %3172 = vmatpush1.msra.mxu0 0.0
  %3173 = vmatprep.subr.mxu0 0.0
  %3174 = vmatpush1.msra.mxu0 0.0
  %3175 = vmatprep.subr.mxu0 0.0
  %3176 = vmatpush1.msra.mxu0 0.0
  %3177 = vmatprep.mubr.f32.mxu0 0.0
  %3178 = vmatmul.mubr.f32.gmra.mrb[0].mxu0 %v2599
  %v3179 = vpop.f32.mrb[0].mxu0
  %v3180 = vadd.f32 0.0, %v3179
  %v3181 = vpop.f32.mrb[0].mxu0
  %3182 = vmatprep.mubr.f32.mxu0 0.0
  %3183 = vmatmul.mubr.f32.gmra.mrb[0].mxu0 %v2602
  %v3184 = vpop.f32.mrb[0].mxu0
  %v3185 = vadd.f32 0.0, %v3184
  %v3186 = vpop.f32.mrb[0].mxu0
  %3187 = vdwg.mxu0
  %v3188 = vadd.f32 %v134, %v3180
  %v3189 = vadd.f32 %v134, %v3185
  %3190 = vmatprep.subr.mxu0 0.0
  %3191 = vmatpush1.msra.mxu0 %v142
  %3192 = vmatprep.subr.mxu0 0.0
  %3193 = vmatpush1.msra.mxu0 %v143
  %3194 = vmatprep.subr.mxu0 0.0
  %3195 = vmatpush1.msra.mxu0 %v144
  %3196 = vmatprep.subr.mxu0 0.0
  %3197 = vmatpush1.msra.mxu0 %v145
  %3198 = vmatprep.subr.mxu0 0.0
  %3199 = vmatpush1.msra.mxu0 %v146
  %3200 = vmatprep.subr.mxu0 0.0
  %3201 = vmatpush1.msra.mxu0 %v147
  %3202 = vmatprep.subr.mxu0 0.0
  %3203 = vmatpush1.msra.mxu0 %v148
  %3204 = vmatprep.subr.mxu0 0.0
  %3205 = vmatpush1.msra.mxu0 %v149
  %3206 = vmatprep.subr.mxu0 0.0
  %3207 = vmatpush1.msra.mxu0 %v150
  %3208 = vmatprep.subr.mxu0 0.0
  %3209 = vmatpush1.msra.mxu0 0.0
  %3210 = vmatprep.subr.mxu0 0.0
  %3211 = vmatpush1.msra.mxu0 0.0
  %3212 = vmatprep.subr.mxu0 0.0
  %3213 = vmatpush1.msra.mxu0 0.0
  %3214 = vmatprep.subr.mxu0 0.0
  %3215 = vmatpush1.msra.mxu0 0.0
  %3216 = vmatprep.subr.mxu0 0.0
  %3217 = vmatpush1.msra.mxu0 0.0
  %3218 = vmatprep.subr.mxu0 0.0
  %3219 = vmatpush1.msra.mxu0 0.0
  %3220 = vmatprep.subr.mxu0 0.0
  %3221 = vmatpush1.msra.mxu0 0.0
  %3222 = vmatprep.subr.mxu0 0.0
  %3223 = vmatpush1.msra.mxu0 0.0
  %3224 = vmatprep.subr.mxu0 0.0
  %3225 = vmatpush1.msra.mxu0 0.0
  %3226 = vmatprep.subr.mxu0 0.0
  %3227 = vmatpush1.msra.mxu0 0.0
  %3228 = vmatprep.subr.mxu0 0.0
  %3229 = vmatpush1.msra.mxu0 0.0
  %3230 = vmatprep.subr.mxu0 0.0
  %3231 = vmatpush1.msra.mxu0 0.0
  %3232 = vmatprep.subr.mxu0 0.0
  %3233 = vmatpush1.msra.mxu0 0.0
  %3234 = vmatprep.subr.mxu0 0.0
  %3235 = vmatpush1.msra.mxu0 0.0
  %3236 = vmatprep.subr.mxu0 0.0
  %3237 = vmatpush1.msra.mxu0 0.0
  %3238 = vmatprep.subr.mxu0 0.0
  %3239 = vmatpush1.msra.mxu0 0.0
  %3240 = vmatprep.subr.mxu0 0.0
  %3241 = vmatpush1.msra.mxu0 0.0
  %3242 = vmatprep.subr.mxu0 0.0
  %3243 = vmatpush1.msra.mxu0 0.0
  %3244 = vmatprep.subr.mxu0 0.0
  %3245 = vmatpush1.msra.mxu0 0.0
  %3246 = vmatprep.subr.mxu0 0.0
  %3247 = vmatpush1.msra.mxu0 0.0
  %3248 = vmatprep.subr.mxu0 0.0
  %3249 = vmatpush1.msra.mxu0 0.0
  %3250 = vmatprep.subr.mxu0 0.0
  %3251 = vmatpush1.msra.mxu0 0.0
  %3252 = vmatprep.subr.mxu0 0.0
  %3253 = vmatpush1.msra.mxu0 0.0
  %3254 = vmatprep.mubr.f32.mxu0 0.0
  %3255 = vmatmul.mubr.f32.gmra.mrb[0].mxu0 %v2935
  %v3256 = vpop.f32.mrb[0].mxu0
  %v3257 = vadd.f32 0.0, %v3256
  %v3258 = vpop.f32.mrb[0].mxu0
  %3259 = vmatprep.mubr.f32.mxu0 0.0
  %3260 = vmatmul.mubr.f32.gmra.mrb[0].mxu0 %v2938
  %v3261 = vpop.f32.mrb[0].mxu0
  %v3262 = vadd.f32 0.0, %v3261
  %v3263 = vpop.f32.mrb[0].mxu0
  %3264 = vdwg.mxu0
  %v3265 = vadd.f32 %v3188, %v3257
  %v3266 = vadd.f32 %v3189, %v3262
  %s3267 = scalar_lea.vmem %s0, 176
  %v3268 = vld [vmem:[%s3267] sm:$0xff]
  %v3269 = vld [vmem:[%s3267 + $0x8] sm:$0xff]
  %v3271 = vsel %vm48, %v3268, 0
  %v3274 = vsel %vm48, %v3269, 0
  %3276 = vmatprep.subr.mxu0 0.0
  %3277 = vmatpush1.msra.mxu0 %v238
  %3278 = vmatprep.subr.mxu0 0.0
  %3279 = vmatpush1.msra.mxu0 %v239
  %3280 = vmatprep.subr.mxu0 0.0
  %3281 = vmatpush1.msra.mxu0 %v240
  %3282 = vmatprep.subr.mxu0 0.0
  %3283 = vmatpush1.msra.mxu0 %v241
  %3284 = vmatprep.subr.mxu0 0.0
  %3285 = vmatpush1.msra.mxu0 %v242
  %3286 = vmatprep.subr.mxu0 0.0
  %3287 = vmatpush1.msra.mxu0 %v243
  %3288 = vmatprep.subr.mxu0 0.0
  %3289 = vmatpush1.msra.mxu0 %v244
  %3290 = vmatprep.subr.mxu0 0.0
  %3291 = vmatpush1.msra.mxu0 %v245
  %3292 = vmatprep.subr.mxu0 0.0
  %3293 = vmatpush1.msra.mxu0 %v246
  %3294 = vmatprep.subr.mxu0 0.0
  %3295 = vmatpush1.msra.mxu0 0.0
  %3296 = vmatprep.subr.mxu0 0.0
  %3297 = vmatpush1.msra.mxu0 0.0
  %3298 = vmatprep.subr.mxu0 0.0
  %3299 = vmatpush1.msra.mxu0 0.0
  %3300 = vmatprep.subr.mxu0 0.0
  %3301 = vmatpush1.msra.mxu0 0.0
  %3302 = vmatprep.subr.mxu0 0.0
  %3303 = vmatpush1.msra.mxu0 0.0
  %3304 = vmatprep.subr.mxu0 0.0
  %3305 = vmatpush1.msra.mxu0 0.0
  %3306 = vmatprep.subr.mxu0 0.0
  %3307 = vmatpush1.msra.mxu0 0.0
  %3308 = vmatprep.subr.mxu0 0.0
  %3309 = vmatpush1.msra.mxu0 0.0
  %3310 = vmatprep.subr.mxu0 0.0
  %3311 = vmatpush1.msra.mxu0 0.0
  %3312 = vmatprep.subr.mxu0 0.0
  %3313 = vmatpush1.msra.mxu0 0.0
  %3314 = vmatprep.subr.mxu0 0.0
  %3315 = vmatpush1.msra.mxu0 0.0
  %3316 = vmatprep.subr.mxu0 0.0
  %3317 = vmatpush1.msra.mxu0 0.0
  %3318 = vmatprep.subr.mxu0 0.0
  %3319 = vmatpush1.msra.mxu0 0.0
  %3320 = vmatprep.subr.mxu0 0.0
  %3321 = vmatpush1.msra.mxu0 0.0
  %3322 = vmatprep.subr.mxu0 0.0
  %3323 = vmatpush1.msra.mxu0 0.0
  %3324 = vmatprep.subr.mxu0 0.0
  %3325 = vmatpush1.msra.mxu0 0.0
  %3326 = vmatprep.subr.mxu0 0.0
  %3327 = vmatpush1.msra.mxu0 0.0
  %3328 = vmatprep.subr.mxu0 0.0
  %3329 = vmatpush1.msra.mxu0 0.0
  %3330 = vmatprep.subr.mxu0 0.0
  %3331 = vmatpush1.msra.mxu0 0.0
  %3332 = vmatprep.subr.mxu0 0.0
  %3333 = vmatpush1.msra.mxu0 0.0
  %3334 = vmatprep.subr.mxu0 0.0
  %3335 = vmatpush1.msra.mxu0 0.0
  %3336 = vmatprep.subr.mxu0 0.0
  %3337 = vmatpush1.msra.mxu0 0.0
  %3338 = vmatprep.subr.mxu0 0.0
  %3339 = vmatpush1.msra.mxu0 0.0
  %3340 = vmatprep.mubr.f32.mxu0 0.0
  %3341 = vmatmul.mubr.f32.gmra.mrb[0].mxu0 %v3271
  %v3342 = vpop.f32.mrb[0].mxu0
  %v3343 = vadd.f32 0.0, %v3342
  %v3344 = vpop.f32.mrb[0].mxu0
  %3345 = vmatprep.mubr.f32.mxu0 0.0
  %3346 = vmatmul.mubr.f32.gmra.mrb[0].mxu0 %v3274
  %v3347 = vpop.f32.mrb[0].mxu0
  %v3348 = vadd.f32 0.0, %v3347
  %v3349 = vpop.f32.mrb[0].mxu0
  %3350 = vdwg.mxu0
  %v3351 = vadd.f32 %v3265, %v3343
  %v3352 = vadd.f32 %v3266, %v3348
  %v3353 = vmax.f32 %v3351, 0.0
  %v3354 = vmax.f32 %v3352, 0.0
  %s3355 = scalar_lea.vmem %s3, 1152
  %v3356 = vld [vmem:[%s3355] sm:$0xff]
  %v3357 = vld [vmem:[%s3355 + $0x8] sm:$0xff]
  %v3358 = vld [vmem:[%s3355 + $0x10] sm:$0xff]
  %v3359 = vld [vmem:[%s3355 + $0x18] sm:$0xff]
  %v3360 = vld [vmem:[%s3355 + $0x20] sm:$0xff]
  %v3361 = vld [vmem:[%s3355 + $0x28] sm:$0xff]
  %v3362 = vld [vmem:[%s3355 + $0x30] sm:$0xff]
  %v3363 = vld [vmem:[%s3355 + $0x38] sm:$0xff]
  %v3364 = vld [vmem:[%s3355 + $0x40] sm:$0xff]
  %v3365 = vld [vmem:[%s3355 + $0x48] sm:$0xff]
  %v3366 = vld [vmem:[%s3355 + $0x50] sm:$0xff]
  %v3367 = vld [vmem:[%s3355 + $0x58] sm:$0xff]
  %v3368 = vld [vmem:[%s3355 + $0x60] sm:$0xff]
  %v3369 = vld [vmem:[%s3355 + $0x68] sm:$0xff]
  %v3370 = vld [vmem:[%s3355 + $0x70] sm:$0xff]
  %v3371 = vld [vmem:[%s3355 + $0x78] sm:$0xff]
  %3372 = vmatprep.subr.mxu0 0.0
  %3373 = vmatpush1.msra.mxu0 %v3356
  %3374 = vmatprep.subr.mxu0 0.0
  %3375 = vmatpush1.msra.mxu0 %v3357
  %3376 = vmatprep.subr.mxu0 0.0
  %3377 = vmatpush1.msra.mxu0 %v3358
  %3378 = vmatprep.subr.mxu0 0.0
  %3379 = vmatpush1.msra.mxu0 %v3359
  %3380 = vmatprep.subr.mxu0 0.0
  %3381 = vmatpush1.msra.mxu0 %v3360
  %3382 = vmatprep.subr.mxu0 0.0
  %3383 = vmatpush1.msra.mxu0 %v3361
  %3384 = vmatprep.subr.mxu0 0.0
  %3385 = vmatpush1.msra.mxu0 %v3362
  %3386 = vmatprep.subr.mxu0 0.0
  %3387 = vmatpush1.msra.mxu0 %v3363
  %3388 = vmatprep.subr.mxu0 0.0
  %3389 = vmatpush1.msra.mxu0 %v3364
  %3390 = vmatprep.subr.mxu0 0.0
  %3391 = vmatpush1.msra.mxu0 %v3365
  %3392 = vmatprep.subr.mxu0 0.0
  %3393 = vmatpush1.msra.mxu0 %v3366
  %3394 = vmatprep.subr.mxu0 0.0
  %3395 = vmatpush1.msra.mxu0 %v3367
  %3396 = vmatprep.subr.mxu0 0.0
  %3397 = vmatpush1.msra.mxu0 %v3368
  %3398 = vmatprep.subr.mxu0 0.0
  %3399 = vmatpush1.msra.mxu0 %v3369
  %3400 = vmatprep.subr.mxu0 0.0
  %3401 = vmatpush1.msra.mxu0 %v3370
  %3402 = vmatprep.subr.mxu0 0.0
  %3403 = vmatpush1.msra.mxu0 %v3371
  %3404 = vmatprep.subr.mxu0 0.0
  %3405 = vmatpush1.msra.mxu0 0.0
  %3406 = vmatprep.subr.mxu0 0.0
  %3407 = vmatpush1.msra.mxu0 0.0
  %3408 = vmatprep.subr.mxu0 0.0
  %3409 = vmatpush1.msra.mxu0 0.0
  %3410 = vmatprep.subr.mxu0 0.0
  %3411 = vmatpush1.msra.mxu0 0.0
  %3412 = vmatprep.subr.mxu0 0.0
  %3413 = vmatpush1.msra.mxu0 0.0
  %3414 = vmatprep.subr.mxu0 0.0
  %3415 = vmatpush1.msra.mxu0 0.0
  %3416 = vmatprep.subr.mxu0 0.0
  %3417 = vmatpush1.msra.mxu0 0.0
  %3418 = vmatprep.subr.mxu0 0.0
  %3419 = vmatpush1.msra.mxu0 0.0
  %3420 = vmatprep.subr.mxu0 0.0
  %3421 = vmatpush1.msra.mxu0 0.0
  %3422 = vmatprep.subr.mxu0 0.0
  %3423 = vmatpush1.msra.mxu0 0.0
  %3424 = vmatprep.subr.mxu0 0.0
  %3425 = vmatpush1.msra.mxu0 0.0
  %3426 = vmatprep.subr.mxu0 0.0
  %3427 = vmatpush1.msra.mxu0 0.0
  %3428 = vmatprep.subr.mxu0 0.0
  %3429 = vmatpush1.msra.mxu0 0.0
  %3430 = vmatprep.subr.mxu0 0.0
  %3431 = vmatpush1.msra.mxu0 0.0
  %3432 = vmatprep.subr.mxu0 0.0
  %3433 = vmatpush1.msra.mxu0 0.0
  %3434 = vmatprep.subr.mxu0 0.0
  %3435 = vmatpush1.msra.mxu0 0.0
  %3436 = vmatprep.mubr.f32.mxu0 0.0
  %3437 = vmatmul.mubr.f32.gmra.mrb[0].mxu0 %v3353
  %v3438 = vpop.f32.mrb[0].mxu0
  %v3439 = vadd.f32 0.0, %v3438
  %v3440 = vpop.f32.mrb[0].mxu0
  %3441 = vmatprep.mubr.f32.mxu0 0.0
  %3442 = vmatmul.mubr.f32.gmra.mrb[0].mxu0 %v3354
  %v3443 = vpop.f32.mrb[0].mxu0
  %v3444 = vadd.f32 0.0, %v3443
  %v3445 = vpop.f32.mrb[0].mxu0
  %3446 = vdwg.mxu0
  %v3447 = vadd.f32 %v3111, %v3439
  %v3448 = vadd.f32 %v3112, %v3444
  %3449 = vmatprep.subr.mxu0 0.0
  %3450 = vmatpush1.msra.mxu0 %v39
  %3451 = vmatprep.subr.mxu0 0.0
  %3452 = vmatpush1.msra.mxu0 %v40
  %3453 = vmatprep.subr.mxu0 0.0
  %3454 = vmatpush1.msra.mxu0 %v41
  %3455 = vmatprep.subr.mxu0 0.0
  %3456 = vmatpush1.msra.mxu0 %v42
  %3457 = vmatprep.subr.mxu0 0.0
  %3458 = vmatpush1.msra.mxu0 %v43
  %3459 = vmatprep.subr.mxu0 0.0
  %3460 = vmatpush1.msra.mxu0 %v44
  %3461 = vmatprep.subr.mxu0 0.0
  %3462 = vmatpush1.msra.mxu0 %v45
  %3463 = vmatprep.subr.mxu0 0.0
  %3464 = vmatpush1.msra.mxu0 %v46
  %3465 = vmatprep.subr.mxu0 0.0
  %3466 = vmatpush1.msra.mxu0 %v47
  %3467 = vmatprep.subr.mxu0 0.0
  %3468 = vmatpush1.msra.mxu0 0.0
  %3469 = vmatprep.subr.mxu0 0.0
  %3470 = vmatpush1.msra.mxu0 0.0
  %3471 = vmatprep.subr.mxu0 0.0
  %3472 = vmatpush1.msra.mxu0 0.0
  %3473 = vmatprep.subr.mxu0 0.0
  %3474 = vmatpush1.msra.mxu0 0.0
  %3475 = vmatprep.subr.mxu0 0.0
  %3476 = vmatpush1.msra.mxu0 0.0
  %3477 = vmatprep.subr.mxu0 0.0
  %3478 = vmatpush1.msra.mxu0 0.0
  %3479 = vmatprep.subr.mxu0 0.0
  %3480 = vmatpush1.msra.mxu0 0.0
  %3481 = vmatprep.subr.mxu0 0.0
  %3482 = vmatpush1.msra.mxu0 0.0
  %3483 = vmatprep.subr.mxu0 0.0
  %3484 = vmatpush1.msra.mxu0 0.0
  %3485 = vmatprep.subr.mxu0 0.0
  %3486 = vmatpush1.msra.mxu0 0.0
  %3487 = vmatprep.subr.mxu0 0.0
  %3488 = vmatpush1.msra.mxu0 0.0
  %3489 = vmatprep.subr.mxu0 0.0
  %3490 = vmatpush1.msra.mxu0 0.0
  %3491 = vmatprep.subr.mxu0 0.0
  %3492 = vmatpush1.msra.mxu0 0.0
  %3493 = vmatprep.subr.mxu0 0.0
  %3494 = vmatpush1.msra.mxu0 0.0
  %3495 = vmatprep.subr.mxu0 0.0
  %3496 = vmatpush1.msra.mxu0 0.0
  %3497 = vmatprep.subr.mxu0 0.0
  %3498 = vmatpush1.msra.mxu0 0.0
  %3499 = vmatprep.subr.mxu0 0.0
  %3500 = vmatpush1.msra.mxu0 0.0
  %3501 = vmatprep.subr.mxu0 0.0
  %3502 = vmatpush1.msra.mxu0 0.0
  %3503 = vmatprep.subr.mxu0 0.0
  %3504 = vmatpush1.msra.mxu0 0.0
  %3505 = vmatprep.subr.mxu0 0.0
  %3506 = vmatpush1.msra.mxu0 0.0
  %3507 = vmatprep.subr.mxu0 0.0
  %3508 = vmatpush1.msra.mxu0 0.0
  %3509 = vmatprep.subr.mxu0 0.0
  %3510 = vmatpush1.msra.mxu0 0.0
  %3511 = vmatprep.subr.mxu0 0.0
  %3512 = vmatpush1.msra.mxu0 0.0
  %3513 = vmatprep.mubr.f32.mxu0 0.0
  %3514 = vmatmul.mubr.f32.gmra.mrb[0].mxu0 %v2935
  %v3515 = vpop.f32.mrb[0].mxu0
  %v3516 = vadd.f32 0.0, %v3515
  %v3517 = vpop.f32.mrb[0].mxu0
  %3518 = vmatprep.mubr.f32.mxu0 0.0
  %3519 = vmatmul.mubr.f32.gmra.mrb[0].mxu0 %v2938
  %v3520 = vpop.f32.mrb[0].mxu0
  %v3521 = vadd.f32 0.0, %v3520
  %v3522 = vpop.f32.mrb[0].mxu0
  %3523 = vdwg.mxu0
  %v3524 = vadd.f32 %v134, %v3516
  %v3525 = vadd.f32 %v134, %v3521
  %3526 = vmatprep.subr.mxu0 0.0
  %3527 = vmatpush1.msra.mxu0 %v142
  %3528 = vmatprep.subr.mxu0 0.0
  %3529 = vmatpush1.msra.mxu0 %v143
  %3530 = vmatprep.subr.mxu0 0.0
  %3531 = vmatpush1.msra.mxu0 %v144
  %3532 = vmatprep.subr.mxu0 0.0
  %3533 = vmatpush1.msra.mxu0 %v145
  %3534 = vmatprep.subr.mxu0 0.0
  %3535 = vmatpush1.msra.mxu0 %v146
  %3536 = vmatprep.subr.mxu0 0.0
  %3537 = vmatpush1.msra.mxu0 %v147
  %3538 = vmatprep.subr.mxu0 0.0
  %3539 = vmatpush1.msra.mxu0 %v148
  %3540 = vmatprep.subr.mxu0 0.0
  %3541 = vmatpush1.msra.mxu0 %v149
  %3542 = vmatprep.subr.mxu0 0.0
  %3543 = vmatpush1.msra.mxu0 %v150
  %3544 = vmatprep.subr.mxu0 0.0
  %3545 = vmatpush1.msra.mxu0 0.0
  %3546 = vmatprep.subr.mxu0 0.0
  %3547 = vmatpush1.msra.mxu0 0.0
  %3548 = vmatprep.subr.mxu0 0.0
  %3549 = vmatpush1.msra.mxu0 0.0
  %3550 = vmatprep.subr.mxu0 0.0
  %3551 = vmatpush1.msra.mxu0 0.0
  %3552 = vmatprep.subr.mxu0 0.0
  %3553 = vmatpush1.msra.mxu0 0.0
  %3554 = vmatprep.subr.mxu0 0.0
  %3555 = vmatpush1.msra.mxu0 0.0
  %3556 = vmatprep.subr.mxu0 0.0
  %3557 = vmatpush1.msra.mxu0 0.0
  %3558 = vmatprep.subr.mxu0 0.0
  %3559 = vmatpush1.msra.mxu0 0.0
  %3560 = vmatprep.subr.mxu0 0.0
  %3561 = vmatpush1.msra.mxu0 0.0
  %3562 = vmatprep.subr.mxu0 0.0
  %3563 = vmatpush1.msra.mxu0 0.0
  %3564 = vmatprep.subr.mxu0 0.0
  %3565 = vmatpush1.msra.mxu0 0.0
  %3566 = vmatprep.subr.mxu0 0.0
  %3567 = vmatpush1.msra.mxu0 0.0
  %3568 = vmatprep.subr.mxu0 0.0
  %3569 = vmatpush1.msra.mxu0 0.0
  %3570 = vmatprep.subr.mxu0 0.0
  %3571 = vmatpush1.msra.mxu0 0.0
  %3572 = vmatprep.subr.mxu0 0.0
  %3573 = vmatpush1.msra.mxu0 0.0
  %3574 = vmatprep.subr.mxu0 0.0
  %3575 = vmatpush1.msra.mxu0 0.0
  %3576 = vmatprep.subr.mxu0 0.0
  %3577 = vmatpush1.msra.mxu0 0.0
  %3578 = vmatprep.subr.mxu0 0.0
  %3579 = vmatpush1.msra.mxu0 0.0
  %3580 = vmatprep.subr.mxu0 0.0
  %3581 = vmatpush1.msra.mxu0 0.0
  %3582 = vmatprep.subr.mxu0 0.0
  %3583 = vmatpush1.msra.mxu0 0.0
  %3584 = vmatprep.subr.mxu0 0.0
  %3585 = vmatpush1.msra.mxu0 0.0
  %3586 = vmatprep.subr.mxu0 0.0
  %3587 = vmatpush1.msra.mxu0 0.0
  %3588 = vmatprep.subr.mxu0 0.0
  %3589 = vmatpush1.msra.mxu0 0.0
  %3590 = vmatprep.mubr.f32.mxu0 0.0
  %3591 = vmatmul.mubr.f32.gmra.mrb[0].mxu0 %v3271
  %v3592 = vpop.f32.mrb[0].mxu0
  %v3593 = vadd.f32 0.0, %v3592
  %v3594 = vpop.f32.mrb[0].mxu0
  %3595 = vmatprep.mubr.f32.mxu0 0.0
  %3596 = vmatmul.mubr.f32.gmra.mrb[0].mxu0 %v3274
  %v3597 = vpop.f32.mrb[0].mxu0
  %v3598 = vadd.f32 0.0, %v3597
  %v3599 = vpop.f32.mrb[0].mxu0
  %3600 = vdwg.mxu0
  %v3601 = vadd.f32 %v3524, %v3593
  %v3602 = vadd.f32 %v3525, %v3598
  %s3603 = scalar_lea.vmem %s0, 192
  %v3604 = vld [vmem:[%s3603] sm:$0xff]
  %v3605 = vld [vmem:[%s3603 + $0x8] sm:$0xff]
  %v3607 = vsel %vm48, %v3604, 0
  %v3610 = vsel %vm48, %v3605, 0
  %3612 = vmatprep.subr.mxu0 0.0
  %3613 = vmatpush1.msra.mxu0 %v238
  %3614 = vmatprep.subr.mxu0 0.0
  %3615 = vmatpush1.msra.mxu0 %v239
  %3616 = vmatprep.subr.mxu0 0.0
  %3617 = vmatpush1.msra.mxu0 %v240
  %3618 = vmatprep.subr.mxu0 0.0
  %3619 = vmatpush1.msra.mxu0 %v241
  %3620 = vmatprep.subr.mxu0 0.0
  %3621 = vmatpush1.msra.mxu0 %v242
  %3622 = vmatprep.subr.mxu0 0.0
  %3623 = vmatpush1.msra.mxu0 %v243
  %3624 = vmatprep.subr.mxu0 0.0
  %3625 = vmatpush1.msra.mxu0 %v244
  %3626 = vmatprep.subr.mxu0 0.0
  %3627 = vmatpush1.msra.mxu0 %v245
  %3628 = vmatprep.subr.mxu0 0.0
  %3629 = vmatpush1.msra.mxu0 %v246
  %3630 = vmatprep.subr.mxu0 0.0
  %3631 = vmatpush1.msra.mxu0 0.0
  %3632 = vmatprep.subr.mxu0 0.0
  %3633 = vmatpush1.msra.mxu0 0.0
  %3634 = vmatprep.subr.mxu0 0.0
  %3635 = vmatpush1.msra.mxu0 0.0
  %3636 = vmatprep.subr.mxu0 0.0
  %3637 = vmatpush1.msra.mxu0 0.0
  %3638 = vmatprep.subr.mxu0 0.0
  %3639 = vmatpush1.msra.mxu0 0.0
  %3640 = vmatprep.subr.mxu0 0.0
  %3641 = vmatpush1.msra.mxu0 0.0
  %3642 = vmatprep.subr.mxu0 0.0
  %3643 = vmatpush1.msra.mxu0 0.0
  %3644 = vmatprep.subr.mxu0 0.0
  %3645 = vmatpush1.msra.mxu0 0.0
  %3646 = vmatprep.subr.mxu0 0.0
  %3647 = vmatpush1.msra.mxu0 0.0
  %3648 = vmatprep.subr.mxu0 0.0
  %3649 = vmatpush1.msra.mxu0 0.0
  %3650 = vmatprep.subr.mxu0 0.0
  %3651 = vmatpush1.msra.mxu0 0.0
  %3652 = vmatprep.subr.mxu0 0.0
  %3653 = vmatpush1.msra.mxu0 0.0
  %3654 = vmatprep.subr.mxu0 0.0
  %3655 = vmatpush1.msra.mxu0 0.0
  %3656 = vmatprep.subr.mxu0 0.0
  %3657 = vmatpush1.msra.mxu0 0.0
  %3658 = vmatprep.subr.mxu0 0.0
  %3659 = vmatpush1.msra.mxu0 0.0
  %3660 = vmatprep.subr.mxu0 0.0
  %3661 = vmatpush1.msra.mxu0 0.0
  %3662 = vmatprep.subr.mxu0 0.0
  %3663 = vmatpush1.msra.mxu0 0.0
  %3664 = vmatprep.subr.mxu0 0.0
  %3665 = vmatpush1.msra.mxu0 0.0
  %3666 = vmatprep.subr.mxu0 0.0
  %3667 = vmatpush1.msra.mxu0 0.0
  %3668 = vmatprep.subr.mxu0 0.0
  %3669 = vmatpush1.msra.mxu0 0.0
  %3670 = vmatprep.subr.mxu0 0.0
  %3671 = vmatpush1.msra.mxu0 0.0
  %3672 = vmatprep.subr.mxu0 0.0
  %3673 = vmatpush1.msra.mxu0 0.0
  %3674 = vmatprep.subr.mxu0 0.0
  %3675 = vmatpush1.msra.mxu0 0.0
  %3676 = vmatprep.mubr.f32.mxu0 0.0
  %3677 = vmatmul.mubr.f32.gmra.mrb[0].mxu0 %v3607
  %v3678 = vpop.f32.mrb[0].mxu0
  %v3679 = vadd.f32 0.0, %v3678
  %v3680 = vpop.f32.mrb[0].mxu0
  %3681 = vmatprep.mubr.f32.mxu0 0.0
  %3682 = vmatmul.mubr.f32.gmra.mrb[0].mxu0 %v3610
  %v3683 = vpop.f32.mrb[0].mxu0
  %v3684 = vadd.f32 0.0, %v3683
  %v3685 = vpop.f32.mrb[0].mxu0
  %3686 = vdwg.mxu0
  %v3687 = vadd.f32 %v3601, %v3679
  %v3688 = vadd.f32 %v3602, %v3684
  %v3689 = vmax.f32 %v3687, 0.0
  %v3690 = vmax.f32 %v3688, 0.0
  %s3691 = scalar_lea.vmem %s3, 1280
  %v3692 = vld [vmem:[%s3691] sm:$0xff]
  %v3693 = vld [vmem:[%s3691 + $0x8] sm:$0xff]
  %v3694 = vld [vmem:[%s3691 + $0x10] sm:$0xff]
  %v3695 = vld [vmem:[%s3691 + $0x18] sm:$0xff]
  %v3696 = vld [vmem:[%s3691 + $0x20] sm:$0xff]
  %v3697 = vld [vmem:[%s3691 + $0x28] sm:$0xff]
  %v3698 = vld [vmem:[%s3691 + $0x30] sm:$0xff]
  %v3699 = vld [vmem:[%s3691 + $0x38] sm:$0xff]
  %v3700 = vld [vmem:[%s3691 + $0x40] sm:$0xff]
  %v3701 = vld [vmem:[%s3691 + $0x48] sm:$0xff]
  %v3702 = vld [vmem:[%s3691 + $0x50] sm:$0xff]
  %v3703 = vld [vmem:[%s3691 + $0x58] sm:$0xff]
  %v3704 = vld [vmem:[%s3691 + $0x60] sm:$0xff]
  %v3705 = vld [vmem:[%s3691 + $0x68] sm:$0xff]
  %v3706 = vld [vmem:[%s3691 + $0x70] sm:$0xff]
  %v3707 = vld [vmem:[%s3691 + $0x78] sm:$0xff]
  %3708 = vmatprep.subr.mxu0 0.0
  %3709 = vmatpush1.msra.mxu0 %v3692
  %3710 = vmatprep.subr.mxu0 0.0
  %3711 = vmatpush1.msra.mxu0 %v3693
  %3712 = vmatprep.subr.mxu0 0.0
  %3713 = vmatpush1.msra.mxu0 %v3694
  %3714 = vmatprep.subr.mxu0 0.0
  %3715 = vmatpush1.msra.mxu0 %v3695
  %3716 = vmatprep.subr.mxu0 0.0
  %3717 = vmatpush1.msra.mxu0 %v3696
  %3718 = vmatprep.subr.mxu0 0.0
  %3719 = vmatpush1.msra.mxu0 %v3697
  %3720 = vmatprep.subr.mxu0 0.0
  %3721 = vmatpush1.msra.mxu0 %v3698
  %3722 = vmatprep.subr.mxu0 0.0
  %3723 = vmatpush1.msra.mxu0 %v3699
  %3724 = vmatprep.subr.mxu0 0.0
  %3725 = vmatpush1.msra.mxu0 %v3700
  %3726 = vmatprep.subr.mxu0 0.0
  %3727 = vmatpush1.msra.mxu0 %v3701
  %3728 = vmatprep.subr.mxu0 0.0
  %3729 = vmatpush1.msra.mxu0 %v3702
  %3730 = vmatprep.subr.mxu0 0.0
  %3731 = vmatpush1.msra.mxu0 %v3703
  %3732 = vmatprep.subr.mxu0 0.0
  %3733 = vmatpush1.msra.mxu0 %v3704
  %3734 = vmatprep.subr.mxu0 0.0
  %3735 = vmatpush1.msra.mxu0 %v3705
  %3736 = vmatprep.subr.mxu0 0.0
  %3737 = vmatpush1.msra.mxu0 %v3706
  %3738 = vmatprep.subr.mxu0 0.0
  %3739 = vmatpush1.msra.mxu0 %v3707
  %3740 = vmatprep.subr.mxu0 0.0
  %3741 = vmatpush1.msra.mxu0 0.0
  %3742 = vmatprep.subr.mxu0 0.0
  %3743 = vmatpush1.msra.mxu0 0.0
  %3744 = vmatprep.subr.mxu0 0.0
  %3745 = vmatpush1.msra.mxu0 0.0
  %3746 = vmatprep.subr.mxu0 0.0
  %3747 = vmatpush1.msra.mxu0 0.0
  %3748 = vmatprep.subr.mxu0 0.0
  %3749 = vmatpush1.msra.mxu0 0.0
  %3750 = vmatprep.subr.mxu0 0.0
  %3751 = vmatpush1.msra.mxu0 0.0
  %3752 = vmatprep.subr.mxu0 0.0
  %3753 = vmatpush1.msra.mxu0 0.0
  %3754 = vmatprep.subr.mxu0 0.0
  %3755 = vmatpush1.msra.mxu0 0.0
  %3756 = vmatprep.subr.mxu0 0.0
  %3757 = vmatpush1.msra.mxu0 0.0
  %3758 = vmatprep.subr.mxu0 0.0
  %3759 = vmatpush1.msra.mxu0 0.0
  %3760 = vmatprep.subr.mxu0 0.0
  %3761 = vmatpush1.msra.mxu0 0.0
  %3762 = vmatprep.subr.mxu0 0.0
  %3763 = vmatpush1.msra.mxu0 0.0
  %3764 = vmatprep.subr.mxu0 0.0
  %3765 = vmatpush1.msra.mxu0 0.0
  %3766 = vmatprep.subr.mxu0 0.0
  %3767 = vmatpush1.msra.mxu0 0.0
  %3768 = vmatprep.subr.mxu0 0.0
  %3769 = vmatpush1.msra.mxu0 0.0
  %3770 = vmatprep.subr.mxu0 0.0
  %3771 = vmatpush1.msra.mxu0 0.0
  %3772 = vmatprep.mubr.f32.mxu0 0.0
  %3773 = vmatmul.mubr.f32.gmra.mrb[0].mxu0 %v3689
  %v3774 = vpop.f32.mrb[0].mxu0
  %v3775 = vadd.f32 0.0, %v3774
  %v3776 = vpop.f32.mrb[0].mxu0
  %3777 = vmatprep.mubr.f32.mxu0 0.0
  %3778 = vmatmul.mubr.f32.gmra.mrb[0].mxu0 %v3690
  %v3779 = vpop.f32.mrb[0].mxu0
  %v3780 = vadd.f32 0.0, %v3779
  %v3781 = vpop.f32.mrb[0].mxu0
  %3782 = vdwg.mxu0
  %v3783 = vadd.f32 %v3447, %v3775
  %v3784 = vadd.f32 %v3448, %v3780
  %3785 = vmatprep.subr.mxu0 0.0
  %3786 = vmatpush1.msra.mxu0 %v39
  %3787 = vmatprep.subr.mxu0 0.0
  %3788 = vmatpush1.msra.mxu0 %v40
  %3789 = vmatprep.subr.mxu0 0.0
  %3790 = vmatpush1.msra.mxu0 %v41
  %3791 = vmatprep.subr.mxu0 0.0
  %3792 = vmatpush1.msra.mxu0 %v42
  %3793 = vmatprep.subr.mxu0 0.0
  %3794 = vmatpush1.msra.mxu0 %v43
  %3795 = vmatprep.subr.mxu0 0.0
  %3796 = vmatpush1.msra.mxu0 %v44
  %3797 = vmatprep.subr.mxu0 0.0
  %3798 = vmatpush1.msra.mxu0 %v45
  %3799 = vmatprep.subr.mxu0 0.0
  %3800 = vmatpush1.msra.mxu0 %v46
  %3801 = vmatprep.subr.mxu0 0.0
  %3802 = vmatpush1.msra.mxu0 %v47
  %3803 = vmatprep.subr.mxu0 0.0
  %3804 = vmatpush1.msra.mxu0 0.0
  %3805 = vmatprep.subr.mxu0 0.0
  %3806 = vmatpush1.msra.mxu0 0.0
  %3807 = vmatprep.subr.mxu0 0.0
  %3808 = vmatpush1.msra.mxu0 0.0
  %3809 = vmatprep.subr.mxu0 0.0
  %3810 = vmatpush1.msra.mxu0 0.0
  %3811 = vmatprep.subr.mxu0 0.0
  %3812 = vmatpush1.msra.mxu0 0.0
  %3813 = vmatprep.subr.mxu0 0.0
  %3814 = vmatpush1.msra.mxu0 0.0
  %3815 = vmatprep.subr.mxu0 0.0
  %3816 = vmatpush1.msra.mxu0 0.0
  %3817 = vmatprep.subr.mxu0 0.0
  %3818 = vmatpush1.msra.mxu0 0.0
  %3819 = vmatprep.subr.mxu0 0.0
  %3820 = vmatpush1.msra.mxu0 0.0
  %3821 = vmatprep.subr.mxu0 0.0
  %3822 = vmatpush1.msra.mxu0 0.0
  %3823 = vmatprep.subr.mxu0 0.0
  %3824 = vmatpush1.msra.mxu0 0.0
  %3825 = vmatprep.subr.mxu0 0.0
  %3826 = vmatpush1.msra.mxu0 0.0
  %3827 = vmatprep.subr.mxu0 0.0
  %3828 = vmatpush1.msra.mxu0 0.0
  %3829 = vmatprep.subr.mxu0 0.0
  %3830 = vmatpush1.msra.mxu0 0.0
  %3831 = vmatprep.subr.mxu0 0.0
  %3832 = vmatpush1.msra.mxu0 0.0
  %3833 = vmatprep.subr.mxu0 0.0
  %3834 = vmatpush1.msra.mxu0 0.0
  %3835 = vmatprep.subr.mxu0 0.0
  %3836 = vmatpush1.msra.mxu0 0.0
  %3837 = vmatprep.subr.mxu0 0.0
  %3838 = vmatpush1.msra.mxu0 0.0
  %3839 = vmatprep.subr.mxu0 0.0
  %3840 = vmatpush1.msra.mxu0 0.0
  %3841 = vmatprep.subr.mxu0 0.0
  %3842 = vmatpush1.msra.mxu0 0.0
  %3843 = vmatprep.subr.mxu0 0.0
  %3844 = vmatpush1.msra.mxu0 0.0
  %3845 = vmatprep.subr.mxu0 0.0
  %3846 = vmatpush1.msra.mxu0 0.0
  %3847 = vmatprep.subr.mxu0 0.0
  %3848 = vmatpush1.msra.mxu0 0.0
  %3849 = vmatprep.mubr.f32.mxu0 0.0
  %3850 = vmatmul.mubr.f32.gmra.mrb[0].mxu0 %v3271
  %v3851 = vpop.f32.mrb[0].mxu0
  %v3852 = vadd.f32 0.0, %v3851
  %v3853 = vpop.f32.mrb[0].mxu0
  %3854 = vmatprep.mubr.f32.mxu0 0.0
  %3855 = vmatmul.mubr.f32.gmra.mrb[0].mxu0 %v3274
  %v3856 = vpop.f32.mrb[0].mxu0
  %v3857 = vadd.f32 0.0, %v3856
  %v3858 = vpop.f32.mrb[0].mxu0
  %3859 = vdwg.mxu0
  %v3860 = vadd.f32 %v134, %v3852
  %v3861 = vadd.f32 %v134, %v3857
  %3862 = vmatprep.subr.mxu0 0.0
  %3863 = vmatpush1.msra.mxu0 %v142
  %3864 = vmatprep.subr.mxu0 0.0
  %3865 = vmatpush1.msra.mxu0 %v143
  %3866 = vmatprep.subr.mxu0 0.0
  %3867 = vmatpush1.msra.mxu0 %v144
  %3868 = vmatprep.subr.mxu0 0.0
  %3869 = vmatpush1.msra.mxu0 %v145
  %3870 = vmatprep.subr.mxu0 0.0
  %3871 = vmatpush1.msra.mxu0 %v146
  %3872 = vmatprep.subr.mxu0 0.0
  %3873 = vmatpush1.msra.mxu0 %v147
  %3874 = vmatprep.subr.mxu0 0.0
  %3875 = vmatpush1.msra.mxu0 %v148
  %3876 = vmatprep.subr.mxu0 0.0
  %3877 = vmatpush1.msra.mxu0 %v149
  %3878 = vmatprep.subr.mxu0 0.0
  %3879 = vmatpush1.msra.mxu0 %v150
  %3880 = vmatprep.subr.mxu0 0.0
  %3881 = vmatpush1.msra.mxu0 0.0
  %3882 = vmatprep.subr.mxu0 0.0
  %3883 = vmatpush1.msra.mxu0 0.0
  %3884 = vmatprep.subr.mxu0 0.0
  %3885 = vmatpush1.msra.mxu0 0.0
  %3886 = vmatprep.subr.mxu0 0.0
  %3887 = vmatpush1.msra.mxu0 0.0
  %3888 = vmatprep.subr.mxu0 0.0
  %3889 = vmatpush1.msra.mxu0 0.0
  %3890 = vmatprep.subr.mxu0 0.0
  %3891 = vmatpush1.msra.mxu0 0.0
  %3892 = vmatprep.subr.mxu0 0.0
  %3893 = vmatpush1.msra.mxu0 0.0
  %3894 = vmatprep.subr.mxu0 0.0
  %3895 = vmatpush1.msra.mxu0 0.0
  %3896 = vmatprep.subr.mxu0 0.0
  %3897 = vmatpush1.msra.mxu0 0.0
  %3898 = vmatprep.subr.mxu0 0.0
  %3899 = vmatpush1.msra.mxu0 0.0
  %3900 = vmatprep.subr.mxu0 0.0
  %3901 = vmatpush1.msra.mxu0 0.0
  %3902 = vmatprep.subr.mxu0 0.0
  %3903 = vmatpush1.msra.mxu0 0.0
  %3904 = vmatprep.subr.mxu0 0.0
  %3905 = vmatpush1.msra.mxu0 0.0
  %3906 = vmatprep.subr.mxu0 0.0
  %3907 = vmatpush1.msra.mxu0 0.0
  %3908 = vmatprep.subr.mxu0 0.0
  %3909 = vmatpush1.msra.mxu0 0.0
  %3910 = vmatprep.subr.mxu0 0.0
  %3911 = vmatpush1.msra.mxu0 0.0
  %3912 = vmatprep.subr.mxu0 0.0
  %3913 = vmatpush1.msra.mxu0 0.0
  %3914 = vmatprep.subr.mxu0 0.0
  %3915 = vmatpush1.msra.mxu0 0.0
  %3916 = vmatprep.subr.mxu0 0.0
  %3917 = vmatpush1.msra.mxu0 0.0
  %3918 = vmatprep.subr.mxu0 0.0
  %3919 = vmatpush1.msra.mxu0 0.0
  %3920 = vmatprep.subr.mxu0 0.0
  %3921 = vmatpush1.msra.mxu0 0.0
  %3922 = vmatprep.subr.mxu0 0.0
  %3923 = vmatpush1.msra.mxu0 0.0
  %3924 = vmatprep.subr.mxu0 0.0
  %3925 = vmatpush1.msra.mxu0 0.0
  %3926 = vmatprep.mubr.f32.mxu0 0.0
  %3927 = vmatmul.mubr.f32.gmra.mrb[0].mxu0 %v3607
  %v3928 = vpop.f32.mrb[0].mxu0
  %v3929 = vadd.f32 0.0, %v3928
  %v3930 = vpop.f32.mrb[0].mxu0
  %3931 = vmatprep.mubr.f32.mxu0 0.0
  %3932 = vmatmul.mubr.f32.gmra.mrb[0].mxu0 %v3610
  %v3933 = vpop.f32.mrb[0].mxu0
  %v3934 = vadd.f32 0.0, %v3933
  %v3935 = vpop.f32.mrb[0].mxu0
  %3936 = vdwg.mxu0
  %v3937 = vadd.f32 %v3860, %v3929
  %v3938 = vadd.f32 %v3861, %v3934
  %s3939 = scalar_lea.vmem %s0, 208
  %v3940 = vld [vmem:[%s3939] sm:$0xff]
  %v3941 = vld [vmem:[%s3939 + $0x8] sm:$0xff]
  %v3943 = vsel %vm48, %v3940, 0
  %v3946 = vsel %vm48, %v3941, 0
  %3948 = vmatprep.subr.mxu0 0.0
  %3949 = vmatpush1.msra.mxu0 %v238
  %3950 = vmatprep.subr.mxu0 0.0
  %3951 = vmatpush1.msra.mxu0 %v239
  %3952 = vmatprep.subr.mxu0 0.0
  %3953 = vmatpush1.msra.mxu0 %v240
  %3954 = vmatprep.subr.mxu0 0.0
  %3955 = vmatpush1.msra.mxu0 %v241
  %3956 = vmatprep.subr.mxu0 0.0
  %3957 = vmatpush1.msra.mxu0 %v242
  %3958 = vmatprep.subr.mxu0 0.0
  %3959 = vmatpush1.msra.mxu0 %v243
  %3960 = vmatprep.subr.mxu0 0.0
  %3961 = vmatpush1.msra.mxu0 %v244
  %3962 = vmatprep.subr.mxu0 0.0
  %3963 = vmatpush1.msra.mxu0 %v245
  %3964 = vmatprep.subr.mxu0 0.0
  %3965 = vmatpush1.msra.mxu0 %v246
  %3966 = vmatprep.subr.mxu0 0.0
  %3967 = vmatpush1.msra.mxu0 0.0
  %3968 = vmatprep.subr.mxu0 0.0
  %3969 = vmatpush1.msra.mxu0 0.0
  %3970 = vmatprep.subr.mxu0 0.0
  %3971 = vmatpush1.msra.mxu0 0.0
  %3972 = vmatprep.subr.mxu0 0.0
  %3973 = vmatpush1.msra.mxu0 0.0
  %3974 = vmatprep.subr.mxu0 0.0
  %3975 = vmatpush1.msra.mxu0 0.0
  %3976 = vmatprep.subr.mxu0 0.0
  %3977 = vmatpush1.msra.mxu0 0.0
  %3978 = vmatprep.subr.mxu0 0.0
  %3979 = vmatpush1.msra.mxu0 0.0
  %3980 = vmatprep.subr.mxu0 0.0
  %3981 = vmatpush1.msra.mxu0 0.0
  %3982 = vmatprep.subr.mxu0 0.0
  %3983 = vmatpush1.msra.mxu0 0.0
  %3984 = vmatprep.subr.mxu0 0.0
  %3985 = vmatpush1.msra.mxu0 0.0
  %3986 = vmatprep.subr.mxu0 0.0
  %3987 = vmatpush1.msra.mxu0 0.0
  %3988 = vmatprep.subr.mxu0 0.0
  %3989 = vmatpush1.msra.mxu0 0.0
  %3990 = vmatprep.subr.mxu0 0.0
  %3991 = vmatpush1.msra.mxu0 0.0
  %3992 = vmatprep.subr.mxu0 0.0
  %3993 = vmatpush1.msra.mxu0 0.0
  %3994 = vmatprep.subr.mxu0 0.0
  %3995 = vmatpush1.msra.mxu0 0.0
  %3996 = vmatprep.subr.mxu0 0.0
  %3997 = vmatpush1.msra.mxu0 0.0
  %3998 = vmatprep.subr.mxu0 0.0
  %3999 = vmatpush1.msra.mxu0 0.0
  %4000 = vmatprep.subr.mxu0 0.0
  %4001 = vmatpush1.msra.mxu0 0.0
  %4002 = vmatprep.subr.mxu0 0.0
  %4003 = vmatpush1.msra.mxu0 0.0
  %4004 = vmatprep.subr.mxu0 0.0
  %4005 = vmatpush1.msra.mxu0 0.0
  %4006 = vmatprep.subr.mxu0 0.0
  %4007 = vmatpush1.msra.mxu0 0.0
  %4008 = vmatprep.subr.mxu0 0.0
  %4009 = vmatpush1.msra.mxu0 0.0
  %4010 = vmatprep.subr.mxu0 0.0
  %4011 = vmatpush1.msra.mxu0 0.0
  %4012 = vmatprep.mubr.f32.mxu0 0.0
  %4013 = vmatmul.mubr.f32.gmra.mrb[0].mxu0 %v3943
  %v4014 = vpop.f32.mrb[0].mxu0
  %v4015 = vadd.f32 0.0, %v4014
  %v4016 = vpop.f32.mrb[0].mxu0
  %4017 = vmatprep.mubr.f32.mxu0 0.0
  %4018 = vmatmul.mubr.f32.gmra.mrb[0].mxu0 %v3946
  %v4019 = vpop.f32.mrb[0].mxu0
  %v4020 = vadd.f32 0.0, %v4019
  %v4021 = vpop.f32.mrb[0].mxu0
  %4022 = vdwg.mxu0
  %v4023 = vadd.f32 %v3937, %v4015
  %v4024 = vadd.f32 %v3938, %v4020
  %v4025 = vmax.f32 %v4023, 0.0
  %v4026 = vmax.f32 %v4024, 0.0
  %s4027 = scalar_lea.vmem %s3, 1408
  %v4028 = vld [vmem:[%s4027] sm:$0xff]
  %v4029 = vld [vmem:[%s4027 + $0x8] sm:$0xff]
  %v4030 = vld [vmem:[%s4027 + $0x10] sm:$0xff]
  %v4031 = vld [vmem:[%s4027 + $0x18] sm:$0xff]
  %v4032 = vld [vmem:[%s4027 + $0x20] sm:$0xff]
  %v4033 = vld [vmem:[%s4027 + $0x28] sm:$0xff]
  %v4034 = vld [vmem:[%s4027 + $0x30] sm:$0xff]
  %v4035 = vld [vmem:[%s4027 + $0x38] sm:$0xff]
  %v4036 = vld [vmem:[%s4027 + $0x40] sm:$0xff]
  %v4037 = vld [vmem:[%s4027 + $0x48] sm:$0xff]
  %v4038 = vld [vmem:[%s4027 + $0x50] sm:$0xff]
  %v4039 = vld [vmem:[%s4027 + $0x58] sm:$0xff]
  %v4040 = vld [vmem:[%s4027 + $0x60] sm:$0xff]
  %v4041 = vld [vmem:[%s4027 + $0x68] sm:$0xff]
  %v4042 = vld [vmem:[%s4027 + $0x70] sm:$0xff]
  %v4043 = vld [vmem:[%s4027 + $0x78] sm:$0xff]
  %4044 = vmatprep.subr.mxu0 0.0
  %4045 = vmatpush1.msra.mxu0 %v4028
  %4046 = vmatprep.subr.mxu0 0.0
  %4047 = vmatpush1.msra.mxu0 %v4029
  %4048 = vmatprep.subr.mxu0 0.0
  %4049 = vmatpush1.msra.mxu0 %v4030
  %4050 = vmatprep.subr.mxu0 0.0
  %4051 = vmatpush1.msra.mxu0 %v4031
  %4052 = vmatprep.subr.mxu0 0.0
  %4053 = vmatpush1.msra.mxu0 %v4032
  %4054 = vmatprep.subr.mxu0 0.0
  %4055 = vmatpush1.msra.mxu0 %v4033
  %4056 = vmatprep.subr.mxu0 0.0
  %4057 = vmatpush1.msra.mxu0 %v4034
  %4058 = vmatprep.subr.mxu0 0.0
  %4059 = vmatpush1.msra.mxu0 %v4035
  %4060 = vmatprep.subr.mxu0 0.0
  %4061 = vmatpush1.msra.mxu0 %v4036
  %4062 = vmatprep.subr.mxu0 0.0
  %4063 = vmatpush1.msra.mxu0 %v4037
  %4064 = vmatprep.subr.mxu0 0.0
  %4065 = vmatpush1.msra.mxu0 %v4038
  %4066 = vmatprep.subr.mxu0 0.0
  %4067 = vmatpush1.msra.mxu0 %v4039
  %4068 = vmatprep.subr.mxu0 0.0
  %4069 = vmatpush1.msra.mxu0 %v4040
  %4070 = vmatprep.subr.mxu0 0.0
  %4071 = vmatpush1.msra.mxu0 %v4041
  %4072 = vmatprep.subr.mxu0 0.0
  %4073 = vmatpush1.msra.mxu0 %v4042
  %4074 = vmatprep.subr.mxu0 0.0
  %4075 = vmatpush1.msra.mxu0 %v4043
  %4076 = vmatprep.subr.mxu0 0.0
  %4077 = vmatpush1.msra.mxu0 0.0
  %4078 = vmatprep.subr.mxu0 0.0
  %4079 = vmatpush1.msra.mxu0 0.0
  %4080 = vmatprep.subr.mxu0 0.0
  %4081 = vmatpush1.msra.mxu0 0.0
  %4082 = vmatprep.subr.mxu0 0.0
  %4083 = vmatpush1.msra.mxu0 0.0
  %4084 = vmatprep.subr.mxu0 0.0
  %4085 = vmatpush1.msra.mxu0 0.0
  %4086 = vmatprep.subr.mxu0 0.0
  %4087 = vmatpush1.msra.mxu0 0.0
  %4088 = vmatprep.subr.mxu0 0.0
  %4089 = vmatpush1.msra.mxu0 0.0
  %4090 = vmatprep.subr.mxu0 0.0
  %4091 = vmatpush1.msra.mxu0 0.0
  %4092 = vmatprep.subr.mxu0 0.0
  %4093 = vmatpush1.msra.mxu0 0.0
  %4094 = vmatprep.subr.mxu0 0.0
  %4095 = vmatpush1.msra.mxu0 0.0
  %4096 = vmatprep.subr.mxu0 0.0
  %4097 = vmatpush1.msra.mxu0 0.0
  %4098 = vmatprep.subr.mxu0 0.0
  %4099 = vmatpush1.msra.mxu0 0.0
  %4100 = vmatprep.subr.mxu0 0.0
  %4101 = vmatpush1.msra.mxu0 0.0
  %4102 = vmatprep.subr.mxu0 0.0
  %4103 = vmatpush1.msra.mxu0 0.0
  %4104 = vmatprep.subr.mxu0 0.0
  %4105 = vmatpush1.msra.mxu0 0.0
  %4106 = vmatprep.subr.mxu0 0.0
  %4107 = vmatpush1.msra.mxu0 0.0
  %4108 = vmatprep.mubr.f32.mxu0 0.0
  %4109 = vmatmul.mubr.f32.gmra.mrb[0].mxu0 %v4025
  %v4110 = vpop.f32.mrb[0].mxu0
  %v4111 = vadd.f32 0.0, %v4110
  %v4112 = vpop.f32.mrb[0].mxu0
  %4113 = vmatprep.mubr.f32.mxu0 0.0
  %4114 = vmatmul.mubr.f32.gmra.mrb[0].mxu0 %v4026
  %v4115 = vpop.f32.mrb[0].mxu0
  %v4116 = vadd.f32 0.0, %v4115
  %v4117 = vpop.f32.mrb[0].mxu0
  %4118 = vdwg.mxu0
  %v4119 = vadd.f32 %v3783, %v4111
  %v4120 = vadd.f32 %v3784, %v4116
  %4121 = vmatprep.subr.mxu0 0.0
  %4122 = vmatpush1.msra.mxu0 %v39
  %4123 = vmatprep.subr.mxu0 0.0
  %4124 = vmatpush1.msra.mxu0 %v40
  %4125 = vmatprep.subr.mxu0 0.0
  %4126 = vmatpush1.msra.mxu0 %v41
  %4127 = vmatprep.subr.mxu0 0.0
  %4128 = vmatpush1.msra.mxu0 %v42
  %4129 = vmatprep.subr.mxu0 0.0
  %4130 = vmatpush1.msra.mxu0 %v43
  %4131 = vmatprep.subr.mxu0 0.0
  %4132 = vmatpush1.msra.mxu0 %v44
  %4133 = vmatprep.subr.mxu0 0.0
  %4134 = vmatpush1.msra.mxu0 %v45
  %4135 = vmatprep.subr.mxu0 0.0
  %4136 = vmatpush1.msra.mxu0 %v46
  %4137 = vmatprep.subr.mxu0 0.0
  %4138 = vmatpush1.msra.mxu0 %v47
  %4139 = vmatprep.subr.mxu0 0.0
  %4140 = vmatpush1.msra.mxu0 0.0
  %4141 = vmatprep.subr.mxu0 0.0
  %4142 = vmatpush1.msra.mxu0 0.0
  %4143 = vmatprep.subr.mxu0 0.0
  %4144 = vmatpush1.msra.mxu0 0.0
  %4145 = vmatprep.subr.mxu0 0.0
  %4146 = vmatpush1.msra.mxu0 0.0
  %4147 = vmatprep.subr.mxu0 0.0
  %4148 = vmatpush1.msra.mxu0 0.0
  %4149 = vmatprep.subr.mxu0 0.0
  %4150 = vmatpush1.msra.mxu0 0.0
  %4151 = vmatprep.subr.mxu0 0.0
  %4152 = vmatpush1.msra.mxu0 0.0
  %4153 = vmatprep.subr.mxu0 0.0
  %4154 = vmatpush1.msra.mxu0 0.0
  %4155 = vmatprep.subr.mxu0 0.0
  %4156 = vmatpush1.msra.mxu0 0.0
  %4157 = vmatprep.subr.mxu0 0.0
  %4158 = vmatpush1.msra.mxu0 0.0
  %4159 = vmatprep.subr.mxu0 0.0
  %4160 = vmatpush1.msra.mxu0 0.0
  %4161 = vmatprep.subr.mxu0 0.0
  %4162 = vmatpush1.msra.mxu0 0.0
  %4163 = vmatprep.subr.mxu0 0.0
  %4164 = vmatpush1.msra.mxu0 0.0
  %4165 = vmatprep.subr.mxu0 0.0
  %4166 = vmatpush1.msra.mxu0 0.0
  %4167 = vmatprep.subr.mxu0 0.0
  %4168 = vmatpush1.msra.mxu0 0.0
  %4169 = vmatprep.subr.mxu0 0.0
  %4170 = vmatpush1.msra.mxu0 0.0
  %4171 = vmatprep.subr.mxu0 0.0
  %4172 = vmatpush1.msra.mxu0 0.0
  %4173 = vmatprep.subr.mxu0 0.0
  %4174 = vmatpush1.msra.mxu0 0.0
  %4175 = vmatprep.subr.mxu0 0.0
  %4176 = vmatpush1.msra.mxu0 0.0
  %4177 = vmatprep.subr.mxu0 0.0
  %4178 = vmatpush1.msra.mxu0 0.0
  %4179 = vmatprep.subr.mxu0 0.0
  %4180 = vmatpush1.msra.mxu0 0.0
  %4181 = vmatprep.subr.mxu0 0.0
  %4182 = vmatpush1.msra.mxu0 0.0
  %4183 = vmatprep.subr.mxu0 0.0
  %4184 = vmatpush1.msra.mxu0 0.0
  %4185 = vmatprep.mubr.f32.mxu0 0.0
  %4186 = vmatmul.mubr.f32.gmra.mrb[0].mxu0 %v3607
  %v4187 = vpop.f32.mrb[0].mxu0
  %v4188 = vadd.f32 0.0, %v4187
  %v4189 = vpop.f32.mrb[0].mxu0
  %4190 = vmatprep.mubr.f32.mxu0 0.0
  %4191 = vmatmul.mubr.f32.gmra.mrb[0].mxu0 %v3610
  %v4192 = vpop.f32.mrb[0].mxu0
  %v4193 = vadd.f32 0.0, %v4192
  %v4194 = vpop.f32.mrb[0].mxu0
  %4195 = vdwg.mxu0
  %v4196 = vadd.f32 %v134, %v4188
  %v4197 = vadd.f32 %v134, %v4193
  %4198 = vmatprep.subr.mxu0 0.0
  %4199 = vmatpush1.msra.mxu0 %v142
  %4200 = vmatprep.subr.mxu0 0.0
  %4201 = vmatpush1.msra.mxu0 %v143
  %4202 = vmatprep.subr.mxu0 0.0
  %4203 = vmatpush1.msra.mxu0 %v144
  %4204 = vmatprep.subr.mxu0 0.0
  %4205 = vmatpush1.msra.mxu0 %v145
  %4206 = vmatprep.subr.mxu0 0.0
  %4207 = vmatpush1.msra.mxu0 %v146
  %4208 = vmatprep.subr.mxu0 0.0
  %4209 = vmatpush1.msra.mxu0 %v147
  %4210 = vmatprep.subr.mxu0 0.0
  %4211 = vmatpush1.msra.mxu0 %v148
  %4212 = vmatprep.subr.mxu0 0.0
  %4213 = vmatpush1.msra.mxu0 %v149
  %4214 = vmatprep.subr.mxu0 0.0
  %4215 = vmatpush1.msra.mxu0 %v150
  %4216 = vmatprep.subr.mxu0 0.0
  %4217 = vmatpush1.msra.mxu0 0.0
  %4218 = vmatprep.subr.mxu0 0.0
  %4219 = vmatpush1.msra.mxu0 0.0
  %4220 = vmatprep.subr.mxu0 0.0
  %4221 = vmatpush1.msra.mxu0 0.0
  %4222 = vmatprep.subr.mxu0 0.0
  %4223 = vmatpush1.msra.mxu0 0.0
  %4224 = vmatprep.subr.mxu0 0.0
  %4225 = vmatpush1.msra.mxu0 0.0
  %4226 = vmatprep.subr.mxu0 0.0
  %4227 = vmatpush1.msra.mxu0 0.0
  %4228 = vmatprep.subr.mxu0 0.0
  %4229 = vmatpush1.msra.mxu0 0.0
  %4230 = vmatprep.subr.mxu0 0.0
  %4231 = vmatpush1.msra.mxu0 0.0
  %4232 = vmatprep.subr.mxu0 0.0
  %4233 = vmatpush1.msra.mxu0 0.0
  %4234 = vmatprep.subr.mxu0 0.0
  %4235 = vmatpush1.msra.mxu0 0.0
  %4236 = vmatprep.subr.mxu0 0.0
  %4237 = vmatpush1.msra.mxu0 0.0
  %4238 = vmatprep.subr.mxu0 0.0
  %4239 = vmatpush1.msra.mxu0 0.0
  %4240 = vmatprep.subr.mxu0 0.0
  %4241 = vmatpush1.msra.mxu0 0.0
  %4242 = vmatprep.subr.mxu0 0.0
  %4243 = vmatpush1.msra.mxu0 0.0
  %4244 = vmatprep.subr.mxu0 0.0
  %4245 = vmatpush1.msra.mxu0 0.0
  %4246 = vmatprep.subr.mxu0 0.0
  %4247 = vmatpush1.msra.mxu0 0.0
  %4248 = vmatprep.subr.mxu0 0.0
  %4249 = vmatpush1.msra.mxu0 0.0
  %4250 = vmatprep.subr.mxu0 0.0
  %4251 = vmatpush1.msra.mxu0 0.0
  %4252 = vmatprep.subr.mxu0 0.0
  %4253 = vmatpush1.msra.mxu0 0.0
  %4254 = vmatprep.subr.mxu0 0.0
  %4255 = vmatpush1.msra.mxu0 0.0
  %4256 = vmatprep.subr.mxu0 0.0
  %4257 = vmatpush1.msra.mxu0 0.0
  %4258 = vmatprep.subr.mxu0 0.0
  %4259 = vmatpush1.msra.mxu0 0.0
  %4260 = vmatprep.subr.mxu0 0.0
  %4261 = vmatpush1.msra.mxu0 0.0
  %4262 = vmatprep.mubr.f32.mxu0 0.0
  %4263 = vmatmul.mubr.f32.gmra.mrb[0].mxu0 %v3943
  %v4264 = vpop.f32.mrb[0].mxu0
  %v4265 = vadd.f32 0.0, %v4264
  %v4266 = vpop.f32.mrb[0].mxu0
  %4267 = vmatprep.mubr.f32.mxu0 0.0
  %4268 = vmatmul.mubr.f32.gmra.mrb[0].mxu0 %v3946
  %v4269 = vpop.f32.mrb[0].mxu0
  %v4270 = vadd.f32 0.0, %v4269
  %v4271 = vpop.f32.mrb[0].mxu0
  %4272 = vdwg.mxu0
  %v4273 = vadd.f32 %v4196, %v4265
  %v4274 = vadd.f32 %v4197, %v4270
  %s4275 = scalar_lea.vmem %s0, 224
  %v4276 = vld [vmem:[%s4275] sm:$0xff]
  %v4277 = vld [vmem:[%s4275 + $0x8] sm:$0xff]
  %v4279 = vsel %vm48, %v4276, 0
  %v4282 = vsel %vm48, %v4277, 0
  %4284 = vmatprep.subr.mxu0 0.0
  %4285 = vmatpush1.msra.mxu0 %v238
  %4286 = vmatprep.subr.mxu0 0.0
  %4287 = vmatpush1.msra.mxu0 %v239
  %4288 = vmatprep.subr.mxu0 0.0
  %4289 = vmatpush1.msra.mxu0 %v240
  %4290 = vmatprep.subr.mxu0 0.0
  %4291 = vmatpush1.msra.mxu0 %v241
  %4292 = vmatprep.subr.mxu0 0.0
  %4293 = vmatpush1.msra.mxu0 %v242
  %4294 = vmatprep.subr.mxu0 0.0
  %4295 = vmatpush1.msra.mxu0 %v243
  %4296 = vmatprep.subr.mxu0 0.0
  %4297 = vmatpush1.msra.mxu0 %v244
  %4298 = vmatprep.subr.mxu0 0.0
  %4299 = vmatpush1.msra.mxu0 %v245
  %4300 = vmatprep.subr.mxu0 0.0
  %4301 = vmatpush1.msra.mxu0 %v246
  %4302 = vmatprep.subr.mxu0 0.0
  %4303 = vmatpush1.msra.mxu0 0.0
  %4304 = vmatprep.subr.mxu0 0.0
  %4305 = vmatpush1.msra.mxu0 0.0
  %4306 = vmatprep.subr.mxu0 0.0
  %4307 = vmatpush1.msra.mxu0 0.0
  %4308 = vmatprep.subr.mxu0 0.0
  %4309 = vmatpush1.msra.mxu0 0.0
  %4310 = vmatprep.subr.mxu0 0.0
  %4311 = vmatpush1.msra.mxu0 0.0
  %4312 = vmatprep.subr.mxu0 0.0
  %4313 = vmatpush1.msra.mxu0 0.0
  %4314 = vmatprep.subr.mxu0 0.0
  %4315 = vmatpush1.msra.mxu0 0.0
  %4316 = vmatprep.subr.mxu0 0.0
  %4317 = vmatpush1.msra.mxu0 0.0
  %4318 = vmatprep.subr.mxu0 0.0
  %4319 = vmatpush1.msra.mxu0 0.0
  %4320 = vmatprep.subr.mxu0 0.0
  %4321 = vmatpush1.msra.mxu0 0.0
  %4322 = vmatprep.subr.mxu0 0.0
  %4323 = vmatpush1.msra.mxu0 0.0
  %4324 = vmatprep.subr.mxu0 0.0
  %4325 = vmatpush1.msra.mxu0 0.0
  %4326 = vmatprep.subr.mxu0 0.0
  %4327 = vmatpush1.msra.mxu0 0.0
  %4328 = vmatprep.subr.mxu0 0.0
  %4329 = vmatpush1.msra.mxu0 0.0
  %4330 = vmatprep.subr.mxu0 0.0
  %4331 = vmatpush1.msra.mxu0 0.0
  %4332 = vmatprep.subr.mxu0 0.0
  %4333 = vmatpush1.msra.mxu0 0.0
  %4334 = vmatprep.subr.mxu0 0.0
  %4335 = vmatpush1.msra.mxu0 0.0
  %4336 = vmatprep.subr.mxu0 0.0
  %4337 = vmatpush1.msra.mxu0 0.0
  %4338 = vmatprep.subr.mxu0 0.0
  %4339 = vmatpush1.msra.mxu0 0.0
  %4340 = vmatprep.subr.mxu0 0.0
  %4341 = vmatpush1.msra.mxu0 0.0
  %4342 = vmatprep.subr.mxu0 0.0
  %4343 = vmatpush1.msra.mxu0 0.0
  %4344 = vmatprep.subr.mxu0 0.0
  %4345 = vmatpush1.msra.mxu0 0.0
  %4346 = vmatprep.subr.mxu0 0.0
  %4347 = vmatpush1.msra.mxu0 0.0
  %4348 = vmatprep.mubr.f32.mxu0 0.0
  %4349 = vmatmul.mubr.f32.gmra.mrb[0].mxu0 %v4279
  %v4350 = vpop.f32.mrb[0].mxu0
  %v4351 = vadd.f32 0.0, %v4350
  %v4352 = vpop.f32.mrb[0].mxu0
  %4353 = vmatprep.mubr.f32.mxu0 0.0
  %4354 = vmatmul.mubr.f32.gmra.mrb[0].mxu0 %v4282
  %v4355 = vpop.f32.mrb[0].mxu0
  %v4356 = vadd.f32 0.0, %v4355
  %v4357 = vpop.f32.mrb[0].mxu0
  %4358 = vdwg.mxu0
  %v4359 = vadd.f32 %v4273, %v4351
  %v4360 = vadd.f32 %v4274, %v4356
  %v4361 = vmax.f32 %v4359, 0.0
  %v4362 = vmax.f32 %v4360, 0.0
  %s4363 = scalar_lea.vmem %s3, 1536
  %v4364 = vld [vmem:[%s4363] sm:$0xff]
  %v4365 = vld [vmem:[%s4363 + $0x8] sm:$0xff]
  %v4366 = vld [vmem:[%s4363 + $0x10] sm:$0xff]
  %v4367 = vld [vmem:[%s4363 + $0x18] sm:$0xff]
  %v4368 = vld [vmem:[%s4363 + $0x20] sm:$0xff]
  %v4369 = vld [vmem:[%s4363 + $0x28] sm:$0xff]
  %v4370 = vld [vmem:[%s4363 + $0x30] sm:$0xff]
  %v4371 = vld [vmem:[%s4363 + $0x38] sm:$0xff]
  %v4372 = vld [vmem:[%s4363 + $0x40] sm:$0xff]
  %v4373 = vld [vmem:[%s4363 + $0x48] sm:$0xff]
  %v4374 = vld [vmem:[%s4363 + $0x50] sm:$0xff]
  %v4375 = vld [vmem:[%s4363 + $0x58] sm:$0xff]
  %v4376 = vld [vmem:[%s4363 + $0x60] sm:$0xff]
  %v4377 = vld [vmem:[%s4363 + $0x68] sm:$0xff]
  %v4378 = vld [vmem:[%s4363 + $0x70] sm:$0xff]
  %v4379 = vld [vmem:[%s4363 + $0x78] sm:$0xff]
  %4380 = vmatprep.subr.mxu0 0.0
  %4381 = vmatpush1.msra.mxu0 %v4364
  %4382 = vmatprep.subr.mxu0 0.0
  %4383 = vmatpush1.msra.mxu0 %v4365
  %4384 = vmatprep.subr.mxu0 0.0
  %4385 = vmatpush1.msra.mxu0 %v4366
  %4386 = vmatprep.subr.mxu0 0.0
  %4387 = vmatpush1.msra.mxu0 %v4367
  %4388 = vmatprep.subr.mxu0 0.0
  %4389 = vmatpush1.msra.mxu0 %v4368
  %4390 = vmatprep.subr.mxu0 0.0
  %4391 = vmatpush1.msra.mxu0 %v4369
  %4392 = vmatprep.subr.mxu0 0.0
  %4393 = vmatpush1.msra.mxu0 %v4370
  %4394 = vmatprep.subr.mxu0 0.0
  %4395 = vmatpush1.msra.mxu0 %v4371
  %4396 = vmatprep.subr.mxu0 0.0
  %4397 = vmatpush1.msra.mxu0 %v4372
  %4398 = vmatprep.subr.mxu0 0.0
  %4399 = vmatpush1.msra.mxu0 %v4373
  %4400 = vmatprep.subr.mxu0 0.0
  %4401 = vmatpush1.msra.mxu0 %v4374
  %4402 = vmatprep.subr.mxu0 0.0
  %4403 = vmatpush1.msra.mxu0 %v4375
  %4404 = vmatprep.subr.mxu0 0.0
  %4405 = vmatpush1.msra.mxu0 %v4376
  %4406 = vmatprep.subr.mxu0 0.0
  %4407 = vmatpush1.msra.mxu0 %v4377
  %4408 = vmatprep.subr.mxu0 0.0
  %4409 = vmatpush1.msra.mxu0 %v4378
  %4410 = vmatprep.subr.mxu0 0.0
  %4411 = vmatpush1.msra.mxu0 %v4379
  %4412 = vmatprep.subr.mxu0 0.0
  %4413 = vmatpush1.msra.mxu0 0.0
  %4414 = vmatprep.subr.mxu0 0.0
  %4415 = vmatpush1.msra.mxu0 0.0
  %4416 = vmatprep.subr.mxu0 0.0
  %4417 = vmatpush1.msra.mxu0 0.0
  %4418 = vmatprep.subr.mxu0 0.0
  %4419 = vmatpush1.msra.mxu0 0.0
  %4420 = vmatprep.subr.mxu0 0.0
  %4421 = vmatpush1.msra.mxu0 0.0
  %4422 = vmatprep.subr.mxu0 0.0
  %4423 = vmatpush1.msra.mxu0 0.0
  %4424 = vmatprep.subr.mxu0 0.0
  %4425 = vmatpush1.msra.mxu0 0.0
  %4426 = vmatprep.subr.mxu0 0.0
  %4427 = vmatpush1.msra.mxu0 0.0
  %4428 = vmatprep.subr.mxu0 0.0
  %4429 = vmatpush1.msra.mxu0 0.0
  %4430 = vmatprep.subr.mxu0 0.0
  %4431 = vmatpush1.msra.mxu0 0.0
  %4432 = vmatprep.subr.mxu0 0.0
  %4433 = vmatpush1.msra.mxu0 0.0
  %4434 = vmatprep.subr.mxu0 0.0
  %4435 = vmatpush1.msra.mxu0 0.0
  %4436 = vmatprep.subr.mxu0 0.0
  %4437 = vmatpush1.msra.mxu0 0.0
  %4438 = vmatprep.subr.mxu0 0.0
  %4439 = vmatpush1.msra.mxu0 0.0
  %4440 = vmatprep.subr.mxu0 0.0
  %4441 = vmatpush1.msra.mxu0 0.0
  %4442 = vmatprep.subr.mxu0 0.0
  %4443 = vmatpush1.msra.mxu0 0.0
  %4444 = vmatprep.mubr.f32.mxu0 0.0
  %4445 = vmatmul.mubr.f32.gmra.mrb[0].mxu0 %v4361
  %v4446 = vpop.f32.mrb[0].mxu0
  %v4447 = vadd.f32 0.0, %v4446
  %v4448 = vpop.f32.mrb[0].mxu0
  %4449 = vmatprep.mubr.f32.mxu0 0.0
  %4450 = vmatmul.mubr.f32.gmra.mrb[0].mxu0 %v4362
  %v4451 = vpop.f32.mrb[0].mxu0
  %v4452 = vadd.f32 0.0, %v4451
  %v4453 = vpop.f32.mrb[0].mxu0
  %4454 = vdwg.mxu0
  %v4455 = vadd.f32 %v4119, %v4447
  %v4456 = vadd.f32 %v4120, %v4452
  %4457 = vmatprep.subr.mxu0 0.0
  %4458 = vmatpush1.msra.mxu0 %v39
  %4459 = vmatprep.subr.mxu0 0.0
  %4460 = vmatpush1.msra.mxu0 %v40
  %4461 = vmatprep.subr.mxu0 0.0
  %4462 = vmatpush1.msra.mxu0 %v41
  %4463 = vmatprep.subr.mxu0 0.0
  %4464 = vmatpush1.msra.mxu0 %v42
  %4465 = vmatprep.subr.mxu0 0.0
  %4466 = vmatpush1.msra.mxu0 %v43
  %4467 = vmatprep.subr.mxu0 0.0
  %4468 = vmatpush1.msra.mxu0 %v44
  %4469 = vmatprep.subr.mxu0 0.0
  %4470 = vmatpush1.msra.mxu0 %v45
  %4471 = vmatprep.subr.mxu0 0.0
  %4472 = vmatpush1.msra.mxu0 %v46
  %4473 = vmatprep.subr.mxu0 0.0
  %4474 = vmatpush1.msra.mxu0 %v47
  %4475 = vmatprep.subr.mxu0 0.0
  %4476 = vmatpush1.msra.mxu0 0.0
  %4477 = vmatprep.subr.mxu0 0.0
  %4478 = vmatpush1.msra.mxu0 0.0
  %4479 = vmatprep.subr.mxu0 0.0
  %4480 = vmatpush1.msra.mxu0 0.0
  %4481 = vmatprep.subr.mxu0 0.0
  %4482 = vmatpush1.msra.mxu0 0.0
  %4483 = vmatprep.subr.mxu0 0.0
  %4484 = vmatpush1.msra.mxu0 0.0
  %4485 = vmatprep.subr.mxu0 0.0
  %4486 = vmatpush1.msra.mxu0 0.0
  %4487 = vmatprep.subr.mxu0 0.0
  %4488 = vmatpush1.msra.mxu0 0.0
  %4489 = vmatprep.subr.mxu0 0.0
  %4490 = vmatpush1.msra.mxu0 0.0
  %4491 = vmatprep.subr.mxu0 0.0
  %4492 = vmatpush1.msra.mxu0 0.0
  %4493 = vmatprep.subr.mxu0 0.0
  %4494 = vmatpush1.msra.mxu0 0.0
  %4495 = vmatprep.subr.mxu0 0.0
  %4496 = vmatpush1.msra.mxu0 0.0
  %4497 = vmatprep.subr.mxu0 0.0
  %4498 = vmatpush1.msra.mxu0 0.0
  %4499 = vmatprep.subr.mxu0 0.0
  %4500 = vmatpush1.msra.mxu0 0.0
  %4501 = vmatprep.subr.mxu0 0.0
  %4502 = vmatpush1.msra.mxu0 0.0
  %4503 = vmatprep.subr.mxu0 0.0
  %4504 = vmatpush1.msra.mxu0 0.0
  %4505 = vmatprep.subr.mxu0 0.0
  %4506 = vmatpush1.msra.mxu0 0.0
  %4507 = vmatprep.subr.mxu0 0.0
  %4508 = vmatpush1.msra.mxu0 0.0
  %4509 = vmatprep.subr.mxu0 0.0
  %4510 = vmatpush1.msra.mxu0 0.0
  %4511 = vmatprep.subr.mxu0 0.0
  %4512 = vmatpush1.msra.mxu0 0.0
  %4513 = vmatprep.subr.mxu0 0.0
  %4514 = vmatpush1.msra.mxu0 0.0
  %4515 = vmatprep.subr.mxu0 0.0
  %4516 = vmatpush1.msra.mxu0 0.0
  %4517 = vmatprep.subr.mxu0 0.0
  %4518 = vmatpush1.msra.mxu0 0.0
  %4519 = vmatprep.subr.mxu0 0.0
  %4520 = vmatpush1.msra.mxu0 0.0
  %4521 = vmatprep.mubr.f32.mxu0 0.0
  %4522 = vmatmul.mubr.f32.gmra.mrb[0].mxu0 %v3943
  %v4523 = vpop.f32.mrb[0].mxu0
  %v4524 = vadd.f32 0.0, %v4523
  %v4525 = vpop.f32.mrb[0].mxu0
  %4526 = vmatprep.mubr.f32.mxu0 0.0
  %4527 = vmatmul.mubr.f32.gmra.mrb[0].mxu0 %v3946
  %v4528 = vpop.f32.mrb[0].mxu0
  %v4529 = vadd.f32 0.0, %v4528
  %v4530 = vpop.f32.mrb[0].mxu0
  %4531 = vdwg.mxu0
  %v4532 = vadd.f32 %v134, %v4524
  %v4533 = vadd.f32 %v134, %v4529
  %4534 = vmatprep.subr.mxu0 0.0
  %4535 = vmatpush1.msra.mxu0 %v142
  %4536 = vmatprep.subr.mxu0 0.0
  %4537 = vmatpush1.msra.mxu0 %v143
  %4538 = vmatprep.subr.mxu0 0.0
  %4539 = vmatpush1.msra.mxu0 %v144
  %4540 = vmatprep.subr.mxu0 0.0
  %4541 = vmatpush1.msra.mxu0 %v145
  %4542 = vmatprep.subr.mxu0 0.0
  %4543 = vmatpush1.msra.mxu0 %v146
  %4544 = vmatprep.subr.mxu0 0.0
  %4545 = vmatpush1.msra.mxu0 %v147
  %4546 = vmatprep.subr.mxu0 0.0
  %4547 = vmatpush1.msra.mxu0 %v148
  %4548 = vmatprep.subr.mxu0 0.0
  %4549 = vmatpush1.msra.mxu0 %v149
  %4550 = vmatprep.subr.mxu0 0.0
  %4551 = vmatpush1.msra.mxu0 %v150
  %4552 = vmatprep.subr.mxu0 0.0
  %4553 = vmatpush1.msra.mxu0 0.0
  %4554 = vmatprep.subr.mxu0 0.0
  %4555 = vmatpush1.msra.mxu0 0.0
  %4556 = vmatprep.subr.mxu0 0.0
  %4557 = vmatpush1.msra.mxu0 0.0
  %4558 = vmatprep.subr.mxu0 0.0
  %4559 = vmatpush1.msra.mxu0 0.0
  %4560 = vmatprep.subr.mxu0 0.0
  %4561 = vmatpush1.msra.mxu0 0.0
  %4562 = vmatprep.subr.mxu0 0.0
  %4563 = vmatpush1.msra.mxu0 0.0
  %4564 = vmatprep.subr.mxu0 0.0
  %4565 = vmatpush1.msra.mxu0 0.0
  %4566 = vmatprep.subr.mxu0 0.0
  %4567 = vmatpush1.msra.mxu0 0.0
  %4568 = vmatprep.subr.mxu0 0.0
  %4569 = vmatpush1.msra.mxu0 0.0
  %4570 = vmatprep.subr.mxu0 0.0
  %4571 = vmatpush1.msra.mxu0 0.0
  %4572 = vmatprep.subr.mxu0 0.0
  %4573 = vmatpush1.msra.mxu0 0.0
  %4574 = vmatprep.subr.mxu0 0.0
  %4575 = vmatpush1.msra.mxu0 0.0
  %4576 = vmatprep.subr.mxu0 0.0
  %4577 = vmatpush1.msra.mxu0 0.0
  %4578 = vmatprep.subr.mxu0 0.0
  %4579 = vmatpush1.msra.mxu0 0.0
  %4580 = vmatprep.subr.mxu0 0.0
  %4581 = vmatpush1.msra.mxu0 0.0
  %4582 = vmatprep.subr.mxu0 0.0
  %4583 = vmatpush1.msra.mxu0 0.0
  %4584 = vmatprep.subr.mxu0 0.0
  %4585 = vmatpush1.msra.mxu0 0.0
  %4586 = vmatprep.subr.mxu0 0.0
  %4587 = vmatpush1.msra.mxu0 0.0
  %4588 = vmatprep.subr.mxu0 0.0
  %4589 = vmatpush1.msra.mxu0 0.0
  %4590 = vmatprep.subr.mxu0 0.0
  %4591 = vmatpush1.msra.mxu0 0.0
  %4592 = vmatprep.subr.mxu0 0.0
  %4593 = vmatpush1.msra.mxu0 0.0
  %4594 = vmatprep.subr.mxu0 0.0
  %4595 = vmatpush1.msra.mxu0 0.0
  %4596 = vmatprep.subr.mxu0 0.0
  %4597 = vmatpush1.msra.mxu0 0.0
  %4598 = vmatprep.mubr.f32.mxu0 0.0
  %4599 = vmatmul.mubr.f32.gmra.mrb[0].mxu0 %v4279
  %v4600 = vpop.f32.mrb[0].mxu0
  %v4601 = vadd.f32 0.0, %v4600
  %v4602 = vpop.f32.mrb[0].mxu0
  %4603 = vmatprep.mubr.f32.mxu0 0.0
  %4604 = vmatmul.mubr.f32.gmra.mrb[0].mxu0 %v4282
  %v4605 = vpop.f32.mrb[0].mxu0
  %v4606 = vadd.f32 0.0, %v4605
  %v4607 = vpop.f32.mrb[0].mxu0
  %4608 = vdwg.mxu0
  %v4609 = vadd.f32 %v4532, %v4601
  %v4610 = vadd.f32 %v4533, %v4606
  %s4611 = scalar_lea.vmem %s0, 240
  %v4612 = vld [vmem:[%s4611] sm:$0xff]
  %v4613 = vld [vmem:[%s4611 + $0x8] sm:$0xff]
  %v4615 = vsel %vm48, %v4612, 0
  %v4618 = vsel %vm48, %v4613, 0
  %4620 = vmatprep.subr.mxu0 0.0
  %4621 = vmatpush1.msra.mxu0 %v238
  %4622 = vmatprep.subr.mxu0 0.0
  %4623 = vmatpush1.msra.mxu0 %v239
  %4624 = vmatprep.subr.mxu0 0.0
  %4625 = vmatpush1.msra.mxu0 %v240
  %4626 = vmatprep.subr.mxu0 0.0
  %4627 = vmatpush1.msra.mxu0 %v241
  %4628 = vmatprep.subr.mxu0 0.0
  %4629 = vmatpush1.msra.mxu0 %v242
  %4630 = vmatprep.subr.mxu0 0.0
  %4631 = vmatpush1.msra.mxu0 %v243
  %4632 = vmatprep.subr.mxu0 0.0
  %4633 = vmatpush1.msra.mxu0 %v244
  %4634 = vmatprep.subr.mxu0 0.0
  %4635 = vmatpush1.msra.mxu0 %v245
  %4636 = vmatprep.subr.mxu0 0.0
  %4637 = vmatpush1.msra.mxu0 %v246
  %4638 = vmatprep.subr.mxu0 0.0
  %4639 = vmatpush1.msra.mxu0 0.0
  %4640 = vmatprep.subr.mxu0 0.0
  %4641 = vmatpush1.msra.mxu0 0.0
  %4642 = vmatprep.subr.mxu0 0.0
  %4643 = vmatpush1.msra.mxu0 0.0
  %4644 = vmatprep.subr.mxu0 0.0
  %4645 = vmatpush1.msra.mxu0 0.0
  %4646 = vmatprep.subr.mxu0 0.0
  %4647 = vmatpush1.msra.mxu0 0.0
  %4648 = vmatprep.subr.mxu0 0.0
  %4649 = vmatpush1.msra.mxu0 0.0
  %4650 = vmatprep.subr.mxu0 0.0
  %4651 = vmatpush1.msra.mxu0 0.0
  %4652 = vmatprep.subr.mxu0 0.0
  %4653 = vmatpush1.msra.mxu0 0.0
  %4654 = vmatprep.subr.mxu0 0.0
  %4655 = vmatpush1.msra.mxu0 0.0
  %4656 = vmatprep.subr.mxu0 0.0
  %4657 = vmatpush1.msra.mxu0 0.0
  %4658 = vmatprep.subr.mxu0 0.0
  %4659 = vmatpush1.msra.mxu0 0.0
  %4660 = vmatprep.subr.mxu0 0.0
  %4661 = vmatpush1.msra.mxu0 0.0
  %4662 = vmatprep.subr.mxu0 0.0
  %4663 = vmatpush1.msra.mxu0 0.0
  %4664 = vmatprep.subr.mxu0 0.0
  %4665 = vmatpush1.msra.mxu0 0.0
  %4666 = vmatprep.subr.mxu0 0.0
  %4667 = vmatpush1.msra.mxu0 0.0
  %4668 = vmatprep.subr.mxu0 0.0
  %4669 = vmatpush1.msra.mxu0 0.0
  %4670 = vmatprep.subr.mxu0 0.0
  %4671 = vmatpush1.msra.mxu0 0.0
  %4672 = vmatprep.subr.mxu0 0.0
  %4673 = vmatpush1.msra.mxu0 0.0
  %4674 = vmatprep.subr.mxu0 0.0
  %4675 = vmatpush1.msra.mxu0 0.0
  %4676 = vmatprep.subr.mxu0 0.0
  %4677 = vmatpush1.msra.mxu0 0.0
  %4678 = vmatprep.subr.mxu0 0.0
  %4679 = vmatpush1.msra.mxu0 0.0
  %4680 = vmatprep.subr.mxu0 0.0
  %4681 = vmatpush1.msra.mxu0 0.0
  %4682 = vmatprep.subr.mxu0 0.0
  %4683 = vmatpush1.msra.mxu0 0.0
  %4684 = vmatprep.mubr.f32.mxu0 0.0
  %4685 = vmatmul.mubr.f32.gmra.mrb[0].mxu0 %v4615
  %v4686 = vpop.f32.mrb[0].mxu0
  %v4687 = vadd.f32 0.0, %v4686
  %v4688 = vpop.f32.mrb[0].mxu0
  %4689 = vmatprep.mubr.f32.mxu0 0.0
  %4690 = vmatmul.mubr.f32.gmra.mrb[0].mxu0 %v4618
  %v4691 = vpop.f32.mrb[0].mxu0
  %v4692 = vadd.f32 0.0, %v4691
  %v4693 = vpop.f32.mrb[0].mxu0
  %4694 = vdwg.mxu0
  %v4695 = vadd.f32 %v4609, %v4687
  %v4696 = vadd.f32 %v4610, %v4692
  %v4697 = vmax.f32 %v4695, 0.0
  %v4698 = vmax.f32 %v4696, 0.0
  %s4699 = scalar_lea.vmem %s3, 1664
  %v4700 = vld [vmem:[%s4699] sm:$0xff]
  %v4701 = vld [vmem:[%s4699 + $0x8] sm:$0xff]
  %v4702 = vld [vmem:[%s4699 + $0x10] sm:$0xff]
  %v4703 = vld [vmem:[%s4699 + $0x18] sm:$0xff]
  %v4704 = vld [vmem:[%s4699 + $0x20] sm:$0xff]
  %v4705 = vld [vmem:[%s4699 + $0x28] sm:$0xff]
  %v4706 = vld [vmem:[%s4699 + $0x30] sm:$0xff]
  %v4707 = vld [vmem:[%s4699 + $0x38] sm:$0xff]
  %v4708 = vld [vmem:[%s4699 + $0x40] sm:$0xff]
  %v4709 = vld [vmem:[%s4699 + $0x48] sm:$0xff]
  %v4710 = vld [vmem:[%s4699 + $0x50] sm:$0xff]
  %v4711 = vld [vmem:[%s4699 + $0x58] sm:$0xff]
  %v4712 = vld [vmem:[%s4699 + $0x60] sm:$0xff]
  %v4713 = vld [vmem:[%s4699 + $0x68] sm:$0xff]
  %v4714 = vld [vmem:[%s4699 + $0x70] sm:$0xff]
  %v4715 = vld [vmem:[%s4699 + $0x78] sm:$0xff]
  %4716 = vmatprep.subr.mxu0 0.0
  %4717 = vmatpush1.msra.mxu0 %v4700
  %4718 = vmatprep.subr.mxu0 0.0
  %4719 = vmatpush1.msra.mxu0 %v4701
  %4720 = vmatprep.subr.mxu0 0.0
  %4721 = vmatpush1.msra.mxu0 %v4702
  %4722 = vmatprep.subr.mxu0 0.0
  %4723 = vmatpush1.msra.mxu0 %v4703
  %4724 = vmatprep.subr.mxu0 0.0
  %4725 = vmatpush1.msra.mxu0 %v4704
  %4726 = vmatprep.subr.mxu0 0.0
  %4727 = vmatpush1.msra.mxu0 %v4705
  %4728 = vmatprep.subr.mxu0 0.0
  %4729 = vmatpush1.msra.mxu0 %v4706
  %4730 = vmatprep.subr.mxu0 0.0
  %4731 = vmatpush1.msra.mxu0 %v4707
  %4732 = vmatprep.subr.mxu0 0.0
  %4733 = vmatpush1.msra.mxu0 %v4708
  %4734 = vmatprep.subr.mxu0 0.0
  %4735 = vmatpush1.msra.mxu0 %v4709
  %4736 = vmatprep.subr.mxu0 0.0
  %4737 = vmatpush1.msra.mxu0 %v4710
  %4738 = vmatprep.subr.mxu0 0.0
  %4739 = vmatpush1.msra.mxu0 %v4711
  %4740 = vmatprep.subr.mxu0 0.0
  %4741 = vmatpush1.msra.mxu0 %v4712
  %4742 = vmatprep.subr.mxu0 0.0
  %4743 = vmatpush1.msra.mxu0 %v4713
  %4744 = vmatprep.subr.mxu0 0.0
  %4745 = vmatpush1.msra.mxu0 %v4714
  %4746 = vmatprep.subr.mxu0 0.0
  %4747 = vmatpush1.msra.mxu0 %v4715
  %4748 = vmatprep.subr.mxu0 0.0
  %4749 = vmatpush1.msra.mxu0 0.0
  %4750 = vmatprep.subr.mxu0 0.0
  %4751 = vmatpush1.msra.mxu0 0.0
  %4752 = vmatprep.subr.mxu0 0.0
  %4753 = vmatpush1.msra.mxu0 0.0
  %4754 = vmatprep.subr.mxu0 0.0
  %4755 = vmatpush1.msra.mxu0 0.0
  %4756 = vmatprep.subr.mxu0 0.0
  %4757 = vmatpush1.msra.mxu0 0.0
  %4758 = vmatprep.subr.mxu0 0.0
  %4759 = vmatpush1.msra.mxu0 0.0
  %4760 = vmatprep.subr.mxu0 0.0
  %4761 = vmatpush1.msra.mxu0 0.0
  %4762 = vmatprep.subr.mxu0 0.0
  %4763 = vmatpush1.msra.mxu0 0.0
  %4764 = vmatprep.subr.mxu0 0.0
  %4765 = vmatpush1.msra.mxu0 0.0
  %4766 = vmatprep.subr.mxu0 0.0
  %4767 = vmatpush1.msra.mxu0 0.0
  %4768 = vmatprep.subr.mxu0 0.0
  %4769 = vmatpush1.msra.mxu0 0.0
  %4770 = vmatprep.subr.mxu0 0.0
  %4771 = vmatpush1.msra.mxu0 0.0
  %4772 = vmatprep.subr.mxu0 0.0
  %4773 = vmatpush1.msra.mxu0 0.0
  %4774 = vmatprep.subr.mxu0 0.0
  %4775 = vmatpush1.msra.mxu0 0.0
  %4776 = vmatprep.subr.mxu0 0.0
  %4777 = vmatpush1.msra.mxu0 0.0
  %4778 = vmatprep.subr.mxu0 0.0
  %4779 = vmatpush1.msra.mxu0 0.0
  %4780 = vmatprep.mubr.f32.mxu0 0.0
  %4781 = vmatmul.mubr.f32.gmra.mrb[0].mxu0 %v4697
  %v4782 = vpop.f32.mrb[0].mxu0
  %v4783 = vadd.f32 0.0, %v4782
  %v4784 = vpop.f32.mrb[0].mxu0
  %4785 = vmatprep.mubr.f32.mxu0 0.0
  %4786 = vmatmul.mubr.f32.gmra.mrb[0].mxu0 %v4698
  %v4787 = vpop.f32.mrb[0].mxu0
  %v4788 = vadd.f32 0.0, %v4787
  %v4789 = vpop.f32.mrb[0].mxu0
  %4790 = vdwg.mxu0
  %v4791 = vadd.f32 %v4455, %v4783
  %v4792 = vadd.f32 %v4456, %v4788
  %4793 = vmatprep.subr.mxu0 0.0
  %4794 = vmatpush1.msra.mxu0 %v39
  %4795 = vmatprep.subr.mxu0 0.0
  %4796 = vmatpush1.msra.mxu0 %v40
  %4797 = vmatprep.subr.mxu0 0.0
  %4798 = vmatpush1.msra.mxu0 %v41
  %4799 = vmatprep.subr.mxu0 0.0
  %4800 = vmatpush1.msra.mxu0 %v42
  %4801 = vmatprep.subr.mxu0 0.0
  %4802 = vmatpush1.msra.mxu0 %v43
  %4803 = vmatprep.subr.mxu0 0.0
  %4804 = vmatpush1.msra.mxu0 %v44
  %4805 = vmatprep.subr.mxu0 0.0
  %4806 = vmatpush1.msra.mxu0 %v45
  %4807 = vmatprep.subr.mxu0 0.0
  %4808 = vmatpush1.msra.mxu0 %v46
  %4809 = vmatprep.subr.mxu0 0.0
  %4810 = vmatpush1.msra.mxu0 %v47
  %4811 = vmatprep.subr.mxu0 0.0
  %4812 = vmatpush1.msra.mxu0 0.0
  %4813 = vmatprep.subr.mxu0 0.0
  %4814 = vmatpush1.msra.mxu0 0.0
  %4815 = vmatprep.subr.mxu0 0.0
  %4816 = vmatpush1.msra.mxu0 0.0
  %4817 = vmatprep.subr.mxu0 0.0
  %4818 = vmatpush1.msra.mxu0 0.0
  %4819 = vmatprep.subr.mxu0 0.0
  %4820 = vmatpush1.msra.mxu0 0.0
  %4821 = vmatprep.subr.mxu0 0.0
  %4822 = vmatpush1.msra.mxu0 0.0
  %4823 = vmatprep.subr.mxu0 0.0
  %4824 = vmatpush1.msra.mxu0 0.0
  %4825 = vmatprep.subr.mxu0 0.0
  %4826 = vmatpush1.msra.mxu0 0.0
  %4827 = vmatprep.subr.mxu0 0.0
  %4828 = vmatpush1.msra.mxu0 0.0
  %4829 = vmatprep.subr.mxu0 0.0
  %4830 = vmatpush1.msra.mxu0 0.0
  %4831 = vmatprep.subr.mxu0 0.0
  %4832 = vmatpush1.msra.mxu0 0.0
  %4833 = vmatprep.subr.mxu0 0.0
  %4834 = vmatpush1.msra.mxu0 0.0
  %4835 = vmatprep.subr.mxu0 0.0
  %4836 = vmatpush1.msra.mxu0 0.0
  %4837 = vmatprep.subr.mxu0 0.0
  %4838 = vmatpush1.msra.mxu0 0.0
  %4839 = vmatprep.subr.mxu0 0.0
  %4840 = vmatpush1.msra.mxu0 0.0
  %4841 = vmatprep.subr.mxu0 0.0
  %4842 = vmatpush1.msra.mxu0 0.0
  %4843 = vmatprep.subr.mxu0 0.0
  %4844 = vmatpush1.msra.mxu0 0.0
  %4845 = vmatprep.subr.mxu0 0.0
  %4846 = vmatpush1.msra.mxu0 0.0
  %4847 = vmatprep.subr.mxu0 0.0
  %4848 = vmatpush1.msra.mxu0 0.0
  %4849 = vmatprep.subr.mxu0 0.0
  %4850 = vmatpush1.msra.mxu0 0.0
  %4851 = vmatprep.subr.mxu0 0.0
  %4852 = vmatpush1.msra.mxu0 0.0
  %4853 = vmatprep.subr.mxu0 0.0
  %4854 = vmatpush1.msra.mxu0 0.0
  %4855 = vmatprep.subr.mxu0 0.0
  %4856 = vmatpush1.msra.mxu0 0.0
  %4857 = vmatprep.mubr.f32.mxu0 0.0
  %4858 = vmatmul.mubr.f32.gmra.mrb[0].mxu0 %v4279
  %v4859 = vpop.f32.mrb[0].mxu0
  %v4860 = vadd.f32 0.0, %v4859
  %v4861 = vpop.f32.mrb[0].mxu0
  %4862 = vmatprep.mubr.f32.mxu0 0.0
  %4863 = vmatmul.mubr.f32.gmra.mrb[0].mxu0 %v4282
  %v4864 = vpop.f32.mrb[0].mxu0
  %v4865 = vadd.f32 0.0, %v4864
  %v4866 = vpop.f32.mrb[0].mxu0
  %4867 = vdwg.mxu0
  %v4868 = vadd.f32 %v134, %v4860
  %v4869 = vadd.f32 %v134, %v4865
  %4870 = vmatprep.subr.mxu0 0.0
  %4871 = vmatpush1.msra.mxu0 %v142
  %4872 = vmatprep.subr.mxu0 0.0
  %4873 = vmatpush1.msra.mxu0 %v143
  %4874 = vmatprep.subr.mxu0 0.0
  %4875 = vmatpush1.msra.mxu0 %v144
  %4876 = vmatprep.subr.mxu0 0.0
  %4877 = vmatpush1.msra.mxu0 %v145
  %4878 = vmatprep.subr.mxu0 0.0
  %4879 = vmatpush1.msra.mxu0 %v146
  %4880 = vmatprep.subr.mxu0 0.0
  %4881 = vmatpush1.msra.mxu0 %v147
  %4882 = vmatprep.subr.mxu0 0.0
  %4883 = vmatpush1.msra.mxu0 %v148
  %4884 = vmatprep.subr.mxu0 0.0
  %4885 = vmatpush1.msra.mxu0 %v149
  %4886 = vmatprep.subr.mxu0 0.0
  %4887 = vmatpush1.msra.mxu0 %v150
  %4888 = vmatprep.subr.mxu0 0.0
  %4889 = vmatpush1.msra.mxu0 0.0
  %4890 = vmatprep.subr.mxu0 0.0
  %4891 = vmatpush1.msra.mxu0 0.0
  %4892 = vmatprep.subr.mxu0 0.0
  %4893 = vmatpush1.msra.mxu0 0.0
  %4894 = vmatprep.subr.mxu0 0.0
  %4895 = vmatpush1.msra.mxu0 0.0
  %4896 = vmatprep.subr.mxu0 0.0
  %4897 = vmatpush1.msra.mxu0 0.0
  %4898 = vmatprep.subr.mxu0 0.0
  %4899 = vmatpush1.msra.mxu0 0.0
  %4900 = vmatprep.subr.mxu0 0.0
  %4901 = vmatpush1.msra.mxu0 0.0
  %4902 = vmatprep.subr.mxu0 0.0
  %4903 = vmatpush1.msra.mxu0 0.0
  %4904 = vmatprep.subr.mxu0 0.0
  %4905 = vmatpush1.msra.mxu0 0.0
  %4906 = vmatprep.subr.mxu0 0.0
  %4907 = vmatpush1.msra.mxu0 0.0
  %4908 = vmatprep.subr.mxu0 0.0
  %4909 = vmatpush1.msra.mxu0 0.0
  %4910 = vmatprep.subr.mxu0 0.0
  %4911 = vmatpush1.msra.mxu0 0.0
  %4912 = vmatprep.subr.mxu0 0.0
  %4913 = vmatpush1.msra.mxu0 0.0
  %4914 = vmatprep.subr.mxu0 0.0
  %4915 = vmatpush1.msra.mxu0 0.0
  %4916 = vmatprep.subr.mxu0 0.0
  %4917 = vmatpush1.msra.mxu0 0.0
  %4918 = vmatprep.subr.mxu0 0.0
  %4919 = vmatpush1.msra.mxu0 0.0
  %4920 = vmatprep.subr.mxu0 0.0
  %4921 = vmatpush1.msra.mxu0 0.0
  %4922 = vmatprep.subr.mxu0 0.0
  %4923 = vmatpush1.msra.mxu0 0.0
  %4924 = vmatprep.subr.mxu0 0.0
  %4925 = vmatpush1.msra.mxu0 0.0
  %4926 = vmatprep.subr.mxu0 0.0
  %4927 = vmatpush1.msra.mxu0 0.0
  %4928 = vmatprep.subr.mxu0 0.0
  %4929 = vmatpush1.msra.mxu0 0.0
  %4930 = vmatprep.subr.mxu0 0.0
  %4931 = vmatpush1.msra.mxu0 0.0
  %4932 = vmatprep.subr.mxu0 0.0
  %4933 = vmatpush1.msra.mxu0 0.0
  %4934 = vmatprep.mubr.f32.mxu0 0.0
  %4935 = vmatmul.mubr.f32.gmra.mrb[0].mxu0 %v4615
  %v4936 = vpop.f32.mrb[0].mxu0
  %v4937 = vadd.f32 0.0, %v4936
  %v4938 = vpop.f32.mrb[0].mxu0
  %4939 = vmatprep.mubr.f32.mxu0 0.0
  %4940 = vmatmul.mubr.f32.gmra.mrb[0].mxu0 %v4618
  %v4941 = vpop.f32.mrb[0].mxu0
  %v4942 = vadd.f32 0.0, %v4941
  %v4943 = vpop.f32.mrb[0].mxu0
  %4944 = vdwg.mxu0
  %v4945 = vadd.f32 %v4868, %v4937
  %v4946 = vadd.f32 %v4869, %v4942
  %s4947 = scalar_lea.vmem %s0, 256
  %v4948 = vld [vmem:[%s4947] sm:$0xff]
  %v4949 = vld [vmem:[%s4947 + $0x8] sm:$0xff]
  %v4951 = vsel %vm48, %v4948, 0
  %v4954 = vsel %vm48, %v4949, 0
  %4956 = vmatprep.subr.mxu0 0.0
  %4957 = vmatpush1.msra.mxu0 %v238
  %4958 = vmatprep.subr.mxu0 0.0
  %4959 = vmatpush1.msra.mxu0 %v239
  %4960 = vmatprep.subr.mxu0 0.0
  %4961 = vmatpush1.msra.mxu0 %v240
  %4962 = vmatprep.subr.mxu0 0.0
  %4963 = vmatpush1.msra.mxu0 %v241
  %4964 = vmatprep.subr.mxu0 0.0
  %4965 = vmatpush1.msra.mxu0 %v242
  %4966 = vmatprep.subr.mxu0 0.0
  %4967 = vmatpush1.msra.mxu0 %v243
  %4968 = vmatprep.subr.mxu0 0.0
  %4969 = vmatpush1.msra.mxu0 %v244
  %4970 = vmatprep.subr.mxu0 0.0
  %4971 = vmatpush1.msra.mxu0 %v245
  %4972 = vmatprep.subr.mxu0 0.0
  %4973 = vmatpush1.msra.mxu0 %v246
  %4974 = vmatprep.subr.mxu0 0.0
  %4975 = vmatpush1.msra.mxu0 0.0
  %4976 = vmatprep.subr.mxu0 0.0
  %4977 = vmatpush1.msra.mxu0 0.0
  %4978 = vmatprep.subr.mxu0 0.0
  %4979 = vmatpush1.msra.mxu0 0.0
  %4980 = vmatprep.subr.mxu0 0.0
  %4981 = vmatpush1.msra.mxu0 0.0
  %4982 = vmatprep.subr.mxu0 0.0
  %4983 = vmatpush1.msra.mxu0 0.0
  %4984 = vmatprep.subr.mxu0 0.0
  %4985 = vmatpush1.msra.mxu0 0.0
  %4986 = vmatprep.subr.mxu0 0.0
  %4987 = vmatpush1.msra.mxu0 0.0
  %4988 = vmatprep.subr.mxu0 0.0
  %4989 = vmatpush1.msra.mxu0 0.0
  %4990 = vmatprep.subr.mxu0 0.0
  %4991 = vmatpush1.msra.mxu0 0.0
  %4992 = vmatprep.subr.mxu0 0.0
  %4993 = vmatpush1.msra.mxu0 0.0
  %4994 = vmatprep.subr.mxu0 0.0
  %4995 = vmatpush1.msra.mxu0 0.0
  %4996 = vmatprep.subr.mxu0 0.0
  %4997 = vmatpush1.msra.mxu0 0.0
  %4998 = vmatprep.subr.mxu0 0.0
  %4999 = vmatpush1.msra.mxu0 0.0
  %5000 = vmatprep.subr.mxu0 0.0
  %5001 = vmatpush1.msra.mxu0 0.0
  %5002 = vmatprep.subr.mxu0 0.0
  %5003 = vmatpush1.msra.mxu0 0.0
  %5004 = vmatprep.subr.mxu0 0.0
  %5005 = vmatpush1.msra.mxu0 0.0
  %5006 = vmatprep.subr.mxu0 0.0
  %5007 = vmatpush1.msra.mxu0 0.0
  %5008 = vmatprep.subr.mxu0 0.0
  %5009 = vmatpush1.msra.mxu0 0.0
  %5010 = vmatprep.subr.mxu0 0.0
  %5011 = vmatpush1.msra.mxu0 0.0
  %5012 = vmatprep.subr.mxu0 0.0
  %5013 = vmatpush1.msra.mxu0 0.0
  %5014 = vmatprep.subr.mxu0 0.0
  %5015 = vmatpush1.msra.mxu0 0.0
  %5016 = vmatprep.subr.mxu0 0.0
  %5017 = vmatpush1.msra.mxu0 0.0
  %5018 = vmatprep.subr.mxu0 0.0
  %5019 = vmatpush1.msra.mxu0 0.0
  %5020 = vmatprep.mubr.f32.mxu0 0.0
  %5021 = vmatmul.mubr.f32.gmra.mrb[0].mxu0 %v4951
  %v5022 = vpop.f32.mrb[0].mxu0
  %v5023 = vadd.f32 0.0, %v5022
  %v5024 = vpop.f32.mrb[0].mxu0
  %5025 = vmatprep.mubr.f32.mxu0 0.0
  %5026 = vmatmul.mubr.f32.gmra.mrb[0].mxu0 %v4954
  %v5027 = vpop.f32.mrb[0].mxu0
  %v5028 = vadd.f32 0.0, %v5027
  %v5029 = vpop.f32.mrb[0].mxu0
  %5030 = vdwg.mxu0
  %v5031 = vadd.f32 %v4945, %v5023
  %v5032 = vadd.f32 %v4946, %v5028
  %v5033 = vmax.f32 %v5031, 0.0
  %v5034 = vmax.f32 %v5032, 0.0
  %s5035 = scalar_lea.vmem %s3, 1792
  %v5036 = vld [vmem:[%s5035] sm:$0xff]
  %v5037 = vld [vmem:[%s5035 + $0x8] sm:$0xff]
  %v5038 = vld [vmem:[%s5035 + $0x10] sm:$0xff]
  %v5039 = vld [vmem:[%s5035 + $0x18] sm:$0xff]
  %v5040 = vld [vmem:[%s5035 + $0x20] sm:$0xff]
  %v5041 = vld [vmem:[%s5035 + $0x28] sm:$0xff]
  %v5042 = vld [vmem:[%s5035 + $0x30] sm:$0xff]
  %v5043 = vld [vmem:[%s5035 + $0x38] sm:$0xff]
  %v5044 = vld [vmem:[%s5035 + $0x40] sm:$0xff]
  %v5045 = vld [vmem:[%s5035 + $0x48] sm:$0xff]
  %v5046 = vld [vmem:[%s5035 + $0x50] sm:$0xff]
  %v5047 = vld [vmem:[%s5035 + $0x58] sm:$0xff]
  %v5048 = vld [vmem:[%s5035 + $0x60] sm:$0xff]
  %v5049 = vld [vmem:[%s5035 + $0x68] sm:$0xff]
  %v5050 = vld [vmem:[%s5035 + $0x70] sm:$0xff]
  %v5051 = vld [vmem:[%s5035 + $0x78] sm:$0xff]
  %5052 = vmatprep.subr.mxu0 0.0
  %5053 = vmatpush1.msra.mxu0 %v5036
  %5054 = vmatprep.subr.mxu0 0.0
  %5055 = vmatpush1.msra.mxu0 %v5037
  %5056 = vmatprep.subr.mxu0 0.0
  %5057 = vmatpush1.msra.mxu0 %v5038
  %5058 = vmatprep.subr.mxu0 0.0
  %5059 = vmatpush1.msra.mxu0 %v5039
  %5060 = vmatprep.subr.mxu0 0.0
  %5061 = vmatpush1.msra.mxu0 %v5040
  %5062 = vmatprep.subr.mxu0 0.0
  %5063 = vmatpush1.msra.mxu0 %v5041
  %5064 = vmatprep.subr.mxu0 0.0
  %5065 = vmatpush1.msra.mxu0 %v5042
  %5066 = vmatprep.subr.mxu0 0.0
  %5067 = vmatpush1.msra.mxu0 %v5043
  %5068 = vmatprep.subr.mxu0 0.0
  %5069 = vmatpush1.msra.mxu0 %v5044
  %5070 = vmatprep.subr.mxu0 0.0
  %5071 = vmatpush1.msra.mxu0 %v5045
  %5072 = vmatprep.subr.mxu0 0.0
  %5073 = vmatpush1.msra.mxu0 %v5046
  %5074 = vmatprep.subr.mxu0 0.0
  %5075 = vmatpush1.msra.mxu0 %v5047
  %5076 = vmatprep.subr.mxu0 0.0
  %5077 = vmatpush1.msra.mxu0 %v5048
  %5078 = vmatprep.subr.mxu0 0.0
  %5079 = vmatpush1.msra.mxu0 %v5049
  %5080 = vmatprep.subr.mxu0 0.0
  %5081 = vmatpush1.msra.mxu0 %v5050
  %5082 = vmatprep.subr.mxu0 0.0
  %5083 = vmatpush1.msra.mxu0 %v5051
  %5084 = vmatprep.subr.mxu0 0.0
  %5085 = vmatpush1.msra.mxu0 0.0
  %5086 = vmatprep.subr.mxu0 0.0
  %5087 = vmatpush1.msra.mxu0 0.0
  %5088 = vmatprep.subr.mxu0 0.0
  %5089 = vmatpush1.msra.mxu0 0.0
  %5090 = vmatprep.subr.mxu0 0.0
  %5091 = vmatpush1.msra.mxu0 0.0
  %5092 = vmatprep.subr.mxu0 0.0
  %5093 = vmatpush1.msra.mxu0 0.0
  %5094 = vmatprep.subr.mxu0 0.0
  %5095 = vmatpush1.msra.mxu0 0.0
  %5096 = vmatprep.subr.mxu0 0.0
  %5097 = vmatpush1.msra.mxu0 0.0
  %5098 = vmatprep.subr.mxu0 0.0
  %5099 = vmatpush1.msra.mxu0 0.0
  %5100 = vmatprep.subr.mxu0 0.0
  %5101 = vmatpush1.msra.mxu0 0.0
  %5102 = vmatprep.subr.mxu0 0.0
  %5103 = vmatpush1.msra.mxu0 0.0
  %5104 = vmatprep.subr.mxu0 0.0
  %5105 = vmatpush1.msra.mxu0 0.0
  %5106 = vmatprep.subr.mxu0 0.0
  %5107 = vmatpush1.msra.mxu0 0.0
  %5108 = vmatprep.subr.mxu0 0.0
  %5109 = vmatpush1.msra.mxu0 0.0
  %5110 = vmatprep.subr.mxu0 0.0
  %5111 = vmatpush1.msra.mxu0 0.0
  %5112 = vmatprep.subr.mxu0 0.0
  %5113 = vmatpush1.msra.mxu0 0.0
  %5114 = vmatprep.subr.mxu0 0.0
  %5115 = vmatpush1.msra.mxu0 0.0
  %5116 = vmatprep.mubr.f32.mxu0 0.0
  %5117 = vmatmul.mubr.f32.gmra.mrb[0].mxu0 %v5033
  %v5118 = vpop.f32.mrb[0].mxu0
  %v5119 = vadd.f32 0.0, %v5118
  %v5120 = vpop.f32.mrb[0].mxu0
  %5121 = vmatprep.mubr.f32.mxu0 0.0
  %5122 = vmatmul.mubr.f32.gmra.mrb[0].mxu0 %v5034
  %v5123 = vpop.f32.mrb[0].mxu0
  %v5124 = vadd.f32 0.0, %v5123
  %v5125 = vpop.f32.mrb[0].mxu0
  %5126 = vdwg.mxu0
  %v5127 = vadd.f32 %v4791, %v5119
  %v5128 = vadd.f32 %v4792, %v5124
  %5129 = vmatprep.subr.mxu0 0.0
  %5130 = vmatpush1.msra.mxu0 %v39
  %5131 = vmatprep.subr.mxu0 0.0
  %5132 = vmatpush1.msra.mxu0 %v40
  %5133 = vmatprep.subr.mxu0 0.0
  %5134 = vmatpush1.msra.mxu0 %v41
  %5135 = vmatprep.subr.mxu0 0.0
  %5136 = vmatpush1.msra.mxu0 %v42
  %5137 = vmatprep.subr.mxu0 0.0
  %5138 = vmatpush1.msra.mxu0 %v43
  %5139 = vmatprep.subr.mxu0 0.0
  %5140 = vmatpush1.msra.mxu0 %v44
  %5141 = vmatprep.subr.mxu0 0.0
  %5142 = vmatpush1.msra.mxu0 %v45
  %5143 = vmatprep.subr.mxu0 0.0
  %5144 = vmatpush1.msra.mxu0 %v46
  %5145 = vmatprep.subr.mxu0 0.0
  %5146 = vmatpush1.msra.mxu0 %v47
  %5147 = vmatprep.subr.mxu0 0.0
  %5148 = vmatpush1.msra.mxu0 0.0
  %5149 = vmatprep.subr.mxu0 0.0
  %5150 = vmatpush1.msra.mxu0 0.0
  %5151 = vmatprep.subr.mxu0 0.0
  %5152 = vmatpush1.msra.mxu0 0.0
  %5153 = vmatprep.subr.mxu0 0.0
  %5154 = vmatpush1.msra.mxu0 0.0
  %5155 = vmatprep.subr.mxu0 0.0
  %5156 = vmatpush1.msra.mxu0 0.0
  %5157 = vmatprep.subr.mxu0 0.0
  %5158 = vmatpush1.msra.mxu0 0.0
  %5159 = vmatprep.subr.mxu0 0.0
  %5160 = vmatpush1.msra.mxu0 0.0
  %5161 = vmatprep.subr.mxu0 0.0
  %5162 = vmatpush1.msra.mxu0 0.0
  %5163 = vmatprep.subr.mxu0 0.0
  %5164 = vmatpush1.msra.mxu0 0.0
  %5165 = vmatprep.subr.mxu0 0.0
  %5166 = vmatpush1.msra.mxu0 0.0
  %5167 = vmatprep.subr.mxu0 0.0
  %5168 = vmatpush1.msra.mxu0 0.0
  %5169 = vmatprep.subr.mxu0 0.0
  %5170 = vmatpush1.msra.mxu0 0.0
  %5171 = vmatprep.subr.mxu0 0.0
  %5172 = vmatpush1.msra.mxu0 0.0
  %5173 = vmatprep.subr.mxu0 0.0
  %5174 = vmatpush1.msra.mxu0 0.0
  %5175 = vmatprep.subr.mxu0 0.0
  %5176 = vmatpush1.msra.mxu0 0.0
  %5177 = vmatprep.subr.mxu0 0.0
  %5178 = vmatpush1.msra.mxu0 0.0
  %5179 = vmatprep.subr.mxu0 0.0
  %5180 = vmatpush1.msra.mxu0 0.0
  %5181 = vmatprep.subr.mxu0 0.0
  %5182 = vmatpush1.msra.mxu0 0.0
  %5183 = vmatprep.subr.mxu0 0.0
  %5184 = vmatpush1.msra.mxu0 0.0
  %5185 = vmatprep.subr.mxu0 0.0
  %5186 = vmatpush1.msra.mxu0 0.0
  %5187 = vmatprep.subr.mxu0 0.0
  %5188 = vmatpush1.msra.mxu0 0.0
  %5189 = vmatprep.subr.mxu0 0.0
  %5190 = vmatpush1.msra.mxu0 0.0
  %5191 = vmatprep.subr.mxu0 0.0
  %5192 = vmatpush1.msra.mxu0 0.0
  %5193 = vmatprep.mubr.f32.mxu0 0.0
  %5194 = vmatmul.mubr.f32.gmra.mrb[0].mxu0 %v4615
  %v5195 = vpop.f32.mrb[0].mxu0
  %v5196 = vadd.f32 0.0, %v5195
  %v5197 = vpop.f32.mrb[0].mxu0
  %5198 = vmatprep.mubr.f32.mxu0 0.0
  %5199 = vmatmul.mubr.f32.gmra.mrb[0].mxu0 %v4618
  %v5200 = vpop.f32.mrb[0].mxu0
  %v5201 = vadd.f32 0.0, %v5200
  %v5202 = vpop.f32.mrb[0].mxu0
  %5203 = vdwg.mxu0
  %v5204 = vadd.f32 %v134, %v5196
  %v5205 = vadd.f32 %v134, %v5201
  %5206 = vmatprep.subr.mxu0 0.0
  %5207 = vmatpush1.msra.mxu0 %v142
  %5208 = vmatprep.subr.mxu0 0.0
  %5209 = vmatpush1.msra.mxu0 %v143
  %5210 = vmatprep.subr.mxu0 0.0
  %5211 = vmatpush1.msra.mxu0 %v144
  %5212 = vmatprep.subr.mxu0 0.0
  %5213 = vmatpush1.msra.mxu0 %v145
  %5214 = vmatprep.subr.mxu0 0.0
  %5215 = vmatpush1.msra.mxu0 %v146
  %5216 = vmatprep.subr.mxu0 0.0
  %5217 = vmatpush1.msra.mxu0 %v147
  %5218 = vmatprep.subr.mxu0 0.0
  %5219 = vmatpush1.msra.mxu0 %v148
  %5220 = vmatprep.subr.mxu0 0.0
  %5221 = vmatpush1.msra.mxu0 %v149
  %5222 = vmatprep.subr.mxu0 0.0
  %5223 = vmatpush1.msra.mxu0 %v150
  %5224 = vmatprep.subr.mxu0 0.0
  %5225 = vmatpush1.msra.mxu0 0.0
  %5226 = vmatprep.subr.mxu0 0.0
  %5227 = vmatpush1.msra.mxu0 0.0
  %5228 = vmatprep.subr.mxu0 0.0
  %5229 = vmatpush1.msra.mxu0 0.0
  %5230 = vmatprep.subr.mxu0 0.0
  %5231 = vmatpush1.msra.mxu0 0.0
  %5232 = vmatprep.subr.mxu0 0.0
  %5233 = vmatpush1.msra.mxu0 0.0
  %5234 = vmatprep.subr.mxu0 0.0
  %5235 = vmatpush1.msra.mxu0 0.0
  %5236 = vmatprep.subr.mxu0 0.0
  %5237 = vmatpush1.msra.mxu0 0.0
  %5238 = vmatprep.subr.mxu0 0.0
  %5239 = vmatpush1.msra.mxu0 0.0
  %5240 = vmatprep.subr.mxu0 0.0
  %5241 = vmatpush1.msra.mxu0 0.0
  %5242 = vmatprep.subr.mxu0 0.0
  %5243 = vmatpush1.msra.mxu0 0.0
  %5244 = vmatprep.subr.mxu0 0.0
  %5245 = vmatpush1.msra.mxu0 0.0
  %5246 = vmatprep.subr.mxu0 0.0
  %5247 = vmatpush1.msra.mxu0 0.0
  %5248 = vmatprep.subr.mxu0 0.0
  %5249 = vmatpush1.msra.mxu0 0.0
  %5250 = vmatprep.subr.mxu0 0.0
  %5251 = vmatpush1.msra.mxu0 0.0
  %5252 = vmatprep.subr.mxu0 0.0
  %5253 = vmatpush1.msra.mxu0 0.0
  %5254 = vmatprep.subr.mxu0 0.0
  %5255 = vmatpush1.msra.mxu0 0.0
  %5256 = vmatprep.subr.mxu0 0.0
  %5257 = vmatpush1.msra.mxu0 0.0
  %5258 = vmatprep.subr.mxu0 0.0
  %5259 = vmatpush1.msra.mxu0 0.0
  %5260 = vmatprep.subr.mxu0 0.0
  %5261 = vmatpush1.msra.mxu0 0.0
  %5262 = vmatprep.subr.mxu0 0.0
  %5263 = vmatpush1.msra.mxu0 0.0
  %5264 = vmatprep.subr.mxu0 0.0
  %5265 = vmatpush1.msra.mxu0 0.0
  %5266 = vmatprep.subr.mxu0 0.0
  %5267 = vmatpush1.msra.mxu0 0.0
  %5268 = vmatprep.subr.mxu0 0.0
  %5269 = vmatpush1.msra.mxu0 0.0
  %5270 = vmatprep.mubr.f32.mxu0 0.0
  %5271 = vmatmul.mubr.f32.gmra.mrb[0].mxu0 %v4951
  %v5272 = vpop.f32.mrb[0].mxu0
  %v5273 = vadd.f32 0.0, %v5272
  %v5274 = vpop.f32.mrb[0].mxu0
  %5275 = vmatprep.mubr.f32.mxu0 0.0
  %5276 = vmatmul.mubr.f32.gmra.mrb[0].mxu0 %v4954
  %v5277 = vpop.f32.mrb[0].mxu0
  %v5278 = vadd.f32 0.0, %v5277
  %v5279 = vpop.f32.mrb[0].mxu0
  %5280 = vdwg.mxu0
  %v5281 = vadd.f32 %v5204, %v5273
  %v5282 = vadd.f32 %v5205, %v5278
  %s5283 = scalar_lea.vmem %s0, 272
  %v5284 = vld [vmem:[%s5283] sm:$0xff]
  %v5285 = vld [vmem:[%s5283 + $0x8] sm:$0xff]
  %v5287 = vsel %vm48, %v5284, 0
  %v5290 = vsel %vm48, %v5285, 0
  %5292 = vmatprep.subr.mxu0 0.0
  %5293 = vmatpush1.msra.mxu0 %v238
  %5294 = vmatprep.subr.mxu0 0.0
  %5295 = vmatpush1.msra.mxu0 %v239
  %5296 = vmatprep.subr.mxu0 0.0
  %5297 = vmatpush1.msra.mxu0 %v240
  %5298 = vmatprep.subr.mxu0 0.0
  %5299 = vmatpush1.msra.mxu0 %v241
  %5300 = vmatprep.subr.mxu0 0.0
  %5301 = vmatpush1.msra.mxu0 %v242
  %5302 = vmatprep.subr.mxu0 0.0
  %5303 = vmatpush1.msra.mxu0 %v243
  %5304 = vmatprep.subr.mxu0 0.0
  %5305 = vmatpush1.msra.mxu0 %v244
  %5306 = vmatprep.subr.mxu0 0.0
  %5307 = vmatpush1.msra.mxu0 %v245
  %5308 = vmatprep.subr.mxu0 0.0
  %5309 = vmatpush1.msra.mxu0 %v246
  %5310 = vmatprep.subr.mxu0 0.0
  %5311 = vmatpush1.msra.mxu0 0.0
  %5312 = vmatprep.subr.mxu0 0.0
  %5313 = vmatpush1.msra.mxu0 0.0
  %5314 = vmatprep.subr.mxu0 0.0
  %5315 = vmatpush1.msra.mxu0 0.0
  %5316 = vmatprep.subr.mxu0 0.0
  %5317 = vmatpush1.msra.mxu0 0.0
  %5318 = vmatprep.subr.mxu0 0.0
  %5319 = vmatpush1.msra.mxu0 0.0
  %5320 = vmatprep.subr.mxu0 0.0
  %5321 = vmatpush1.msra.mxu0 0.0
  %5322 = vmatprep.subr.mxu0 0.0
  %5323 = vmatpush1.msra.mxu0 0.0
  %5324 = vmatprep.subr.mxu0 0.0
  %5325 = vmatpush1.msra.mxu0 0.0
  %5326 = vmatprep.subr.mxu0 0.0
  %5327 = vmatpush1.msra.mxu0 0.0
  %5328 = vmatprep.subr.mxu0 0.0
  %5329 = vmatpush1.msra.mxu0 0.0
  %5330 = vmatprep.subr.mxu0 0.0
  %5331 = vmatpush1.msra.mxu0 0.0
  %5332 = vmatprep.subr.mxu0 0.0
  %5333 = vmatpush1.msra.mxu0 0.0
  %5334 = vmatprep.subr.mxu0 0.0
  %5335 = vmatpush1.msra.mxu0 0.0
  %5336 = vmatprep.subr.mxu0 0.0
  %5337 = vmatpush1.msra.mxu0 0.0
  %5338 = vmatprep.subr.mxu0 0.0
  %5339 = vmatpush1.msra.mxu0 0.0
  %5340 = vmatprep.subr.mxu0 0.0
  %5341 = vmatpush1.msra.mxu0 0.0
  %5342 = vmatprep.subr.mxu0 0.0
  %5343 = vmatpush1.msra.mxu0 0.0
  %5344 = vmatprep.subr.mxu0 0.0
  %5345 = vmatpush1.msra.mxu0 0.0
  %5346 = vmatprep.subr.mxu0 0.0
  %5347 = vmatpush1.msra.mxu0 0.0
  %5348 = vmatprep.subr.mxu0 0.0
  %5349 = vmatpush1.msra.mxu0 0.0
  %5350 = vmatprep.subr.mxu0 0.0
  %5351 = vmatpush1.msra.mxu0 0.0
  %5352 = vmatprep.subr.mxu0 0.0
  %5353 = vmatpush1.msra.mxu0 0.0
  %5354 = vmatprep.subr.mxu0 0.0
  %5355 = vmatpush1.msra.mxu0 0.0
  %5356 = vmatprep.mubr.f32.mxu0 0.0
  %5357 = vmatmul.mubr.f32.gmra.mrb[0].mxu0 %v5287
  %v5358 = vpop.f32.mrb[0].mxu0
  %v5359 = vadd.f32 0.0, %v5358
  %v5360 = vpop.f32.mrb[0].mxu0
  %5361 = vmatprep.mubr.f32.mxu0 0.0
  %5362 = vmatmul.mubr.f32.gmra.mrb[0].mxu0 %v5290
  %v5363 = vpop.f32.mrb[0].mxu0
  %v5364 = vadd.f32 0.0, %v5363
  %v5365 = vpop.f32.mrb[0].mxu0
  %5366 = vdwg.mxu0
  %v5367 = vadd.f32 %v5281, %v5359
  %v5368 = vadd.f32 %v5282, %v5364
  %v5369 = vmax.f32 %v5367, 0.0
  %v5370 = vmax.f32 %v5368, 0.0
  %s5371 = scalar_lea.vmem %s3, 1920
  %v5372 = vld [vmem:[%s5371] sm:$0xff]
  %v5373 = vld [vmem:[%s5371 + $0x8] sm:$0xff]
  %v5374 = vld [vmem:[%s5371 + $0x10] sm:$0xff]
  %v5375 = vld [vmem:[%s5371 + $0x18] sm:$0xff]
  %v5376 = vld [vmem:[%s5371 + $0x20] sm:$0xff]
  %v5377 = vld [vmem:[%s5371 + $0x28] sm:$0xff]
  %v5378 = vld [vmem:[%s5371 + $0x30] sm:$0xff]
  %v5379 = vld [vmem:[%s5371 + $0x38] sm:$0xff]
  %v5380 = vld [vmem:[%s5371 + $0x40] sm:$0xff]
  %v5381 = vld [vmem:[%s5371 + $0x48] sm:$0xff]
  %v5382 = vld [vmem:[%s5371 + $0x50] sm:$0xff]
  %v5383 = vld [vmem:[%s5371 + $0x58] sm:$0xff]
  %v5384 = vld [vmem:[%s5371 + $0x60] sm:$0xff]
  %v5385 = vld [vmem:[%s5371 + $0x68] sm:$0xff]
  %v5386 = vld [vmem:[%s5371 + $0x70] sm:$0xff]
  %v5387 = vld [vmem:[%s5371 + $0x78] sm:$0xff]
  %5388 = vmatprep.subr.mxu0 0.0
  %5389 = vmatpush1.msra.mxu0 %v5372
  %5390 = vmatprep.subr.mxu0 0.0
  %5391 = vmatpush1.msra.mxu0 %v5373
  %5392 = vmatprep.subr.mxu0 0.0
  %5393 = vmatpush1.msra.mxu0 %v5374
  %5394 = vmatprep.subr.mxu0 0.0
  %5395 = vmatpush1.msra.mxu0 %v5375
  %5396 = vmatprep.subr.mxu0 0.0
  %5397 = vmatpush1.msra.mxu0 %v5376
  %5398 = vmatprep.subr.mxu0 0.0
  %5399 = vmatpush1.msra.mxu0 %v5377
  %5400 = vmatprep.subr.mxu0 0.0
  %5401 = vmatpush1.msra.mxu0 %v5378
  %5402 = vmatprep.subr.mxu0 0.0
  %5403 = vmatpush1.msra.mxu0 %v5379
  %5404 = vmatprep.subr.mxu0 0.0
  %5405 = vmatpush1.msra.mxu0 %v5380
  %5406 = vmatprep.subr.mxu0 0.0
  %5407 = vmatpush1.msra.mxu0 %v5381
  %5408 = vmatprep.subr.mxu0 0.0
  %5409 = vmatpush1.msra.mxu0 %v5382
  %5410 = vmatprep.subr.mxu0 0.0
  %5411 = vmatpush1.msra.mxu0 %v5383
  %5412 = vmatprep.subr.mxu0 0.0
  %5413 = vmatpush1.msra.mxu0 %v5384
  %5414 = vmatprep.subr.mxu0 0.0
  %5415 = vmatpush1.msra.mxu0 %v5385
  %5416 = vmatprep.subr.mxu0 0.0
  %5417 = vmatpush1.msra.mxu0 %v5386
  %5418 = vmatprep.subr.mxu0 0.0
  %5419 = vmatpush1.msra.mxu0 %v5387
  %5420 = vmatprep.subr.mxu0 0.0
  %5421 = vmatpush1.msra.mxu0 0.0
  %5422 = vmatprep.subr.mxu0 0.0
  %5423 = vmatpush1.msra.mxu0 0.0
  %5424 = vmatprep.subr.mxu0 0.0
  %5425 = vmatpush1.msra.mxu0 0.0
  %5426 = vmatprep.subr.mxu0 0.0
  %5427 = vmatpush1.msra.mxu0 0.0
  %5428 = vmatprep.subr.mxu0 0.0
  %5429 = vmatpush1.msra.mxu0 0.0
  %5430 = vmatprep.subr.mxu0 0.0
  %5431 = vmatpush1.msra.mxu0 0.0
  %5432 = vmatprep.subr.mxu0 0.0
  %5433 = vmatpush1.msra.mxu0 0.0
  %5434 = vmatprep.subr.mxu0 0.0
  %5435 = vmatpush1.msra.mxu0 0.0
  %5436 = vmatprep.subr.mxu0 0.0
  %5437 = vmatpush1.msra.mxu0 0.0
  %5438 = vmatprep.subr.mxu0 0.0
  %5439 = vmatpush1.msra.mxu0 0.0
  %5440 = vmatprep.subr.mxu0 0.0
  %5441 = vmatpush1.msra.mxu0 0.0
  %5442 = vmatprep.subr.mxu0 0.0
  %5443 = vmatpush1.msra.mxu0 0.0
  %5444 = vmatprep.subr.mxu0 0.0
  %5445 = vmatpush1.msra.mxu0 0.0
  %5446 = vmatprep.subr.mxu0 0.0
  %5447 = vmatpush1.msra.mxu0 0.0
  %5448 = vmatprep.subr.mxu0 0.0
  %5449 = vmatpush1.msra.mxu0 0.0
  %5450 = vmatprep.subr.mxu0 0.0
  %5451 = vmatpush1.msra.mxu0 0.0
  %5452 = vmatprep.mubr.f32.mxu0 0.0
  %5453 = vmatmul.mubr.f32.gmra.mrb[0].mxu0 %v5369
  %v5454 = vpop.f32.mrb[0].mxu0
  %v5455 = vadd.f32 0.0, %v5454
  %v5456 = vpop.f32.mrb[0].mxu0
  %5457 = vmatprep.mubr.f32.mxu0 0.0
  %5458 = vmatmul.mubr.f32.gmra.mrb[0].mxu0 %v5370
  %v5459 = vpop.f32.mrb[0].mxu0
  %v5460 = vadd.f32 0.0, %v5459
  %v5461 = vpop.f32.mrb[0].mxu0
  %5462 = vdwg.mxu0
  %v5463 = vadd.f32 %v5127, %v5455
  %v5464 = vadd.f32 %v5128, %v5460
  %v5465 = vld [vmem:[%s5] sm:$0xff]
  %v5466 = vld [vmem:[%s5 + $0x8] sm:$0xff]
  %v5467 = vld [vmem:[%s5 + $0x10] sm:$0xff]
  %v5468 = vld [vmem:[%s5 + $0x18] sm:$0xff]
  %v5469 = vld [vmem:[%s6] sm:$0xff]
  %v5470 = vld [vmem:[%s6 + $0x8] sm:$0xff]
  %v5471 = vld [vmem:[%s6 + $0x10] sm:$0xff]
  %v5472 = vld [vmem:[%s6 + $0x18] sm:$0xff]
  %v5473 = vld [vmem:[%s7] sm:$0x1]
  %vm5474 = vcmask 261120
  %v5476 = vsel %vm5474, 0.0, 0
  %5478 = vmatprep.subr.mxu0 0.0
  %5479 = vmatpush1.msra.mxu0 %v5465
  %5480 = vmatprep.subr.mxu0 0.0
  %5481 = vmatpush1.msra.mxu0 %v5466
  %5482 = vmatprep.subr.mxu0 0.0
  %5483 = vmatpush1.msra.mxu0 %v5467
  %5484 = vmatprep.subr.mxu0 0.0
  %5485 = vmatpush1.msra.mxu0 %v5468
  %5486 = vmatprep.subr.mxu0 0.0
  %5487 = vmatpush1.msra.mxu0 0.0
  %5488 = vmatprep.subr.mxu0 0.0
  %5489 = vmatpush1.msra.mxu0 0.0
  %5490 = vmatprep.subr.mxu0 0.0
  %5491 = vmatpush1.msra.mxu0 0.0
  %5492 = vmatprep.subr.mxu0 0.0
  %5493 = vmatpush1.msra.mxu0 0.0
  %5494 = vmatprep.subr.mxu0 0.0
  %5495 = vmatpush1.msra.mxu0 0.0
  %5496 = vmatprep.subr.mxu0 0.0
  %5497 = vmatpush1.msra.mxu0 0.0
  %5498 = vmatprep.subr.mxu0 0.0
  %5499 = vmatpush1.msra.mxu0 0.0
  %5500 = vmatprep.subr.mxu0 0.0
  %5501 = vmatpush1.msra.mxu0 0.0
  %5502 = vmatprep.subr.mxu0 0.0
  %5503 = vmatpush1.msra.mxu0 0.0
  %5504 = vmatprep.subr.mxu0 0.0
  %5505 = vmatpush1.msra.mxu0 0.0
  %5506 = vmatprep.subr.mxu0 0.0
  %5507 = vmatpush1.msra.mxu0 0.0
  %5508 = vmatprep.subr.mxu0 0.0
  %5509 = vmatpush1.msra.mxu0 0.0
  %5510 = vmatprep.subr.mxu0 0.0
  %5511 = vmatpush1.msra.mxu0 0.0
  %5512 = vmatprep.subr.mxu0 0.0
  %5513 = vmatpush1.msra.mxu0 0.0
  %5514 = vmatprep.subr.mxu0 0.0
  %5515 = vmatpush1.msra.mxu0 0.0
  %5516 = vmatprep.subr.mxu0 0.0
  %5517 = vmatpush1.msra.mxu0 0.0
  %5518 = vmatprep.subr.mxu0 0.0
  %5519 = vmatpush1.msra.mxu0 0.0
  %5520 = vmatprep.subr.mxu0 0.0
  %5521 = vmatpush1.msra.mxu0 0.0
  %5522 = vmatprep.subr.mxu0 0.0
  %5523 = vmatpush1.msra.mxu0 0.0
  %5524 = vmatprep.subr.mxu0 0.0
  %5525 = vmatpush1.msra.mxu0 0.0
  %5526 = vmatprep.subr.mxu0 0.0
  %5527 = vmatpush1.msra.mxu0 0.0
  %5528 = vmatprep.subr.mxu0 0.0
  %5529 = vmatpush1.msra.mxu0 0.0
  %5530 = vmatprep.subr.mxu0 0.0
  %5531 = vmatpush1.msra.mxu0 0.0
  %5532 = vmatprep.subr.mxu0 0.0
  %5533 = vmatpush1.msra.mxu0 0.0
  %5534 = vmatprep.subr.mxu0 0.0
  %5535 = vmatpush1.msra.mxu0 0.0
  %5536 = vmatprep.subr.mxu0 0.0
  %5537 = vmatpush1.msra.mxu0 0.0
  %5538 = vmatprep.subr.mxu0 0.0
  %5539 = vmatpush1.msra.mxu0 0.0
  %5540 = vmatprep.subr.mxu0 0.0
  %5541 = vmatpush1.msra.mxu0 0.0
  %5542 = vmatprep.mubr.f32.mxu0 0.0
  %5543 = vmatmul.mubr.f32.gmra.mrb[0].mxu0 %v5476
  %v5544 = vpop.f32.mrb[0].mxu0
  %v5545 = vadd.f32 0.0, %v5544
  %v5546 = vpop.f32.mrb[0].mxu0
  %5547 = vdwg.mxu0
  %v5548 = vadd.f32 %v5463, %v5545
  %v5549 = vxor.u32 %v5548, 2147483648
  %v5550 = vmul.f32 %v5549, 1.442695
  %v5551 = vpow.pop %v5550
  %v5552 = vadd.f32 %v5551, 1.0
  %v5553 = vrcp.pop %v5552
  %v5554 = vmul.f32 1.0, %v5553
  %v5555 = vtanh.pop %v5548
  %v5556 = vmul.f32 %v5554, 0.0
  %5558 = vrot.lane.b32.xlu0 %v5555, 64
  %v5559 = vpop.permute.xlu0 %5558
  %v5561 = vmul.f32 %v5554, %v5559
  %5563 = vrot.lane.b32.xlu0 %v5561, 32
  %v5564 = vpop.permute.xlu0 %5563
  %v5566 = vadd.f32 %v5556, %v5564
  %v5567 = vtanh.pop %v5566
  %5569 = vrot.lane.b32.xlu0 %v5567, 64
  %v5570 = vpop.permute.xlu0 %5569
  %v5572 = vmul.f32 %v5554, %v5570
  %v5574 = vlaneseq
  %v5575 = vshrl.u32 %v5574, 7
  %v5576 = vsub.s32 0, %v5575
  %v5577 = vrot.slane %v5473, %v5576
  %5580 = vrot.lane.b32.xlu0 %v5572, 32
  %v5581 = vpop.permute.xlu0 %5580
  %v5582 = vsel %vm5474, %v5581, 0
  %5584 = vmatprep.subr.mxu0 0.0
  %5585 = vmatpush1.msra.mxu0 %v5469
  %5586 = vmatprep.subr.mxu0 0.0
  %5587 = vmatpush1.msra.mxu0 %v5470
  %5588 = vmatprep.subr.mxu0 0.0
  %5589 = vmatpush1.msra.mxu0 %v5471
  %5590 = vmatprep.subr.mxu0 0.0
  %5591 = vmatpush1.msra.mxu0 %v5472
  %5592 = vmatprep.subr.mxu0 0.0
  %5593 = vmatpush1.msra.mxu0 0.0
  %5594 = vmatprep.subr.mxu0 0.0
  %5595 = vmatpush1.msra.mxu0 0.0
  %5596 = vmatprep.subr.mxu0 0.0
  %5597 = vmatpush1.msra.mxu0 0.0
  %5598 = vmatprep.subr.mxu0 0.0
  %5599 = vmatpush1.msra.mxu0 0.0
  %5600 = vmatprep.subr.mxu0 0.0
  %5601 = vmatpush1.msra.mxu0 0.0
  %5602 = vmatprep.subr.mxu0 0.0
  %5603 = vmatpush1.msra.mxu0 0.0
  %5604 = vmatprep.subr.mxu0 0.0
  %5605 = vmatpush1.msra.mxu0 0.0
  %5606 = vmatprep.subr.mxu0 0.0
  %5607 = vmatpush1.msra.mxu0 0.0
  %5608 = vmatprep.subr.mxu0 0.0
  %5609 = vmatpush1.msra.mxu0 0.0
  %5610 = vmatprep.subr.mxu0 0.0
  %5611 = vmatpush1.msra.mxu0 0.0
  %5612 = vmatprep.subr.mxu0 0.0
  %5613 = vmatpush1.msra.mxu0 0.0
  %5614 = vmatprep.subr.mxu0 0.0
  %5615 = vmatpush1.msra.mxu0 0.0
  %5616 = vmatprep.subr.mxu0 0.0
  %5617 = vmatpush1.msra.mxu0 0.0
  %5618 = vmatprep.subr.mxu0 0.0
  %5619 = vmatpush1.msra.mxu0 0.0
  %5620 = vmatprep.subr.mxu0 0.0
  %5621 = vmatpush1.msra.mxu0 0.0
  %5622 = vmatprep.subr.mxu0 0.0
  %5623 = vmatpush1.msra.mxu0 0.0
  %5624 = vmatprep.subr.mxu0 0.0
  %5625 = vmatpush1.msra.mxu0 0.0
  %5626 = vmatprep.subr.mxu0 0.0
  %5627 = vmatpush1.msra.mxu0 0.0
  %5628 = vmatprep.subr.mxu0 0.0
  %5629 = vmatpush1.msra.mxu0 0.0
  %5630 = vmatprep.subr.mxu0 0.0
  %5631 = vmatpush1.msra.mxu0 0.0
  %5632 = vmatprep.subr.mxu0 0.0
  %5633 = vmatpush1.msra.mxu0 0.0
  %5634 = vmatprep.subr.mxu0 0.0
  %5635 = vmatpush1.msra.mxu0 0.0
  %5636 = vmatprep.subr.mxu0 0.0
  %5637 = vmatpush1.msra.mxu0 0.0
  %5638 = vmatprep.subr.mxu0 0.0
  %5639 = vmatpush1.msra.mxu0 0.0
  %5640 = vmatprep.subr.mxu0 0.0
  %5641 = vmatpush1.msra.mxu0 0.0
  %5642 = vmatprep.subr.mxu0 0.0
  %5643 = vmatpush1.msra.mxu0 0.0
  %5644 = vmatprep.subr.mxu0 0.0
  %5645 = vmatpush1.msra.mxu0 0.0
  %5646 = vmatprep.subr.mxu0 0.0
  %5647 = vmatpush1.msra.mxu0 0.0
  %5648 = vmatprep.mubr.f32.mxu0 0.0
  %5649 = vmatmul.mubr.f32.gmra.mrb[0].mxu0 %v5582
  %v5650 = vpop.f32.mrb[0].mxu0
  %v5651 = vadd.f32 %v5577, %v5650
  %v5652 = vpop.f32.mrb[0].mxu0
  %5653 = vdwg.mxu0
  %5654 = vst [vmem:[%s8] sm:$0x3] %v5651
  %5655 = vmatprep.subr.mxu0 0.0
  %5656 = vmatpush1.msra.mxu0 %v5465
  %5657 = vmatprep.subr.mxu0 0.0
  %5658 = vmatpush1.msra.mxu0 %v5466
  %5659 = vmatprep.subr.mxu0 0.0
  %5660 = vmatpush1.msra.mxu0 %v5467
  %5661 = vmatprep.subr.mxu0 0.0
  %5662 = vmatpush1.msra.mxu0 %v5468
  %5663 = vmatprep.subr.mxu0 0.0
  %5664 = vmatpush1.msra.mxu0 0.0
  %5665 = vmatprep.subr.mxu0 0.0
  %5666 = vmatpush1.msra.mxu0 0.0
  %5667 = vmatprep.subr.mxu0 0.0
  %5668 = vmatpush1.msra.mxu0 0.0
  %5669 = vmatprep.subr.mxu0 0.0
  %5670 = vmatpush1.msra.mxu0 0.0
  %5671 = vmatprep.subr.mxu0 0.0
  %5672 = vmatpush1.msra.mxu0 0.0
  %5673 = vmatprep.subr.mxu0 0.0
  %5674 = vmatpush1.msra.mxu0 0.0
  %5675 = vmatprep.subr.mxu0 0.0
  %5676 = vmatpush1.msra.mxu0 0.0
  %5677 = vmatprep.subr.mxu0 0.0
  %5678 = vmatpush1.msra.mxu0 0.0
  %5679 = vmatprep.subr.mxu0 0.0
  %5680 = vmatpush1.msra.mxu0 0.0
  %5681 = vmatprep.subr.mxu0 0.0
  %5682 = vmatpush1.msra.mxu0 0.0
  %5683 = vmatprep.subr.mxu0 0.0
  %5684 = vmatpush1.msra.mxu0 0.0
  %5685 = vmatprep.subr.mxu0 0.0
  %5686 = vmatpush1.msra.mxu0 0.0
  %5687 = vmatprep.subr.mxu0 0.0
  %5688 = vmatpush1.msra.mxu0 0.0
  %5689 = vmatprep.subr.mxu0 0.0
  %5690 = vmatpush1.msra.mxu0 0.0
  %5691 = vmatprep.subr.mxu0 0.0
  %5692 = vmatpush1.msra.mxu0 0.0
  %5693 = vmatprep.subr.mxu0 0.0
  %5694 = vmatpush1.msra.mxu0 0.0
  %5695 = vmatprep.subr.mxu0 0.0
  %5696 = vmatpush1.msra.mxu0 0.0
  %5697 = vmatprep.subr.mxu0 0.0
  %5698 = vmatpush1.msra.mxu0 0.0
  %5699 = vmatprep.subr.mxu0 0.0
  %5700 = vmatpush1.msra.mxu0 0.0
  %5701 = vmatprep.subr.mxu0 0.0
  %5702 = vmatpush1.msra.mxu0 0.0
  %5703 = vmatprep.subr.mxu0 0.0
  %5704 = vmatpush1.msra.mxu0 0.0
  %5705 = vmatprep.subr.mxu0 0.0
  %5706 = vmatpush1.msra.mxu0 0.0
  %5707 = vmatprep.subr.mxu0 0.0
  %5708 = vmatpush1.msra.mxu0 0.0
  %5709 = vmatprep.subr.mxu0 0.0
  %5710 = vmatpush1.msra.mxu0 0.0
  %5711 = vmatprep.subr.mxu0 0.0
  %5712 = vmatpush1.msra.mxu0 0.0
  %5713 = vmatprep.subr.mxu0 0.0
  %5714 = vmatpush1.msra.mxu0 0.0
  %5715 = vmatprep.subr.mxu0 0.0
  %5716 = vmatpush1.msra.mxu0 0.0
  %5717 = vmatprep.subr.mxu0 0.0
  %5718 = vmatpush1.msra.mxu0 0.0
  %5719 = vmatprep.mubr.f32.mxu0 0.0
  %5720 = vmatmul.mubr.f32.gmra.mrb[0].mxu0 %v5582
  %v5721 = vpop.f32.mrb[0].mxu0
  %v5722 = vadd.f32 0.0, %v5721
  %v5723 = vpop.f32.mrb[0].mxu0
  %5724 = vdwg.mxu0
  %v5726 = vrot.slane %v5722, 6
  %v5728 = vadd.f32 %v5463, %v5726
  %v5729 = vxor.u32 %v5728, 2147483648
  %v5730 = vmul.f32 %v5729, 1.442695
  %v5731 = vpow.pop %v5730
  %v5732 = vadd.f32 %v5731, 1.0
  %v5733 = vrcp.pop %v5732
  %v5734 = vmul.f32 1.0, %v5733
  %v5735 = vtanh.pop %v5728
  %v5737 = vrot.slane %v5566, 6
  %v5739 = vmul.f32 %v5734, %v5737
  %5741 = vrot.lane.b32.xlu0 %v5735, 64
  %v5742 = vpop.permute.xlu0 %5741
  %v5744 = vmul.f32 %v5734, %v5742
  %5746 = vrot.lane.b32.xlu0 %v5744, 32
  %v5747 = vpop.permute.xlu0 %5746
  %v5749 = vadd.f32 %v5739, %v5747
  %v5750 = vtanh.pop %v5749
  %5752 = vrot.lane.b32.xlu0 %v5750, 64
  %v5753 = vpop.permute.xlu0 %5752
  %v5755 = vmul.f32 %v5734, %v5753
  %v5757 = vrot.slane %v5755, 2
  %5758 = vrot.lane.b32.xlu0 %v5757, 32
  %v5759 = vpop.permute.xlu0 %5758
  %v5760 = vsel %vm5474, %v5759, 0
  %5762 = vmatprep.subr.mxu0 0.0
  %5763 = vmatpush1.msra.mxu0 %v5469
  %5764 = vmatprep.subr.mxu0 0.0
  %5765 = vmatpush1.msra.mxu0 %v5470
  %5766 = vmatprep.subr.mxu0 0.0
  %5767 = vmatpush1.msra.mxu0 %v5471
  %5768 = vmatprep.subr.mxu0 0.0
  %5769 = vmatpush1.msra.mxu0 %v5472
  %5770 = vmatprep.subr.mxu0 0.0
  %5771 = vmatpush1.msra.mxu0 0.0
  %5772 = vmatprep.subr.mxu0 0.0
  %5773 = vmatpush1.msra.mxu0 0.0
  %5774 = vmatprep.subr.mxu0 0.0
  %5775 = vmatpush1.msra.mxu0 0.0
  %5776 = vmatprep.subr.mxu0 0.0
  %5777 = vmatpush1.msra.mxu0 0.0
  %5778 = vmatprep.subr.mxu0 0.0
  %5779 = vmatpush1.msra.mxu0 0.0
  %5780 = vmatprep.subr.mxu0 0.0
  %5781 = vmatpush1.msra.mxu0 0.0
  %5782 = vmatprep.subr.mxu0 0.0
  %5783 = vmatpush1.msra.mxu0 0.0
  %5784 = vmatprep.subr.mxu0 0.0
  %5785 = vmatpush1.msra.mxu0 0.0
  %5786 = vmatprep.subr.mxu0 0.0
  %5787 = vmatpush1.msra.mxu0 0.0
  %5788 = vmatprep.subr.mxu0 0.0
  %5789 = vmatpush1.msra.mxu0 0.0
  %5790 = vmatprep.subr.mxu0 0.0
  %5791 = vmatpush1.msra.mxu0 0.0
  %5792 = vmatprep.subr.mxu0 0.0
  %5793 = vmatpush1.msra.mxu0 0.0
  %5794 = vmatprep.subr.mxu0 0.0
  %5795 = vmatpush1.msra.mxu0 0.0
  %5796 = vmatprep.subr.mxu0 0.0
  %5797 = vmatpush1.msra.mxu0 0.0
  %5798 = vmatprep.subr.mxu0 0.0
  %5799 = vmatpush1.msra.mxu0 0.0
  %5800 = vmatprep.subr.mxu0 0.0
  %5801 = vmatpush1.msra.mxu0 0.0
  %5802 = vmatprep.subr.mxu0 0.0
  %5803 = vmatpush1.msra.mxu0 0.0
  %5804 = vmatprep.subr.mxu0 0.0
  %5805 = vmatpush1.msra.mxu0 0.0
  %5806 = vmatprep.subr.mxu0 0.0
  %5807 = vmatpush1.msra.mxu0 0.0
  %5808 = vmatprep.subr.mxu0 0.0
  %5809 = vmatpush1.msra.mxu0 0.0
  %5810 = vmatprep.subr.mxu0 0.0
  %5811 = vmatpush1.msra.mxu0 0.0
  %5812 = vmatprep.subr.mxu0 0.0
  %5813 = vmatpush1.msra.mxu0 0.0
  %5814 = vmatprep.subr.mxu0 0.0
  %5815 = vmatpush1.msra.mxu0 0.0
  %5816 = vmatprep.subr.mxu0 0.0
  %5817 = vmatpush1.msra.mxu0 0.0
  %5818 = vmatprep.subr.mxu0 0.0
  %5819 = vmatpush1.msra.mxu0 0.0
  %5820 = vmatprep.subr.mxu0 0.0
  %5821 = vmatpush1.msra.mxu0 0.0
  %5822 = vmatprep.subr.mxu0 0.0
  %5823 = vmatpush1.msra.mxu0 0.0
  %5824 = vmatprep.subr.mxu0 0.0
  %5825 = vmatpush1.msra.mxu0 0.0
  %5826 = vmatprep.mubr.f32.mxu0 0.0
  %5827 = vmatmul.mubr.f32.gmra.mrb[0].mxu0 %v5760
  %v5828 = vpop.f32.mrb[0].mxu0
  %v5829 = vadd.f32 %v5577, %v5828
  %v5830 = vpop.f32.mrb[0].mxu0
  %5831 = vdwg.mxu0
  %s5832 = scalar_lea.vmem %s8, 2
  %5833 = vst [vmem:[%s5832] sm:$0x3] %v5829
  %5834 = vmatprep.subr.mxu0 0.0
  %5835 = vmatpush1.msra.mxu0 %v5465
  %5836 = vmatprep.subr.mxu0 0.0
  %5837 = vmatpush1.msra.mxu0 %v5466
  %5838 = vmatprep.subr.mxu0 0.0
  %5839 = vmatpush1.msra.mxu0 %v5467
  %5840 = vmatprep.subr.mxu0 0.0
  %5841 = vmatpush1.msra.mxu0 %v5468
  %5842 = vmatprep.subr.mxu0 0.0
  %5843 = vmatpush1.msra.mxu0 0.0
  %5844 = vmatprep.subr.mxu0 0.0
  %5845 = vmatpush1.msra.mxu0 0.0
  %5846 = vmatprep.subr.mxu0 0.0
  %5847 = vmatpush1.msra.mxu0 0.0
  %5848 = vmatprep.subr.mxu0 0.0
  %5849 = vmatpush1.msra.mxu0 0.0
  %5850 = vmatprep.subr.mxu0 0.0
  %5851 = vmatpush1.msra.mxu0 0.0
  %5852 = vmatprep.subr.mxu0 0.0
  %5853 = vmatpush1.msra.mxu0 0.0
  %5854 = vmatprep.subr.mxu0 0.0
  %5855 = vmatpush1.msra.mxu0 0.0
  %5856 = vmatprep.subr.mxu0 0.0
  %5857 = vmatpush1.msra.mxu0 0.0
  %5858 = vmatprep.subr.mxu0 0.0
  %5859 = vmatpush1.msra.mxu0 0.0
  %5860 = vmatprep.subr.mxu0 0.0
  %5861 = vmatpush1.msra.mxu0 0.0
  %5862 = vmatprep.subr.mxu0 0.0
  %5863 = vmatpush1.msra.mxu0 0.0
  %5864 = vmatprep.subr.mxu0 0.0
  %5865 = vmatpush1.msra.mxu0 0.0
  %5866 = vmatprep.subr.mxu0 0.0
  %5867 = vmatpush1.msra.mxu0 0.0
  %5868 = vmatprep.subr.mxu0 0.0
  %5869 = vmatpush1.msra.mxu0 0.0
  %5870 = vmatprep.subr.mxu0 0.0
  %5871 = vmatpush1.msra.mxu0 0.0
  %5872 = vmatprep.subr.mxu0 0.0
  %5873 = vmatpush1.msra.mxu0 0.0
  %5874 = vmatprep.subr.mxu0 0.0
  %5875 = vmatpush1.msra.mxu0 0.0
  %5876 = vmatprep.subr.mxu0 0.0
  %5877 = vmatpush1.msra.mxu0 0.0
  %5878 = vmatprep.subr.mxu0 0.0
  %5879 = vmatpush1.msra.mxu0 0.0
  %5880 = vmatprep.subr.mxu0 0.0
  %5881 = vmatpush1.msra.mxu0 0.0
  %5882 = vmatprep.subr.mxu0 0.0
  %5883 = vmatpush1.msra.mxu0 0.0
  %5884 = vmatprep.subr.mxu0 0.0
  %5885 = vmatpush1.msra.mxu0 0.0
  %5886 = vmatprep.subr.mxu0 0.0
  %5887 = vmatpush1.msra.mxu0 0.0
  %5888 = vmatprep.subr.mxu0 0.0
  %5889 = vmatpush1.msra.mxu0 0.0
  %5890 = vmatprep.subr.mxu0 0.0
  %5891 = vmatpush1.msra.mxu0 0.0
  %5892 = vmatprep.subr.mxu0 0.0
  %5893 = vmatpush1.msra.mxu0 0.0
  %5894 = vmatprep.subr.mxu0 0.0
  %5895 = vmatpush1.msra.mxu0 0.0
  %5896 = vmatprep.subr.mxu0 0.0
  %5897 = vmatpush1.msra.mxu0 0.0
  %5898 = vmatprep.mubr.f32.mxu0 0.0
  %5899 = vmatmul.mubr.f32.gmra.mrb[0].mxu0 %v5760
  %v5900 = vpop.f32.mrb[0].mxu0
  %v5901 = vadd.f32 0.0, %v5900
  %v5902 = vpop.f32.mrb[0].mxu0
  %5903 = vdwg.mxu0
  %v5905 = vrot.slane %v5901, 4
  %v5907 = vadd.f32 %v5463, %v5905
  %v5908 = vxor.u32 %v5907, 2147483648
  %v5909 = vmul.f32 %v5908, 1.442695
  %v5910 = vpow.pop %v5909
  %v5911 = vadd.f32 %v5910, 1.0
  %v5912 = vrcp.pop %v5911
  %v5913 = vmul.f32 1.0, %v5912
  %v5914 = vtanh.pop %v5907
  %v5916 = vrot.slane %v5749, 6
  %v5918 = vmul.f32 %v5913, %v5916
  %5920 = vrot.lane.b32.xlu0 %v5914, 64
  %v5921 = vpop.permute.xlu0 %5920
  %v5923 = vmul.f32 %v5913, %v5921
  %5925 = vrot.lane.b32.xlu0 %v5923, 32
  %v5926 = vpop.permute.xlu0 %5925
  %v5928 = vadd.f32 %v5918, %v5926
  %v5929 = vtanh.pop %v5928
  %5931 = vrot.lane.b32.xlu0 %v5929, 64
  %v5932 = vpop.permute.xlu0 %5931
  %v5934 = vmul.f32 %v5913, %v5932
  %v5936 = vrot.slane %v5934, 4
  %5937 = vrot.lane.b32.xlu0 %v5936, 32
  %v5938 = vpop.permute.xlu0 %5937
  %v5939 = vsel %vm5474, %v5938, 0
  %5941 = vmatprep.subr.mxu0 0.0
  %5942 = vmatpush1.msra.mxu0 %v5469
  %5943 = vmatprep.subr.mxu0 0.0
  %5944 = vmatpush1.msra.mxu0 %v5470
  %5945 = vmatprep.subr.mxu0 0.0
  %5946 = vmatpush1.msra.mxu0 %v5471
  %5947 = vmatprep.subr.mxu0 0.0
  %5948 = vmatpush1.msra.mxu0 %v5472
  %5949 = vmatprep.subr.mxu0 0.0
  %5950 = vmatpush1.msra.mxu0 0.0
  %5951 = vmatprep.subr.mxu0 0.0
  %5952 = vmatpush1.msra.mxu0 0.0
  %5953 = vmatprep.subr.mxu0 0.0
  %5954 = vmatpush1.msra.mxu0 0.0
  %5955 = vmatprep.subr.mxu0 0.0
  %5956 = vmatpush1.msra.mxu0 0.0
  %5957 = vmatprep.subr.mxu0 0.0
  %5958 = vmatpush1.msra.mxu0 0.0
  %5959 = vmatprep.subr.mxu0 0.0
  %5960 = vmatpush1.msra.mxu0 0.0
  %5961 = vmatprep.subr.mxu0 0.0
  %5962 = vmatpush1.msra.mxu0 0.0
  %5963 = vmatprep.subr.mxu0 0.0
  %5964 = vmatpush1.msra.mxu0 0.0
  %5965 = vmatprep.subr.mxu0 0.0
  %5966 = vmatpush1.msra.mxu0 0.0
  %5967 = vmatprep.subr.mxu0 0.0
  %5968 = vmatpush1.msra.mxu0 0.0
  %5969 = vmatprep.subr.mxu0 0.0
  %5970 = vmatpush1.msra.mxu0 0.0
  %5971 = vmatprep.subr.mxu0 0.0
  %5972 = vmatpush1.msra.mxu0 0.0
  %5973 = vmatprep.subr.mxu0 0.0
  %5974 = vmatpush1.msra.mxu0 0.0
  %5975 = vmatprep.subr.mxu0 0.0
  %5976 = vmatpush1.msra.mxu0 0.0
  %5977 = vmatprep.subr.mxu0 0.0
  %5978 = vmatpush1.msra.mxu0 0.0
  %5979 = vmatprep.subr.mxu0 0.0
  %5980 = vmatpush1.msra.mxu0 0.0
  %5981 = vmatprep.subr.mxu0 0.0
  %5982 = vmatpush1.msra.mxu0 0.0
  %5983 = vmatprep.subr.mxu0 0.0
  %5984 = vmatpush1.msra.mxu0 0.0
  %5985 = vmatprep.subr.mxu0 0.0
  %5986 = vmatpush1.msra.mxu0 0.0
  %5987 = vmatprep.subr.mxu0 0.0
  %5988 = vmatpush1.msra.mxu0 0.0
  %5989 = vmatprep.subr.mxu0 0.0
  %5990 = vmatpush1.msra.mxu0 0.0
  %5991 = vmatprep.subr.mxu0 0.0
  %5992 = vmatpush1.msra.mxu0 0.0
  %5993 = vmatprep.subr.mxu0 0.0
  %5994 = vmatpush1.msra.mxu0 0.0
  %5995 = vmatprep.subr.mxu0 0.0
  %5996 = vmatpush1.msra.mxu0 0.0
  %5997 = vmatprep.subr.mxu0 0.0
  %5998 = vmatpush1.msra.mxu0 0.0
  %5999 = vmatprep.subr.mxu0 0.0
  %6000 = vmatpush1.msra.mxu0 0.0
  %6001 = vmatprep.subr.mxu0 0.0
  %6002 = vmatpush1.msra.mxu0 0.0
  %6003 = vmatprep.subr.mxu0 0.0
  %6004 = vmatpush1.msra.mxu0 0.0
  %6005 = vmatprep.mubr.f32.mxu0 0.0
  %6006 = vmatmul.mubr.f32.gmra.mrb[0].mxu0 %v5939
  %v6007 = vpop.f32.mrb[0].mxu0
  %v6008 = vadd.f32 %v5577, %v6007
  %v6009 = vpop.f32.mrb[0].mxu0
  %6010 = vdwg.mxu0
  %s6011 = scalar_lea.vmem %s8, 4
  %6012 = vst [vmem:[%s6011] sm:$0x3] %v6008
  %6013 = vmatprep.subr.mxu0 0.0
  %6014 = vmatpush1.msra.mxu0 %v5465
  %6015 = vmatprep.subr.mxu0 0.0
  %6016 = vmatpush1.msra.mxu0 %v5466
  %6017 = vmatprep.subr.mxu0 0.0
  %6018 = vmatpush1.msra.mxu0 %v5467
  %6019 = vmatprep.subr.mxu0 0.0
  %6020 = vmatpush1.msra.mxu0 %v5468
  %6021 = vmatprep.subr.mxu0 0.0
  %6022 = vmatpush1.msra.mxu0 0.0
  %6023 = vmatprep.subr.mxu0 0.0
  %6024 = vmatpush1.msra.mxu0 0.0
  %6025 = vmatprep.subr.mxu0 0.0
  %6026 = vmatpush1.msra.mxu0 0.0
  %6027 = vmatprep.subr.mxu0 0.0
  %6028 = vmatpush1.msra.mxu0 0.0
  %6029 = vmatprep.subr.mxu0 0.0
  %6030 = vmatpush1.msra.mxu0 0.0
  %6031 = vmatprep.subr.mxu0 0.0
  %6032 = vmatpush1.msra.mxu0 0.0
  %6033 = vmatprep.subr.mxu0 0.0
  %6034 = vmatpush1.msra.mxu0 0.0
  %6035 = vmatprep.subr.mxu0 0.0
  %6036 = vmatpush1.msra.mxu0 0.0
  %6037 = vmatprep.subr.mxu0 0.0
  %6038 = vmatpush1.msra.mxu0 0.0
  %6039 = vmatprep.subr.mxu0 0.0
  %6040 = vmatpush1.msra.mxu0 0.0
  %6041 = vmatprep.subr.mxu0 0.0
  %6042 = vmatpush1.msra.mxu0 0.0
  %6043 = vmatprep.subr.mxu0 0.0
  %6044 = vmatpush1.msra.mxu0 0.0
  %6045 = vmatprep.subr.mxu0 0.0
  %6046 = vmatpush1.msra.mxu0 0.0
  %6047 = vmatprep.subr.mxu0 0.0
  %6048 = vmatpush1.msra.mxu0 0.0
  %6049 = vmatprep.subr.mxu0 0.0
  %6050 = vmatpush1.msra.mxu0 0.0
  %6051 = vmatprep.subr.mxu0 0.0
  %6052 = vmatpush1.msra.mxu0 0.0
  %6053 = vmatprep.subr.mxu0 0.0
  %6054 = vmatpush1.msra.mxu0 0.0
  %6055 = vmatprep.subr.mxu0 0.0
  %6056 = vmatpush1.msra.mxu0 0.0
  %6057 = vmatprep.subr.mxu0 0.0
  %6058 = vmatpush1.msra.mxu0 0.0
  %6059 = vmatprep.subr.mxu0 0.0
  %6060 = vmatpush1.msra.mxu0 0.0
  %6061 = vmatprep.subr.mxu0 0.0
  %6062 = vmatpush1.msra.mxu0 0.0
  %6063 = vmatprep.subr.mxu0 0.0
  %6064 = vmatpush1.msra.mxu0 0.0
  %6065 = vmatprep.subr.mxu0 0.0
  %6066 = vmatpush1.msra.mxu0 0.0
  %6067 = vmatprep.subr.mxu0 0.0
  %6068 = vmatpush1.msra.mxu0 0.0
  %6069 = vmatprep.subr.mxu0 0.0
  %6070 = vmatpush1.msra.mxu0 0.0
  %6071 = vmatprep.subr.mxu0 0.0
  %6072 = vmatpush1.msra.mxu0 0.0
  %6073 = vmatprep.subr.mxu0 0.0
  %6074 = vmatpush1.msra.mxu0 0.0
  %6075 = vmatprep.subr.mxu0 0.0
  %6076 = vmatpush1.msra.mxu0 0.0
  %6077 = vmatprep.mubr.f32.mxu0 0.0
  %6078 = vmatmul.mubr.f32.gmra.mrb[0].mxu0 %v5939
  %v6079 = vpop.f32.mrb[0].mxu0
  %v6080 = vadd.f32 0.0, %v6079
  %v6081 = vpop.f32.mrb[0].mxu0
  %6082 = vdwg.mxu0
  %v6084 = vrot.slane %v6080, 2
  %v6086 = vadd.f32 %v5463, %v6084
  %v6087 = vxor.u32 %v6086, 2147483648
  %v6088 = vmul.f32 %v6087, 1.442695
  %v6089 = vpow.pop %v6088
  %v6090 = vadd.f32 %v6089, 1.0
  %v6091 = vrcp.pop %v6090
  %v6092 = vmul.f32 1.0, %v6091
  %v6093 = vtanh.pop %v6086
  %v6095 = vrot.slane %v5928, 6
  %v6097 = vmul.f32 %v6092, %v6095
  %6099 = vrot.lane.b32.xlu0 %v6093, 64
  %v6100 = vpop.permute.xlu0 %6099
  %v6102 = vmul.f32 %v6092, %v6100
  %6104 = vrot.lane.b32.xlu0 %v6102, 32
  %v6105 = vpop.permute.xlu0 %6104
  %v6107 = vadd.f32 %v6097, %v6105
  %v6108 = vtanh.pop %v6107
  %6110 = vrot.lane.b32.xlu0 %v6108, 64
  %v6111 = vpop.permute.xlu0 %6110
  %v6113 = vmul.f32 %v6092, %v6111
  %v6115 = vrot.slane %v6113, 6
  %6116 = vrot.lane.b32.xlu0 %v6115, 32
  %v6117 = vpop.permute.xlu0 %6116
  %v6118 = vsel %vm5474, %v6117, 0
  %6120 = vmatprep.subr.mxu0 0.0
  %6121 = vmatpush1.msra.mxu0 %v5469
  %6122 = vmatprep.subr.mxu0 0.0
  %6123 = vmatpush1.msra.mxu0 %v5470
  %6124 = vmatprep.subr.mxu0 0.0
  %6125 = vmatpush1.msra.mxu0 %v5471
  %6126 = vmatprep.subr.mxu0 0.0
  %6127 = vmatpush1.msra.mxu0 %v5472
  %6128 = vmatprep.subr.mxu0 0.0
  %6129 = vmatpush1.msra.mxu0 0.0
  %6130 = vmatprep.subr.mxu0 0.0
  %6131 = vmatpush1.msra.mxu0 0.0
  %6132 = vmatprep.subr.mxu0 0.0
  %6133 = vmatpush1.msra.mxu0 0.0
  %6134 = vmatprep.subr.mxu0 0.0
  %6135 = vmatpush1.msra.mxu0 0.0
  %6136 = vmatprep.subr.mxu0 0.0
  %6137 = vmatpush1.msra.mxu0 0.0
  %6138 = vmatprep.subr.mxu0 0.0
  %6139 = vmatpush1.msra.mxu0 0.0
  %6140 = vmatprep.subr.mxu0 0.0
  %6141 = vmatpush1.msra.mxu0 0.0
  %6142 = vmatprep.subr.mxu0 0.0
  %6143 = vmatpush1.msra.mxu0 0.0
  %6144 = vmatprep.subr.mxu0 0.0
  %6145 = vmatpush1.msra.mxu0 0.0
  %6146 = vmatprep.subr.mxu0 0.0
  %6147 = vmatpush1.msra.mxu0 0.0
  %6148 = vmatprep.subr.mxu0 0.0
  %6149 = vmatpush1.msra.mxu0 0.0
  %6150 = vmatprep.subr.mxu0 0.0
  %6151 = vmatpush1.msra.mxu0 0.0
  %6152 = vmatprep.subr.mxu0 0.0
  %6153 = vmatpush1.msra.mxu0 0.0
  %6154 = vmatprep.subr.mxu0 0.0
  %6155 = vmatpush1.msra.mxu0 0.0
  %6156 = vmatprep.subr.mxu0 0.0
  %6157 = vmatpush1.msra.mxu0 0.0
  %6158 = vmatprep.subr.mxu0 0.0
  %6159 = vmatpush1.msra.mxu0 0.0
  %6160 = vmatprep.subr.mxu0 0.0
  %6161 = vmatpush1.msra.mxu0 0.0
  %6162 = vmatprep.subr.mxu0 0.0
  %6163 = vmatpush1.msra.mxu0 0.0
  %6164 = vmatprep.subr.mxu0 0.0
  %6165 = vmatpush1.msra.mxu0 0.0
  %6166 = vmatprep.subr.mxu0 0.0
  %6167 = vmatpush1.msra.mxu0 0.0
  %6168 = vmatprep.subr.mxu0 0.0
  %6169 = vmatpush1.msra.mxu0 0.0
  %6170 = vmatprep.subr.mxu0 0.0
  %6171 = vmatpush1.msra.mxu0 0.0
  %6172 = vmatprep.subr.mxu0 0.0
  %6173 = vmatpush1.msra.mxu0 0.0
  %6174 = vmatprep.subr.mxu0 0.0
  %6175 = vmatpush1.msra.mxu0 0.0
  %6176 = vmatprep.subr.mxu0 0.0
  %6177 = vmatpush1.msra.mxu0 0.0
  %6178 = vmatprep.subr.mxu0 0.0
  %6179 = vmatpush1.msra.mxu0 0.0
  %6180 = vmatprep.subr.mxu0 0.0
  %6181 = vmatpush1.msra.mxu0 0.0
  %6182 = vmatprep.subr.mxu0 0.0
  %6183 = vmatpush1.msra.mxu0 0.0
  %6184 = vmatprep.mubr.f32.mxu0 0.0
  %6185 = vmatmul.mubr.f32.gmra.mrb[0].mxu0 %v6118
  %v6186 = vpop.f32.mrb[0].mxu0
  %v6187 = vadd.f32 %v5577, %v6186
  %v6188 = vpop.f32.mrb[0].mxu0
  %6189 = vdwg.mxu0
  %s6190 = scalar_lea.vmem %s8, 6
  %6191 = vst [vmem:[%s6190] sm:$0x3] %v6187
  %6192 = vmatprep.subr.mxu0 0.0
  %6193 = vmatpush1.msra.mxu0 %v5465
  %6194 = vmatprep.subr.mxu0 0.0
  %6195 = vmatpush1.msra.mxu0 %v5466
  %6196 = vmatprep.subr.mxu0 0.0
  %6197 = vmatpush1.msra.mxu0 %v5467
  %6198 = vmatprep.subr.mxu0 0.0
  %6199 = vmatpush1.msra.mxu0 %v5468
  %6200 = vmatprep.subr.mxu0 0.0
  %6201 = vmatpush1.msra.mxu0 0.0
  %6202 = vmatprep.subr.mxu0 0.0
  %6203 = vmatpush1.msra.mxu0 0.0
  %6204 = vmatprep.subr.mxu0 0.0
  %6205 = vmatpush1.msra.mxu0 0.0
  %6206 = vmatprep.subr.mxu0 0.0
  %6207 = vmatpush1.msra.mxu0 0.0
  %6208 = vmatprep.subr.mxu0 0.0
  %6209 = vmatpush1.msra.mxu0 0.0
  %6210 = vmatprep.subr.mxu0 0.0
  %6211 = vmatpush1.msra.mxu0 0.0
  %6212 = vmatprep.subr.mxu0 0.0
  %6213 = vmatpush1.msra.mxu0 0.0
  %6214 = vmatprep.subr.mxu0 0.0
  %6215 = vmatpush1.msra.mxu0 0.0
  %6216 = vmatprep.subr.mxu0 0.0
  %6217 = vmatpush1.msra.mxu0 0.0
  %6218 = vmatprep.subr.mxu0 0.0
  %6219 = vmatpush1.msra.mxu0 0.0
  %6220 = vmatprep.subr.mxu0 0.0
  %6221 = vmatpush1.msra.mxu0 0.0
  %6222 = vmatprep.subr.mxu0 0.0
  %6223 = vmatpush1.msra.mxu0 0.0
  %6224 = vmatprep.subr.mxu0 0.0
  %6225 = vmatpush1.msra.mxu0 0.0
  %6226 = vmatprep.subr.mxu0 0.0
  %6227 = vmatpush1.msra.mxu0 0.0
  %6228 = vmatprep.subr.mxu0 0.0
  %6229 = vmatpush1.msra.mxu0 0.0
  %6230 = vmatprep.subr.mxu0 0.0
  %6231 = vmatpush1.msra.mxu0 0.0
  %6232 = vmatprep.subr.mxu0 0.0
  %6233 = vmatpush1.msra.mxu0 0.0
  %6234 = vmatprep.subr.mxu0 0.0
  %6235 = vmatpush1.msra.mxu0 0.0
  %6236 = vmatprep.subr.mxu0 0.0
  %6237 = vmatpush1.msra.mxu0 0.0
  %6238 = vmatprep.subr.mxu0 0.0
  %6239 = vmatpush1.msra.mxu0 0.0
  %6240 = vmatprep.subr.mxu0 0.0
  %6241 = vmatpush1.msra.mxu0 0.0
  %6242 = vmatprep.subr.mxu0 0.0
  %6243 = vmatpush1.msra.mxu0 0.0
  %6244 = vmatprep.subr.mxu0 0.0
  %6245 = vmatpush1.msra.mxu0 0.0
  %6246 = vmatprep.subr.mxu0 0.0
  %6247 = vmatpush1.msra.mxu0 0.0
  %6248 = vmatprep.subr.mxu0 0.0
  %6249 = vmatpush1.msra.mxu0 0.0
  %6250 = vmatprep.subr.mxu0 0.0
  %6251 = vmatpush1.msra.mxu0 0.0
  %6252 = vmatprep.subr.mxu0 0.0
  %6253 = vmatpush1.msra.mxu0 0.0
  %6254 = vmatprep.subr.mxu0 0.0
  %6255 = vmatpush1.msra.mxu0 0.0
  %6256 = vmatprep.mubr.f32.mxu0 0.0
  %6257 = vmatmul.mubr.f32.gmra.mrb[0].mxu0 %v6118
  %v6258 = vpop.f32.mrb[0].mxu0
  %v6259 = vadd.f32 0.0, %v6258
  %v6260 = vpop.f32.mrb[0].mxu0
  %6261 = vdwg.mxu0
  %v6262 = vadd.f32 %v5464, %v6259
  %v6263 = vxor.u32 %v6262, 2147483648
  %v6264 = vmul.f32 %v6263, 1.442695
  %v6265 = vpow.pop %v6264
  %v6266 = vadd.f32 %v6265, 1.0
  %v6267 = vrcp.pop %v6266
  %v6268 = vmul.f32 1.0, %v6267
  %v6269 = vtanh.pop %v6262
  %v6271 = vrot.slane %v6107, 6
  %v6273 = vmul.f32 %v6268, %v6271
  %6275 = vrot.lane.b32.xlu0 %v6269, 64
  %v6276 = vpop.permute.xlu0 %6275
  %v6278 = vmul.f32 %v6268, %v6276
  %6280 = vrot.lane.b32.xlu0 %v6278, 32
  %v6281 = vpop.permute.xlu0 %6280
  %v6283 = vadd.f32 %v6273, %v6281
  %v6284 = vtanh.pop %v6283
  %6286 = vrot.lane.b32.xlu0 %v6284, 64
  %v6287 = vpop.permute.xlu0 %6286
  %v6289 = vmul.f32 %v6268, %v6287
  %6291 = vrot.lane.b32.xlu0 %v6289, 32
  %v6292 = vpop.permute.xlu0 %6291
  %v6293 = vsel %vm5474, %v6292, 0
  %6295 = vmatprep.subr.mxu0 0.0
  %6296 = vmatpush1.msra.mxu0 %v5469
  %6297 = vmatprep.subr.mxu0 0.0
  %6298 = vmatpush1.msra.mxu0 %v5470
  %6299 = vmatprep.subr.mxu0 0.0
  %6300 = vmatpush1.msra.mxu0 %v5471
  %6301 = vmatprep.subr.mxu0 0.0
  %6302 = vmatpush1.msra.mxu0 %v5472
  %6303 = vmatprep.subr.mxu0 0.0
  %6304 = vmatpush1.msra.mxu0 0.0
  %6305 = vmatprep.subr.mxu0 0.0
  %6306 = vmatpush1.msra.mxu0 0.0
  %6307 = vmatprep.subr.mxu0 0.0
  %6308 = vmatpush1.msra.mxu0 0.0
  %6309 = vmatprep.subr.mxu0 0.0
  %6310 = vmatpush1.msra.mxu0 0.0
  %6311 = vmatprep.subr.mxu0 0.0
  %6312 = vmatpush1.msra.mxu0 0.0
  %6313 = vmatprep.subr.mxu0 0.0
  %6314 = vmatpush1.msra.mxu0 0.0
  %6315 = vmatprep.subr.mxu0 0.0
  %6316 = vmatpush1.msra.mxu0 0.0
  %6317 = vmatprep.subr.mxu0 0.0
  %6318 = vmatpush1.msra.mxu0 0.0
  %6319 = vmatprep.subr.mxu0 0.0
  %6320 = vmatpush1.msra.mxu0 0.0
  %6321 = vmatprep.subr.mxu0 0.0
  %6322 = vmatpush1.msra.mxu0 0.0
  %6323 = vmatprep.subr.mxu0 0.0
  %6324 = vmatpush1.msra.mxu0 0.0
  %6325 = vmatprep.subr.mxu0 0.0
  %6326 = vmatpush1.msra.mxu0 0.0
  %6327 = vmatprep.subr.mxu0 0.0
  %6328 = vmatpush1.msra.mxu0 0.0
  %6329 = vmatprep.subr.mxu0 0.0
  %6330 = vmatpush1.msra.mxu0 0.0
  %6331 = vmatprep.subr.mxu0 0.0
  %6332 = vmatpush1.msra.mxu0 0.0
  %6333 = vmatprep.subr.mxu0 0.0
  %6334 = vmatpush1.msra.mxu0 0.0
  %6335 = vmatprep.subr.mxu0 0.0
  %6336 = vmatpush1.msra.mxu0 0.0
  %6337 = vmatprep.subr.mxu0 0.0
  %6338 = vmatpush1.msra.mxu0 0.0
  %6339 = vmatprep.subr.mxu0 0.0
  %6340 = vmatpush1.msra.mxu0 0.0
  %6341 = vmatprep.subr.mxu0 0.0
  %6342 = vmatpush1.msra.mxu0 0.0
  %6343 = vmatprep.subr.mxu0 0.0
  %6344 = vmatpush1.msra.mxu0 0.0
  %6345 = vmatprep.subr.mxu0 0.0
  %6346 = vmatpush1.msra.mxu0 0.0
  %6347 = vmatprep.subr.mxu0 0.0
  %6348 = vmatpush1.msra.mxu0 0.0
  %6349 = vmatprep.subr.mxu0 0.0
  %6350 = vmatpush1.msra.mxu0 0.0
  %6351 = vmatprep.subr.mxu0 0.0
  %6352 = vmatpush1.msra.mxu0 0.0
  %6353 = vmatprep.subr.mxu0 0.0
  %6354 = vmatpush1.msra.mxu0 0.0
  %6355 = vmatprep.subr.mxu0 0.0
  %6356 = vmatpush1.msra.mxu0 0.0
  %6357 = vmatprep.subr.mxu0 0.0
  %6358 = vmatpush1.msra.mxu0 0.0
  %6359 = vmatprep.mubr.f32.mxu0 0.0
  %6360 = vmatmul.mubr.f32.gmra.mrb[0].mxu0 %v6293
  %v6361 = vpop.f32.mrb[0].mxu0
  %v6362 = vadd.f32 %v5577, %v6361
  %v6363 = vpop.f32.mrb[0].mxu0
  %6364 = vdwg.mxu0
  %s6365 = scalar_lea.vmem %s8, 8
  %6366 = vst [vmem:[%s6365] sm:$0x3] %v6362
  %6367 = vmatprep.subr.mxu0 0.0
  %6368 = vmatpush1.msra.mxu0 %v5465
  %6369 = vmatprep.subr.mxu0 0.0
  %6370 = vmatpush1.msra.mxu0 %v5466
  %6371 = vmatprep.subr.mxu0 0.0
  %6372 = vmatpush1.msra.mxu0 %v5467
  %6373 = vmatprep.subr.mxu0 0.0
  %6374 = vmatpush1.msra.mxu0 %v5468
  %6375 = vmatprep.subr.mxu0 0.0
  %6376 = vmatpush1.msra.mxu0 0.0
  %6377 = vmatprep.subr.mxu0 0.0
  %6378 = vmatpush1.msra.mxu0 0.0
  %6379 = vmatprep.subr.mxu0 0.0
  %6380 = vmatpush1.msra.mxu0 0.0
  %6381 = vmatprep.subr.mxu0 0.0
  %6382 = vmatpush1.msra.mxu0 0.0
  %6383 = vmatprep.subr.mxu0 0.0
  %6384 = vmatpush1.msra.mxu0 0.0
  %6385 = vmatprep.subr.mxu0 0.0
  %6386 = vmatpush1.msra.mxu0 0.0
  %6387 = vmatprep.subr.mxu0 0.0
  %6388 = vmatpush1.msra.mxu0 0.0
  %6389 = vmatprep.subr.mxu0 0.0
  %6390 = vmatpush1.msra.mxu0 0.0
  %6391 = vmatprep.subr.mxu0 0.0
  %6392 = vmatpush1.msra.mxu0 0.0
  %6393 = vmatprep.subr.mxu0 0.0
  %6394 = vmatpush1.msra.mxu0 0.0
  %6395 = vmatprep.subr.mxu0 0.0
  %6396 = vmatpush1.msra.mxu0 0.0
  %6397 = vmatprep.subr.mxu0 0.0
  %6398 = vmatpush1.msra.mxu0 0.0
  %6399 = vmatprep.subr.mxu0 0.0
  %6400 = vmatpush1.msra.mxu0 0.0
  %6401 = vmatprep.subr.mxu0 0.0
  %6402 = vmatpush1.msra.mxu0 0.0
  %6403 = vmatprep.subr.mxu0 0.0
  %6404 = vmatpush1.msra.mxu0 0.0
  %6405 = vmatprep.subr.mxu0 0.0
  %6406 = vmatpush1.msra.mxu0 0.0
  %6407 = vmatprep.subr.mxu0 0.0
  %6408 = vmatpush1.msra.mxu0 0.0
  %6409 = vmatprep.subr.mxu0 0.0
  %6410 = vmatpush1.msra.mxu0 0.0
  %6411 = vmatprep.subr.mxu0 0.0
  %6412 = vmatpush1.msra.mxu0 0.0
  %6413 = vmatprep.subr.mxu0 0.0
  %6414 = vmatpush1.msra.mxu0 0.0
  %6415 = vmatprep.subr.mxu0 0.0
  %6416 = vmatpush1.msra.mxu0 0.0
  %6417 = vmatprep.subr.mxu0 0.0
  %6418 = vmatpush1.msra.mxu0 0.0
  %6419 = vmatprep.subr.mxu0 0.0
  %6420 = vmatpush1.msra.mxu0 0.0
  %6421 = vmatprep.subr.mxu0 0.0
  %6422 = vmatpush1.msra.mxu0 0.0
  %6423 = vmatprep.subr.mxu0 0.0
  %6424 = vmatpush1.msra.mxu0 0.0
  %6425 = vmatprep.subr.mxu0 0.0
  %6426 = vmatpush1.msra.mxu0 0.0
  %6427 = vmatprep.subr.mxu0 0.0
  %6428 = vmatpush1.msra.mxu0 0.0
  %6429 = vmatprep.subr.mxu0 0.0
  %6430 = vmatpush1.msra.mxu0 0.0
  %6431 = vmatprep.mubr.f32.mxu0 0.0
  %6432 = vmatmul.mubr.f32.gmra.mrb[0].mxu0 %v6293
  %v6433 = vpop.f32.mrb[0].mxu0
  %v6434 = vadd.f32 0.0, %v6433
  %v6435 = vpop.f32.mrb[0].mxu0
  %6436 = vdwg.mxu0
  %v6438 = vrot.slane %v6434, 6
  %v6440 = vadd.f32 %v5464, %v6438
  %v6441 = vxor.u32 %v6440, 2147483648
  %v6442 = vmul.f32 %v6441, 1.442695
  %v6443 = vpow.pop %v6442
  %v6444 = vadd.f32 %v6443, 1.0
  %v6445 = vrcp.pop %v6444
  %v6446 = vmul.f32 1.0, %v6445
  %v6447 = vtanh.pop %v6440
  %v6449 = vrot.slane %v6283, 6
  %v6451 = vmul.f32 %v6446, %v6449
  %6453 = vrot.lane.b32.xlu0 %v6447, 64
  %v6454 = vpop.permute.xlu0 %6453
  %v6456 = vmul.f32 %v6446, %v6454
  %6458 = vrot.lane.b32.xlu0 %v6456, 32
  %v6459 = vpop.permute.xlu0 %6458
  %v6461 = vadd.f32 %v6451, %v6459
  %v6462 = vtanh.pop %v6461
  %6464 = vrot.lane.b32.xlu0 %v6462, 64
  %v6465 = vpop.permute.xlu0 %6464
  %v6467 = vmul.f32 %v6446, %v6465
  %v6469 = vrot.slane %v6467, 2
  %6470 = vrot.lane.b32.xlu0 %v6469, 32
  %v6471 = vpop.permute.xlu0 %6470
  %v6472 = vsel %vm5474, %v6471, 0
  %6474 = vmatprep.subr.mxu0 0.0
  %6475 = vmatpush1.msra.mxu0 %v5469
  %6476 = vmatprep.subr.mxu0 0.0
  %6477 = vmatpush1.msra.mxu0 %v5470
  %6478 = vmatprep.subr.mxu0 0.0
  %6479 = vmatpush1.msra.mxu0 %v5471
  %6480 = vmatprep.subr.mxu0 0.0
  %6481 = vmatpush1.msra.mxu0 %v5472
  %6482 = vmatprep.subr.mxu0 0.0
  %6483 = vmatpush1.msra.mxu0 0.0
  %6484 = vmatprep.subr.mxu0 0.0
  %6485 = vmatpush1.msra.mxu0 0.0
  %6486 = vmatprep.subr.mxu0 0.0
  %6487 = vmatpush1.msra.mxu0 0.0
  %6488 = vmatprep.subr.mxu0 0.0
  %6489 = vmatpush1.msra.mxu0 0.0
  %6490 = vmatprep.subr.mxu0 0.0
  %6491 = vmatpush1.msra.mxu0 0.0
  %6492 = vmatprep.subr.mxu0 0.0
  %6493 = vmatpush1.msra.mxu0 0.0
  %6494 = vmatprep.subr.mxu0 0.0
  %6495 = vmatpush1.msra.mxu0 0.0
  %6496 = vmatprep.subr.mxu0 0.0
  %6497 = vmatpush1.msra.mxu0 0.0
  %6498 = vmatprep.subr.mxu0 0.0
  %6499 = vmatpush1.msra.mxu0 0.0
  %6500 = vmatprep.subr.mxu0 0.0
  %6501 = vmatpush1.msra.mxu0 0.0
  %6502 = vmatprep.subr.mxu0 0.0
  %6503 = vmatpush1.msra.mxu0 0.0
  %6504 = vmatprep.subr.mxu0 0.0
  %6505 = vmatpush1.msra.mxu0 0.0
  %6506 = vmatprep.subr.mxu0 0.0
  %6507 = vmatpush1.msra.mxu0 0.0
  %6508 = vmatprep.subr.mxu0 0.0
  %6509 = vmatpush1.msra.mxu0 0.0
  %6510 = vmatprep.subr.mxu0 0.0
  %6511 = vmatpush1.msra.mxu0 0.0
  %6512 = vmatprep.subr.mxu0 0.0
  %6513 = vmatpush1.msra.mxu0 0.0
  %6514 = vmatprep.subr.mxu0 0.0
  %6515 = vmatpush1.msra.mxu0 0.0
  %6516 = vmatprep.subr.mxu0 0.0
  %6517 = vmatpush1.msra.mxu0 0.0
  %6518 = vmatprep.subr.mxu0 0.0
  %6519 = vmatpush1.msra.mxu0 0.0
  %6520 = vmatprep.subr.mxu0 0.0
  %6521 = vmatpush1.msra.mxu0 0.0
  %6522 = vmatprep.subr.mxu0 0.0
  %6523 = vmatpush1.msra.mxu0 0.0
  %6524 = vmatprep.subr.mxu0 0.0
  %6525 = vmatpush1.msra.mxu0 0.0
  %6526 = vmatprep.subr.mxu0 0.0
  %6527 = vmatpush1.msra.mxu0 0.0
  %6528 = vmatprep.subr.mxu0 0.0
  %6529 = vmatpush1.msra.mxu0 0.0
  %6530 = vmatprep.subr.mxu0 0.0
  %6531 = vmatpush1.msra.mxu0 0.0
  %6532 = vmatprep.subr.mxu0 0.0
  %6533 = vmatpush1.msra.mxu0 0.0
  %6534 = vmatprep.subr.mxu0 0.0
  %6535 = vmatpush1.msra.mxu0 0.0
  %6536 = vmatprep.subr.mxu0 0.0
  %6537 = vmatpush1.msra.mxu0 0.0
  %6538 = vmatprep.mubr.f32.mxu0 0.0
  %6539 = vmatmul.mubr.f32.gmra.mrb[0].mxu0 %v6472
  %v6540 = vpop.f32.mrb[0].mxu0
  %v6541 = vadd.f32 %v5577, %v6540
  %v6542 = vpop.f32.mrb[0].mxu0
  %6543 = vdwg.mxu0
  %s6544 = scalar_lea.vmem %s8, 10
  %6545 = vst [vmem:[%s6544] sm:$0x3] %v6541
  %6546 = vmatprep.subr.mxu0 0.0
  %6547 = vmatpush1.msra.mxu0 %v5465
  %6548 = vmatprep.subr.mxu0 0.0
  %6549 = vmatpush1.msra.mxu0 %v5466
  %6550 = vmatprep.subr.mxu0 0.0
  %6551 = vmatpush1.msra.mxu0 %v5467
  %6552 = vmatprep.subr.mxu0 0.0
  %6553 = vmatpush1.msra.mxu0 %v5468
  %6554 = vmatprep.subr.mxu0 0.0
  %6555 = vmatpush1.msra.mxu0 0.0
  %6556 = vmatprep.subr.mxu0 0.0
  %6557 = vmatpush1.msra.mxu0 0.0
  %6558 = vmatprep.subr.mxu0 0.0
  %6559 = vmatpush1.msra.mxu0 0.0
  %6560 = vmatprep.subr.mxu0 0.0
  %6561 = vmatpush1.msra.mxu0 0.0
  %6562 = vmatprep.subr.mxu0 0.0
  %6563 = vmatpush1.msra.mxu0 0.0
  %6564 = vmatprep.subr.mxu0 0.0
  %6565 = vmatpush1.msra.mxu0 0.0
  %6566 = vmatprep.subr.mxu0 0.0
  %6567 = vmatpush1.msra.mxu0 0.0
  %6568 = vmatprep.subr.mxu0 0.0
  %6569 = vmatpush1.msra.mxu0 0.0
  %6570 = vmatprep.subr.mxu0 0.0
  %6571 = vmatpush1.msra.mxu0 0.0
  %6572 = vmatprep.subr.mxu0 0.0
  %6573 = vmatpush1.msra.mxu0 0.0
  %6574 = vmatprep.subr.mxu0 0.0
  %6575 = vmatpush1.msra.mxu0 0.0
  %6576 = vmatprep.subr.mxu0 0.0
  %6577 = vmatpush1.msra.mxu0 0.0
  %6578 = vmatprep.subr.mxu0 0.0
  %6579 = vmatpush1.msra.mxu0 0.0
  %6580 = vmatprep.subr.mxu0 0.0
  %6581 = vmatpush1.msra.mxu0 0.0
  %6582 = vmatprep.subr.mxu0 0.0
  %6583 = vmatpush1.msra.mxu0 0.0
  %6584 = vmatprep.subr.mxu0 0.0
  %6585 = vmatpush1.msra.mxu0 0.0
  %6586 = vmatprep.subr.mxu0 0.0
  %6587 = vmatpush1.msra.mxu0 0.0
  %6588 = vmatprep.subr.mxu0 0.0
  %6589 = vmatpush1.msra.mxu0 0.0
  %6590 = vmatprep.subr.mxu0 0.0
  %6591 = vmatpush1.msra.mxu0 0.0
  %6592 = vmatprep.subr.mxu0 0.0
  %6593 = vmatpush1.msra.mxu0 0.0
  %6594 = vmatprep.subr.mxu0 0.0
  %6595 = vmatpush1.msra.mxu0 0.0
  %6596 = vmatprep.subr.mxu0 0.0
  %6597 = vmatpush1.msra.mxu0 0.0
  %6598 = vmatprep.subr.mxu0 0.0
  %6599 = vmatpush1.msra.mxu0 0.0
  %6600 = vmatprep.subr.mxu0 0.0
  %6601 = vmatpush1.msra.mxu0 0.0
  %6602 = vmatprep.subr.mxu0 0.0
  %6603 = vmatpush1.msra.mxu0 0.0
  %6604 = vmatprep.subr.mxu0 0.0
  %6605 = vmatpush1.msra.mxu0 0.0
  %6606 = vmatprep.subr.mxu0 0.0
  %6607 = vmatpush1.msra.mxu0 0.0
  %6608 = vmatprep.subr.mxu0 0.0
  %6609 = vmatpush1.msra.mxu0 0.0
  %6610 = vmatprep.mubr.f32.mxu0 0.0
  %6611 = vmatmul.mubr.f32.gmra.mrb[0].mxu0 %v6472
  %v6612 = vpop.f32.mrb[0].mxu0
  %v6613 = vadd.f32 0.0, %v6612
  %v6614 = vpop.f32.mrb[0].mxu0
  %6615 = vdwg.mxu0
  %v6617 = vrot.slane %v6613, 4
  %v6619 = vadd.f32 %v5464, %v6617
  %v6620 = vxor.u32 %v6619, 2147483648
  %v6621 = vmul.f32 %v6620, 1.442695
  %v6622 = vpow.pop %v6621
  %v6623 = vadd.f32 %v6622, 1.0
  %v6624 = vrcp.pop %v6623
  %v6625 = vmul.f32 1.0, %v6624
  %v6626 = vtanh.pop %v6619
  %v6628 = vrot.slane %v6461, 6
  %v6630 = vmul.f32 %v6625, %v6628
  %6632 = vrot.lane.b32.xlu0 %v6626, 64
  %v6633 = vpop.permute.xlu0 %6632
  %v6635 = vmul.f32 %v6625, %v6633
  %6637 = vrot.lane.b32.xlu0 %v6635, 32
  %v6638 = vpop.permute.xlu0 %6637
  %v6640 = vadd.f32 %v6630, %v6638
  %v6641 = vtanh.pop %v6640
  %6643 = vrot.lane.b32.xlu0 %v6641, 64
  %v6644 = vpop.permute.xlu0 %6643
  %v6646 = vmul.f32 %v6625, %v6644
  %v6648 = vrot.slane %v6646, 4
  %6649 = vrot.lane.b32.xlu0 %v6648, 32
  %v6650 = vpop.permute.xlu0 %6649
  %v6651 = vsel %vm5474, %v6650, 0
  %6653 = vmatprep.subr.mxu0 0.0
  %6654 = vmatpush1.msra.mxu0 %v5469
  %6655 = vmatprep.subr.mxu0 0.0
  %6656 = vmatpush1.msra.mxu0 %v5470
  %6657 = vmatprep.subr.mxu0 0.0
  %6658 = vmatpush1.msra.mxu0 %v5471
  %6659 = vmatprep.subr.mxu0 0.0
  %6660 = vmatpush1.msra.mxu0 %v5472
  %6661 = vmatprep.subr.mxu0 0.0
  %6662 = vmatpush1.msra.mxu0 0.0
  %6663 = vmatprep.subr.mxu0 0.0
  %6664 = vmatpush1.msra.mxu0 0.0
  %6665 = vmatprep.subr.mxu0 0.0
  %6666 = vmatpush1.msra.mxu0 0.0
  %6667 = vmatprep.subr.mxu0 0.0
  %6668 = vmatpush1.msra.mxu0 0.0
  %6669 = vmatprep.subr.mxu0 0.0
  %6670 = vmatpush1.msra.mxu0 0.0
  %6671 = vmatprep.subr.mxu0 0.0
  %6672 = vmatpush1.msra.mxu0 0.0
  %6673 = vmatprep.subr.mxu0 0.0
  %6674 = vmatpush1.msra.mxu0 0.0
  %6675 = vmatprep.subr.mxu0 0.0
  %6676 = vmatpush1.msra.mxu0 0.0
  %6677 = vmatprep.subr.mxu0 0.0
  %6678 = vmatpush1.msra.mxu0 0.0
  %6679 = vmatprep.subr.mxu0 0.0
  %6680 = vmatpush1.msra.mxu0 0.0
  %6681 = vmatprep.subr.mxu0 0.0
  %6682 = vmatpush1.msra.mxu0 0.0
  %6683 = vmatprep.subr.mxu0 0.0
  %6684 = vmatpush1.msra.mxu0 0.0
  %6685 = vmatprep.subr.mxu0 0.0
  %6686 = vmatpush1.msra.mxu0 0.0
  %6687 = vmatprep.subr.mxu0 0.0
  %6688 = vmatpush1.msra.mxu0 0.0
  %6689 = vmatprep.subr.mxu0 0.0
  %6690 = vmatpush1.msra.mxu0 0.0
  %6691 = vmatprep.subr.mxu0 0.0
  %6692 = vmatpush1.msra.mxu0 0.0
  %6693 = vmatprep.subr.mxu0 0.0
  %6694 = vmatpush1.msra.mxu0 0.0
  %6695 = vmatprep.subr.mxu0 0.0
  %6696 = vmatpush1.msra.mxu0 0.0
  %6697 = vmatprep.subr.mxu0 0.0
  %6698 = vmatpush1.msra.mxu0 0.0
  %6699 = vmatprep.subr.mxu0 0.0
  %6700 = vmatpush1.msra.mxu0 0.0
  %6701 = vmatprep.subr.mxu0 0.0
  %6702 = vmatpush1.msra.mxu0 0.0
  %6703 = vmatprep.subr.mxu0 0.0
  %6704 = vmatpush1.msra.mxu0 0.0
  %6705 = vmatprep.subr.mxu0 0.0
  %6706 = vmatpush1.msra.mxu0 0.0
  %6707 = vmatprep.subr.mxu0 0.0
  %6708 = vmatpush1.msra.mxu0 0.0
  %6709 = vmatprep.subr.mxu0 0.0
  %6710 = vmatpush1.msra.mxu0 0.0
  %6711 = vmatprep.subr.mxu0 0.0
  %6712 = vmatpush1.msra.mxu0 0.0
  %6713 = vmatprep.subr.mxu0 0.0
  %6714 = vmatpush1.msra.mxu0 0.0
  %6715 = vmatprep.subr.mxu0 0.0
  %6716 = vmatpush1.msra.mxu0 0.0
  %6717 = vmatprep.mubr.f32.mxu0 0.0
  %6718 = vmatmul.mubr.f32.gmra.mrb[0].mxu0 %v6651
  %v6719 = vpop.f32.mrb[0].mxu0
  %v6720 = vadd.f32 %v5577, %v6719
  %v6721 = vpop.f32.mrb[0].mxu0
  %6722 = vdwg.mxu0
  %s6723 = scalar_lea.vmem %s8, 12
  %6724 = vst [vmem:[%s6723] sm:$0x3] %v6720
  %6725 = vmatprep.subr.mxu0 0.0
  %6726 = vmatpush1.msra.mxu0 %v5465
  %6727 = vmatprep.subr.mxu0 0.0
  %6728 = vmatpush1.msra.mxu0 %v5466
  %6729 = vmatprep.subr.mxu0 0.0
  %6730 = vmatpush1.msra.mxu0 %v5467
  %6731 = vmatprep.subr.mxu0 0.0
  %6732 = vmatpush1.msra.mxu0 %v5468
  %6733 = vmatprep.subr.mxu0 0.0
  %6734 = vmatpush1.msra.mxu0 0.0
  %6735 = vmatprep.subr.mxu0 0.0
  %6736 = vmatpush1.msra.mxu0 0.0
  %6737 = vmatprep.subr.mxu0 0.0
  %6738 = vmatpush1.msra.mxu0 0.0
  %6739 = vmatprep.subr.mxu0 0.0
  %6740 = vmatpush1.msra.mxu0 0.0
  %6741 = vmatprep.subr.mxu0 0.0
  %6742 = vmatpush1.msra.mxu0 0.0
  %6743 = vmatprep.subr.mxu0 0.0
  %6744 = vmatpush1.msra.mxu0 0.0
  %6745 = vmatprep.subr.mxu0 0.0
  %6746 = vmatpush1.msra.mxu0 0.0
  %6747 = vmatprep.subr.mxu0 0.0
  %6748 = vmatpush1.msra.mxu0 0.0
  %6749 = vmatprep.subr.mxu0 0.0
  %6750 = vmatpush1.msra.mxu0 0.0
  %6751 = vmatprep.subr.mxu0 0.0
  %6752 = vmatpush1.msra.mxu0 0.0
  %6753 = vmatprep.subr.mxu0 0.0
  %6754 = vmatpush1.msra.mxu0 0.0
  %6755 = vmatprep.subr.mxu0 0.0
  %6756 = vmatpush1.msra.mxu0 0.0
  %6757 = vmatprep.subr.mxu0 0.0
  %6758 = vmatpush1.msra.mxu0 0.0
  %6759 = vmatprep.subr.mxu0 0.0
  %6760 = vmatpush1.msra.mxu0 0.0
  %6761 = vmatprep.subr.mxu0 0.0
  %6762 = vmatpush1.msra.mxu0 0.0
  %6763 = vmatprep.subr.mxu0 0.0
  %6764 = vmatpush1.msra.mxu0 0.0
  %6765 = vmatprep.subr.mxu0 0.0
  %6766 = vmatpush1.msra.mxu0 0.0
  %6767 = vmatprep.subr.mxu0 0.0
  %6768 = vmatpush1.msra.mxu0 0.0
  %6769 = vmatprep.subr.mxu0 0.0
  %6770 = vmatpush1.msra.mxu0 0.0
  %6771 = vmatprep.subr.mxu0 0.0
  %6772 = vmatpush1.msra.mxu0 0.0
  %6773 = vmatprep.subr.mxu0 0.0
  %6774 = vmatpush1.msra.mxu0 0.0
  %6775 = vmatprep.subr.mxu0 0.0
  %6776 = vmatpush1.msra.mxu0 0.0
  %6777 = vmatprep.subr.mxu0 0.0
  %6778 = vmatpush1.msra.mxu0 0.0
  %6779 = vmatprep.subr.mxu0 0.0
  %6780 = vmatpush1.msra.mxu0 0.0
  %6781 = vmatprep.subr.mxu0 0.0
  %6782 = vmatpush1.msra.mxu0 0.0
  %6783 = vmatprep.subr.mxu0 0.0
  %6784 = vmatpush1.msra.mxu0 0.0
  %6785 = vmatprep.subr.mxu0 0.0
  %6786 = vmatpush1.msra.mxu0 0.0
  %6787 = vmatprep.subr.mxu0 0.0
  %6788 = vmatpush1.msra.mxu0 0.0
  %6789 = vmatprep.mubr.f32.mxu0 0.0
  %6790 = vmatmul.mubr.f32.gmra.mrb[0].mxu0 %v6651
  %v6791 = vpop.f32.mrb[0].mxu0
  %v6792 = vadd.f32 0.0, %v6791
  %v6793 = vpop.f32.mrb[0].mxu0
  %6794 = vdwg.mxu0
  %v6796 = vrot.slane %v6792, 2
  %v6798 = vadd.f32 %v5464, %v6796
  %v6799 = vxor.u32 %v6798, 2147483648
  %v6800 = vmul.f32 %v6799, 1.442695
  %v6801 = vpow.pop %v6800
  %v6802 = vadd.f32 %v6801, 1.0
  %v6803 = vrcp.pop %v6802
  %v6804 = vmul.f32 1.0, %v6803
  %v6805 = vtanh.pop %v6798
  %v6807 = vrot.slane %v6640, 6
  %v6809 = vmul.f32 %v6804, %v6807
  %6811 = vrot.lane.b32.xlu0 %v6805, 64
  %v6812 = vpop.permute.xlu0 %6811
  %v6814 = vmul.f32 %v6804, %v6812
  %6816 = vrot.lane.b32.xlu0 %v6814, 32
  %v6817 = vpop.permute.xlu0 %6816
  %v6819 = vadd.f32 %v6809, %v6817
  %v6820 = vtanh.pop %v6819
  %6822 = vrot.lane.b32.xlu0 %v6820, 64
  %v6823 = vpop.permute.xlu0 %6822
  %v6825 = vmul.f32 %v6804, %v6823
  %v6827 = vrot.slane %v6825, 6
  %6828 = vrot.lane.b32.xlu0 %v6827, 32
  %v6829 = vpop.permute.xlu0 %6828
  %v6830 = vsel %vm5474, %v6829, 0
  %6832 = vmatprep.subr.mxu0 0.0
  %6833 = vmatpush1.msra.mxu0 %v5469
  %6834 = vmatprep.subr.mxu0 0.0
  %6835 = vmatpush1.msra.mxu0 %v5470
  %6836 = vmatprep.subr.mxu0 0.0
  %6837 = vmatpush1.msra.mxu0 %v5471
  %6838 = vmatprep.subr.mxu0 0.0
  %6839 = vmatpush1.msra.mxu0 %v5472
  %6840 = vmatprep.subr.mxu0 0.0
  %6841 = vmatpush1.msra.mxu0 0.0
  %6842 = vmatprep.subr.mxu0 0.0
  %6843 = vmatpush1.msra.mxu0 0.0
  %6844 = vmatprep.subr.mxu0 0.0
  %6845 = vmatpush1.msra.mxu0 0.0
  %6846 = vmatprep.subr.mxu0 0.0
  %6847 = vmatpush1.msra.mxu0 0.0
  %6848 = vmatprep.subr.mxu0 0.0
  %6849 = vmatpush1.msra.mxu0 0.0
  %6850 = vmatprep.subr.mxu0 0.0
  %6851 = vmatpush1.msra.mxu0 0.0
  %6852 = vmatprep.subr.mxu0 0.0
  %6853 = vmatpush1.msra.mxu0 0.0
  %6854 = vmatprep.subr.mxu0 0.0
  %6855 = vmatpush1.msra.mxu0 0.0
  %6856 = vmatprep.subr.mxu0 0.0
  %6857 = vmatpush1.msra.mxu0 0.0
  %6858 = vmatprep.subr.mxu0 0.0
  %6859 = vmatpush1.msra.mxu0 0.0
  %6860 = vmatprep.subr.mxu0 0.0
  %6861 = vmatpush1.msra.mxu0 0.0
  %6862 = vmatprep.subr.mxu0 0.0
  %6863 = vmatpush1.msra.mxu0 0.0
  %6864 = vmatprep.subr.mxu0 0.0
  %6865 = vmatpush1.msra.mxu0 0.0
  %6866 = vmatprep.subr.mxu0 0.0
  %6867 = vmatpush1.msra.mxu0 0.0
  %6868 = vmatprep.subr.mxu0 0.0
  %6869 = vmatpush1.msra.mxu0 0.0
  %6870 = vmatprep.subr.mxu0 0.0
  %6871 = vmatpush1.msra.mxu0 0.0
  %6872 = vmatprep.subr.mxu0 0.0
  %6873 = vmatpush1.msra.mxu0 0.0
  %6874 = vmatprep.subr.mxu0 0.0
  %6875 = vmatpush1.msra.mxu0 0.0
  %6876 = vmatprep.subr.mxu0 0.0
  %6877 = vmatpush1.msra.mxu0 0.0
  %6878 = vmatprep.subr.mxu0 0.0
  %6879 = vmatpush1.msra.mxu0 0.0
  %6880 = vmatprep.subr.mxu0 0.0
  %6881 = vmatpush1.msra.mxu0 0.0
  %6882 = vmatprep.subr.mxu0 0.0
  %6883 = vmatpush1.msra.mxu0 0.0
  %6884 = vmatprep.subr.mxu0 0.0
  %6885 = vmatpush1.msra.mxu0 0.0
  %6886 = vmatprep.subr.mxu0 0.0
  %6887 = vmatpush1.msra.mxu0 0.0
  %6888 = vmatprep.subr.mxu0 0.0
  %6889 = vmatpush1.msra.mxu0 0.0
  %6890 = vmatprep.subr.mxu0 0.0
  %6891 = vmatpush1.msra.mxu0 0.0
  %6892 = vmatprep.subr.mxu0 0.0
  %6893 = vmatpush1.msra.mxu0 0.0
  %6894 = vmatprep.subr.mxu0 0.0
  %6895 = vmatpush1.msra.mxu0 0.0
  %6896 = vmatprep.mubr.f32.mxu0 0.0
  %6897 = vmatmul.mubr.f32.gmra.mrb[0].mxu0 %v6830
  %v6898 = vpop.f32.mrb[0].mxu0
  %v6899 = vadd.f32 %v5577, %v6898
  %v6900 = vpop.f32.mrb[0].mxu0
  %6901 = vdwg.mxu0
  %s6902 = scalar_lea.vmem %s8, 14
  %6903 = vst [vmem:[%s6902] sm:$0x3] %v6899
  // Predicated region
  $region34: #{lrcn3d_forward.1} parent=0 // pred_check
    _
  $region35: #{lrcn3d_forward.1} parent=0 // pred_check_branch
    %6905 = sbr.rel (0) target = $region37
  $region36: #{lrcn3d_forward.1} parent=0 // pred_region
    _
  $region37: #{lrcn3d_forward.1} parent=0 // pred_fallthru
    _
  // Predicated region
  $region38: #{lrcn3d_forward.1} parent=0 // pred_check
    _
  $region39: #{lrcn3d_forward.1} parent=0 // pred_check_branch
    %6907 = sbr.rel (0) target = $region41
  $region40: #{lrcn3d_forward.1} parent=0 // pred_region
    _
  $region41: #{lrcn3d_forward.1} parent=0 // pred_fallthru
    _

</llo_original>
